<compile_context>
chip_gen: v6e
topology: v6e:2x2x1
jax: 0.10.0
libtpu: 0.0.40
codegen_flags: <defaults>
</compile_context>

<pallas_src>
import jax
import jax.numpy as jnp
from jax import lax
from jax.experimental import pallas as pl
from jax.experimental.pallas import tpu as pltpu


def _round_up(n, m):
    return ((n + m - 1) // m) * m


# ------------------------------ Pallas kernel ------------------------------ #

def _cnnet_kernel(x_ref, w1_ref, b1_ref, w2_ref, b2_ref, wl_ref, bl_ref, o_ref):
    """Fused conv1+relu+pool -> conv2+relu+pool -> flatten -> linear1@2@3 for BB images.

    x_ref : (BB, 28, 28)     f32, W on lanes
    w1_ref: (5, 28, 240)     conv1 banded weights (per vertical tap ki)
    b1_ref: (1, 240)         conv1 bias tiled over output columns
    w2_ref: (5, 240, 160)    conv2 banded weights (read only even-j input lane groups)
    b2_ref: (1, 160)         conv2 bias tiled over output columns
    wl_ref: (640, 10)        collapsed linear1@2@3 (odd-j2 feature lanes zero-weighted)
    bl_ref: (1, 10)          collapsed bias
    o_ref : (BB, 10)
    """
    BB = x_ref.shape[0]

    # ---- conv1 (5x5, Cin=1, Cout=10): 5 accumulated MXU matmuls, K=28, N=240 ----
    # rows = (b, i), lanes = j*10 + o  (j = output column, o = output channel)
    acc1 = jnp.dot(x_ref[:, 0:24, :].reshape(BB * 24, 28), w1_ref[0],
                   preferred_element_type=jnp.float32)
    for ki in range(1, 5):
        acc1 = acc1 + jnp.dot(x_ref[:, ki:ki + 24, :].reshape(BB * 24, 28), w1_ref[ki],
                              preferred_element_type=jnp.float32)
    c1 = jnp.maximum(acc1 + b1_ref[...], 0.0)                      # (BB*24, 240)

    # ---- 2x2 max-pool #1 ----
    # W direction: lane roll (+10) and max; the stride-2 lane downsample is folded into the
    # conv2 banded weights (odd-j lane groups have zero weight) -> no lane gather needed.
    c1 = jnp.maximum(c1, pltpu.roll(c1, shift=230, axis=1))        # 230 == -10 mod 240
    # H direction: adjacent-row pairs -> max.
    g1 = jnp.max(c1.reshape(BB, 12, 2, 240), axis=2)               # (BB, 12, 240)

    # ---- conv2 (5x5, Cin=10, Cout=20): 5 accumulated MXU matmuls, K=240, N=160 ----
    acc2 = jnp.dot(g1[:, 0:8, :].reshape(BB * 8, 240), w2_ref[0],
                   preferred_element_type=jnp.float32)
    for ki in range(1, 5):
        acc2 = acc2 + jnp.dot(g1[:, ki:ki + 8, :].reshape(BB * 8, 240), w2_ref[ki],
                              preferred_element_type=jnp.float32)
    c2 = jnp.maximum(acc2 + b2_ref[...], 0.0)                      # (BB*8, 160), lanes = j2*20+o

    # ---- 2x2 max-pool #2 + flatten + collapsed linear1@2@3 ----
    c2 = jnp.maximum(c2, pltpu.roll(c2, shift=140, axis=1))        # 140 == -20 mod 160
    g2 = jnp.max(c2.reshape(BB, 4, 2, 160), axis=2)                # (BB, 4, 160)
    feat = g2.reshape(BB, 640)                                     # odd-j2 lanes zero-weighted
    o_ref[...] = jnp.dot(feat, wl_ref[...],
                         preferred_element_type=jnp.float32) + bl_ref[...]


# ----------------- one-time host-side weight preparation ------------------- #

def prepare_params(p):
    """Pure layout / algebra on the weights.  Call ONCE, outside the jitted forward."""
    f32 = jnp.float32
    HP = lax.Precision.HIGHEST

    # conv1 banded weights: W1b[ki, w, j*10+o] = conv1_w[o, 0, ki, w-j] for 0 <= w-j <= 4.
    w1v = p["conv1_w"].astype(f32)[:, 0]                            # (10, 5, 5) [o, ki, kj]
    ki = jnp.arange(5)[:, None, None, None]
    w_ = jnp.arange(28)[None, :, None, None]
    j_ = jnp.arange(24)[None, None, :, None]
    o_ = jnp.arange(10)[None, None, None, :]
    kj = w_ - j_
    w1b = jnp.where((kj >= 0) & (kj <= 4),
                    w1v[o_, ki, jnp.clip(kj, 0, 4)], 0.0).reshape(5, 28, 240)
    b1 = jnp.tile(p["conv1_b"].astype(f32), 24).reshape(1, 240)

    # conv2 banded weights over the pooled-but-not-lane-downsampled layout:
    # input lanes L = j1*10 + c (j1 in 0..23, only even j1 = 2*wp hold valid pooled data);
    # W2b[ki, L, j2*20+o] = conv2_w[o, c, ki, wp-j2] for even j1 and 0 <= wp-j2 <= 4, else 0.
    w2 = p["conv2_w"].astype(f32)                                   # (20, 10, 5, 5) [o,c,ki,kj]
    ki = jnp.arange(5)[:, None, None, None, None]
    j1 = jnp.arange(24)[None, :, None, None, None]
    c_ = jnp.arange(10)[None, None, :, None, None]
    j2 = jnp.arange(8)[None, None, None, :, None]
    o_ = jnp.arange(20)[None, None, None, None, :]
    kj = j1 // 2 - j2
    w2b = jnp.where((j1 % 2 == 0) & (kj >= 0) & (kj <= 4),
                    w2[o_, c_, ki, jnp.clip(kj, 0, 4)], 0.0).reshape(5, 240, 160)
    b2 = jnp.tile(p["conv2_b"].astype(f32), 8).reshape(1, 160)

    # linear1/2/3 have no nonlinearity between them (per the PyTorch source) -> collapse to a
    # single (320, 10) matmul + bias, then scatter its rows into the kernel's feature layout
    # F = hp*160 + j2*20 + o (valid only at even j2 = 2*wp; odd-j2 rows are zero).
    wl320 = jnp.dot(jnp.dot(p["lin1_w"].T, p["lin2_w"].T, precision=HP),
                    p["lin3_w"].T, precision=HP)                    # (320, 10), torch flatten order
    bl = (jnp.dot(jnp.dot(p["lin1_b"], p["lin2_w"].T, precision=HP) + p["lin2_b"],
                  p["lin3_w"].T, precision=HP) + p["lin3_b"]).reshape(1, 10)
    hp = jnp.arange(4)[:, None, None]
    j2 = jnp.arange(8)[None, :, None]
    o_ = jnp.arange(20)[None, None, :]
    src = o_ * 16 + hp * 4 + (j2 // 2)                              # torch index c*16 + h*4 + w
    wl = jnp.where((j2 % 2 == 0)[..., None], wl320[src], 0.0).reshape(640, 10)

    return {"w1b": w1b, "b1": b1, "w2b": w2b, "b2": b2, "wl": wl, "bl": bl}


# --------------------------------- Wrapper --------------------------------- #

def cnnet_forward(x_nchw, prep, batch_block=32):
    """Pallas CNNet forward.  x_nchw: (B, 1, 28, 28) f32; prep: output of prepare_params()."""
    B = x_nchw.shape[0]
    # Cin == 1 -> squeezing the channel dim is free; W (28) lands on the lane dimension.
    x = x_nchw.astype(jnp.float32).reshape(B, 28, 28)

    # BB: multiple of 8 (sublane / out-block alignment), capped so batches >= 16 give at least
    # 2 grid steps -> the "parallel" batch axis feeds both v7x TensorCores.
    BB = min(_round_up(batch_block, 8), _round_up(-(-B // 2), 8))
    Bp = _round_up(B, BB)
    if Bp != B:
        x = jnp.pad(x, ((0, Bp - B), (0, 0), (0, 0)))

    out = pl.pallas_call(
        _cnnet_kernel,
        out_shape=jax.ShapeDtypeStruct((Bp, 10), jnp.float32),
        grid=(Bp // BB,),
        in_specs=[
            pl.BlockSpec((BB, 28, 28), lambda i: (i, 0, 0)),        # images for this step
            pl.BlockSpec((5, 28, 240), lambda i: (0, 0, 0)),        # conv1 banded weights
            pl.BlockSpec((1, 240), lambda i: (0, 0)),               # conv1 bias
            pl.BlockSpec((5, 240, 160), lambda i: (0, 0, 0)),       # conv2 banded weights
            pl.BlockSpec((1, 160), lambda i: (0, 0)),               # conv2 bias
            pl.BlockSpec((640, 10), lambda i: (0, 0)),              # collapsed linear1@2@3
            pl.BlockSpec((1, 10), lambda i: (0, 0)),                # collapsed bias
        ],
        out_specs=pl.BlockSpec((BB, 10), lambda i: (i, 0)),
        compiler_params=pltpu.CompilerParams(
            dimension_semantics=("parallel",),       # batch steps independent (v7x 2 TCs)
            vmem_limit_bytes=48 * 1024 * 1024,       # sized for BB=32; within v7x's 64 MiB VMEM
        ),
    )(x, prep["w1b"], prep["b1"], prep["w2b"], prep["b2"], prep["wl"], prep["bl"])
    return out[:B]


# --------------------- deterministic parameter init ------------------------ #

def init_params(key):
    ks = jax.random.split(key, 10)

    def u(k, shape, fan_in):
        bound = 1.0 / (fan_in ** 0.5)
        return jax.random.uniform(k, shape, jnp.float32, -bound, bound)

    return {
        "conv1_w": u(ks[0], (10, 1, 5, 5), 1 * 5 * 5),
        "conv1_b": u(ks[1], (10,), 1 * 5 * 5),
        "conv2_w": u(ks[2], (20, 10, 5, 5), 10 * 5 * 5),
        "conv2_b": u(ks[3], (20,), 10 * 5 * 5),
        "lin1_w": u(ks[4], (256, 320), 320),
        "lin1_b": u(ks[5], (256,), 320),
        "lin2_w": u(ks[6], (64, 256), 256),
        "lin2_b": u(ks[7], (64,), 256),
        "lin3_w": u(ks[8], (10, 64), 64),
        "lin3_b": u(ks[9], (10,), 64),
    }


# ------------------------- plain-JAX reference ------------------------------ #

def ref_forward(x, p):
    hp = lax.Precision.HIGHEST

    def conv(y, w, b):
        y = lax.conv_general_dilated(
            y, w, (1, 1), "VALID",
            dimension_numbers=("NCHW", "OIHW", "NCHW"), precision=hp)
        return y + b[None, :, None, None]

    def pool(y):
        B, C, H, W = y.shape
        return y.reshape(B, C, H // 2, 2, W // 2, 2).max(axis=(3, 5))

    y = pool(jax.nn.relu(conv(x, p["conv1_w"], p["conv1_b"])))
    y = pool(jax.nn.relu(conv(y, p["conv2_w"], p["conv2_b"])))
    y = y.reshape(y.shape[0], -1)
    y = jnp.dot(y, p["lin1_w"].T, precision=hp) + p["lin1_b"]
    y = jnp.dot(y, p["lin2_w"].T, precision=hp) + p["lin2_b"]
    y = jnp.dot(y, p["lin3_w"].T, precision=hp) + p["lin3_b"]
    return y


# --------------------------------- main ------------------------------------ #

if __name__ == "__main__":
    key = jax.random.PRNGKey(0)
    pkey, xkey = jax.random.split(key)
    params = init_params(pkey)
    prep = prepare_params(params)            # one-time host prep, outside the jitted forward

    # MNIST-style input: linear1(320) implies 1x28x28 images. Small batch = 2.
    x = jax.random.normal(xkey, (2, 1, 28, 28), jnp.float32)

    fwd = jax.jit(cnnet_forward)
    out = jax.block_until_ready(fwd(x, prep))

    ref = ref_forward(x, params)
    err = float(jnp.max(jnp.abs(out - ref)))
    assert out.shape == (2, 10), out.shape
    assert err < 2e-3, f"max abs err vs reference: {err}"
    print("KERNEL_OK")
</pallas_src>

<mosaic_0001>
module attributes {stable_mosaic.version = 11 : i64} {
  func.func @_cnnet_kernel(%arg0: i32, %arg1: memref<8x28x28xf32, #tpu.memory_space<vmem>>, %arg2: memref<5x28x240xf32, #tpu.memory_space<vmem>>, %arg3: memref<1x240xf32, #tpu.memory_space<vmem>>, %arg4: memref<5x240x160xf32, #tpu.memory_space<vmem>>, %arg5: memref<1x160xf32, #tpu.memory_space<vmem>>, %arg6: memref<640x10xf32, #tpu.memory_space<vmem>>, %arg7: memref<1x10xf32, #tpu.memory_space<vmem>>, %arg8: memref<8x10xf32, #tpu.memory_space<vmem>>) attributes {dimension_semantics = [#tpu.dimension_semantics<parallel>], iteration_bounds = array<i64: 1>, scalar_prefetch = 0 : i64, scratch_operands = 0 : i64, tpu.core_type = #tpu.core_type<tc>, window_params = [{transform_indices = @transform_0, window_bounds = array<i64: 8, 28, 28>}, {pipeline_mode = #tpu.pipeline_mode<synchronous>, transform_indices = @transform_1, window_bounds = array<i64: 5, 28, 240>}, {pipeline_mode = #tpu.pipeline_mode<synchronous>, transform_indices = @transform_2, window_bounds = array<i64: 1, 240>}, {pipeline_mode = #tpu.pipeline_mode<synchronous>, transform_indices = @transform_3, window_bounds = array<i64: 5, 240, 160>}, {pipeline_mode = #tpu.pipeline_mode<synchronous>, transform_indices = @transform_4, window_bounds = array<i64: 1, 160>}, {pipeline_mode = #tpu.pipeline_mode<synchronous>, transform_indices = @transform_5, window_bounds = array<i64: 640, 10>}, {pipeline_mode = #tpu.pipeline_mode<synchronous>, transform_indices = @transform_6, window_bounds = array<i64: 1, 10>}, {transform_indices = @transform_7, window_bounds = array<i64: 8, 10>}]} {
    %c0 = arith.constant 0 : index
    %c0_0 = arith.constant 0 : index
    %c0_1 = arith.constant 0 : index
    %0 = vector.load %arg1[%c0, %c0_0, %c0_1] : memref<8x28x28xf32, #tpu.memory_space<vmem>>, vector<8x24x28xf32>
    %1 = vector.shape_cast %0 : vector<8x24x28xf32> to vector<192x28xf32>
    %c0_2 = arith.constant 0 : index
    %c0_3 = arith.constant 0 : index
    %c0_4 = arith.constant 0 : index
    %2 = vector.load %arg2[%c0_2, %c0_3, %c0_4] : memref<5x28x240xf32, #tpu.memory_space<vmem>>, vector<1x28x240xf32>
    %3 = vector.shape_cast %2 : vector<1x28x240xf32> to vector<28x240xf32>
    %cst = arith.constant dense<0.000000e+00> : vector<192x240xf32>
    %4 = tpu.matmul %1, %3, %cst {dimension_numbers = #tpu.dot_dimension_numbers<[1], [0], [0], [1], [0, 0, 1, 1], [], []>} : vector<192x28xf32>, vector<28x240xf32>, vector<192x240xf32> -> vector<192x240xf32>
    %c0_5 = arith.constant 0 : index
    %c1 = arith.constant 1 : index
    %c0_6 = arith.constant 0 : index
    %5 = vector.load %arg1[%c0_5, %c1, %c0_6] : memref<8x28x28xf32, #tpu.memory_space<vmem>>, vector<8x24x28xf32>
    %6 = vector.shape_cast %5 : vector<8x24x28xf32> to vector<192x28xf32>
    %c1_7 = arith.constant 1 : index
    %c0_8 = arith.constant 0 : index
    %c0_9 = arith.constant 0 : index
    %7 = vector.load %arg2[%c1_7, %c0_8, %c0_9] : memref<5x28x240xf32, #tpu.memory_space<vmem>>, vector<1x28x240xf32>
    %8 = vector.shape_cast %7 : vector<1x28x240xf32> to vector<28x240xf32>
    %cst_10 = arith.constant dense<0.000000e+00> : vector<192x240xf32>
    %9 = tpu.matmul %6, %8, %cst_10 {dimension_numbers = #tpu.dot_dimension_numbers<[1], [0], [0], [1], [0, 0, 1, 1], [], []>} : vector<192x28xf32>, vector<28x240xf32>, vector<192x240xf32> -> vector<192x240xf32>
    %10 = arith.addf %4, %9 : vector<192x240xf32>
    %c0_11 = arith.constant 0 : index
    %c2 = arith.constant 2 : index
    %c0_12 = arith.constant 0 : index
    %11 = vector.load %arg1[%c0_11, %c2, %c0_12] : memref<8x28x28xf32, #tpu.memory_space<vmem>>, vector<8x24x28xf32>
    %12 = vector.shape_cast %11 : vector<8x24x28xf32> to vector<192x28xf32>
    %c2_13 = arith.constant 2 : index
    %c0_14 = arith.constant 0 : index
    %c0_15 = arith.constant 0 : index
    %13 = vector.load %arg2[%c2_13, %c0_14, %c0_15] : memref<5x28x240xf32, #tpu.memory_space<vmem>>, vector<1x28x240xf32>
    %14 = vector.shape_cast %13 : vector<1x28x240xf32> to vector<28x240xf32>
    %cst_16 = arith.constant dense<0.000000e+00> : vector<192x240xf32>
    %15 = tpu.matmul %12, %14, %cst_16 {dimension_numbers = #tpu.dot_dimension_numbers<[1], [0], [0], [1], [0, 0, 1, 1], [], []>} : vector<192x28xf32>, vector<28x240xf32>, vector<192x240xf32> -> vector<192x240xf32>
    %16 = arith.addf %10, %15 : vector<192x240xf32>
    %c0_17 = arith.constant 0 : index
    %c3 = arith.constant 3 : index
    %c0_18 = arith.constant 0 : index
    %17 = vector.load %arg1[%c0_17, %c3, %c0_18] : memref<8x28x28xf32, #tpu.memory_space<vmem>>, vector<8x24x28xf32>
    %18 = vector.shape_cast %17 : vector<8x24x28xf32> to vector<192x28xf32>
    %c3_19 = arith.constant 3 : index
    %c0_20 = arith.constant 0 : index
    %c0_21 = arith.constant 0 : index
    %19 = vector.load %arg2[%c3_19, %c0_20, %c0_21] : memref<5x28x240xf32, #tpu.memory_space<vmem>>, vector<1x28x240xf32>
    %20 = vector.shape_cast %19 : vector<1x28x240xf32> to vector<28x240xf32>
    %cst_22 = arith.constant dense<0.000000e+00> : vector<192x240xf32>
    %21 = tpu.matmul %18, %20, %cst_22 {dimension_numbers = #tpu.dot_dimension_numbers<[1], [0], [0], [1], [0, 0, 1, 1], [], []>} : vector<192x28xf32>, vector<28x240xf32>, vector<192x240xf32> -> vector<192x240xf32>
    %22 = arith.addf %16, %21 : vector<192x240xf32>
    %c0_23 = arith.constant 0 : index
    %c4 = arith.constant 4 : index
    %c0_24 = arith.constant 0 : index
    %23 = vector.load %arg1[%c0_23, %c4, %c0_24] : memref<8x28x28xf32, #tpu.memory_space<vmem>>, vector<8x24x28xf32>
    %24 = vector.shape_cast %23 : vector<8x24x28xf32> to vector<192x28xf32>
    %c4_25 = arith.constant 4 : index
    %c0_26 = arith.constant 0 : index
    %c0_27 = arith.constant 0 : index
    %25 = vector.load %arg2[%c4_25, %c0_26, %c0_27] : memref<5x28x240xf32, #tpu.memory_space<vmem>>, vector<1x28x240xf32>
    %26 = vector.shape_cast %25 : vector<1x28x240xf32> to vector<28x240xf32>
    %cst_28 = arith.constant dense<0.000000e+00> : vector<192x240xf32>
    %27 = tpu.matmul %24, %26, %cst_28 {dimension_numbers = #tpu.dot_dimension_numbers<[1], [0], [0], [1], [0, 0, 1, 1], [], []>} : vector<192x28xf32>, vector<28x240xf32>, vector<192x240xf32> -> vector<192x240xf32>
    %28 = arith.addf %22, %27 : vector<192x240xf32>
    %c0_29 = arith.constant 0 : index
    %c0_30 = arith.constant 0 : index
    %29 = vector.load %arg3[%c0_29, %c0_30] : memref<1x240xf32, #tpu.memory_space<vmem>>, vector<1x240xf32>
    %30 = vector.broadcast %29 : vector<1x240xf32> to vector<192x240xf32>
    %31 = arith.addf %28, %30 : vector<192x240xf32>
    %cst_31 = arith.constant 0.000000e+00 : f32
    %32 = vector.broadcast %cst_31 : f32 to vector<192x240xf32>
    %33 = arith.maximumf %31, %32 : vector<192x240xf32>
    %c230_i32 = arith.constant 230 : i32
    %34 = tpu.dynamic_rotate %33 by %c230_i32 dim 1 : vector<192x240xf32>, i32 -> vector<192x240xf32>
    %35 = arith.maximumf %33, %34 : vector<192x240xf32>
    %36 = vector.shape_cast %35 : vector<192x240xf32> to vector<8x12x2x240xf32>
    %cst_32 = arith.constant dense<0xFF800000> : vector<8x12x240xf32>
    %37 = vector.multi_reduction <maximumf>, %36, %cst_32 [2] : vector<8x12x2x240xf32> to vector<8x12x240xf32>
    %38 = vector.extract_strided_slice %37 {offsets = [0, 0, 0], sizes = [8, 8, 240], strides = [1, 1, 1]} : vector<8x12x240xf32> to vector<8x8x240xf32>
    %39 = vector.shape_cast %38 : vector<8x8x240xf32> to vector<64x240xf32>
    %c0_33 = arith.constant 0 : index
    %c0_34 = arith.constant 0 : index
    %c0_35 = arith.constant 0 : index
    %40 = vector.load %arg4[%c0_33, %c0_34, %c0_35] : memref<5x240x160xf32, #tpu.memory_space<vmem>>, vector<1x240x160xf32>
    %41 = vector.shape_cast %40 : vector<1x240x160xf32> to vector<240x160xf32>
    %cst_36 = arith.constant dense<0.000000e+00> : vector<64x160xf32>
    %42 = tpu.matmul %39, %41, %cst_36 {dimension_numbers = #tpu.dot_dimension_numbers<[1], [0], [0], [1], [0, 0, 1, 1], [], []>} : vector<64x240xf32>, vector<240x160xf32>, vector<64x160xf32> -> vector<64x160xf32>
    %43 = vector.extract_strided_slice %37 {offsets = [0, 1, 0], sizes = [8, 8, 240], strides = [1, 1, 1]} : vector<8x12x240xf32> to vector<8x8x240xf32>
    %44 = vector.shape_cast %43 : vector<8x8x240xf32> to vector<64x240xf32>
    %c1_37 = arith.constant 1 : index
    %c0_38 = arith.constant 0 : index
    %c0_39 = arith.constant 0 : index
    %45 = vector.load %arg4[%c1_37, %c0_38, %c0_39] : memref<5x240x160xf32, #tpu.memory_space<vmem>>, vector<1x240x160xf32>
    %46 = vector.shape_cast %45 : vector<1x240x160xf32> to vector<240x160xf32>
    %cst_40 = arith.constant dense<0.000000e+00> : vector<64x160xf32>
    %47 = tpu.matmul %44, %46, %cst_40 {dimension_numbers = #tpu.dot_dimension_numbers<[1], [0], [0], [1], [0, 0, 1, 1], [], []>} : vector<64x240xf32>, vector<240x160xf32>, vector<64x160xf32> -> vector<64x160xf32>
    %48 = arith.addf %42, %47 : vector<64x160xf32>
    %49 = vector.extract_strided_slice %37 {offsets = [0, 2, 0], sizes = [8, 8, 240], strides = [1, 1, 1]} : vector<8x12x240xf32> to vector<8x8x240xf32>
    %50 = vector.shape_cast %49 : vector<8x8x240xf32> to vector<64x240xf32>
    %c2_41 = arith.constant 2 : index
    %c0_42 = arith.constant 0 : index
    %c0_43 = arith.constant 0 : index
    %51 = vector.load %arg4[%c2_41, %c0_42, %c0_43] : memref<5x240x160xf32, #tpu.memory_space<vmem>>, vector<1x240x160xf32>
    %52 = vector.shape_cast %51 : vector<1x240x160xf32> to vector<240x160xf32>
    %cst_44 = arith.constant dense<0.000000e+00> : vector<64x160xf32>
    %53 = tpu.matmul %50, %52, %cst_44 {dimension_numbers = #tpu.dot_dimension_numbers<[1], [0], [0], [1], [0, 0, 1, 1], [], []>} : vector<64x240xf32>, vector<240x160xf32>, vector<64x160xf32> -> vector<64x160xf32>
    %54 = arith.addf %48, %53 : vector<64x160xf32>
    %55 = vector.extract_strided_slice %37 {offsets = [0, 3, 0], sizes = [8, 8, 240], strides = [1, 1, 1]} : vector<8x12x240xf32> to vector<8x8x240xf32>
    %56 = vector.shape_cast %55 : vector<8x8x240xf32> to vector<64x240xf32>
    %c3_45 = arith.constant 3 : index
    %c0_46 = arith.constant 0 : index
    %c0_47 = arith.constant 0 : index
    %57 = vector.load %arg4[%c3_45, %c0_46, %c0_47] : memref<5x240x160xf32, #tpu.memory_space<vmem>>, vector<1x240x160xf32>
    %58 = vector.shape_cast %57 : vector<1x240x160xf32> to vector<240x160xf32>
    %cst_48 = arith.constant dense<0.000000e+00> : vector<64x160xf32>
    %59 = tpu.matmul %56, %58, %cst_48 {dimension_numbers = #tpu.dot_dimension_numbers<[1], [0], [0], [1], [0, 0, 1, 1], [], []>} : vector<64x240xf32>, vector<240x160xf32>, vector<64x160xf32> -> vector<64x160xf32>
    %60 = arith.addf %54, %59 : vector<64x160xf32>
    %61 = vector.extract_strided_slice %37 {offsets = [0, 4, 0], sizes = [8, 8, 240], strides = [1, 1, 1]} : vector<8x12x240xf32> to vector<8x8x240xf32>
    %62 = vector.shape_cast %61 : vector<8x8x240xf32> to vector<64x240xf32>
    %c4_49 = arith.constant 4 : index
    %c0_50 = arith.constant 0 : index
    %c0_51 = arith.constant 0 : index
    %63 = vector.load %arg4[%c4_49, %c0_50, %c0_51] : memref<5x240x160xf32, #tpu.memory_space<vmem>>, vector<1x240x160xf32>
    %64 = vector.shape_cast %63 : vector<1x240x160xf32> to vector<240x160xf32>
    %cst_52 = arith.constant dense<0.000000e+00> : vector<64x160xf32>
    %65 = tpu.matmul %62, %64, %cst_52 {dimension_numbers = #tpu.dot_dimension_numbers<[1], [0], [0], [1], [0, 0, 1, 1], [], []>} : vector<64x240xf32>, vector<240x160xf32>, vector<64x160xf32> -> vector<64x160xf32>
    %66 = arith.addf %60, %65 : vector<64x160xf32>
    %c0_53 = arith.constant 0 : index
    %c0_54 = arith.constant 0 : index
    %67 = vector.load %arg5[%c0_53, %c0_54] : memref<1x160xf32, #tpu.memory_space<vmem>>, vector<1x160xf32>
    %68 = vector.broadcast %67 : vector<1x160xf32> to vector<64x160xf32>
    %69 = arith.addf %66, %68 : vector<64x160xf32>
    %cst_55 = arith.constant 0.000000e+00 : f32
    %70 = vector.broadcast %cst_55 : f32 to vector<64x160xf32>
    %71 = arith.maximumf %69, %70 : vector<64x160xf32>
    %c140_i32 = arith.constant 140 : i32
    %72 = tpu.dynamic_rotate %71 by %c140_i32 dim 1 : vector<64x160xf32>, i32 -> vector<64x160xf32>
    %73 = arith.maximumf %71, %72 : vector<64x160xf32>
    %74 = vector.shape_cast %73 : vector<64x160xf32> to vector<8x4x2x160xf32>
    %cst_56 = arith.constant dense<0xFF800000> : vector<8x4x160xf32>
    %75 = vector.multi_reduction <maximumf>, %74, %cst_56 [2] : vector<8x4x2x160xf32> to vector<8x4x160xf32>
    %76 = vector.shape_cast %75 : vector<8x4x160xf32> to vector<8x640xf32>
    %c0_57 = arith.constant 0 : index
    %c0_58 = arith.constant 0 : index
    %77 = vector.load %arg6[%c0_57, %c0_58] : memref<640x10xf32, #tpu.memory_space<vmem>>, vector<640x10xf32>
    %cst_59 = arith.constant dense<0.000000e+00> : vector<8x10xf32>
    %78 = tpu.matmul %76, %77, %cst_59 {dimension_numbers = #tpu.dot_dimension_numbers<[1], [0], [0], [1], [0, 0, 1, 1], [], []>} : vector<8x640xf32>, vector<640x10xf32>, vector<8x10xf32> -> vector<8x10xf32>
    %c0_60 = arith.constant 0 : index
    %c0_61 = arith.constant 0 : index
    %79 = vector.load %arg7[%c0_60, %c0_61] : memref<1x10xf32, #tpu.memory_space<vmem>>, vector<1x10xf32>
    %80 = vector.broadcast %79 : vector<1x10xf32> to vector<8x10xf32>
    %81 = arith.addf %78, %80 : vector<8x10xf32>
    %c0_62 = arith.constant 0 : index
    %c0_63 = arith.constant 0 : index
    %82 = vector.load %arg8[%c0_62, %c0_63] : memref<8x10xf32, #tpu.memory_space<vmem>>, vector<8x10xf32>
    tpu.vector_store %arg8[%c0_62, %c0_63], %81 {strides = array<i32>} : memref<8x10xf32, #tpu.memory_space<vmem>>, vector<8x10xf32>,
    return
  }
  func.func @transform_0(%arg0: i32) -> (i32, i32, i32) {
    %c0_i32 = arith.constant 0 : i32
    %c0_i32_0 = arith.constant 0 : i32
    %c0_i32_1 = arith.constant 0 : i32
    return %arg0, %c0_i32, %c0_i32_0 : i32, i32, i32
  }
  func.func @transform_1(%arg0: i32) -> (i32, i32, i32) {
    %c0_i32 = arith.constant 0 : i32
    %c0_i32_0 = arith.constant 0 : i32
    %c0_i32_1 = arith.constant 0 : i32
    %c0_i32_2 = arith.constant 0 : i32
    return %c0_i32, %c0_i32_0, %c0_i32_1 : i32, i32, i32
  }
  func.func @transform_2(%arg0: i32) -> (i32, i32) {
    %c0_i32 = arith.constant 0 : i32
    %c0_i32_0 = arith.constant 0 : i32
    %c0_i32_1 = arith.constant 0 : i32
    return %c0_i32, %c0_i32_0 : i32, i32
  }
  func.func @transform_3(%arg0: i32) -> (i32, i32, i32) {
    %c0_i32 = arith.constant 0 : i32
    %c0_i32_0 = arith.constant 0 : i32
    %c0_i32_1 = arith.constant 0 : i32
    %c0_i32_2 = arith.constant 0 : i32
    return %c0_i32, %c0_i32_0, %c0_i32_1 : i32, i32, i32
  }
  func.func @transform_4(%arg0: i32) -> (i32, i32) {
    %c0_i32 = arith.constant 0 : i32
    %c0_i32_0 = arith.constant 0 : i32
    %c0_i32_1 = arith.constant 0 : i32
    return %c0_i32, %c0_i32_0 : i32, i32
  }
  func.func @transform_5(%arg0: i32) -> (i32, i32) {
    %c0_i32 = arith.constant 0 : i32
    %c0_i32_0 = arith.constant 0 : i32
    %c0_i32_1 = arith.constant 0 : i32
    return %c0_i32, %c0_i32_0 : i32, i32
  }
  func.func @transform_6(%arg0: i32) -> (i32, i32) {
    %c0_i32 = arith.constant 0 : i32
    %c0_i32_0 = arith.constant 0 : i32
    %c0_i32_1 = arith.constant 0 : i32
    return %c0_i32, %c0_i32_0 : i32, i32
  }
  func.func @transform_7(%arg0: i32) -> (i32, i32) {
    %c0_i32 = arith.constant 0 : i32
    %c0_i32_0 = arith.constant 0 : i32
    return %arg0, %c0_i32 : i32, i32
  }
}

</mosaic_0001>

<llo_original>
// kernel: cnnet_forward.1
$region0: #{cnnet_forward.1}
  #allocation0 [shape = 'u32[]', space=smem, size = 0x4, offset = 0x4, fixed_abs, tag = 'smem constant byte address 0x4 - core index']
  #allocation1 [shape = 'u32[144,128]{1,0:T(1,128)}', space=vmem, size = 0x12000, scoped, tag = 'internal scratch']
  %s0 = inlined_call_operand.vmem [shape: f32[8,28,28], index: 0, kind: input, shape index: {}]
  %s1 = inlined_call_operand.vmem [shape: f32[5,28,240], index: 1, kind: input, shape index: {}]
  %s2 = inlined_call_operand.vmem [shape: f32[1,240], index: 2, kind: input, shape index: {}]
  %s3 = inlined_call_operand.vmem [shape: f32[5,240,160], index: 3, kind: input, shape index: {}]
  %s4 = inlined_call_operand.vmem [shape: f32[1,160], index: 4, kind: input, shape index: {}]
  %s5 = inlined_call_operand.vmem [shape: f32[640,10], index: 5, kind: input, shape index: {}]
  %s6 = inlined_call_operand.vmem [shape: f32[1,10], index: 6, kind: input, shape index: {}]
  %s7 = inlined_call_operand.vmem [shape: f32[8,10], index: 7, kind: output, shape index: {}]
  %s8 = sld [smem:[#allocation0]]
  $region38: #{cnnet_forward.1} parent=0
    _
  %s10 = ssub.s32 1, %s8
  %s11 = scalar_select 0, %s10, %s8
  // Predicated region
  $region2: #{cnnet_forward.1} parent=0 // pred_check
    _
  $region3: #{cnnet_forward.1} parent=0 // pred_check_branch
    %13 = sbr.rel (0) target = $region5
  $region4: #{cnnet_forward.1} parent=0 // pred_region
    _
  $region5: #{cnnet_forward.1} parent=0 // pred_fallthru
    _
  // Predicated region
  $region6: #{cnnet_forward.1} parent=0 // pred_check
    _
  $region7: #{cnnet_forward.1} parent=0 // pred_check_branch
    %15 = sbr.rel (0) target = $region9
  $region8: #{cnnet_forward.1} parent=0 // pred_region
    _
  $region9: #{cnnet_forward.1} parent=0 // pred_fallthru
    _
  // Predicated region
  $region10: #{cnnet_forward.1} parent=0 // pred_check
    _
  $region11: #{cnnet_forward.1} parent=0 // pred_check_branch
    %17 = sbr.rel (0) target = $region13
  $region12: #{cnnet_forward.1} parent=0 // pred_region
    _
  $region13: #{cnnet_forward.1} parent=0 // pred_fallthru
    _
  // Predicated region
  $region14: #{cnnet_forward.1} parent=0 // pred_check
    _
  $region15: #{cnnet_forward.1} parent=0 // pred_check_branch
    %19 = sbr.rel (0) target = $region17
  $region16: #{cnnet_forward.1} parent=0 // pred_region
    _
  $region17: #{cnnet_forward.1} parent=0 // pred_fallthru
    _
  // Predicated region
  $region18: #{cnnet_forward.1} parent=0 // pred_check
    _
  $region19: #{cnnet_forward.1} parent=0 // pred_check_branch
    %21 = sbr.rel (0) target = $region21
  $region20: #{cnnet_forward.1} parent=0 // pred_region
    _
  $region21: #{cnnet_forward.1} parent=0 // pred_fallthru
    _
  // Predicated region
  $region22: #{cnnet_forward.1} parent=0 // pred_check
    _
  $region23: #{cnnet_forward.1} parent=0 // pred_check_branch
    %23 = sbr.rel (0) target = $region25
  $region24: #{cnnet_forward.1} parent=0 // pred_region
    _
  $region25: #{cnnet_forward.1} parent=0 // pred_fallthru
    _
  // Predicated region
  $region26: #{cnnet_forward.1} parent=0 // pred_check
    _
  $region27: #{cnnet_forward.1} parent=0 // pred_check_branch
    %25 = sbr.rel (0) target = $region29
  $region28: #{cnnet_forward.1} parent=0 // pred_region
    _
  $region29: #{cnnet_forward.1} parent=0 // pred_fallthru
    _
  %v26 = vld [vmem:[%s0] sm:$0xff]
  %v27 = vld [vmem:[%s0 + $0x8] sm:$0xff]
  %v28 = vld [vmem:[%s0 + $0x10] sm:$0xff]
  %v29 = vld [vmem:[%s0 + $0x20] sm:$0xff]
  %v30 = vld [vmem:[%s0 + $0x28] sm:$0xff]
  %v31 = vld [vmem:[%s0 + $0x30] sm:$0xff]
  %v32 = vld [vmem:[%s0 + $0x40] sm:$0xff]
  %v33 = vld [vmem:[%s0 + $0x48] sm:$0xff]
  %v34 = vld [vmem:[%s0 + $0x50] sm:$0xff]
  %v35 = vld [vmem:[%s0 + $0x60] sm:$0xff]
  %v36 = vld [vmem:[%s0 + $0x68] sm:$0xff]
  %v37 = vld [vmem:[%s0 + $0x70] sm:$0xff]
  %v38 = vld [vmem:[%s0 + $0x80] sm:$0xff]
  %v39 = vld [vmem:[%s0 + $0x88] sm:$0xff]
  %v40 = vld [vmem:[%s0 + $0x90] sm:$0xff]
  %v41 = vld [vmem:[%s0 + $0xa0] sm:$0xff]
  %v42 = vld [vmem:[%s0 + $0xa8] sm:$0xff]
  %v43 = vld [vmem:[%s0 + $0xb0] sm:$0xff]
  %v44 = vld [vmem:[%s0 + $0xc0] sm:$0xff]
  %v45 = vld [vmem:[%s0 + $0xc8] sm:$0xff]
  %v46 = vld [vmem:[%s0 + $0xd0] sm:$0xff]
  %v47 = vld [vmem:[%s0 + $0xe0] sm:$0xff]
  %v48 = vld [vmem:[%s0 + $0xe8] sm:$0xff]
  %v49 = vld [vmem:[%s0 + $0xf0] sm:$0xff]
  %v50 = vld [vmem:[%s1] sm:$0xff]
  %v51 = vld [vmem:[%s1 + $0x8] sm:$0xff]
  %v52 = vld [vmem:[%s1 + $0x10] sm:$0xff]
  %v53 = vld [vmem:[%s1 + $0x18] sm:$0xff]
  %v54 = vld [vmem:[%s1 + $0x20] sm:$0xff]
  %v55 = vld [vmem:[%s1 + $0x28] sm:$0xff]
  %v56 = vld [vmem:[%s1 + $0x30] sm:$0xf]
  %v57 = vld [vmem:[%s1 + $0x38] sm:$0xf]
  %v58 = vld [vmem:[%s0 + $0x1] sm:$0xff]
  %v59 = vld [vmem:[%s0 + $0x9] sm:$0xff]
  %v60 = vld [vmem:[%s0 + $0x11] sm:$0xff]
  %v61 = vld [vmem:[%s0 + $0x21] sm:$0xff]
  %v62 = vld [vmem:[%s0 + $0x29] sm:$0xff]
  %v63 = vld [vmem:[%s0 + $0x31] sm:$0xff]
  %v64 = vld [vmem:[%s0 + $0x41] sm:$0xff]
  %v65 = vld [vmem:[%s0 + $0x49] sm:$0xff]
  %v66 = vld [vmem:[%s0 + $0x51] sm:$0xff]
  %v67 = vld [vmem:[%s0 + $0x61] sm:$0xff]
  %v68 = vld [vmem:[%s0 + $0x69] sm:$0xff]
  %v69 = vld [vmem:[%s0 + $0x71] sm:$0xff]
  %v70 = vld [vmem:[%s0 + $0x81] sm:$0xff]
  %v71 = vld [vmem:[%s0 + $0x89] sm:$0xff]
  %v72 = vld [vmem:[%s0 + $0x91] sm:$0xff]
  %v73 = vld [vmem:[%s0 + $0xa1] sm:$0xff]
  %v74 = vld [vmem:[%s0 + $0xa9] sm:$0xff]
  %v75 = vld [vmem:[%s0 + $0xb1] sm:$0xff]
  %v76 = vld [vmem:[%s0 + $0xc1] sm:$0xff]
  %v77 = vld [vmem:[%s0 + $0xc9] sm:$0xff]
  %v78 = vld [vmem:[%s0 + $0xd1] sm:$0xff]
  %v79 = vld [vmem:[%s0 + $0xe1] sm:$0xff]
  %v80 = vld [vmem:[%s0 + $0xe9] sm:$0xff]
  %v81 = vld [vmem:[%s0 + $0xf1] sm:$0xff]
  %s82 = scalar_lea.vmem %s1, 64
  %v83 = vld [vmem:[%s82] sm:$0xff]
  %v84 = vld [vmem:[%s82 + $0x8] sm:$0xff]
  %v85 = vld [vmem:[%s82 + $0x10] sm:$0xff]
  %v86 = vld [vmem:[%s82 + $0x18] sm:$0xff]
  %v87 = vld [vmem:[%s82 + $0x20] sm:$0xff]
  %v88 = vld [vmem:[%s82 + $0x28] sm:$0xff]
  %v89 = vld [vmem:[%s82 + $0x30] sm:$0xf]
  %v90 = vld [vmem:[%s82 + $0x38] sm:$0xf]
  %vm91 = vcmask 228352
  %v93 = vsel %vm91, %v58, 0
  %v96 = vsel %vm91, %v59, 0
  %v99 = vsel %vm91, %v60, 0
  %v102 = vsel %vm91, %v61, 0
  %v105 = vsel %vm91, %v62, 0
  %v108 = vsel %vm91, %v63, 0
  %v111 = vsel %vm91, %v64, 0
  %v114 = vsel %vm91, %v65, 0
  %v117 = vsel %vm91, %v66, 0
  %v120 = vsel %vm91, %v67, 0
  %v123 = vsel %vm91, %v68, 0
  %v126 = vsel %vm91, %v69, 0
  %v129 = vsel %vm91, %v70, 0
  %v132 = vsel %vm91, %v71, 0
  %v135 = vsel %vm91, %v72, 0
  %v138 = vsel %vm91, %v73, 0
  %v141 = vsel %vm91, %v74, 0
  %v144 = vsel %vm91, %v75, 0
  %v147 = vsel %vm91, %v76, 0
  %v150 = vsel %vm91, %v77, 0
  %v153 = vsel %vm91, %v78, 0
  %v156 = vsel %vm91, %v79, 0
  %v159 = vsel %vm91, %v80, 0
  %v162 = vsel %vm91, %v81, 0
  %vm164 = vcmask 1043456
  %v166 = vsel %vm164, %v89, 0
  %v169 = vsel %vm164, %v90, 0
  %171 = vmatprep.subr.mxu0 0.0
  %172 = vmatpush1.msra.mxu0 0.0
  %173 = vmatprep.subr.mxu0 0.0
  %174 = vmatpush1.msra.mxu0 0.0
  %175 = vmatprep.subr.mxu0 0.0
  %176 = vmatpush1.msra.mxu0 0.0
  %177 = vmatprep.subr.mxu0 0.0
  %178 = vmatpush1.msra.mxu0 0.0
  %179 = vmatprep.subr.mxu0 0.0
  %180 = vmatpush1.msra.mxu0 0.0
  %181 = vmatprep.subr.mxu0 0.0
  %182 = vmatpush1.msra.mxu0 0.0
  %183 = vmatprep.subr.mxu0 0.0
  %184 = vmatpush1.msra.mxu0 0.0
  %185 = vmatprep.subr.mxu0 0.0
  %186 = vmatpush1.msra.mxu0 0.0
  %187 = vmatprep.subr.mxu0 0.0
  %188 = vmatpush1.msra.mxu0 0.0
  %189 = vmatprep.subr.mxu0 0.0
  %190 = vmatpush1.msra.mxu0 0.0
  %191 = vmatprep.subr.mxu0 0.0
  %192 = vmatpush1.msra.mxu0 0.0
  %193 = vmatprep.subr.mxu0 0.0
  %194 = vmatpush1.msra.mxu0 0.0
  %195 = vmatprep.subr.mxu0 %v169
  %196 = vmatpush1.msra.mxu0 %v166
  %197 = vmatprep.subr.mxu0 %v88
  %198 = vmatpush1.msra.mxu0 %v87
  %199 = vmatprep.subr.mxu0 %v86
  %200 = vmatpush1.msra.mxu0 %v85
  %201 = vmatprep.subr.mxu0 %v84
  %202 = vmatpush1.msra.mxu0 %v83
  %203 = vmatprep.subr.mxu0 0.0
  %204 = vmatpush2.msra.mxu0 0.0
  %205 = vmatprep.subr.mxu0 0.0
  %206 = vmatpush2.msra.mxu0 0.0
  %207 = vmatprep.subr.mxu0 0.0
  %208 = vmatpush2.msra.mxu0 0.0
  %209 = vmatprep.subr.mxu0 0.0
  %210 = vmatpush2.msra.mxu0 0.0
  %211 = vmatprep.subr.mxu0 0.0
  %212 = vmatpush2.msra.mxu0 0.0
  %213 = vmatprep.subr.mxu0 0.0
  %214 = vmatpush2.msra.mxu0 0.0
  %215 = vmatprep.subr.mxu0 0.0
  %216 = vmatpush2.msra.mxu0 0.0
  %217 = vmatprep.subr.mxu0 0.0
  %218 = vmatpush2.msra.mxu0 0.0
  %219 = vmatprep.subr.mxu0 0.0
  %220 = vmatpush2.msra.mxu0 0.0
  %221 = vmatprep.subr.mxu0 0.0
  %222 = vmatpush2.msra.mxu0 0.0
  %223 = vmatprep.subr.mxu0 0.0
  %224 = vmatpush2.msra.mxu0 0.0
  %225 = vmatprep.subr.mxu0 0.0
  %226 = vmatpush2.msra.mxu0 0.0
  %227 = vmatprep.subr.mxu0 0.0
  %228 = vmatpush2.msra.mxu0 0.0
  %229 = vmatprep.subr.mxu0 0.0
  %230 = vmatpush2.msra.mxu0 0.0
  %231 = vmatprep.subr.mxu0 0.0
  %232 = vmatpush2.msra.mxu0 0.0
  %233 = vmatprep.subr.mxu0 0.0
  %234 = vmatpush2.msra.mxu0 0.0
  %235 = vmatprep.mubr.f32.mxu0 0.0
  %236 = vmatmul.mubr.f32.gmra.mxu0 %v93
  %v237 = vpop.f32.mrf.mxu0
  %v238 = vadd.f32 0.0, %v237
  %v239 = vpop.f32.mrf.mxu0
  %v240 = vadd.f32 0.0, %v239
  %241 = vmatprep.mubr.f32.mxu0 0.0
  %242 = vmatmul.mubr.f32.gmra.mxu0 %v96
  %v243 = vpop.f32.mrf.mxu0
  %v244 = vadd.f32 0.0, %v243
  %v245 = vpop.f32.mrf.mxu0
  %v246 = vadd.f32 0.0, %v245
  %247 = vmatprep.mubr.f32.mxu0 0.0
  %248 = vmatmul.mubr.f32.gmra.mxu0 %v99
  %v249 = vpop.f32.mrf.mxu0
  %v250 = vadd.f32 0.0, %v249
  %v251 = vpop.f32.mrf.mxu0
  %v252 = vadd.f32 0.0, %v251
  %253 = vmatprep.mubr.f32.mxu0 0.0
  %254 = vmatmul.mubr.f32.gmra.mxu0 %v102
  %v255 = vpop.f32.mrf.mxu0
  %v256 = vadd.f32 0.0, %v255
  %v257 = vpop.f32.mrf.mxu0
  %v258 = vadd.f32 0.0, %v257
  %259 = vmatprep.mubr.f32.mxu0 0.0
  %260 = vmatmul.mubr.f32.gmra.mxu0 %v105
  %v261 = vpop.f32.mrf.mxu0
  %v262 = vadd.f32 0.0, %v261
  %v263 = vpop.f32.mrf.mxu0
  %v264 = vadd.f32 0.0, %v263
  %265 = vmatprep.mubr.f32.mxu0 0.0
  %266 = vmatmul.mubr.f32.gmra.mxu0 %v108
  %v267 = vpop.f32.mrf.mxu0
  %v268 = vadd.f32 0.0, %v267
  %v269 = vpop.f32.mrf.mxu0
  %v270 = vadd.f32 0.0, %v269
  %271 = vmatprep.mubr.f32.mxu0 0.0
  %272 = vmatmul.mubr.f32.gmra.mxu0 %v111
  %v273 = vpop.f32.mrf.mxu0
  %v274 = vadd.f32 0.0, %v273
  %v275 = vpop.f32.mrf.mxu0
  %v276 = vadd.f32 0.0, %v275
  %277 = vmatprep.mubr.f32.mxu0 0.0
  %278 = vmatmul.mubr.f32.gmra.mxu0 %v114
  %v279 = vpop.f32.mrf.mxu0
  %v280 = vadd.f32 0.0, %v279
  %v281 = vpop.f32.mrf.mxu0
  %v282 = vadd.f32 0.0, %v281
  %283 = vmatprep.mubr.f32.mxu0 0.0
  %284 = vmatmul.mubr.f32.gmra.mxu0 %v117
  %v285 = vpop.f32.mrf.mxu0
  %v286 = vadd.f32 0.0, %v285
  %v287 = vpop.f32.mrf.mxu0
  %v288 = vadd.f32 0.0, %v287
  %289 = vmatprep.mubr.f32.mxu0 0.0
  %290 = vmatmul.mubr.f32.gmra.mxu0 %v120
  %v291 = vpop.f32.mrf.mxu0
  %v292 = vadd.f32 0.0, %v291
  %v293 = vpop.f32.mrf.mxu0
  %v294 = vadd.f32 0.0, %v293
  %295 = vmatprep.mubr.f32.mxu0 0.0
  %296 = vmatmul.mubr.f32.gmra.mxu0 %v123
  %v297 = vpop.f32.mrf.mxu0
  %v298 = vadd.f32 0.0, %v297
  %v299 = vpop.f32.mrf.mxu0
  %v300 = vadd.f32 0.0, %v299
  %301 = vmatprep.mubr.f32.mxu0 0.0
  %302 = vmatmul.mubr.f32.gmra.mxu0 %v126
  %v303 = vpop.f32.mrf.mxu0
  %v304 = vadd.f32 0.0, %v303
  %v305 = vpop.f32.mrf.mxu0
  %v306 = vadd.f32 0.0, %v305
  %307 = vmatprep.mubr.f32.mxu0 0.0
  %308 = vmatmul.mubr.f32.gmra.mxu0 %v129
  %v309 = vpop.f32.mrf.mxu0
  %v310 = vadd.f32 0.0, %v309
  %v311 = vpop.f32.mrf.mxu0
  %v312 = vadd.f32 0.0, %v311
  %313 = vmatprep.mubr.f32.mxu0 0.0
  %314 = vmatmul.mubr.f32.gmra.mxu0 %v132
  %v315 = vpop.f32.mrf.mxu0
  %v316 = vadd.f32 0.0, %v315
  %v317 = vpop.f32.mrf.mxu0
  %v318 = vadd.f32 0.0, %v317
  %319 = vmatprep.mubr.f32.mxu0 0.0
  %320 = vmatmul.mubr.f32.gmra.mxu0 %v135
  %v321 = vpop.f32.mrf.mxu0
  %v322 = vadd.f32 0.0, %v321
  %v323 = vpop.f32.mrf.mxu0
  %v324 = vadd.f32 0.0, %v323
  %325 = vmatprep.mubr.f32.mxu0 0.0
  %326 = vmatmul.mubr.f32.gmra.mxu0 %v138
  %v327 = vpop.f32.mrf.mxu0
  %v328 = vadd.f32 0.0, %v327
  %v329 = vpop.f32.mrf.mxu0
  %v330 = vadd.f32 0.0, %v329
  %331 = vmatprep.mubr.f32.mxu0 0.0
  %332 = vmatmul.mubr.f32.gmra.mxu0 %v141
  %v333 = vpop.f32.mrf.mxu0
  %v334 = vadd.f32 0.0, %v333
  %v335 = vpop.f32.mrf.mxu0
  %v336 = vadd.f32 0.0, %v335
  %337 = vmatprep.mubr.f32.mxu0 0.0
  %338 = vmatmul.mubr.f32.gmra.mxu0 %v144
  %v339 = vpop.f32.mrf.mxu0
  %v340 = vadd.f32 0.0, %v339
  %v341 = vpop.f32.mrf.mxu0
  %v342 = vadd.f32 0.0, %v341
  %343 = vmatprep.mubr.f32.mxu0 0.0
  %344 = vmatmul.mubr.f32.gmra.mxu0 %v147
  %v345 = vpop.f32.mrf.mxu0
  %v346 = vadd.f32 0.0, %v345
  %v347 = vpop.f32.mrf.mxu0
  %v348 = vadd.f32 0.0, %v347
  %349 = vmatprep.mubr.f32.mxu0 0.0
  %350 = vmatmul.mubr.f32.gmra.mxu0 %v150
  %v351 = vpop.f32.mrf.mxu0
  %v352 = vadd.f32 0.0, %v351
  %v353 = vpop.f32.mrf.mxu0
  %v354 = vadd.f32 0.0, %v353
  %355 = vmatprep.mubr.f32.mxu0 0.0
  %356 = vmatmul.mubr.f32.gmra.mxu0 %v153
  %v357 = vpop.f32.mrf.mxu0
  %v358 = vadd.f32 0.0, %v357
  %v359 = vpop.f32.mrf.mxu0
  %v360 = vadd.f32 0.0, %v359
  %361 = vmatprep.mubr.f32.mxu0 0.0
  %362 = vmatmul.mubr.f32.gmra.mxu0 %v156
  %v363 = vpop.f32.mrf.mxu0
  %v364 = vadd.f32 0.0, %v363
  %v365 = vpop.f32.mrf.mxu0
  %v366 = vadd.f32 0.0, %v365
  %367 = vmatprep.mubr.f32.mxu0 0.0
  %368 = vmatmul.mubr.f32.gmra.mxu0 %v159
  %v369 = vpop.f32.mrf.mxu0
  %v370 = vadd.f32 0.0, %v369
  %v371 = vpop.f32.mrf.mxu0
  %v372 = vadd.f32 0.0, %v371
  %373 = vmatprep.mubr.f32.mxu0 0.0
  %374 = vmatmul.mubr.f32.gmra.mxu0 %v162
  %v375 = vpop.f32.mrf.mxu0
  %v376 = vadd.f32 0.0, %v375
  %v377 = vpop.f32.mrf.mxu0
  %v378 = vadd.f32 0.0, %v377
  %379 = vdwg.mxu0
  %v381 = vsel %vm91, %v26, 0
  %v384 = vsel %vm91, %v27, 0
  %v387 = vsel %vm91, %v28, 0
  %v390 = vsel %vm91, %v29, 0
  %v393 = vsel %vm91, %v30, 0
  %v396 = vsel %vm91, %v31, 0
  %v399 = vsel %vm91, %v32, 0
  %v402 = vsel %vm91, %v33, 0
  %v405 = vsel %vm91, %v34, 0
  %v408 = vsel %vm91, %v35, 0
  %v411 = vsel %vm91, %v36, 0
  %v414 = vsel %vm91, %v37, 0
  %v417 = vsel %vm91, %v38, 0
  %v420 = vsel %vm91, %v39, 0
  %v423 = vsel %vm91, %v40, 0
  %v426 = vsel %vm91, %v41, 0
  %v429 = vsel %vm91, %v42, 0
  %v432 = vsel %vm91, %v43, 0
  %v435 = vsel %vm91, %v44, 0
  %v438 = vsel %vm91, %v45, 0
  %v441 = vsel %vm91, %v46, 0
  %v444 = vsel %vm91, %v47, 0
  %v447 = vsel %vm91, %v48, 0
  %v450 = vsel %vm91, %v49, 0
  %v453 = vsel %vm164, %v56, 0
  %v456 = vsel %vm164, %v57, 0
  %458 = vmatprep.subr.mxu0 0.0
  %459 = vmatpush1.msra.mxu0 0.0
  %460 = vmatprep.subr.mxu0 0.0
  %461 = vmatpush1.msra.mxu0 0.0
  %462 = vmatprep.subr.mxu0 0.0
  %463 = vmatpush1.msra.mxu0 0.0
  %464 = vmatprep.subr.mxu0 0.0
  %465 = vmatpush1.msra.mxu0 0.0
  %466 = vmatprep.subr.mxu0 0.0
  %467 = vmatpush1.msra.mxu0 0.0
  %468 = vmatprep.subr.mxu0 0.0
  %469 = vmatpush1.msra.mxu0 0.0
  %470 = vmatprep.subr.mxu0 0.0
  %471 = vmatpush1.msra.mxu0 0.0
  %472 = vmatprep.subr.mxu0 0.0
  %473 = vmatpush1.msra.mxu0 0.0
  %474 = vmatprep.subr.mxu0 0.0
  %475 = vmatpush1.msra.mxu0 0.0
  %476 = vmatprep.subr.mxu0 0.0
  %477 = vmatpush1.msra.mxu0 0.0
  %478 = vmatprep.subr.mxu0 0.0
  %479 = vmatpush1.msra.mxu0 0.0
  %480 = vmatprep.subr.mxu0 0.0
  %481 = vmatpush1.msra.mxu0 0.0
  %482 = vmatprep.subr.mxu0 %v456
  %483 = vmatpush1.msra.mxu0 %v453
  %484 = vmatprep.subr.mxu0 %v55
  %485 = vmatpush1.msra.mxu0 %v54
  %486 = vmatprep.subr.mxu0 %v53
  %487 = vmatpush1.msra.mxu0 %v52
  %488 = vmatprep.subr.mxu0 %v51
  %489 = vmatpush1.msra.mxu0 %v50
  %490 = vmatprep.subr.mxu0 0.0
  %491 = vmatpush2.msra.mxu0 0.0
  %492 = vmatprep.subr.mxu0 0.0
  %493 = vmatpush2.msra.mxu0 0.0
  %494 = vmatprep.subr.mxu0 0.0
  %495 = vmatpush2.msra.mxu0 0.0
  %496 = vmatprep.subr.mxu0 0.0
  %497 = vmatpush2.msra.mxu0 0.0
  %498 = vmatprep.subr.mxu0 0.0
  %499 = vmatpush2.msra.mxu0 0.0
  %500 = vmatprep.subr.mxu0 0.0
  %501 = vmatpush2.msra.mxu0 0.0
  %502 = vmatprep.subr.mxu0 0.0
  %503 = vmatpush2.msra.mxu0 0.0
  %504 = vmatprep.subr.mxu0 0.0
  %505 = vmatpush2.msra.mxu0 0.0
  %506 = vmatprep.subr.mxu0 0.0
  %507 = vmatpush2.msra.mxu0 0.0
  %508 = vmatprep.subr.mxu0 0.0
  %509 = vmatpush2.msra.mxu0 0.0
  %510 = vmatprep.subr.mxu0 0.0
  %511 = vmatpush2.msra.mxu0 0.0
  %512 = vmatprep.subr.mxu0 0.0
  %513 = vmatpush2.msra.mxu0 0.0
  %514 = vmatprep.subr.mxu0 0.0
  %515 = vmatpush2.msra.mxu0 0.0
  %516 = vmatprep.subr.mxu0 0.0
  %517 = vmatpush2.msra.mxu0 0.0
  %518 = vmatprep.subr.mxu0 0.0
  %519 = vmatpush2.msra.mxu0 0.0
  %520 = vmatprep.subr.mxu0 0.0
  %521 = vmatpush2.msra.mxu0 0.0
  %522 = vmatprep.mubr.f32.mxu0 0.0
  %523 = vmatmul.mubr.f32.gmra.mxu0 %v381
  %v524 = vpop.f32.mrf.mxu0
  %v525 = vadd.f32 %v238, %v524
  %v526 = vpop.f32.mrf.mxu0
  %v527 = vadd.f32 %v240, %v526
  %528 = vmatprep.mubr.f32.mxu0 0.0
  %529 = vmatmul.mubr.f32.gmra.mxu0 %v384
  %v530 = vpop.f32.mrf.mxu0
  %v531 = vadd.f32 %v244, %v530
  %v532 = vpop.f32.mrf.mxu0
  %v533 = vadd.f32 %v246, %v532
  %534 = vmatprep.mubr.f32.mxu0 0.0
  %535 = vmatmul.mubr.f32.gmra.mxu0 %v387
  %v536 = vpop.f32.mrf.mxu0
  %v537 = vadd.f32 %v250, %v536
  %v538 = vpop.f32.mrf.mxu0
  %v539 = vadd.f32 %v252, %v538
  %540 = vmatprep.mubr.f32.mxu0 0.0
  %541 = vmatmul.mubr.f32.gmra.mxu0 %v390
  %v542 = vpop.f32.mrf.mxu0
  %v543 = vadd.f32 %v256, %v542
  %v544 = vpop.f32.mrf.mxu0
  %v545 = vadd.f32 %v258, %v544
  %546 = vmatprep.mubr.f32.mxu0 0.0
  %547 = vmatmul.mubr.f32.gmra.mxu0 %v393
  %v548 = vpop.f32.mrf.mxu0
  %v549 = vadd.f32 %v262, %v548
  %v550 = vpop.f32.mrf.mxu0
  %v551 = vadd.f32 %v264, %v550
  %552 = vmatprep.mubr.f32.mxu0 0.0
  %553 = vmatmul.mubr.f32.gmra.mxu0 %v396
  %v554 = vpop.f32.mrf.mxu0
  %v555 = vadd.f32 %v268, %v554
  %v556 = vpop.f32.mrf.mxu0
  %v557 = vadd.f32 %v270, %v556
  %558 = vmatprep.mubr.f32.mxu0 0.0
  %559 = vmatmul.mubr.f32.gmra.mxu0 %v399
  %v560 = vpop.f32.mrf.mxu0
  %v561 = vadd.f32 %v274, %v560
  %v562 = vpop.f32.mrf.mxu0
  %v563 = vadd.f32 %v276, %v562
  %564 = vmatprep.mubr.f32.mxu0 0.0
  %565 = vmatmul.mubr.f32.gmra.mxu0 %v402
  %v566 = vpop.f32.mrf.mxu0
  %v567 = vadd.f32 %v280, %v566
  %v568 = vpop.f32.mrf.mxu0
  %v569 = vadd.f32 %v282, %v568
  %570 = vmatprep.mubr.f32.mxu0 0.0
  %571 = vmatmul.mubr.f32.gmra.mxu0 %v405
  %v572 = vpop.f32.mrf.mxu0
  %v573 = vadd.f32 %v286, %v572
  %v574 = vpop.f32.mrf.mxu0
  %v575 = vadd.f32 %v288, %v574
  %576 = vmatprep.mubr.f32.mxu0 0.0
  %577 = vmatmul.mubr.f32.gmra.mxu0 %v408
  %v578 = vpop.f32.mrf.mxu0
  %v579 = vadd.f32 %v292, %v578
  %v580 = vpop.f32.mrf.mxu0
  %v581 = vadd.f32 %v294, %v580
  %582 = vmatprep.mubr.f32.mxu0 0.0
  %583 = vmatmul.mubr.f32.gmra.mxu0 %v411
  %v584 = vpop.f32.mrf.mxu0
  %v585 = vadd.f32 %v298, %v584
  %v586 = vpop.f32.mrf.mxu0
  %v587 = vadd.f32 %v300, %v586
  %588 = vmatprep.mubr.f32.mxu0 0.0
  %589 = vmatmul.mubr.f32.gmra.mxu0 %v414
  %v590 = vpop.f32.mrf.mxu0
  %v591 = vadd.f32 %v304, %v590
  %v592 = vpop.f32.mrf.mxu0
  %v593 = vadd.f32 %v306, %v592
  %594 = vmatprep.mubr.f32.mxu0 0.0
  %595 = vmatmul.mubr.f32.gmra.mxu0 %v417
  %v596 = vpop.f32.mrf.mxu0
  %v597 = vadd.f32 %v310, %v596
  %v598 = vpop.f32.mrf.mxu0
  %v599 = vadd.f32 %v312, %v598
  %600 = vmatprep.mubr.f32.mxu0 0.0
  %601 = vmatmul.mubr.f32.gmra.mxu0 %v420
  %v602 = vpop.f32.mrf.mxu0
  %v603 = vadd.f32 %v316, %v602
  %v604 = vpop.f32.mrf.mxu0
  %v605 = vadd.f32 %v318, %v604
  %606 = vmatprep.mubr.f32.mxu0 0.0
  %607 = vmatmul.mubr.f32.gmra.mxu0 %v423
  %v608 = vpop.f32.mrf.mxu0
  %v609 = vadd.f32 %v322, %v608
  %v610 = vpop.f32.mrf.mxu0
  %v611 = vadd.f32 %v324, %v610
  %612 = vmatprep.mubr.f32.mxu0 0.0
  %613 = vmatmul.mubr.f32.gmra.mxu0 %v426
  %v614 = vpop.f32.mrf.mxu0
  %v615 = vadd.f32 %v328, %v614
  %v616 = vpop.f32.mrf.mxu0
  %v617 = vadd.f32 %v330, %v616
  %618 = vmatprep.mubr.f32.mxu0 0.0
  %619 = vmatmul.mubr.f32.gmra.mxu0 %v429
  %v620 = vpop.f32.mrf.mxu0
  %v621 = vadd.f32 %v334, %v620
  %v622 = vpop.f32.mrf.mxu0
  %v623 = vadd.f32 %v336, %v622
  %624 = vmatprep.mubr.f32.mxu0 0.0
  %625 = vmatmul.mubr.f32.gmra.mxu0 %v432
  %v626 = vpop.f32.mrf.mxu0
  %v627 = vadd.f32 %v340, %v626
  %v628 = vpop.f32.mrf.mxu0
  %v629 = vadd.f32 %v342, %v628
  %630 = vmatprep.mubr.f32.mxu0 0.0
  %631 = vmatmul.mubr.f32.gmra.mxu0 %v435
  %v632 = vpop.f32.mrf.mxu0
  %v633 = vadd.f32 %v346, %v632
  %v634 = vpop.f32.mrf.mxu0
  %v635 = vadd.f32 %v348, %v634
  %636 = vmatprep.mubr.f32.mxu0 0.0
  %637 = vmatmul.mubr.f32.gmra.mxu0 %v438
  %v638 = vpop.f32.mrf.mxu0
  %v639 = vadd.f32 %v352, %v638
  %v640 = vpop.f32.mrf.mxu0
  %v641 = vadd.f32 %v354, %v640
  %642 = vmatprep.mubr.f32.mxu0 0.0
  %643 = vmatmul.mubr.f32.gmra.mxu0 %v441
  %v644 = vpop.f32.mrf.mxu0
  %v645 = vadd.f32 %v358, %v644
  %v646 = vpop.f32.mrf.mxu0
  %v647 = vadd.f32 %v360, %v646
  %648 = vmatprep.mubr.f32.mxu0 0.0
  %649 = vmatmul.mubr.f32.gmra.mxu0 %v444
  %v650 = vpop.f32.mrf.mxu0
  %v651 = vadd.f32 %v364, %v650
  %v652 = vpop.f32.mrf.mxu0
  %v653 = vadd.f32 %v366, %v652
  %654 = vmatprep.mubr.f32.mxu0 0.0
  %655 = vmatmul.mubr.f32.gmra.mxu0 %v447
  %v656 = vpop.f32.mrf.mxu0
  %v657 = vadd.f32 %v370, %v656
  %v658 = vpop.f32.mrf.mxu0
  %v659 = vadd.f32 %v372, %v658
  %660 = vmatprep.mubr.f32.mxu0 0.0
  %661 = vmatmul.mubr.f32.gmra.mxu0 %v450
  %v662 = vpop.f32.mrf.mxu0
  %v663 = vadd.f32 %v376, %v662
  %v664 = vpop.f32.mrf.mxu0
  %v665 = vadd.f32 %v378, %v664
  %666 = vdwg.mxu0
  %v667 = vld [vmem:[%s0 + $0x2] sm:$0xff]
  %v668 = vld [vmem:[%s0 + $0xa] sm:$0xff]
  %v669 = vld [vmem:[%s0 + $0x12] sm:$0xff]
  %v670 = vld [vmem:[%s0 + $0x22] sm:$0xff]
  %v671 = vld [vmem:[%s0 + $0x2a] sm:$0xff]
  %v672 = vld [vmem:[%s0 + $0x32] sm:$0xff]
  %v673 = vld [vmem:[%s0 + $0x42] sm:$0xff]
  %v674 = vld [vmem:[%s0 + $0x4a] sm:$0xff]
  %v675 = vld [vmem:[%s0 + $0x52] sm:$0xff]
  %v676 = vld [vmem:[%s0 + $0x62] sm:$0xff]
  %v677 = vld [vmem:[%s0 + $0x6a] sm:$0xff]
  %v678 = vld [vmem:[%s0 + $0x72] sm:$0xff]
  %v679 = vld [vmem:[%s0 + $0x82] sm:$0xff]
  %v680 = vld [vmem:[%s0 + $0x8a] sm:$0xff]
  %v681 = vld [vmem:[%s0 + $0x92] sm:$0xff]
  %v682 = vld [vmem:[%s0 + $0xa2] sm:$0xff]
  %v683 = vld [vmem:[%s0 + $0xaa] sm:$0xff]
  %v684 = vld [vmem:[%s0 + $0xb2] sm:$0xff]
  %v685 = vld [vmem:[%s0 + $0xc2] sm:$0xff]
  %v686 = vld [vmem:[%s0 + $0xca] sm:$0xff]
  %v687 = vld [vmem:[%s0 + $0xd2] sm:$0xff]
  %v688 = vld [vmem:[%s0 + $0xe2] sm:$0xff]
  %v689 = vld [vmem:[%s0 + $0xea] sm:$0xff]
  %v690 = vld [vmem:[%s0 + $0xf2] sm:$0xff]
  %s691 = scalar_lea.vmem %s1, 128
  %v692 = vld [vmem:[%s691] sm:$0xff]
  %v693 = vld [vmem:[%s691 + $0x8] sm:$0xff]
  %v694 = vld [vmem:[%s691 + $0x10] sm:$0xff]
  %v695 = vld [vmem:[%s691 + $0x18] sm:$0xff]
  %v696 = vld [vmem:[%s691 + $0x20] sm:$0xff]
  %v697 = vld [vmem:[%s691 + $0x28] sm:$0xff]
  %v698 = vld [vmem:[%s691 + $0x30] sm:$0xf]
  %v699 = vld [vmem:[%s691 + $0x38] sm:$0xf]
  %v701 = vsel %vm91, %v667, 0
  %v704 = vsel %vm91, %v668, 0
  %v707 = vsel %vm91, %v669, 0
  %v710 = vsel %vm91, %v670, 0
  %v713 = vsel %vm91, %v671, 0
  %v716 = vsel %vm91, %v672, 0
  %v719 = vsel %vm91, %v673, 0
  %v722 = vsel %vm91, %v674, 0
  %v725 = vsel %vm91, %v675, 0
  %v728 = vsel %vm91, %v676, 0
  %v731 = vsel %vm91, %v677, 0
  %v734 = vsel %vm91, %v678, 0
  %v737 = vsel %vm91, %v679, 0
  %v740 = vsel %vm91, %v680, 0
  %v743 = vsel %vm91, %v681, 0
  %v746 = vsel %vm91, %v682, 0
  %v749 = vsel %vm91, %v683, 0
  %v752 = vsel %vm91, %v684, 0
  %v755 = vsel %vm91, %v685, 0
  %v758 = vsel %vm91, %v686, 0
  %v761 = vsel %vm91, %v687, 0
  %v764 = vsel %vm91, %v688, 0
  %v767 = vsel %vm91, %v689, 0
  %v770 = vsel %vm91, %v690, 0
  %v773 = vsel %vm164, %v698, 0
  %v776 = vsel %vm164, %v699, 0
  %778 = vmatprep.subr.mxu0 0.0
  %779 = vmatpush1.msra.mxu0 0.0
  %780 = vmatprep.subr.mxu0 0.0
  %781 = vmatpush1.msra.mxu0 0.0
  %782 = vmatprep.subr.mxu0 0.0
  %783 = vmatpush1.msra.mxu0 0.0
  %784 = vmatprep.subr.mxu0 0.0
  %785 = vmatpush1.msra.mxu0 0.0
  %786 = vmatprep.subr.mxu0 0.0
  %787 = vmatpush1.msra.mxu0 0.0
  %788 = vmatprep.subr.mxu0 0.0
  %789 = vmatpush1.msra.mxu0 0.0
  %790 = vmatprep.subr.mxu0 0.0
  %791 = vmatpush1.msra.mxu0 0.0
  %792 = vmatprep.subr.mxu0 0.0
  %793 = vmatpush1.msra.mxu0 0.0
  %794 = vmatprep.subr.mxu0 0.0
  %795 = vmatpush1.msra.mxu0 0.0
  %796 = vmatprep.subr.mxu0 0.0
  %797 = vmatpush1.msra.mxu0 0.0
  %798 = vmatprep.subr.mxu0 0.0
  %799 = vmatpush1.msra.mxu0 0.0
  %800 = vmatprep.subr.mxu0 0.0
  %801 = vmatpush1.msra.mxu0 0.0
  %802 = vmatprep.subr.mxu0 %v776
  %803 = vmatpush1.msra.mxu0 %v773
  %804 = vmatprep.subr.mxu0 %v697
  %805 = vmatpush1.msra.mxu0 %v696
  %806 = vmatprep.subr.mxu0 %v695
  %807 = vmatpush1.msra.mxu0 %v694
  %808 = vmatprep.subr.mxu0 %v693
  %809 = vmatpush1.msra.mxu0 %v692
  %810 = vmatprep.subr.mxu0 0.0
  %811 = vmatpush2.msra.mxu0 0.0
  %812 = vmatprep.subr.mxu0 0.0
  %813 = vmatpush2.msra.mxu0 0.0
  %814 = vmatprep.subr.mxu0 0.0
  %815 = vmatpush2.msra.mxu0 0.0
  %816 = vmatprep.subr.mxu0 0.0
  %817 = vmatpush2.msra.mxu0 0.0
  %818 = vmatprep.subr.mxu0 0.0
  %819 = vmatpush2.msra.mxu0 0.0
  %820 = vmatprep.subr.mxu0 0.0
  %821 = vmatpush2.msra.mxu0 0.0
  %822 = vmatprep.subr.mxu0 0.0
  %823 = vmatpush2.msra.mxu0 0.0
  %824 = vmatprep.subr.mxu0 0.0
  %825 = vmatpush2.msra.mxu0 0.0
  %826 = vmatprep.subr.mxu0 0.0
  %827 = vmatpush2.msra.mxu0 0.0
  %828 = vmatprep.subr.mxu0 0.0
  %829 = vmatpush2.msra.mxu0 0.0
  %830 = vmatprep.subr.mxu0 0.0
  %831 = vmatpush2.msra.mxu0 0.0
  %832 = vmatprep.subr.mxu0 0.0
  %833 = vmatpush2.msra.mxu0 0.0
  %834 = vmatprep.subr.mxu0 0.0
  %835 = vmatpush2.msra.mxu0 0.0
  %836 = vmatprep.subr.mxu0 0.0
  %837 = vmatpush2.msra.mxu0 0.0
  %838 = vmatprep.subr.mxu0 0.0
  %839 = vmatpush2.msra.mxu0 0.0
  %840 = vmatprep.subr.mxu0 0.0
  %841 = vmatpush2.msra.mxu0 0.0
  %842 = vmatprep.mubr.f32.mxu0 0.0
  %843 = vmatmul.mubr.f32.gmra.mxu0 %v701
  %v844 = vpop.f32.mrf.mxu0
  %v845 = vadd.f32 0.0, %v844
  %v846 = vpop.f32.mrf.mxu0
  %v847 = vadd.f32 0.0, %v846
  %848 = vmatprep.mubr.f32.mxu0 0.0
  %849 = vmatmul.mubr.f32.gmra.mxu0 %v704
  %v850 = vpop.f32.mrf.mxu0
  %v851 = vadd.f32 0.0, %v850
  %v852 = vpop.f32.mrf.mxu0
  %v853 = vadd.f32 0.0, %v852
  %854 = vmatprep.mubr.f32.mxu0 0.0
  %855 = vmatmul.mubr.f32.gmra.mxu0 %v707
  %v856 = vpop.f32.mrf.mxu0
  %v857 = vadd.f32 0.0, %v856
  %v858 = vpop.f32.mrf.mxu0
  %v859 = vadd.f32 0.0, %v858
  %860 = vmatprep.mubr.f32.mxu0 0.0
  %861 = vmatmul.mubr.f32.gmra.mxu0 %v710
  %v862 = vpop.f32.mrf.mxu0
  %v863 = vadd.f32 0.0, %v862
  %v864 = vpop.f32.mrf.mxu0
  %v865 = vadd.f32 0.0, %v864
  %866 = vmatprep.mubr.f32.mxu0 0.0
  %867 = vmatmul.mubr.f32.gmra.mxu0 %v713
  %v868 = vpop.f32.mrf.mxu0
  %v869 = vadd.f32 0.0, %v868
  %v870 = vpop.f32.mrf.mxu0
  %v871 = vadd.f32 0.0, %v870
  %872 = vmatprep.mubr.f32.mxu0 0.0
  %873 = vmatmul.mubr.f32.gmra.mxu0 %v716
  %v874 = vpop.f32.mrf.mxu0
  %v875 = vadd.f32 0.0, %v874
  %v876 = vpop.f32.mrf.mxu0
  %v877 = vadd.f32 0.0, %v876
  %878 = vmatprep.mubr.f32.mxu0 0.0
  %879 = vmatmul.mubr.f32.gmra.mxu0 %v719
  %v880 = vpop.f32.mrf.mxu0
  %v881 = vadd.f32 0.0, %v880
  %v882 = vpop.f32.mrf.mxu0
  %v883 = vadd.f32 0.0, %v882
  %884 = vmatprep.mubr.f32.mxu0 0.0
  %885 = vmatmul.mubr.f32.gmra.mxu0 %v722
  %v886 = vpop.f32.mrf.mxu0
  %v887 = vadd.f32 0.0, %v886
  %v888 = vpop.f32.mrf.mxu0
  %v889 = vadd.f32 0.0, %v888
  %890 = vmatprep.mubr.f32.mxu0 0.0
  %891 = vmatmul.mubr.f32.gmra.mxu0 %v725
  %v892 = vpop.f32.mrf.mxu0
  %v893 = vadd.f32 0.0, %v892
  %v894 = vpop.f32.mrf.mxu0
  %v895 = vadd.f32 0.0, %v894
  %896 = vmatprep.mubr.f32.mxu0 0.0
  %897 = vmatmul.mubr.f32.gmra.mxu0 %v728
  %v898 = vpop.f32.mrf.mxu0
  %v899 = vadd.f32 0.0, %v898
  %v900 = vpop.f32.mrf.mxu0
  %v901 = vadd.f32 0.0, %v900
  %902 = vmatprep.mubr.f32.mxu0 0.0
  %903 = vmatmul.mubr.f32.gmra.mxu0 %v731
  %v904 = vpop.f32.mrf.mxu0
  %v905 = vadd.f32 0.0, %v904
  %v906 = vpop.f32.mrf.mxu0
  %v907 = vadd.f32 0.0, %v906
  %908 = vmatprep.mubr.f32.mxu0 0.0
  %909 = vmatmul.mubr.f32.gmra.mxu0 %v734
  %v910 = vpop.f32.mrf.mxu0
  %v911 = vadd.f32 0.0, %v910
  %v912 = vpop.f32.mrf.mxu0
  %v913 = vadd.f32 0.0, %v912
  %914 = vmatprep.mubr.f32.mxu0 0.0
  %915 = vmatmul.mubr.f32.gmra.mxu0 %v737
  %v916 = vpop.f32.mrf.mxu0
  %v917 = vadd.f32 0.0, %v916
  %v918 = vpop.f32.mrf.mxu0
  %v919 = vadd.f32 0.0, %v918
  %920 = vmatprep.mubr.f32.mxu0 0.0
  %921 = vmatmul.mubr.f32.gmra.mxu0 %v740
  %v922 = vpop.f32.mrf.mxu0
  %v923 = vadd.f32 0.0, %v922
  %v924 = vpop.f32.mrf.mxu0
  %v925 = vadd.f32 0.0, %v924
  %926 = vmatprep.mubr.f32.mxu0 0.0
  %927 = vmatmul.mubr.f32.gmra.mxu0 %v743
  %v928 = vpop.f32.mrf.mxu0
  %v929 = vadd.f32 0.0, %v928
  %v930 = vpop.f32.mrf.mxu0
  %v931 = vadd.f32 0.0, %v930
  %932 = vmatprep.mubr.f32.mxu0 0.0
  %933 = vmatmul.mubr.f32.gmra.mxu0 %v746
  %v934 = vpop.f32.mrf.mxu0
  %v935 = vadd.f32 0.0, %v934
  %v936 = vpop.f32.mrf.mxu0
  %v937 = vadd.f32 0.0, %v936
  %938 = vmatprep.mubr.f32.mxu0 0.0
  %939 = vmatmul.mubr.f32.gmra.mxu0 %v749
  %v940 = vpop.f32.mrf.mxu0
  %v941 = vadd.f32 0.0, %v940
  %v942 = vpop.f32.mrf.mxu0
  %v943 = vadd.f32 0.0, %v942
  %944 = vmatprep.mubr.f32.mxu0 0.0
  %945 = vmatmul.mubr.f32.gmra.mxu0 %v752
  %v946 = vpop.f32.mrf.mxu0
  %v947 = vadd.f32 0.0, %v946
  %v948 = vpop.f32.mrf.mxu0
  %v949 = vadd.f32 0.0, %v948
  %950 = vmatprep.mubr.f32.mxu0 0.0
  %951 = vmatmul.mubr.f32.gmra.mxu0 %v755
  %v952 = vpop.f32.mrf.mxu0
  %v953 = vadd.f32 0.0, %v952
  %v954 = vpop.f32.mrf.mxu0
  %v955 = vadd.f32 0.0, %v954
  %956 = vmatprep.mubr.f32.mxu0 0.0
  %957 = vmatmul.mubr.f32.gmra.mxu0 %v758
  %v958 = vpop.f32.mrf.mxu0
  %v959 = vadd.f32 0.0, %v958
  %v960 = vpop.f32.mrf.mxu0
  %v961 = vadd.f32 0.0, %v960
  %962 = vmatprep.mubr.f32.mxu0 0.0
  %963 = vmatmul.mubr.f32.gmra.mxu0 %v761
  %v964 = vpop.f32.mrf.mxu0
  %v965 = vadd.f32 0.0, %v964
  %v966 = vpop.f32.mrf.mxu0
  %v967 = vadd.f32 0.0, %v966
  %968 = vmatprep.mubr.f32.mxu0 0.0
  %969 = vmatmul.mubr.f32.gmra.mxu0 %v764
  %v970 = vpop.f32.mrf.mxu0
  %v971 = vadd.f32 0.0, %v970
  %v972 = vpop.f32.mrf.mxu0
  %v973 = vadd.f32 0.0, %v972
  %974 = vmatprep.mubr.f32.mxu0 0.0
  %975 = vmatmul.mubr.f32.gmra.mxu0 %v767
  %v976 = vpop.f32.mrf.mxu0
  %v977 = vadd.f32 0.0, %v976
  %v978 = vpop.f32.mrf.mxu0
  %v979 = vadd.f32 0.0, %v978
  %980 = vmatprep.mubr.f32.mxu0 0.0
  %981 = vmatmul.mubr.f32.gmra.mxu0 %v770
  %v982 = vpop.f32.mrf.mxu0
  %v983 = vadd.f32 0.0, %v982
  %v984 = vpop.f32.mrf.mxu0
  %v985 = vadd.f32 0.0, %v984
  %986 = vdwg.mxu0
  %v987 = vadd.f32 %v525, %v845
  %v988 = vadd.f32 %v527, %v847
  %v989 = vadd.f32 %v531, %v851
  %v990 = vadd.f32 %v533, %v853
  %v991 = vadd.f32 %v537, %v857
  %v992 = vadd.f32 %v539, %v859
  %v993 = vadd.f32 %v543, %v863
  %v994 = vadd.f32 %v545, %v865
  %v995 = vadd.f32 %v549, %v869
  %v996 = vadd.f32 %v551, %v871
  %v997 = vadd.f32 %v555, %v875
  %v998 = vadd.f32 %v557, %v877
  %v999 = vadd.f32 %v561, %v881
  %v1000 = vadd.f32 %v563, %v883
  %v1001 = vadd.f32 %v567, %v887
  %v1002 = vadd.f32 %v569, %v889
  %v1003 = vadd.f32 %v573, %v893
  %v1004 = vadd.f32 %v575, %v895
  %v1005 = vadd.f32 %v579, %v899
  %v1006 = vadd.f32 %v581, %v901
  %v1007 = vadd.f32 %v585, %v905
  %v1008 = vadd.f32 %v587, %v907
  %v1009 = vadd.f32 %v591, %v911
  %v1010 = vadd.f32 %v593, %v913
  %v1011 = vadd.f32 %v597, %v917
  %v1012 = vadd.f32 %v599, %v919
  %v1013 = vadd.f32 %v603, %v923
  %v1014 = vadd.f32 %v605, %v925
  %v1015 = vadd.f32 %v609, %v929
  %v1016 = vadd.f32 %v611, %v931
  %v1017 = vadd.f32 %v615, %v935
  %v1018 = vadd.f32 %v617, %v937
  %v1019 = vadd.f32 %v621, %v941
  %v1020 = vadd.f32 %v623, %v943
  %v1021 = vadd.f32 %v627, %v947
  %v1022 = vadd.f32 %v629, %v949
  %v1023 = vadd.f32 %v633, %v953
  %v1024 = vadd.f32 %v635, %v955
  %v1025 = vadd.f32 %v639, %v959
  %v1026 = vadd.f32 %v641, %v961
  %v1027 = vadd.f32 %v645, %v965
  %v1028 = vadd.f32 %v647, %v967
  %v1029 = vadd.f32 %v651, %v971
  %v1030 = vadd.f32 %v653, %v973
  %v1031 = vadd.f32 %v657, %v977
  %v1032 = vadd.f32 %v659, %v979
  %v1033 = vadd.f32 %v663, %v983
  %v1034 = vadd.f32 %v665, %v985
  %v1035 = vld [vmem:[%s0 + $0x3] sm:$0xff]
  %v1036 = vld [vmem:[%s0 + $0xb] sm:$0xff]
  %v1037 = vld [vmem:[%s0 + $0x13] sm:$0xff]
  %v1038 = vld [vmem:[%s0 + $0x23] sm:$0xff]
  %v1039 = vld [vmem:[%s0 + $0x2b] sm:$0xff]
  %v1040 = vld [vmem:[%s0 + $0x33] sm:$0xff]
  %v1041 = vld [vmem:[%s0 + $0x43] sm:$0xff]
  %v1042 = vld [vmem:[%s0 + $0x4b] sm:$0xff]
  %v1043 = vld [vmem:[%s0 + $0x53] sm:$0xff]
  %v1044 = vld [vmem:[%s0 + $0x63] sm:$0xff]
  %v1045 = vld [vmem:[%s0 + $0x6b] sm:$0xff]
  %v1046 = vld [vmem:[%s0 + $0x73] sm:$0xff]
  %v1047 = vld [vmem:[%s0 + $0x83] sm:$0xff]
  %v1048 = vld [vmem:[%s0 + $0x8b] sm:$0xff]
  %v1049 = vld [vmem:[%s0 + $0x93] sm:$0xff]
  %v1050 = vld [vmem:[%s0 + $0xa3] sm:$0xff]
  %v1051 = vld [vmem:[%s0 + $0xab] sm:$0xff]
  %v1052 = vld [vmem:[%s0 + $0xb3] sm:$0xff]
  %v1053 = vld [vmem:[%s0 + $0xc3] sm:$0xff]
  %v1054 = vld [vmem:[%s0 + $0xcb] sm:$0xff]
  %v1055 = vld [vmem:[%s0 + $0xd3] sm:$0xff]
  %v1056 = vld [vmem:[%s0 + $0xe3] sm:$0xff]
  %v1057 = vld [vmem:[%s0 + $0xeb] sm:$0xff]
  %v1058 = vld [vmem:[%s0 + $0xf3] sm:$0xff]
  %s1059 = scalar_lea.vmem %s1, 192
  %v1060 = vld [vmem:[%s1059] sm:$0xff]
  %v1061 = vld [vmem:[%s1059 + $0x8] sm:$0xff]
  %v1062 = vld [vmem:[%s1059 + $0x10] sm:$0xff]
  %v1063 = vld [vmem:[%s1059 + $0x18] sm:$0xff]
  %v1064 = vld [vmem:[%s1059 + $0x20] sm:$0xff]
  %v1065 = vld [vmem:[%s1059 + $0x28] sm:$0xff]
  %v1066 = vld [vmem:[%s1059 + $0x30] sm:$0xf]
  %v1067 = vld [vmem:[%s1059 + $0x38] sm:$0xf]
  %v1069 = vsel %vm91, %v1035, 0
  %v1072 = vsel %vm91, %v1036, 0
  %v1075 = vsel %vm91, %v1037, 0
  %v1078 = vsel %vm91, %v1038, 0
  %v1081 = vsel %vm91, %v1039, 0
  %v1084 = vsel %vm91, %v1040, 0
  %v1087 = vsel %vm91, %v1041, 0
  %v1090 = vsel %vm91, %v1042, 0
  %v1093 = vsel %vm91, %v1043, 0
  %v1096 = vsel %vm91, %v1044, 0
  %v1099 = vsel %vm91, %v1045, 0
  %v1102 = vsel %vm91, %v1046, 0
  %v1105 = vsel %vm91, %v1047, 0
  %v1108 = vsel %vm91, %v1048, 0
  %v1111 = vsel %vm91, %v1049, 0
  %v1114 = vsel %vm91, %v1050, 0
  %v1117 = vsel %vm91, %v1051, 0
  %v1120 = vsel %vm91, %v1052, 0
  %v1123 = vsel %vm91, %v1053, 0
  %v1126 = vsel %vm91, %v1054, 0
  %v1129 = vsel %vm91, %v1055, 0
  %v1132 = vsel %vm91, %v1056, 0
  %v1135 = vsel %vm91, %v1057, 0
  %v1138 = vsel %vm91, %v1058, 0
  %v1141 = vsel %vm164, %v1066, 0
  %v1144 = vsel %vm164, %v1067, 0
  %1146 = vmatprep.subr.mxu0 0.0
  %1147 = vmatpush1.msra.mxu0 0.0
  %1148 = vmatprep.subr.mxu0 0.0
  %1149 = vmatpush1.msra.mxu0 0.0
  %1150 = vmatprep.subr.mxu0 0.0
  %1151 = vmatpush1.msra.mxu0 0.0
  %1152 = vmatprep.subr.mxu0 0.0
  %1153 = vmatpush1.msra.mxu0 0.0
  %1154 = vmatprep.subr.mxu0 0.0
  %1155 = vmatpush1.msra.mxu0 0.0
  %1156 = vmatprep.subr.mxu0 0.0
  %1157 = vmatpush1.msra.mxu0 0.0
  %1158 = vmatprep.subr.mxu0 0.0
  %1159 = vmatpush1.msra.mxu0 0.0
  %1160 = vmatprep.subr.mxu0 0.0
  %1161 = vmatpush1.msra.mxu0 0.0
  %1162 = vmatprep.subr.mxu0 0.0
  %1163 = vmatpush1.msra.mxu0 0.0
  %1164 = vmatprep.subr.mxu0 0.0
  %1165 = vmatpush1.msra.mxu0 0.0
  %1166 = vmatprep.subr.mxu0 0.0
  %1167 = vmatpush1.msra.mxu0 0.0
  %1168 = vmatprep.subr.mxu0 0.0
  %1169 = vmatpush1.msra.mxu0 0.0
  %1170 = vmatprep.subr.mxu0 %v1144
  %1171 = vmatpush1.msra.mxu0 %v1141
  %1172 = vmatprep.subr.mxu0 %v1065
  %1173 = vmatpush1.msra.mxu0 %v1064
  %1174 = vmatprep.subr.mxu0 %v1063
  %1175 = vmatpush1.msra.mxu0 %v1062
  %1176 = vmatprep.subr.mxu0 %v1061
  %1177 = vmatpush1.msra.mxu0 %v1060
  %1178 = vmatprep.subr.mxu0 0.0
  %1179 = vmatpush2.msra.mxu0 0.0
  %1180 = vmatprep.subr.mxu0 0.0
  %1181 = vmatpush2.msra.mxu0 0.0
  %1182 = vmatprep.subr.mxu0 0.0
  %1183 = vmatpush2.msra.mxu0 0.0
  %1184 = vmatprep.subr.mxu0 0.0
  %1185 = vmatpush2.msra.mxu0 0.0
  %1186 = vmatprep.subr.mxu0 0.0
  %1187 = vmatpush2.msra.mxu0 0.0
  %1188 = vmatprep.subr.mxu0 0.0
  %1189 = vmatpush2.msra.mxu0 0.0
  %1190 = vmatprep.subr.mxu0 0.0
  %1191 = vmatpush2.msra.mxu0 0.0
  %1192 = vmatprep.subr.mxu0 0.0
  %1193 = vmatpush2.msra.mxu0 0.0
  %1194 = vmatprep.subr.mxu0 0.0
  %1195 = vmatpush2.msra.mxu0 0.0
  %1196 = vmatprep.subr.mxu0 0.0
  %1197 = vmatpush2.msra.mxu0 0.0
  %1198 = vmatprep.subr.mxu0 0.0
  %1199 = vmatpush2.msra.mxu0 0.0
  %1200 = vmatprep.subr.mxu0 0.0
  %1201 = vmatpush2.msra.mxu0 0.0
  %1202 = vmatprep.subr.mxu0 0.0
  %1203 = vmatpush2.msra.mxu0 0.0
  %1204 = vmatprep.subr.mxu0 0.0
  %1205 = vmatpush2.msra.mxu0 0.0
  %1206 = vmatprep.subr.mxu0 0.0
  %1207 = vmatpush2.msra.mxu0 0.0
  %1208 = vmatprep.subr.mxu0 0.0
  %1209 = vmatpush2.msra.mxu0 0.0
  %1210 = vmatprep.mubr.f32.mxu0 0.0
  %1211 = vmatmul.mubr.f32.gmra.mxu0 %v1069
  %v1212 = vpop.f32.mrf.mxu0
  %v1213 = vadd.f32 0.0, %v1212
  %v1214 = vpop.f32.mrf.mxu0
  %v1215 = vadd.f32 0.0, %v1214
  %1216 = vmatprep.mubr.f32.mxu0 0.0
  %1217 = vmatmul.mubr.f32.gmra.mxu0 %v1072
  %v1218 = vpop.f32.mrf.mxu0
  %v1219 = vadd.f32 0.0, %v1218
  %v1220 = vpop.f32.mrf.mxu0
  %v1221 = vadd.f32 0.0, %v1220
  %1222 = vmatprep.mubr.f32.mxu0 0.0
  %1223 = vmatmul.mubr.f32.gmra.mxu0 %v1075
  %v1224 = vpop.f32.mrf.mxu0
  %v1225 = vadd.f32 0.0, %v1224
  %v1226 = vpop.f32.mrf.mxu0
  %v1227 = vadd.f32 0.0, %v1226
  %1228 = vmatprep.mubr.f32.mxu0 0.0
  %1229 = vmatmul.mubr.f32.gmra.mxu0 %v1078
  %v1230 = vpop.f32.mrf.mxu0
  %v1231 = vadd.f32 0.0, %v1230
  %v1232 = vpop.f32.mrf.mxu0
  %v1233 = vadd.f32 0.0, %v1232
  %1234 = vmatprep.mubr.f32.mxu0 0.0
  %1235 = vmatmul.mubr.f32.gmra.mxu0 %v1081
  %v1236 = vpop.f32.mrf.mxu0
  %v1237 = vadd.f32 0.0, %v1236
  %v1238 = vpop.f32.mrf.mxu0
  %v1239 = vadd.f32 0.0, %v1238
  %1240 = vmatprep.mubr.f32.mxu0 0.0
  %1241 = vmatmul.mubr.f32.gmra.mxu0 %v1084
  %v1242 = vpop.f32.mrf.mxu0
  %v1243 = vadd.f32 0.0, %v1242
  %v1244 = vpop.f32.mrf.mxu0
  %v1245 = vadd.f32 0.0, %v1244
  %1246 = vmatprep.mubr.f32.mxu0 0.0
  %1247 = vmatmul.mubr.f32.gmra.mxu0 %v1087
  %v1248 = vpop.f32.mrf.mxu0
  %v1249 = vadd.f32 0.0, %v1248
  %v1250 = vpop.f32.mrf.mxu0
  %v1251 = vadd.f32 0.0, %v1250
  %1252 = vmatprep.mubr.f32.mxu0 0.0
  %1253 = vmatmul.mubr.f32.gmra.mxu0 %v1090
  %v1254 = vpop.f32.mrf.mxu0
  %v1255 = vadd.f32 0.0, %v1254
  %v1256 = vpop.f32.mrf.mxu0
  %v1257 = vadd.f32 0.0, %v1256
  %1258 = vmatprep.mubr.f32.mxu0 0.0
  %1259 = vmatmul.mubr.f32.gmra.mxu0 %v1093
  %v1260 = vpop.f32.mrf.mxu0
  %v1261 = vadd.f32 0.0, %v1260
  %v1262 = vpop.f32.mrf.mxu0
  %v1263 = vadd.f32 0.0, %v1262
  %1264 = vmatprep.mubr.f32.mxu0 0.0
  %1265 = vmatmul.mubr.f32.gmra.mxu0 %v1096
  %v1266 = vpop.f32.mrf.mxu0
  %v1267 = vadd.f32 0.0, %v1266
  %v1268 = vpop.f32.mrf.mxu0
  %v1269 = vadd.f32 0.0, %v1268
  %1270 = vmatprep.mubr.f32.mxu0 0.0
  %1271 = vmatmul.mubr.f32.gmra.mxu0 %v1099
  %v1272 = vpop.f32.mrf.mxu0
  %v1273 = vadd.f32 0.0, %v1272
  %v1274 = vpop.f32.mrf.mxu0
  %v1275 = vadd.f32 0.0, %v1274
  %1276 = vmatprep.mubr.f32.mxu0 0.0
  %1277 = vmatmul.mubr.f32.gmra.mxu0 %v1102
  %v1278 = vpop.f32.mrf.mxu0
  %v1279 = vadd.f32 0.0, %v1278
  %v1280 = vpop.f32.mrf.mxu0
  %v1281 = vadd.f32 0.0, %v1280
  %1282 = vmatprep.mubr.f32.mxu0 0.0
  %1283 = vmatmul.mubr.f32.gmra.mxu0 %v1105
  %v1284 = vpop.f32.mrf.mxu0
  %v1285 = vadd.f32 0.0, %v1284
  %v1286 = vpop.f32.mrf.mxu0
  %v1287 = vadd.f32 0.0, %v1286
  %1288 = vmatprep.mubr.f32.mxu0 0.0
  %1289 = vmatmul.mubr.f32.gmra.mxu0 %v1108
  %v1290 = vpop.f32.mrf.mxu0
  %v1291 = vadd.f32 0.0, %v1290
  %v1292 = vpop.f32.mrf.mxu0
  %v1293 = vadd.f32 0.0, %v1292
  %1294 = vmatprep.mubr.f32.mxu0 0.0
  %1295 = vmatmul.mubr.f32.gmra.mxu0 %v1111
  %v1296 = vpop.f32.mrf.mxu0
  %v1297 = vadd.f32 0.0, %v1296
  %v1298 = vpop.f32.mrf.mxu0
  %v1299 = vadd.f32 0.0, %v1298
  %1300 = vmatprep.mubr.f32.mxu0 0.0
  %1301 = vmatmul.mubr.f32.gmra.mxu0 %v1114
  %v1302 = vpop.f32.mrf.mxu0
  %v1303 = vadd.f32 0.0, %v1302
  %v1304 = vpop.f32.mrf.mxu0
  %v1305 = vadd.f32 0.0, %v1304
  %1306 = vmatprep.mubr.f32.mxu0 0.0
  %1307 = vmatmul.mubr.f32.gmra.mxu0 %v1117
  %v1308 = vpop.f32.mrf.mxu0
  %v1309 = vadd.f32 0.0, %v1308
  %v1310 = vpop.f32.mrf.mxu0
  %v1311 = vadd.f32 0.0, %v1310
  %1312 = vmatprep.mubr.f32.mxu0 0.0
  %1313 = vmatmul.mubr.f32.gmra.mxu0 %v1120
  %v1314 = vpop.f32.mrf.mxu0
  %v1315 = vadd.f32 0.0, %v1314
  %v1316 = vpop.f32.mrf.mxu0
  %v1317 = vadd.f32 0.0, %v1316
  %1318 = vmatprep.mubr.f32.mxu0 0.0
  %1319 = vmatmul.mubr.f32.gmra.mxu0 %v1123
  %v1320 = vpop.f32.mrf.mxu0
  %v1321 = vadd.f32 0.0, %v1320
  %v1322 = vpop.f32.mrf.mxu0
  %v1323 = vadd.f32 0.0, %v1322
  %1324 = vmatprep.mubr.f32.mxu0 0.0
  %1325 = vmatmul.mubr.f32.gmra.mxu0 %v1126
  %v1326 = vpop.f32.mrf.mxu0
  %v1327 = vadd.f32 0.0, %v1326
  %v1328 = vpop.f32.mrf.mxu0
  %v1329 = vadd.f32 0.0, %v1328
  %1330 = vmatprep.mubr.f32.mxu0 0.0
  %1331 = vmatmul.mubr.f32.gmra.mxu0 %v1129
  %v1332 = vpop.f32.mrf.mxu0
  %v1333 = vadd.f32 0.0, %v1332
  %v1334 = vpop.f32.mrf.mxu0
  %v1335 = vadd.f32 0.0, %v1334
  %1336 = vmatprep.mubr.f32.mxu0 0.0
  %1337 = vmatmul.mubr.f32.gmra.mxu0 %v1132
  %v1338 = vpop.f32.mrf.mxu0
  %v1339 = vadd.f32 0.0, %v1338
  %v1340 = vpop.f32.mrf.mxu0
  %v1341 = vadd.f32 0.0, %v1340
  %1342 = vmatprep.mubr.f32.mxu0 0.0
  %1343 = vmatmul.mubr.f32.gmra.mxu0 %v1135
  %v1344 = vpop.f32.mrf.mxu0
  %v1345 = vadd.f32 0.0, %v1344
  %v1346 = vpop.f32.mrf.mxu0
  %v1347 = vadd.f32 0.0, %v1346
  %1348 = vmatprep.mubr.f32.mxu0 0.0
  %1349 = vmatmul.mubr.f32.gmra.mxu0 %v1138
  %v1350 = vpop.f32.mrf.mxu0
  %v1351 = vadd.f32 0.0, %v1350
  %v1352 = vpop.f32.mrf.mxu0
  %v1353 = vadd.f32 0.0, %v1352
  %1354 = vdwg.mxu0
  %v1355 = vadd.f32 %v987, %v1213
  %v1356 = vadd.f32 %v988, %v1215
  %v1357 = vadd.f32 %v989, %v1219
  %v1358 = vadd.f32 %v990, %v1221
  %v1359 = vadd.f32 %v991, %v1225
  %v1360 = vadd.f32 %v992, %v1227
  %v1361 = vadd.f32 %v993, %v1231
  %v1362 = vadd.f32 %v994, %v1233
  %v1363 = vadd.f32 %v995, %v1237
  %v1364 = vadd.f32 %v996, %v1239
  %v1365 = vadd.f32 %v997, %v1243
  %v1366 = vadd.f32 %v998, %v1245
  %v1367 = vadd.f32 %v999, %v1249
  %v1368 = vadd.f32 %v1000, %v1251
  %v1369 = vadd.f32 %v1001, %v1255
  %v1370 = vadd.f32 %v1002, %v1257
  %v1371 = vadd.f32 %v1003, %v1261
  %v1372 = vadd.f32 %v1004, %v1263
  %v1373 = vadd.f32 %v1005, %v1267
  %v1374 = vadd.f32 %v1006, %v1269
  %v1375 = vadd.f32 %v1007, %v1273
  %v1376 = vadd.f32 %v1008, %v1275
  %v1377 = vadd.f32 %v1009, %v1279
  %v1378 = vadd.f32 %v1010, %v1281
  %v1379 = vadd.f32 %v1011, %v1285
  %v1380 = vadd.f32 %v1012, %v1287
  %v1381 = vadd.f32 %v1013, %v1291
  %v1382 = vadd.f32 %v1014, %v1293
  %v1383 = vadd.f32 %v1015, %v1297
  %v1384 = vadd.f32 %v1016, %v1299
  %v1385 = vadd.f32 %v1017, %v1303
  %v1386 = vadd.f32 %v1018, %v1305
  %v1387 = vadd.f32 %v1019, %v1309
  %v1388 = vadd.f32 %v1020, %v1311
  %v1389 = vadd.f32 %v1021, %v1315
  %v1390 = vadd.f32 %v1022, %v1317
  %v1391 = vadd.f32 %v1023, %v1321
  %v1392 = vadd.f32 %v1024, %v1323
  %v1393 = vadd.f32 %v1025, %v1327
  %v1394 = vadd.f32 %v1026, %v1329
  %v1395 = vadd.f32 %v1027, %v1333
  %v1396 = vadd.f32 %v1028, %v1335
  %v1397 = vadd.f32 %v1029, %v1339
  %v1398 = vadd.f32 %v1030, %v1341
  %v1399 = vadd.f32 %v1031, %v1345
  %v1400 = vadd.f32 %v1032, %v1347
  %v1401 = vadd.f32 %v1033, %v1351
  %v1402 = vadd.f32 %v1034, %v1353
  %v1403 = vld [vmem:[%s0 + $0x4] sm:$0xff]
  %v1404 = vld [vmem:[%s0 + $0xc] sm:$0xff]
  %v1405 = vld [vmem:[%s0 + $0x14] sm:$0xff]
  %v1406 = vld [vmem:[%s0 + $0x24] sm:$0xff]
  %v1407 = vld [vmem:[%s0 + $0x2c] sm:$0xff]
  %v1408 = vld [vmem:[%s0 + $0x34] sm:$0xff]
  %v1409 = vld [vmem:[%s0 + $0x44] sm:$0xff]
  %v1410 = vld [vmem:[%s0 + $0x4c] sm:$0xff]
  %v1411 = vld [vmem:[%s0 + $0x54] sm:$0xff]
  %v1412 = vld [vmem:[%s0 + $0x64] sm:$0xff]
  %v1413 = vld [vmem:[%s0 + $0x6c] sm:$0xff]
  %v1414 = vld [vmem:[%s0 + $0x74] sm:$0xff]
  %v1415 = vld [vmem:[%s0 + $0x84] sm:$0xff]
  %v1416 = vld [vmem:[%s0 + $0x8c] sm:$0xff]
  %v1417 = vld [vmem:[%s0 + $0x94] sm:$0xff]
  %v1418 = vld [vmem:[%s0 + $0xa4] sm:$0xff]
  %v1419 = vld [vmem:[%s0 + $0xac] sm:$0xff]
  %v1420 = vld [vmem:[%s0 + $0xb4] sm:$0xff]
  %v1421 = vld [vmem:[%s0 + $0xc4] sm:$0xff]
  %v1422 = vld [vmem:[%s0 + $0xcc] sm:$0xff]
  %v1423 = vld [vmem:[%s0 + $0xd4] sm:$0xff]
  %v1424 = vld [vmem:[%s0 + $0xe4] sm:$0xff]
  %v1425 = vld [vmem:[%s0 + $0xec] sm:$0xff]
  %v1426 = vld [vmem:[%s0 + $0xf4] sm:$0xff]
  %s1427 = scalar_lea.vmem %s1, 256
  %v1428 = vld [vmem:[%s1427] sm:$0xff]
  %v1429 = vld [vmem:[%s1427 + $0x8] sm:$0xff]
  %v1430 = vld [vmem:[%s1427 + $0x10] sm:$0xff]
  %v1431 = vld [vmem:[%s1427 + $0x18] sm:$0xff]
  %v1432 = vld [vmem:[%s1427 + $0x20] sm:$0xff]
  %v1433 = vld [vmem:[%s1427 + $0x28] sm:$0xff]
  %v1434 = vld [vmem:[%s1427 + $0x30] sm:$0xf]
  %v1435 = vld [vmem:[%s1427 + $0x38] sm:$0xf]
  %v1437 = vsel %vm91, %v1403, 0
  %v1440 = vsel %vm91, %v1404, 0
  %v1443 = vsel %vm91, %v1405, 0
  %v1446 = vsel %vm91, %v1406, 0
  %v1449 = vsel %vm91, %v1407, 0
  %v1452 = vsel %vm91, %v1408, 0
  %v1455 = vsel %vm91, %v1409, 0
  %v1458 = vsel %vm91, %v1410, 0
  %v1461 = vsel %vm91, %v1411, 0
  %v1464 = vsel %vm91, %v1412, 0
  %v1467 = vsel %vm91, %v1413, 0
  %v1470 = vsel %vm91, %v1414, 0
  %v1473 = vsel %vm91, %v1415, 0
  %v1476 = vsel %vm91, %v1416, 0
  %v1479 = vsel %vm91, %v1417, 0
  %v1482 = vsel %vm91, %v1418, 0
  %v1485 = vsel %vm91, %v1419, 0
  %v1488 = vsel %vm91, %v1420, 0
  %v1491 = vsel %vm91, %v1421, 0
  %v1494 = vsel %vm91, %v1422, 0
  %v1497 = vsel %vm91, %v1423, 0
  %v1500 = vsel %vm91, %v1424, 0
  %v1503 = vsel %vm91, %v1425, 0
  %v1506 = vsel %vm91, %v1426, 0
  %v1509 = vsel %vm164, %v1434, 0
  %v1512 = vsel %vm164, %v1435, 0
  %1514 = vmatprep.subr.mxu0 0.0
  %1515 = vmatpush1.msra.mxu0 0.0
  %1516 = vmatprep.subr.mxu0 0.0
  %1517 = vmatpush1.msra.mxu0 0.0
  %1518 = vmatprep.subr.mxu0 0.0
  %1519 = vmatpush1.msra.mxu0 0.0
  %1520 = vmatprep.subr.mxu0 0.0
  %1521 = vmatpush1.msra.mxu0 0.0
  %1522 = vmatprep.subr.mxu0 0.0
  %1523 = vmatpush1.msra.mxu0 0.0
  %1524 = vmatprep.subr.mxu0 0.0
  %1525 = vmatpush1.msra.mxu0 0.0
  %1526 = vmatprep.subr.mxu0 0.0
  %1527 = vmatpush1.msra.mxu0 0.0
  %1528 = vmatprep.subr.mxu0 0.0
  %1529 = vmatpush1.msra.mxu0 0.0
  %1530 = vmatprep.subr.mxu0 0.0
  %1531 = vmatpush1.msra.mxu0 0.0
  %1532 = vmatprep.subr.mxu0 0.0
  %1533 = vmatpush1.msra.mxu0 0.0
  %1534 = vmatprep.subr.mxu0 0.0
  %1535 = vmatpush1.msra.mxu0 0.0
  %1536 = vmatprep.subr.mxu0 0.0
  %1537 = vmatpush1.msra.mxu0 0.0
  %1538 = vmatprep.subr.mxu0 %v1512
  %1539 = vmatpush1.msra.mxu0 %v1509
  %1540 = vmatprep.subr.mxu0 %v1433
  %1541 = vmatpush1.msra.mxu0 %v1432
  %1542 = vmatprep.subr.mxu0 %v1431
  %1543 = vmatpush1.msra.mxu0 %v1430
  %1544 = vmatprep.subr.mxu0 %v1429
  %1545 = vmatpush1.msra.mxu0 %v1428
  %1546 = vmatprep.subr.mxu0 0.0
  %1547 = vmatpush2.msra.mxu0 0.0
  %1548 = vmatprep.subr.mxu0 0.0
  %1549 = vmatpush2.msra.mxu0 0.0
  %1550 = vmatprep.subr.mxu0 0.0
  %1551 = vmatpush2.msra.mxu0 0.0
  %1552 = vmatprep.subr.mxu0 0.0
  %1553 = vmatpush2.msra.mxu0 0.0
  %1554 = vmatprep.subr.mxu0 0.0
  %1555 = vmatpush2.msra.mxu0 0.0
  %1556 = vmatprep.subr.mxu0 0.0
  %1557 = vmatpush2.msra.mxu0 0.0
  %1558 = vmatprep.subr.mxu0 0.0
  %1559 = vmatpush2.msra.mxu0 0.0
  %1560 = vmatprep.subr.mxu0 0.0
  %1561 = vmatpush2.msra.mxu0 0.0
  %1562 = vmatprep.subr.mxu0 0.0
  %1563 = vmatpush2.msra.mxu0 0.0
  %1564 = vmatprep.subr.mxu0 0.0
  %1565 = vmatpush2.msra.mxu0 0.0
  %1566 = vmatprep.subr.mxu0 0.0
  %1567 = vmatpush2.msra.mxu0 0.0
  %1568 = vmatprep.subr.mxu0 0.0
  %1569 = vmatpush2.msra.mxu0 0.0
  %1570 = vmatprep.subr.mxu0 0.0
  %1571 = vmatpush2.msra.mxu0 0.0
  %1572 = vmatprep.subr.mxu0 0.0
  %1573 = vmatpush2.msra.mxu0 0.0
  %1574 = vmatprep.subr.mxu0 0.0
  %1575 = vmatpush2.msra.mxu0 0.0
  %1576 = vmatprep.subr.mxu0 0.0
  %1577 = vmatpush2.msra.mxu0 0.0
  %1578 = vmatprep.mubr.f32.mxu0 0.0
  %1579 = vmatmul.mubr.f32.gmra.mxu0 %v1437
  %v1580 = vpop.f32.mrf.mxu0
  %v1581 = vadd.f32 0.0, %v1580
  %v1582 = vpop.f32.mrf.mxu0
  %v1583 = vadd.f32 0.0, %v1582
  %1584 = vmatprep.mubr.f32.mxu0 0.0
  %1585 = vmatmul.mubr.f32.gmra.mxu0 %v1440
  %v1586 = vpop.f32.mrf.mxu0
  %v1587 = vadd.f32 0.0, %v1586
  %v1588 = vpop.f32.mrf.mxu0
  %v1589 = vadd.f32 0.0, %v1588
  %1590 = vmatprep.mubr.f32.mxu0 0.0
  %1591 = vmatmul.mubr.f32.gmra.mxu0 %v1443
  %v1592 = vpop.f32.mrf.mxu0
  %v1593 = vadd.f32 0.0, %v1592
  %v1594 = vpop.f32.mrf.mxu0
  %v1595 = vadd.f32 0.0, %v1594
  %1596 = vmatprep.mubr.f32.mxu0 0.0
  %1597 = vmatmul.mubr.f32.gmra.mxu0 %v1446
  %v1598 = vpop.f32.mrf.mxu0
  %v1599 = vadd.f32 0.0, %v1598
  %v1600 = vpop.f32.mrf.mxu0
  %v1601 = vadd.f32 0.0, %v1600
  %1602 = vmatprep.mubr.f32.mxu0 0.0
  %1603 = vmatmul.mubr.f32.gmra.mxu0 %v1449
  %v1604 = vpop.f32.mrf.mxu0
  %v1605 = vadd.f32 0.0, %v1604
  %v1606 = vpop.f32.mrf.mxu0
  %v1607 = vadd.f32 0.0, %v1606
  %1608 = vmatprep.mubr.f32.mxu0 0.0
  %1609 = vmatmul.mubr.f32.gmra.mxu0 %v1452
  %v1610 = vpop.f32.mrf.mxu0
  %v1611 = vadd.f32 0.0, %v1610
  %v1612 = vpop.f32.mrf.mxu0
  %v1613 = vadd.f32 0.0, %v1612
  %1614 = vmatprep.mubr.f32.mxu0 0.0
  %1615 = vmatmul.mubr.f32.gmra.mxu0 %v1455
  %v1616 = vpop.f32.mrf.mxu0
  %v1617 = vadd.f32 0.0, %v1616
  %v1618 = vpop.f32.mrf.mxu0
  %v1619 = vadd.f32 0.0, %v1618
  %1620 = vmatprep.mubr.f32.mxu0 0.0
  %1621 = vmatmul.mubr.f32.gmra.mxu0 %v1458
  %v1622 = vpop.f32.mrf.mxu0
  %v1623 = vadd.f32 0.0, %v1622
  %v1624 = vpop.f32.mrf.mxu0
  %v1625 = vadd.f32 0.0, %v1624
  %1626 = vmatprep.mubr.f32.mxu0 0.0
  %1627 = vmatmul.mubr.f32.gmra.mxu0 %v1461
  %v1628 = vpop.f32.mrf.mxu0
  %v1629 = vadd.f32 0.0, %v1628
  %v1630 = vpop.f32.mrf.mxu0
  %v1631 = vadd.f32 0.0, %v1630
  %1632 = vmatprep.mubr.f32.mxu0 0.0
  %1633 = vmatmul.mubr.f32.gmra.mxu0 %v1464
  %v1634 = vpop.f32.mrf.mxu0
  %v1635 = vadd.f32 0.0, %v1634
  %v1636 = vpop.f32.mrf.mxu0
  %v1637 = vadd.f32 0.0, %v1636
  %1638 = vmatprep.mubr.f32.mxu0 0.0
  %1639 = vmatmul.mubr.f32.gmra.mxu0 %v1467
  %v1640 = vpop.f32.mrf.mxu0
  %v1641 = vadd.f32 0.0, %v1640
  %v1642 = vpop.f32.mrf.mxu0
  %v1643 = vadd.f32 0.0, %v1642
  %1644 = vmatprep.mubr.f32.mxu0 0.0
  %1645 = vmatmul.mubr.f32.gmra.mxu0 %v1470
  %v1646 = vpop.f32.mrf.mxu0
  %v1647 = vadd.f32 0.0, %v1646
  %v1648 = vpop.f32.mrf.mxu0
  %v1649 = vadd.f32 0.0, %v1648
  %1650 = vmatprep.mubr.f32.mxu0 0.0
  %1651 = vmatmul.mubr.f32.gmra.mxu0 %v1473
  %v1652 = vpop.f32.mrf.mxu0
  %v1653 = vadd.f32 0.0, %v1652
  %v1654 = vpop.f32.mrf.mxu0
  %v1655 = vadd.f32 0.0, %v1654
  %1656 = vmatprep.mubr.f32.mxu0 0.0
  %1657 = vmatmul.mubr.f32.gmra.mxu0 %v1476
  %v1658 = vpop.f32.mrf.mxu0
  %v1659 = vadd.f32 0.0, %v1658
  %v1660 = vpop.f32.mrf.mxu0
  %v1661 = vadd.f32 0.0, %v1660
  %1662 = vmatprep.mubr.f32.mxu0 0.0
  %1663 = vmatmul.mubr.f32.gmra.mxu0 %v1479
  %v1664 = vpop.f32.mrf.mxu0
  %v1665 = vadd.f32 0.0, %v1664
  %v1666 = vpop.f32.mrf.mxu0
  %v1667 = vadd.f32 0.0, %v1666
  %1668 = vmatprep.mubr.f32.mxu0 0.0
  %1669 = vmatmul.mubr.f32.gmra.mxu0 %v1482
  %v1670 = vpop.f32.mrf.mxu0
  %v1671 = vadd.f32 0.0, %v1670
  %v1672 = vpop.f32.mrf.mxu0
  %v1673 = vadd.f32 0.0, %v1672
  %1674 = vmatprep.mubr.f32.mxu0 0.0
  %1675 = vmatmul.mubr.f32.gmra.mxu0 %v1485
  %v1676 = vpop.f32.mrf.mxu0
  %v1677 = vadd.f32 0.0, %v1676
  %v1678 = vpop.f32.mrf.mxu0
  %v1679 = vadd.f32 0.0, %v1678
  %1680 = vmatprep.mubr.f32.mxu0 0.0
  %1681 = vmatmul.mubr.f32.gmra.mxu0 %v1488
  %v1682 = vpop.f32.mrf.mxu0
  %v1683 = vadd.f32 0.0, %v1682
  %v1684 = vpop.f32.mrf.mxu0
  %v1685 = vadd.f32 0.0, %v1684
  %1686 = vmatprep.mubr.f32.mxu0 0.0
  %1687 = vmatmul.mubr.f32.gmra.mxu0 %v1491
  %v1688 = vpop.f32.mrf.mxu0
  %v1689 = vadd.f32 0.0, %v1688
  %v1690 = vpop.f32.mrf.mxu0
  %v1691 = vadd.f32 0.0, %v1690
  %1692 = vmatprep.mubr.f32.mxu0 0.0
  %1693 = vmatmul.mubr.f32.gmra.mxu0 %v1494
  %v1694 = vpop.f32.mrf.mxu0
  %v1695 = vadd.f32 0.0, %v1694
  %v1696 = vpop.f32.mrf.mxu0
  %v1697 = vadd.f32 0.0, %v1696
  %1698 = vmatprep.mubr.f32.mxu0 0.0
  %1699 = vmatmul.mubr.f32.gmra.mxu0 %v1497
  %v1700 = vpop.f32.mrf.mxu0
  %v1701 = vadd.f32 0.0, %v1700
  %v1702 = vpop.f32.mrf.mxu0
  %v1703 = vadd.f32 0.0, %v1702
  %1704 = vmatprep.mubr.f32.mxu0 0.0
  %1705 = vmatmul.mubr.f32.gmra.mxu0 %v1500
  %v1706 = vpop.f32.mrf.mxu0
  %v1707 = vadd.f32 0.0, %v1706
  %v1708 = vpop.f32.mrf.mxu0
  %v1709 = vadd.f32 0.0, %v1708
  %1710 = vmatprep.mubr.f32.mxu0 0.0
  %1711 = vmatmul.mubr.f32.gmra.mxu0 %v1503
  %v1712 = vpop.f32.mrf.mxu0
  %v1713 = vadd.f32 0.0, %v1712
  %v1714 = vpop.f32.mrf.mxu0
  %v1715 = vadd.f32 0.0, %v1714
  %1716 = vmatprep.mubr.f32.mxu0 0.0
  %1717 = vmatmul.mubr.f32.gmra.mxu0 %v1506
  %v1718 = vpop.f32.mrf.mxu0
  %v1719 = vadd.f32 0.0, %v1718
  %v1720 = vpop.f32.mrf.mxu0
  %v1721 = vadd.f32 0.0, %v1720
  %1722 = vdwg.mxu0
  %v1723 = vadd.f32 %v1355, %v1581
  %v1724 = vadd.f32 %v1356, %v1583
  %v1725 = vadd.f32 %v1357, %v1587
  %v1726 = vadd.f32 %v1358, %v1589
  %v1727 = vadd.f32 %v1359, %v1593
  %v1728 = vadd.f32 %v1360, %v1595
  %v1729 = vadd.f32 %v1361, %v1599
  %v1730 = vadd.f32 %v1362, %v1601
  %v1731 = vadd.f32 %v1363, %v1605
  %v1732 = vadd.f32 %v1364, %v1607
  %v1733 = vadd.f32 %v1365, %v1611
  %v1734 = vadd.f32 %v1366, %v1613
  %v1735 = vadd.f32 %v1367, %v1617
  %v1736 = vadd.f32 %v1368, %v1619
  %v1737 = vadd.f32 %v1369, %v1623
  %v1738 = vadd.f32 %v1370, %v1625
  %v1739 = vadd.f32 %v1371, %v1629
  %v1740 = vadd.f32 %v1372, %v1631
  %v1741 = vadd.f32 %v1373, %v1635
  %v1742 = vadd.f32 %v1374, %v1637
  %v1743 = vadd.f32 %v1375, %v1641
  %v1744 = vadd.f32 %v1376, %v1643
  %v1745 = vadd.f32 %v1377, %v1647
  %v1746 = vadd.f32 %v1378, %v1649
  %v1747 = vadd.f32 %v1379, %v1653
  %v1748 = vadd.f32 %v1380, %v1655
  %v1749 = vadd.f32 %v1381, %v1659
  %v1750 = vadd.f32 %v1382, %v1661
  %v1751 = vadd.f32 %v1383, %v1665
  %v1752 = vadd.f32 %v1384, %v1667
  %v1753 = vadd.f32 %v1385, %v1671
  %v1754 = vadd.f32 %v1386, %v1673
  %v1755 = vadd.f32 %v1387, %v1677
  %v1756 = vadd.f32 %v1388, %v1679
  %v1757 = vadd.f32 %v1389, %v1683
  %v1758 = vadd.f32 %v1390, %v1685
  %v1759 = vadd.f32 %v1391, %v1689
  %v1760 = vadd.f32 %v1392, %v1691
  %v1761 = vadd.f32 %v1393, %v1695
  %v1762 = vadd.f32 %v1394, %v1697
  %v1763 = vadd.f32 %v1395, %v1701
  %v1764 = vadd.f32 %v1396, %v1703
  %v1765 = vadd.f32 %v1397, %v1707
  %v1766 = vadd.f32 %v1398, %v1709
  %v1767 = vadd.f32 %v1399, %v1713
  %v1768 = vadd.f32 %v1400, %v1715
  %v1769 = vadd.f32 %v1401, %v1719
  %v1770 = vadd.f32 %v1402, %v1721
  %v1771 = vld [vmem:[%s2] sm:$0x3]
  %v1773 = vlaneseq
  %v1774 = vshrl.u32 %v1773, 7
  %v1775 = vsub.s32 0, %v1774
  %v1776 = vrot.slane %v1771, %v1775
  %v1777 = vlaneseq
  %v1778 = vshrl.u32 %v1777, 7
  %v1779 = vsub.s32 1, %v1778
  %v1780 = vrot.slane %v1771, %v1779
  %v1783 = vadd.f32 %v1723, %v1776
  %v1784 = vadd.f32 %v1724, %v1780
  %v1785 = vadd.f32 %v1725, %v1776
  %v1786 = vadd.f32 %v1726, %v1780
  %v1787 = vadd.f32 %v1727, %v1776
  %v1788 = vadd.f32 %v1728, %v1780
  %v1789 = vadd.f32 %v1729, %v1776
  %v1790 = vadd.f32 %v1730, %v1780
  %v1791 = vadd.f32 %v1731, %v1776
  %v1792 = vadd.f32 %v1732, %v1780
  %v1793 = vadd.f32 %v1733, %v1776
  %v1794 = vadd.f32 %v1734, %v1780
  %v1795 = vadd.f32 %v1735, %v1776
  %v1796 = vadd.f32 %v1736, %v1780
  %v1797 = vadd.f32 %v1737, %v1776
  %v1798 = vadd.f32 %v1738, %v1780
  %v1799 = vadd.f32 %v1739, %v1776
  %v1800 = vadd.f32 %v1740, %v1780
  %v1801 = vadd.f32 %v1741, %v1776
  %v1802 = vadd.f32 %v1742, %v1780
  %v1803 = vadd.f32 %v1743, %v1776
  %v1804 = vadd.f32 %v1744, %v1780
  %v1805 = vadd.f32 %v1745, %v1776
  %v1806 = vadd.f32 %v1746, %v1780
  %v1807 = vadd.f32 %v1747, %v1776
  %v1808 = vadd.f32 %v1748, %v1780
  %v1809 = vadd.f32 %v1749, %v1776
  %v1810 = vadd.f32 %v1750, %v1780
  %v1811 = vadd.f32 %v1751, %v1776
  %v1812 = vadd.f32 %v1752, %v1780
  %v1813 = vadd.f32 %v1753, %v1776
  %v1814 = vadd.f32 %v1754, %v1780
  %v1815 = vadd.f32 %v1755, %v1776
  %v1816 = vadd.f32 %v1756, %v1780
  %v1817 = vadd.f32 %v1757, %v1776
  %v1818 = vadd.f32 %v1758, %v1780
  %v1819 = vadd.f32 %v1759, %v1776
  %v1820 = vadd.f32 %v1760, %v1780
  %v1821 = vadd.f32 %v1761, %v1776
  %v1822 = vadd.f32 %v1762, %v1780
  %v1823 = vadd.f32 %v1763, %v1776
  %v1824 = vadd.f32 %v1764, %v1780
  %v1825 = vadd.f32 %v1765, %v1776
  %v1826 = vadd.f32 %v1766, %v1780
  %v1827 = vadd.f32 %v1767, %v1776
  %v1828 = vadd.f32 %v1768, %v1780
  %v1829 = vadd.f32 %v1769, %v1776
  %v1830 = vadd.f32 %v1770, %v1780
  %v1831 = vmax.f32 %v1783, 0.0
  %v1832 = vmax.f32 %v1784, 0.0
  %v1833 = vmax.f32 %v1785, 0.0
  %v1834 = vmax.f32 %v1786, 0.0
  %v1835 = vmax.f32 %v1787, 0.0
  %v1836 = vmax.f32 %v1788, 0.0
  %v1837 = vmax.f32 %v1789, 0.0
  %v1838 = vmax.f32 %v1790, 0.0
  %v1839 = vmax.f32 %v1791, 0.0
  %v1840 = vmax.f32 %v1792, 0.0
  %v1841 = vmax.f32 %v1793, 0.0
  %v1842 = vmax.f32 %v1794, 0.0
  %v1843 = vmax.f32 %v1795, 0.0
  %v1844 = vmax.f32 %v1796, 0.0
  %v1845 = vmax.f32 %v1797, 0.0
  %v1846 = vmax.f32 %v1798, 0.0
  %v1847 = vmax.f32 %v1799, 0.0
  %v1848 = vmax.f32 %v1800, 0.0
  %v1849 = vmax.f32 %v1801, 0.0
  %v1850 = vmax.f32 %v1802, 0.0
  %v1851 = vmax.f32 %v1803, 0.0
  %v1852 = vmax.f32 %v1804, 0.0
  %v1853 = vmax.f32 %v1805, 0.0
  %v1854 = vmax.f32 %v1806, 0.0
  %v1855 = vmax.f32 %v1807, 0.0
  %v1856 = vmax.f32 %v1808, 0.0
  %v1857 = vmax.f32 %v1809, 0.0
  %v1858 = vmax.f32 %v1810, 0.0
  %v1859 = vmax.f32 %v1811, 0.0
  %v1860 = vmax.f32 %v1812, 0.0
  %v1861 = vmax.f32 %v1813, 0.0
  %v1862 = vmax.f32 %v1814, 0.0
  %v1863 = vmax.f32 %v1815, 0.0
  %v1864 = vmax.f32 %v1816, 0.0
  %v1865 = vmax.f32 %v1817, 0.0
  %v1866 = vmax.f32 %v1818, 0.0
  %v1867 = vmax.f32 %v1819, 0.0
  %v1868 = vmax.f32 %v1820, 0.0
  %v1869 = vmax.f32 %v1821, 0.0
  %v1870 = vmax.f32 %v1822, 0.0
  %v1871 = vmax.f32 %v1823, 0.0
  %v1872 = vmax.f32 %v1824, 0.0
  %v1873 = vmax.f32 %v1825, 0.0
  %v1874 = vmax.f32 %v1826, 0.0
  %v1875 = vmax.f32 %v1827, 0.0
  %v1876 = vmax.f32 %v1828, 0.0
  %v1877 = vmax.f32 %v1829, 0.0
  %v1878 = vmax.f32 %v1830, 0.0
  %vm1879 = vcmask 1048448
  %1880 = vrot.lane.b32.xlu0 %v1831, 112
  %v1881 = vpop.permute.xlu0 %1880
  %1882 = vrot.lane.b32.xlu0 %v1833, 112
  %v1883 = vpop.permute.xlu0 %1882
  %1884 = vrot.lane.b32.xlu0 %v1835, 112
  %v1885 = vpop.permute.xlu0 %1884
  %1886 = vrot.lane.b32.xlu0 %v1837, 112
  %v1887 = vpop.permute.xlu0 %1886
  %1888 = vrot.lane.b32.xlu0 %v1839, 112
  %v1889 = vpop.permute.xlu0 %1888
  %1890 = vrot.lane.b32.xlu0 %v1841, 112
  %v1891 = vpop.permute.xlu0 %1890
  %1892 = vrot.lane.b32.xlu0 %v1843, 112
  %v1893 = vpop.permute.xlu0 %1892
  %1894 = vrot.lane.b32.xlu0 %v1845, 112
  %v1895 = vpop.permute.xlu0 %1894
  %1896 = vrot.lane.b32.xlu0 %v1847, 112
  %v1897 = vpop.permute.xlu0 %1896
  %1898 = vrot.lane.b32.xlu0 %v1849, 112
  %v1899 = vpop.permute.xlu0 %1898
  %1900 = vrot.lane.b32.xlu0 %v1851, 112
  %v1901 = vpop.permute.xlu0 %1900
  %1902 = vrot.lane.b32.xlu0 %v1853, 112
  %v1903 = vpop.permute.xlu0 %1902
  %1904 = vrot.lane.b32.xlu0 %v1855, 112
  %v1905 = vpop.permute.xlu0 %1904
  %1906 = vrot.lane.b32.xlu0 %v1857, 112
  %v1907 = vpop.permute.xlu0 %1906
  %1908 = vrot.lane.b32.xlu0 %v1859, 112
  %v1909 = vpop.permute.xlu0 %1908
  %1910 = vrot.lane.b32.xlu0 %v1861, 112
  %v1911 = vpop.permute.xlu0 %1910
  %1912 = vrot.lane.b32.xlu0 %v1863, 112
  %v1913 = vpop.permute.xlu0 %1912
  %1914 = vrot.lane.b32.xlu0 %v1865, 112
  %v1915 = vpop.permute.xlu0 %1914
  %1916 = vrot.lane.b32.xlu0 %v1867, 112
  %v1917 = vpop.permute.xlu0 %1916
  %1918 = vrot.lane.b32.xlu0 %v1869, 112
  %v1919 = vpop.permute.xlu0 %1918
  %1920 = vrot.lane.b32.xlu0 %v1871, 112
  %v1921 = vpop.permute.xlu0 %1920
  %1922 = vrot.lane.b32.xlu0 %v1873, 112
  %v1923 = vpop.permute.xlu0 %1922
  %1924 = vrot.lane.b32.xlu0 %v1875, 112
  %v1925 = vpop.permute.xlu0 %1924
  %1926 = vrot.lane.b32.xlu0 %v1877, 112
  %v1927 = vpop.permute.xlu0 %1926
  %v1928 = vsel %vm1879, %v1881, %v1832
  %v1929 = vsel %vm1879, %v1883, %v1834
  %v1930 = vsel %vm1879, %v1885, %v1836
  %v1931 = vsel %vm1879, %v1887, %v1838
  %v1932 = vsel %vm1879, %v1889, %v1840
  %v1933 = vsel %vm1879, %v1891, %v1842
  %v1934 = vsel %vm1879, %v1893, %v1844
  %v1935 = vsel %vm1879, %v1895, %v1846
  %v1936 = vsel %vm1879, %v1897, %v1848
  %v1937 = vsel %vm1879, %v1899, %v1850
  %v1938 = vsel %vm1879, %v1901, %v1852
  %v1939 = vsel %vm1879, %v1903, %v1854
  %v1940 = vsel %vm1879, %v1905, %v1856
  %v1941 = vsel %vm1879, %v1907, %v1858
  %v1942 = vsel %vm1879, %v1909, %v1860
  %v1943 = vsel %vm1879, %v1911, %v1862
  %v1944 = vsel %vm1879, %v1913, %v1864
  %v1945 = vsel %vm1879, %v1915, %v1866
  %v1946 = vsel %vm1879, %v1917, %v1868
  %v1947 = vsel %vm1879, %v1919, %v1870
  %v1948 = vsel %vm1879, %v1921, %v1872
  %v1949 = vsel %vm1879, %v1923, %v1874
  %v1950 = vsel %vm1879, %v1925, %v1876
  %v1951 = vsel %vm1879, %v1927, %v1878
  %2000 = vrot.lane.b32.xlu0 %v1831, 118
  %v2001 = vpop.permute.xlu0 %2000
  %2002 = vrot.lane.b32.xlu0 %v1928, 118
  %v2003 = vpop.permute.xlu0 %2002
  %2004 = vrot.lane.b32.xlu0 %v1833, 118
  %v2005 = vpop.permute.xlu0 %2004
  %2006 = vrot.lane.b32.xlu0 %v1929, 118
  %v2007 = vpop.permute.xlu0 %2006
  %2008 = vrot.lane.b32.xlu0 %v1835, 118
  %v2009 = vpop.permute.xlu0 %2008
  %2010 = vrot.lane.b32.xlu0 %v1930, 118
  %v2011 = vpop.permute.xlu0 %2010
  %2012 = vrot.lane.b32.xlu0 %v1837, 118
  %v2013 = vpop.permute.xlu0 %2012
  %2014 = vrot.lane.b32.xlu0 %v1931, 118
  %v2015 = vpop.permute.xlu0 %2014
  %2016 = vrot.lane.b32.xlu0 %v1839, 118
  %v2017 = vpop.permute.xlu0 %2016
  %2018 = vrot.lane.b32.xlu0 %v1932, 118
  %v2019 = vpop.permute.xlu0 %2018
  %2020 = vrot.lane.b32.xlu0 %v1841, 118
  %v2021 = vpop.permute.xlu0 %2020
  %2022 = vrot.lane.b32.xlu0 %v1933, 118
  %v2023 = vpop.permute.xlu0 %2022
  %2024 = vrot.lane.b32.xlu0 %v1843, 118
  %v2025 = vpop.permute.xlu0 %2024
  %2026 = vrot.lane.b32.xlu0 %v1934, 118
  %v2027 = vpop.permute.xlu0 %2026
  %2028 = vrot.lane.b32.xlu0 %v1845, 118
  %v2029 = vpop.permute.xlu0 %2028
  %2030 = vrot.lane.b32.xlu0 %v1935, 118
  %v2031 = vpop.permute.xlu0 %2030
  %2032 = vrot.lane.b32.xlu0 %v1847, 118
  %v2033 = vpop.permute.xlu0 %2032
  %2034 = vrot.lane.b32.xlu0 %v1936, 118
  %v2035 = vpop.permute.xlu0 %2034
  %2036 = vrot.lane.b32.xlu0 %v1849, 118
  %v2037 = vpop.permute.xlu0 %2036
  %2038 = vrot.lane.b32.xlu0 %v1937, 118
  %v2039 = vpop.permute.xlu0 %2038
  %2040 = vrot.lane.b32.xlu0 %v1851, 118
  %v2041 = vpop.permute.xlu0 %2040
  %2042 = vrot.lane.b32.xlu0 %v1938, 118
  %v2043 = vpop.permute.xlu0 %2042
  %2044 = vrot.lane.b32.xlu0 %v1853, 118
  %v2045 = vpop.permute.xlu0 %2044
  %2046 = vrot.lane.b32.xlu0 %v1939, 118
  %v2047 = vpop.permute.xlu0 %2046
  %2048 = vrot.lane.b32.xlu0 %v1855, 118
  %v2049 = vpop.permute.xlu0 %2048
  %2050 = vrot.lane.b32.xlu0 %v1940, 118
  %v2051 = vpop.permute.xlu0 %2050
  %2052 = vrot.lane.b32.xlu0 %v1857, 118
  %v2053 = vpop.permute.xlu0 %2052
  %2054 = vrot.lane.b32.xlu0 %v1941, 118
  %v2055 = vpop.permute.xlu0 %2054
  %2056 = vrot.lane.b32.xlu0 %v1859, 118
  %v2057 = vpop.permute.xlu0 %2056
  %2058 = vrot.lane.b32.xlu0 %v1942, 118
  %v2059 = vpop.permute.xlu0 %2058
  %2060 = vrot.lane.b32.xlu0 %v1861, 118
  %v2061 = vpop.permute.xlu0 %2060
  %2062 = vrot.lane.b32.xlu0 %v1943, 118
  %v2063 = vpop.permute.xlu0 %2062
  %2064 = vrot.lane.b32.xlu0 %v1863, 118
  %v2065 = vpop.permute.xlu0 %2064
  %2066 = vrot.lane.b32.xlu0 %v1944, 118
  %v2067 = vpop.permute.xlu0 %2066
  %2068 = vrot.lane.b32.xlu0 %v1865, 118
  %v2069 = vpop.permute.xlu0 %2068
  %2070 = vrot.lane.b32.xlu0 %v1945, 118
  %v2071 = vpop.permute.xlu0 %2070
  %2072 = vrot.lane.b32.xlu0 %v1867, 118
  %v2073 = vpop.permute.xlu0 %2072
  %2074 = vrot.lane.b32.xlu0 %v1946, 118
  %v2075 = vpop.permute.xlu0 %2074
  %2076 = vrot.lane.b32.xlu0 %v1869, 118
  %v2077 = vpop.permute.xlu0 %2076
  %2078 = vrot.lane.b32.xlu0 %v1947, 118
  %v2079 = vpop.permute.xlu0 %2078
  %2080 = vrot.lane.b32.xlu0 %v1871, 118
  %v2081 = vpop.permute.xlu0 %2080
  %2082 = vrot.lane.b32.xlu0 %v1948, 118
  %v2083 = vpop.permute.xlu0 %2082
  %2084 = vrot.lane.b32.xlu0 %v1873, 118
  %v2085 = vpop.permute.xlu0 %2084
  %2086 = vrot.lane.b32.xlu0 %v1949, 118
  %v2087 = vpop.permute.xlu0 %2086
  %2088 = vrot.lane.b32.xlu0 %v1875, 118
  %v2089 = vpop.permute.xlu0 %2088
  %2090 = vrot.lane.b32.xlu0 %v1950, 118
  %v2091 = vpop.permute.xlu0 %2090
  %2092 = vrot.lane.b32.xlu0 %v1877, 118
  %v2093 = vpop.permute.xlu0 %2092
  %2094 = vrot.lane.b32.xlu0 %v1951, 118
  %v2095 = vpop.permute.xlu0 %2094
  %vm2096 = vcmask 965632
  %v2097 = vsel %vm2096, %v2001, %v2003
  %v2098 = vsel %vm2096, %v2005, %v2007
  %v2099 = vsel %vm2096, %v2009, %v2011
  %v2100 = vsel %vm2096, %v2013, %v2015
  %v2101 = vsel %vm2096, %v2017, %v2019
  %v2102 = vsel %vm2096, %v2021, %v2023
  %v2103 = vsel %vm2096, %v2025, %v2027
  %v2104 = vsel %vm2096, %v2029, %v2031
  %v2105 = vsel %vm2096, %v2033, %v2035
  %v2106 = vsel %vm2096, %v2037, %v2039
  %v2107 = vsel %vm2096, %v2041, %v2043
  %v2108 = vsel %vm2096, %v2045, %v2047
  %v2109 = vsel %vm2096, %v2049, %v2051
  %v2110 = vsel %vm2096, %v2053, %v2055
  %v2111 = vsel %vm2096, %v2057, %v2059
  %v2112 = vsel %vm2096, %v2061, %v2063
  %v2113 = vsel %vm2096, %v2065, %v2067
  %v2114 = vsel %vm2096, %v2069, %v2071
  %v2115 = vsel %vm2096, %v2073, %v2075
  %v2116 = vsel %vm2096, %v2077, %v2079
  %v2117 = vsel %vm2096, %v2081, %v2083
  %v2118 = vsel %vm2096, %v2085, %v2087
  %v2119 = vsel %vm2096, %v2089, %v2091
  %v2120 = vsel %vm2096, %v2093, %v2095
  %v2169 = vmax.f32 %v1831, %v2097
  %v2170 = vmax.f32 %v1832, %v2003
  %v2171 = vmax.f32 %v1833, %v2098
  %v2172 = vmax.f32 %v1834, %v2007
  %v2173 = vmax.f32 %v1835, %v2099
  %v2174 = vmax.f32 %v1836, %v2011
  %v2175 = vmax.f32 %v1837, %v2100
  %v2176 = vmax.f32 %v1838, %v2015
  %v2177 = vmax.f32 %v1839, %v2101
  %v2178 = vmax.f32 %v1840, %v2019
  %v2179 = vmax.f32 %v1841, %v2102
  %v2180 = vmax.f32 %v1842, %v2023
  %v2181 = vmax.f32 %v1843, %v2103
  %v2182 = vmax.f32 %v1844, %v2027
  %v2183 = vmax.f32 %v1845, %v2104
  %v2184 = vmax.f32 %v1846, %v2031
  %v2185 = vmax.f32 %v1847, %v2105
  %v2186 = vmax.f32 %v1848, %v2035
  %v2187 = vmax.f32 %v1849, %v2106
  %v2188 = vmax.f32 %v1850, %v2039
  %v2189 = vmax.f32 %v1851, %v2107
  %v2190 = vmax.f32 %v1852, %v2043
  %v2191 = vmax.f32 %v1853, %v2108
  %v2192 = vmax.f32 %v1854, %v2047
  %v2193 = vmax.f32 %v1855, %v2109
  %v2194 = vmax.f32 %v1856, %v2051
  %v2195 = vmax.f32 %v1857, %v2110
  %v2196 = vmax.f32 %v1858, %v2055
  %v2197 = vmax.f32 %v1859, %v2111
  %v2198 = vmax.f32 %v1860, %v2059
  %v2199 = vmax.f32 %v1861, %v2112
  %v2200 = vmax.f32 %v1862, %v2063
  %v2201 = vmax.f32 %v1863, %v2113
  %v2202 = vmax.f32 %v1864, %v2067
  %v2203 = vmax.f32 %v1865, %v2114
  %v2204 = vmax.f32 %v1866, %v2071
  %v2205 = vmax.f32 %v1867, %v2115
  %v2206 = vmax.f32 %v1868, %v2075
  %v2207 = vmax.f32 %v1869, %v2116
  %v2208 = vmax.f32 %v1870, %v2079
  %v2209 = vmax.f32 %v1871, %v2117
  %v2210 = vmax.f32 %v1872, %v2083
  %v2211 = vmax.f32 %v1873, %v2118
  %v2212 = vmax.f32 %v1874, %v2087
  %v2213 = vmax.f32 %v1875, %v2119
  %v2214 = vmax.f32 %v1876, %v2091
  %v2215 = vmax.f32 %v1877, %v2120
  %v2216 = vmax.f32 %v1878, %v2095
  %v2265 = vcombine.low %v2169, %v2170
  %v2266 = vcombine.high %v2169, %v2170
  %v2268 = vunpack.c.l.s4 1983009808
  %v2269 = vunpack.c.0.s8 %v2268
  %v2270 = vlaneseq
  %v2271 = vshrl.u32 %v2270, 7
  %v2272 = vsub.s32 %v2269, %v2271
  %v2273 = vrot.slane %v2265, %v2272
  %v2275 = vunpack.c.l.s4 1983009808
  %v2276 = vunpack.c.0.s8 %v2275
  %v2277 = vlaneseq
  %v2278 = vshrl.u32 %v2277, 7
  %v2279 = vsub.s32 %v2276, %v2278
  %v2280 = vrot.slane %v2266, %v2279
  %v2281 = vcombine.high %v2273, %v2273
  %v2282 = vcombine.high %v2280, %v2280
  %v2283 = vcombine.low %v2171, %v2172
  %v2284 = vcombine.high %v2171, %v2172
  %v2286 = vunpack.c.l.s4 1983009808
  %v2287 = vunpack.c.0.s8 %v2286
  %v2288 = vlaneseq
  %v2289 = vshrl.u32 %v2288, 7
  %v2290 = vsub.s32 %v2287, %v2289
  %v2291 = vrot.slane %v2283, %v2290
  %v2293 = vunpack.c.l.s4 1983009808
  %v2294 = vunpack.c.0.s8 %v2293
  %v2295 = vlaneseq
  %v2296 = vshrl.u32 %v2295, 7
  %v2297 = vsub.s32 %v2294, %v2296
  %v2298 = vrot.slane %v2284, %v2297
  %v2299 = vcombine.high %v2291, %v2291
  %v2300 = vcombine.high %v2298, %v2298
  %v2301 = vcombine.low %v2173, %v2174
  %v2302 = vcombine.high %v2173, %v2174
  %v2304 = vunpack.c.l.s4 1983009808
  %v2305 = vunpack.c.0.s8 %v2304
  %v2306 = vlaneseq
  %v2307 = vshrl.u32 %v2306, 7
  %v2308 = vsub.s32 %v2305, %v2307
  %v2309 = vrot.slane %v2301, %v2308
  %v2311 = vunpack.c.l.s4 1983009808
  %v2312 = vunpack.c.0.s8 %v2311
  %v2313 = vlaneseq
  %v2314 = vshrl.u32 %v2313, 7
  %v2315 = vsub.s32 %v2312, %v2314
  %v2316 = vrot.slane %v2302, %v2315
  %v2317 = vcombine.high %v2309, %v2309
  %v2318 = vcombine.high %v2316, %v2316
  %v2319 = vcombine.low %v2175, %v2176
  %v2320 = vcombine.high %v2175, %v2176
  %v2322 = vunpack.c.l.s4 1983009808
  %v2323 = vunpack.c.0.s8 %v2322
  %v2324 = vlaneseq
  %v2325 = vshrl.u32 %v2324, 7
  %v2326 = vsub.s32 %v2323, %v2325
  %v2327 = vrot.slane %v2319, %v2326
  %v2329 = vunpack.c.l.s4 1983009808
  %v2330 = vunpack.c.0.s8 %v2329
  %v2331 = vlaneseq
  %v2332 = vshrl.u32 %v2331, 7
  %v2333 = vsub.s32 %v2330, %v2332
  %v2334 = vrot.slane %v2320, %v2333
  %v2335 = vcombine.high %v2327, %v2327
  %v2336 = vcombine.high %v2334, %v2334
  %v2337 = vcombine.low %v2177, %v2178
  %v2338 = vcombine.high %v2177, %v2178
  %v2340 = vunpack.c.l.s4 1983009808
  %v2341 = vunpack.c.0.s8 %v2340
  %v2342 = vlaneseq
  %v2343 = vshrl.u32 %v2342, 7
  %v2344 = vsub.s32 %v2341, %v2343
  %v2345 = vrot.slane %v2337, %v2344
  %v2347 = vunpack.c.l.s4 1983009808
  %v2348 = vunpack.c.0.s8 %v2347
  %v2349 = vlaneseq
  %v2350 = vshrl.u32 %v2349, 7
  %v2351 = vsub.s32 %v2348, %v2350
  %v2352 = vrot.slane %v2338, %v2351
  %v2353 = vcombine.high %v2345, %v2345
  %v2354 = vcombine.high %v2352, %v2352
  %v2355 = vcombine.low %v2179, %v2180
  %v2356 = vcombine.high %v2179, %v2180
  %v2358 = vunpack.c.l.s4 1983009808
  %v2359 = vunpack.c.0.s8 %v2358
  %v2360 = vlaneseq
  %v2361 = vshrl.u32 %v2360, 7
  %v2362 = vsub.s32 %v2359, %v2361
  %v2363 = vrot.slane %v2355, %v2362
  %v2365 = vunpack.c.l.s4 1983009808
  %v2366 = vunpack.c.0.s8 %v2365
  %v2367 = vlaneseq
  %v2368 = vshrl.u32 %v2367, 7
  %v2369 = vsub.s32 %v2366, %v2368
  %v2370 = vrot.slane %v2356, %v2369
  %v2371 = vcombine.high %v2363, %v2363
  %v2372 = vcombine.high %v2370, %v2370
  %v2373 = vcombine.low %v2181, %v2182
  %v2374 = vcombine.high %v2181, %v2182
  %v2376 = vunpack.c.l.s4 1983009808
  %v2377 = vunpack.c.0.s8 %v2376
  %v2378 = vlaneseq
  %v2379 = vshrl.u32 %v2378, 7
  %v2380 = vsub.s32 %v2377, %v2379
  %v2381 = vrot.slane %v2373, %v2380
  %v2383 = vunpack.c.l.s4 1983009808
  %v2384 = vunpack.c.0.s8 %v2383
  %v2385 = vlaneseq
  %v2386 = vshrl.u32 %v2385, 7
  %v2387 = vsub.s32 %v2384, %v2386
  %v2388 = vrot.slane %v2374, %v2387
  %v2389 = vcombine.high %v2381, %v2381
  %v2390 = vcombine.high %v2388, %v2388
  %v2391 = vcombine.low %v2183, %v2184
  %v2392 = vcombine.high %v2183, %v2184
  %v2394 = vunpack.c.l.s4 1983009808
  %v2395 = vunpack.c.0.s8 %v2394
  %v2396 = vlaneseq
  %v2397 = vshrl.u32 %v2396, 7
  %v2398 = vsub.s32 %v2395, %v2397
  %v2399 = vrot.slane %v2391, %v2398
  %v2401 = vunpack.c.l.s4 1983009808
  %v2402 = vunpack.c.0.s8 %v2401
  %v2403 = vlaneseq
  %v2404 = vshrl.u32 %v2403, 7
  %v2405 = vsub.s32 %v2402, %v2404
  %v2406 = vrot.slane %v2392, %v2405
  %v2407 = vcombine.high %v2399, %v2399
  %v2408 = vcombine.high %v2406, %v2406
  %v2409 = vcombine.low %v2185, %v2186
  %v2410 = vcombine.high %v2185, %v2186
  %v2412 = vunpack.c.l.s4 1983009808
  %v2413 = vunpack.c.0.s8 %v2412
  %v2414 = vlaneseq
  %v2415 = vshrl.u32 %v2414, 7
  %v2416 = vsub.s32 %v2413, %v2415
  %v2417 = vrot.slane %v2409, %v2416
  %v2419 = vunpack.c.l.s4 1983009808
  %v2420 = vunpack.c.0.s8 %v2419
  %v2421 = vlaneseq
  %v2422 = vshrl.u32 %v2421, 7
  %v2423 = vsub.s32 %v2420, %v2422
  %v2424 = vrot.slane %v2410, %v2423
  %v2425 = vcombine.high %v2417, %v2417
  %v2426 = vcombine.high %v2424, %v2424
  %v2427 = vcombine.low %v2187, %v2188
  %v2428 = vcombine.high %v2187, %v2188
  %v2430 = vunpack.c.l.s4 1983009808
  %v2431 = vunpack.c.0.s8 %v2430
  %v2432 = vlaneseq
  %v2433 = vshrl.u32 %v2432, 7
  %v2434 = vsub.s32 %v2431, %v2433
  %v2435 = vrot.slane %v2427, %v2434
  %v2437 = vunpack.c.l.s4 1983009808
  %v2438 = vunpack.c.0.s8 %v2437
  %v2439 = vlaneseq
  %v2440 = vshrl.u32 %v2439, 7
  %v2441 = vsub.s32 %v2438, %v2440
  %v2442 = vrot.slane %v2428, %v2441
  %v2443 = vcombine.high %v2435, %v2435
  %v2444 = vcombine.high %v2442, %v2442
  %v2445 = vcombine.low %v2189, %v2190
  %v2446 = vcombine.high %v2189, %v2190
  %v2448 = vunpack.c.l.s4 1983009808
  %v2449 = vunpack.c.0.s8 %v2448
  %v2450 = vlaneseq
  %v2451 = vshrl.u32 %v2450, 7
  %v2452 = vsub.s32 %v2449, %v2451
  %v2453 = vrot.slane %v2445, %v2452
  %v2455 = vunpack.c.l.s4 1983009808
  %v2456 = vunpack.c.0.s8 %v2455
  %v2457 = vlaneseq
  %v2458 = vshrl.u32 %v2457, 7
  %v2459 = vsub.s32 %v2456, %v2458
  %v2460 = vrot.slane %v2446, %v2459
  %v2461 = vcombine.high %v2453, %v2453
  %v2462 = vcombine.high %v2460, %v2460
  %v2463 = vcombine.low %v2191, %v2192
  %v2464 = vcombine.high %v2191, %v2192
  %v2466 = vunpack.c.l.s4 1983009808
  %v2467 = vunpack.c.0.s8 %v2466
  %v2468 = vlaneseq
  %v2469 = vshrl.u32 %v2468, 7
  %v2470 = vsub.s32 %v2467, %v2469
  %v2471 = vrot.slane %v2463, %v2470
  %v2473 = vunpack.c.l.s4 1983009808
  %v2474 = vunpack.c.0.s8 %v2473
  %v2475 = vlaneseq
  %v2476 = vshrl.u32 %v2475, 7
  %v2477 = vsub.s32 %v2474, %v2476
  %v2478 = vrot.slane %v2464, %v2477
  %v2479 = vcombine.high %v2471, %v2471
  %v2480 = vcombine.high %v2478, %v2478
  %v2481 = vcombine.low %v2193, %v2194
  %v2482 = vcombine.high %v2193, %v2194
  %v2484 = vunpack.c.l.s4 1983009808
  %v2485 = vunpack.c.0.s8 %v2484
  %v2486 = vlaneseq
  %v2487 = vshrl.u32 %v2486, 7
  %v2488 = vsub.s32 %v2485, %v2487
  %v2489 = vrot.slane %v2481, %v2488
  %v2491 = vunpack.c.l.s4 1983009808
  %v2492 = vunpack.c.0.s8 %v2491
  %v2493 = vlaneseq
  %v2494 = vshrl.u32 %v2493, 7
  %v2495 = vsub.s32 %v2492, %v2494
  %v2496 = vrot.slane %v2482, %v2495
  %v2497 = vcombine.high %v2489, %v2489
  %v2498 = vcombine.high %v2496, %v2496
  %v2499 = vcombine.low %v2195, %v2196
  %v2500 = vcombine.high %v2195, %v2196
  %v2502 = vunpack.c.l.s4 1983009808
  %v2503 = vunpack.c.0.s8 %v2502
  %v2504 = vlaneseq
  %v2505 = vshrl.u32 %v2504, 7
  %v2506 = vsub.s32 %v2503, %v2505
  %v2507 = vrot.slane %v2499, %v2506
  %v2509 = vunpack.c.l.s4 1983009808
  %v2510 = vunpack.c.0.s8 %v2509
  %v2511 = vlaneseq
  %v2512 = vshrl.u32 %v2511, 7
  %v2513 = vsub.s32 %v2510, %v2512
  %v2514 = vrot.slane %v2500, %v2513
  %v2515 = vcombine.high %v2507, %v2507
  %v2516 = vcombine.high %v2514, %v2514
  %v2517 = vcombine.low %v2197, %v2198
  %v2518 = vcombine.high %v2197, %v2198
  %v2520 = vunpack.c.l.s4 1983009808
  %v2521 = vunpack.c.0.s8 %v2520
  %v2522 = vlaneseq
  %v2523 = vshrl.u32 %v2522, 7
  %v2524 = vsub.s32 %v2521, %v2523
  %v2525 = vrot.slane %v2517, %v2524
  %v2527 = vunpack.c.l.s4 1983009808
  %v2528 = vunpack.c.0.s8 %v2527
  %v2529 = vlaneseq
  %v2530 = vshrl.u32 %v2529, 7
  %v2531 = vsub.s32 %v2528, %v2530
  %v2532 = vrot.slane %v2518, %v2531
  %v2533 = vcombine.high %v2525, %v2525
  %v2534 = vcombine.high %v2532, %v2532
  %v2535 = vcombine.low %v2199, %v2200
  %v2536 = vcombine.high %v2199, %v2200
  %v2538 = vunpack.c.l.s4 1983009808
  %v2539 = vunpack.c.0.s8 %v2538
  %v2540 = vlaneseq
  %v2541 = vshrl.u32 %v2540, 7
  %v2542 = vsub.s32 %v2539, %v2541
  %v2543 = vrot.slane %v2535, %v2542
  %v2545 = vunpack.c.l.s4 1983009808
  %v2546 = vunpack.c.0.s8 %v2545
  %v2547 = vlaneseq
  %v2548 = vshrl.u32 %v2547, 7
  %v2549 = vsub.s32 %v2546, %v2548
  %v2550 = vrot.slane %v2536, %v2549
  %v2551 = vcombine.high %v2543, %v2543
  %v2552 = vcombine.high %v2550, %v2550
  %v2553 = vcombine.low %v2201, %v2202
  %v2554 = vcombine.high %v2201, %v2202
  %v2556 = vunpack.c.l.s4 1983009808
  %v2557 = vunpack.c.0.s8 %v2556
  %v2558 = vlaneseq
  %v2559 = vshrl.u32 %v2558, 7
  %v2560 = vsub.s32 %v2557, %v2559
  %v2561 = vrot.slane %v2553, %v2560
  %v2563 = vunpack.c.l.s4 1983009808
  %v2564 = vunpack.c.0.s8 %v2563
  %v2565 = vlaneseq
  %v2566 = vshrl.u32 %v2565, 7
  %v2567 = vsub.s32 %v2564, %v2566
  %v2568 = vrot.slane %v2554, %v2567
  %v2569 = vcombine.high %v2561, %v2561
  %v2570 = vcombine.high %v2568, %v2568
  %v2571 = vcombine.low %v2203, %v2204
  %v2572 = vcombine.high %v2203, %v2204
  %v2574 = vunpack.c.l.s4 1983009808
  %v2575 = vunpack.c.0.s8 %v2574
  %v2576 = vlaneseq
  %v2577 = vshrl.u32 %v2576, 7
  %v2578 = vsub.s32 %v2575, %v2577
  %v2579 = vrot.slane %v2571, %v2578
  %v2581 = vunpack.c.l.s4 1983009808
  %v2582 = vunpack.c.0.s8 %v2581
  %v2583 = vlaneseq
  %v2584 = vshrl.u32 %v2583, 7
  %v2585 = vsub.s32 %v2582, %v2584
  %v2586 = vrot.slane %v2572, %v2585
  %v2587 = vcombine.high %v2579, %v2579
  %v2588 = vcombine.high %v2586, %v2586
  %v2589 = vcombine.low %v2205, %v2206
  %v2590 = vcombine.high %v2205, %v2206
  %v2592 = vunpack.c.l.s4 1983009808
  %v2593 = vunpack.c.0.s8 %v2592
  %v2594 = vlaneseq
  %v2595 = vshrl.u32 %v2594, 7
  %v2596 = vsub.s32 %v2593, %v2595
  %v2597 = vrot.slane %v2589, %v2596
  %v2599 = vunpack.c.l.s4 1983009808
  %v2600 = vunpack.c.0.s8 %v2599
  %v2601 = vlaneseq
  %v2602 = vshrl.u32 %v2601, 7
  %v2603 = vsub.s32 %v2600, %v2602
  %v2604 = vrot.slane %v2590, %v2603
  %v2605 = vcombine.high %v2597, %v2597
  %v2606 = vcombine.high %v2604, %v2604
  %v2607 = vcombine.low %v2207, %v2208
  %v2608 = vcombine.high %v2207, %v2208
  %v2610 = vunpack.c.l.s4 1983009808
  %v2611 = vunpack.c.0.s8 %v2610
  %v2612 = vlaneseq
  %v2613 = vshrl.u32 %v2612, 7
  %v2614 = vsub.s32 %v2611, %v2613
  %v2615 = vrot.slane %v2607, %v2614
  %v2617 = vunpack.c.l.s4 1983009808
  %v2618 = vunpack.c.0.s8 %v2617
  %v2619 = vlaneseq
  %v2620 = vshrl.u32 %v2619, 7
  %v2621 = vsub.s32 %v2618, %v2620
  %v2622 = vrot.slane %v2608, %v2621
  %v2623 = vcombine.high %v2615, %v2615
  %v2624 = vcombine.high %v2622, %v2622
  %v2625 = vcombine.low %v2209, %v2210
  %v2626 = vcombine.high %v2209, %v2210
  %v2628 = vunpack.c.l.s4 1983009808
  %v2629 = vunpack.c.0.s8 %v2628
  %v2630 = vlaneseq
  %v2631 = vshrl.u32 %v2630, 7
  %v2632 = vsub.s32 %v2629, %v2631
  %v2633 = vrot.slane %v2625, %v2632
  %v2635 = vunpack.c.l.s4 1983009808
  %v2636 = vunpack.c.0.s8 %v2635
  %v2637 = vlaneseq
  %v2638 = vshrl.u32 %v2637, 7
  %v2639 = vsub.s32 %v2636, %v2638
  %v2640 = vrot.slane %v2626, %v2639
  %v2641 = vcombine.high %v2633, %v2633
  %v2642 = vcombine.high %v2640, %v2640
  %v2643 = vcombine.low %v2211, %v2212
  %v2644 = vcombine.high %v2211, %v2212
  %v2646 = vunpack.c.l.s4 1983009808
  %v2647 = vunpack.c.0.s8 %v2646
  %v2648 = vlaneseq
  %v2649 = vshrl.u32 %v2648, 7
  %v2650 = vsub.s32 %v2647, %v2649
  %v2651 = vrot.slane %v2643, %v2650
  %v2653 = vunpack.c.l.s4 1983009808
  %v2654 = vunpack.c.0.s8 %v2653
  %v2655 = vlaneseq
  %v2656 = vshrl.u32 %v2655, 7
  %v2657 = vsub.s32 %v2654, %v2656
  %v2658 = vrot.slane %v2644, %v2657
  %v2659 = vcombine.high %v2651, %v2651
  %v2660 = vcombine.high %v2658, %v2658
  %v2661 = vcombine.low %v2213, %v2214
  %v2662 = vcombine.high %v2213, %v2214
  %v2664 = vunpack.c.l.s4 1983009808
  %v2665 = vunpack.c.0.s8 %v2664
  %v2666 = vlaneseq
  %v2667 = vshrl.u32 %v2666, 7
  %v2668 = vsub.s32 %v2665, %v2667
  %v2669 = vrot.slane %v2661, %v2668
  %v2671 = vunpack.c.l.s4 1983009808
  %v2672 = vunpack.c.0.s8 %v2671
  %v2673 = vlaneseq
  %v2674 = vshrl.u32 %v2673, 7
  %v2675 = vsub.s32 %v2672, %v2674
  %v2676 = vrot.slane %v2662, %v2675
  %v2677 = vcombine.high %v2669, %v2669
  %v2678 = vcombine.high %v2676, %v2676
  %v2679 = vcombine.low %v2215, %v2216
  %v2680 = vcombine.high %v2215, %v2216
  %v2682 = vunpack.c.l.s4 1983009808
  %v2683 = vunpack.c.0.s8 %v2682
  %v2684 = vlaneseq
  %v2685 = vshrl.u32 %v2684, 7
  %v2686 = vsub.s32 %v2683, %v2685
  %v2687 = vrot.slane %v2679, %v2686
  %v2689 = vunpack.c.l.s4 1983009808
  %v2690 = vunpack.c.0.s8 %v2689
  %v2691 = vlaneseq
  %v2692 = vshrl.u32 %v2691, 7
  %v2693 = vsub.s32 %v2690, %v2692
  %v2694 = vrot.slane %v2680, %v2693
  %v2695 = vcombine.high %v2687, %v2687
  %v2696 = vcombine.high %v2694, %v2694
  %v2698 = vunpack.c.l.s4 1983009808
  %v2699 = vunpack.c.0.s8 %v2698
  %v2700 = vlaneseq
  %v2701 = vshrl.u32 %v2700, 7
  %v2702 = vsub.s32 %v2699, %v2701
  %v2703 = vrot.slane %v2273, %v2702
  %v2704 = vcombine.high %v2703, %v2703
  %v2706 = vunpack.c.l.s4 1983009808
  %v2707 = vunpack.c.0.s8 %v2706
  %v2708 = vlaneseq
  %v2709 = vshrl.u32 %v2708, 7
  %v2710 = vsub.s32 %v2707, %v2709
  %v2711 = vrot.slane %v2281, %v2710
  %v2712 = vcombine.high %v2711, %v2711
  %v2714 = vunpack.c.l.s4 1983009808
  %v2715 = vunpack.c.0.s8 %v2714
  %v2716 = vlaneseq
  %v2717 = vshrl.u32 %v2716, 7
  %v2718 = vsub.s32 %v2715, %v2717
  %v2719 = vrot.slane %v2280, %v2718
  %v2720 = vcombine.high %v2719, %v2719
  %v2722 = vunpack.c.l.s4 1983009808
  %v2723 = vunpack.c.0.s8 %v2722
  %v2724 = vlaneseq
  %v2725 = vshrl.u32 %v2724, 7
  %v2726 = vsub.s32 %v2723, %v2725
  %v2727 = vrot.slane %v2282, %v2726
  %v2728 = vcombine.high %v2727, %v2727
  %v2730 = vunpack.c.l.s4 1983009808
  %v2731 = vunpack.c.0.s8 %v2730
  %v2732 = vlaneseq
  %v2733 = vshrl.u32 %v2732, 7
  %v2734 = vsub.s32 %v2731, %v2733
  %v2735 = vrot.slane %v2291, %v2734
  %v2736 = vcombine.high %v2735, %v2735
  %v2738 = vunpack.c.l.s4 1983009808
  %v2739 = vunpack.c.0.s8 %v2738
  %v2740 = vlaneseq
  %v2741 = vshrl.u32 %v2740, 7
  %v2742 = vsub.s32 %v2739, %v2741
  %v2743 = vrot.slane %v2299, %v2742
  %v2744 = vcombine.high %v2743, %v2743
  %v2746 = vunpack.c.l.s4 1983009808
  %v2747 = vunpack.c.0.s8 %v2746
  %v2748 = vlaneseq
  %v2749 = vshrl.u32 %v2748, 7
  %v2750 = vsub.s32 %v2747, %v2749
  %v2751 = vrot.slane %v2298, %v2750
  %v2752 = vcombine.high %v2751, %v2751
  %v2754 = vunpack.c.l.s4 1983009808
  %v2755 = vunpack.c.0.s8 %v2754
  %v2756 = vlaneseq
  %v2757 = vshrl.u32 %v2756, 7
  %v2758 = vsub.s32 %v2755, %v2757
  %v2759 = vrot.slane %v2300, %v2758
  %v2760 = vcombine.high %v2759, %v2759
  %v2762 = vunpack.c.l.s4 1983009808
  %v2763 = vunpack.c.0.s8 %v2762
  %v2764 = vlaneseq
  %v2765 = vshrl.u32 %v2764, 7
  %v2766 = vsub.s32 %v2763, %v2765
  %v2767 = vrot.slane %v2309, %v2766
  %v2768 = vcombine.high %v2767, %v2767
  %v2770 = vunpack.c.l.s4 1983009808
  %v2771 = vunpack.c.0.s8 %v2770
  %v2772 = vlaneseq
  %v2773 = vshrl.u32 %v2772, 7
  %v2774 = vsub.s32 %v2771, %v2773
  %v2775 = vrot.slane %v2317, %v2774
  %v2776 = vcombine.high %v2775, %v2775
  %v2778 = vunpack.c.l.s4 1983009808
  %v2779 = vunpack.c.0.s8 %v2778
  %v2780 = vlaneseq
  %v2781 = vshrl.u32 %v2780, 7
  %v2782 = vsub.s32 %v2779, %v2781
  %v2783 = vrot.slane %v2316, %v2782
  %v2784 = vcombine.high %v2783, %v2783
  %v2786 = vunpack.c.l.s4 1983009808
  %v2787 = vunpack.c.0.s8 %v2786
  %v2788 = vlaneseq
  %v2789 = vshrl.u32 %v2788, 7
  %v2790 = vsub.s32 %v2787, %v2789
  %v2791 = vrot.slane %v2318, %v2790
  %v2792 = vcombine.high %v2791, %v2791
  %v2794 = vunpack.c.l.s4 1983009808
  %v2795 = vunpack.c.0.s8 %v2794
  %v2796 = vlaneseq
  %v2797 = vshrl.u32 %v2796, 7
  %v2798 = vsub.s32 %v2795, %v2797
  %v2799 = vrot.slane %v2327, %v2798
  %v2800 = vcombine.high %v2799, %v2799
  %v2802 = vunpack.c.l.s4 1983009808
  %v2803 = vunpack.c.0.s8 %v2802
  %v2804 = vlaneseq
  %v2805 = vshrl.u32 %v2804, 7
  %v2806 = vsub.s32 %v2803, %v2805
  %v2807 = vrot.slane %v2335, %v2806
  %v2808 = vcombine.high %v2807, %v2807
  %v2810 = vunpack.c.l.s4 1983009808
  %v2811 = vunpack.c.0.s8 %v2810
  %v2812 = vlaneseq
  %v2813 = vshrl.u32 %v2812, 7
  %v2814 = vsub.s32 %v2811, %v2813
  %v2815 = vrot.slane %v2334, %v2814
  %v2816 = vcombine.high %v2815, %v2815
  %v2818 = vunpack.c.l.s4 1983009808
  %v2819 = vunpack.c.0.s8 %v2818
  %v2820 = vlaneseq
  %v2821 = vshrl.u32 %v2820, 7
  %v2822 = vsub.s32 %v2819, %v2821
  %v2823 = vrot.slane %v2336, %v2822
  %v2824 = vcombine.high %v2823, %v2823
  %v2826 = vunpack.c.l.s4 1983009808
  %v2827 = vunpack.c.0.s8 %v2826
  %v2828 = vlaneseq
  %v2829 = vshrl.u32 %v2828, 7
  %v2830 = vsub.s32 %v2827, %v2829
  %v2831 = vrot.slane %v2345, %v2830
  %v2832 = vcombine.high %v2831, %v2831
  %v2834 = vunpack.c.l.s4 1983009808
  %v2835 = vunpack.c.0.s8 %v2834
  %v2836 = vlaneseq
  %v2837 = vshrl.u32 %v2836, 7
  %v2838 = vsub.s32 %v2835, %v2837
  %v2839 = vrot.slane %v2353, %v2838
  %v2840 = vcombine.high %v2839, %v2839
  %v2842 = vunpack.c.l.s4 1983009808
  %v2843 = vunpack.c.0.s8 %v2842
  %v2844 = vlaneseq
  %v2845 = vshrl.u32 %v2844, 7
  %v2846 = vsub.s32 %v2843, %v2845
  %v2847 = vrot.slane %v2352, %v2846
  %v2848 = vcombine.high %v2847, %v2847
  %v2850 = vunpack.c.l.s4 1983009808
  %v2851 = vunpack.c.0.s8 %v2850
  %v2852 = vlaneseq
  %v2853 = vshrl.u32 %v2852, 7
  %v2854 = vsub.s32 %v2851, %v2853
  %v2855 = vrot.slane %v2354, %v2854
  %v2856 = vcombine.high %v2855, %v2855
  %v2858 = vunpack.c.l.s4 1983009808
  %v2859 = vunpack.c.0.s8 %v2858
  %v2860 = vlaneseq
  %v2861 = vshrl.u32 %v2860, 7
  %v2862 = vsub.s32 %v2859, %v2861
  %v2863 = vrot.slane %v2363, %v2862
  %v2864 = vcombine.high %v2863, %v2863
  %v2866 = vunpack.c.l.s4 1983009808
  %v2867 = vunpack.c.0.s8 %v2866
  %v2868 = vlaneseq
  %v2869 = vshrl.u32 %v2868, 7
  %v2870 = vsub.s32 %v2867, %v2869
  %v2871 = vrot.slane %v2371, %v2870
  %v2872 = vcombine.high %v2871, %v2871
  %v2874 = vunpack.c.l.s4 1983009808
  %v2875 = vunpack.c.0.s8 %v2874
  %v2876 = vlaneseq
  %v2877 = vshrl.u32 %v2876, 7
  %v2878 = vsub.s32 %v2875, %v2877
  %v2879 = vrot.slane %v2370, %v2878
  %v2880 = vcombine.high %v2879, %v2879
  %v2882 = vunpack.c.l.s4 1983009808
  %v2883 = vunpack.c.0.s8 %v2882
  %v2884 = vlaneseq
  %v2885 = vshrl.u32 %v2884, 7
  %v2886 = vsub.s32 %v2883, %v2885
  %v2887 = vrot.slane %v2372, %v2886
  %v2888 = vcombine.high %v2887, %v2887
  %v2890 = vunpack.c.l.s4 1983009808
  %v2891 = vunpack.c.0.s8 %v2890
  %v2892 = vlaneseq
  %v2893 = vshrl.u32 %v2892, 7
  %v2894 = vsub.s32 %v2891, %v2893
  %v2895 = vrot.slane %v2381, %v2894
  %v2896 = vcombine.high %v2895, %v2895
  %v2898 = vunpack.c.l.s4 1983009808
  %v2899 = vunpack.c.0.s8 %v2898
  %v2900 = vlaneseq
  %v2901 = vshrl.u32 %v2900, 7
  %v2902 = vsub.s32 %v2899, %v2901
  %v2903 = vrot.slane %v2389, %v2902
  %v2904 = vcombine.high %v2903, %v2903
  %v2906 = vunpack.c.l.s4 1983009808
  %v2907 = vunpack.c.0.s8 %v2906
  %v2908 = vlaneseq
  %v2909 = vshrl.u32 %v2908, 7
  %v2910 = vsub.s32 %v2907, %v2909
  %v2911 = vrot.slane %v2388, %v2910
  %v2912 = vcombine.high %v2911, %v2911
  %v2914 = vunpack.c.l.s4 1983009808
  %v2915 = vunpack.c.0.s8 %v2914
  %v2916 = vlaneseq
  %v2917 = vshrl.u32 %v2916, 7
  %v2918 = vsub.s32 %v2915, %v2917
  %v2919 = vrot.slane %v2390, %v2918
  %v2920 = vcombine.high %v2919, %v2919
  %v2922 = vunpack.c.l.s4 1983009808
  %v2923 = vunpack.c.0.s8 %v2922
  %v2924 = vlaneseq
  %v2925 = vshrl.u32 %v2924, 7
  %v2926 = vsub.s32 %v2923, %v2925
  %v2927 = vrot.slane %v2399, %v2926
  %v2928 = vcombine.high %v2927, %v2927
  %v2930 = vunpack.c.l.s4 1983009808
  %v2931 = vunpack.c.0.s8 %v2930
  %v2932 = vlaneseq
  %v2933 = vshrl.u32 %v2932, 7
  %v2934 = vsub.s32 %v2931, %v2933
  %v2935 = vrot.slane %v2407, %v2934
  %v2936 = vcombine.high %v2935, %v2935
  %v2938 = vunpack.c.l.s4 1983009808
  %v2939 = vunpack.c.0.s8 %v2938
  %v2940 = vlaneseq
  %v2941 = vshrl.u32 %v2940, 7
  %v2942 = vsub.s32 %v2939, %v2941
  %v2943 = vrot.slane %v2406, %v2942
  %v2944 = vcombine.high %v2943, %v2943
  %v2946 = vunpack.c.l.s4 1983009808
  %v2947 = vunpack.c.0.s8 %v2946
  %v2948 = vlaneseq
  %v2949 = vshrl.u32 %v2948, 7
  %v2950 = vsub.s32 %v2947, %v2949
  %v2951 = vrot.slane %v2408, %v2950
  %v2952 = vcombine.high %v2951, %v2951
  %v2954 = vunpack.c.l.s4 1983009808
  %v2955 = vunpack.c.0.s8 %v2954
  %v2956 = vlaneseq
  %v2957 = vshrl.u32 %v2956, 7
  %v2958 = vsub.s32 %v2955, %v2957
  %v2959 = vrot.slane %v2417, %v2958
  %v2960 = vcombine.high %v2959, %v2959
  %v2962 = vunpack.c.l.s4 1983009808
  %v2963 = vunpack.c.0.s8 %v2962
  %v2964 = vlaneseq
  %v2965 = vshrl.u32 %v2964, 7
  %v2966 = vsub.s32 %v2963, %v2965
  %v2967 = vrot.slane %v2425, %v2966
  %v2968 = vcombine.high %v2967, %v2967
  %v2970 = vunpack.c.l.s4 1983009808
  %v2971 = vunpack.c.0.s8 %v2970
  %v2972 = vlaneseq
  %v2973 = vshrl.u32 %v2972, 7
  %v2974 = vsub.s32 %v2971, %v2973
  %v2975 = vrot.slane %v2424, %v2974
  %v2976 = vcombine.high %v2975, %v2975
  %v2978 = vunpack.c.l.s4 1983009808
  %v2979 = vunpack.c.0.s8 %v2978
  %v2980 = vlaneseq
  %v2981 = vshrl.u32 %v2980, 7
  %v2982 = vsub.s32 %v2979, %v2981
  %v2983 = vrot.slane %v2426, %v2982
  %v2984 = vcombine.high %v2983, %v2983
  %v2986 = vunpack.c.l.s4 1983009808
  %v2987 = vunpack.c.0.s8 %v2986
  %v2988 = vlaneseq
  %v2989 = vshrl.u32 %v2988, 7
  %v2990 = vsub.s32 %v2987, %v2989
  %v2991 = vrot.slane %v2435, %v2990
  %v2992 = vcombine.high %v2991, %v2991
  %v2994 = vunpack.c.l.s4 1983009808
  %v2995 = vunpack.c.0.s8 %v2994
  %v2996 = vlaneseq
  %v2997 = vshrl.u32 %v2996, 7
  %v2998 = vsub.s32 %v2995, %v2997
  %v2999 = vrot.slane %v2443, %v2998
  %v3000 = vcombine.high %v2999, %v2999
  %v3002 = vunpack.c.l.s4 1983009808
  %v3003 = vunpack.c.0.s8 %v3002
  %v3004 = vlaneseq
  %v3005 = vshrl.u32 %v3004, 7
  %v3006 = vsub.s32 %v3003, %v3005
  %v3007 = vrot.slane %v2442, %v3006
  %v3008 = vcombine.high %v3007, %v3007
  %v3010 = vunpack.c.l.s4 1983009808
  %v3011 = vunpack.c.0.s8 %v3010
  %v3012 = vlaneseq
  %v3013 = vshrl.u32 %v3012, 7
  %v3014 = vsub.s32 %v3011, %v3013
  %v3015 = vrot.slane %v2444, %v3014
  %v3016 = vcombine.high %v3015, %v3015
  %v3018 = vunpack.c.l.s4 1983009808
  %v3019 = vunpack.c.0.s8 %v3018
  %v3020 = vlaneseq
  %v3021 = vshrl.u32 %v3020, 7
  %v3022 = vsub.s32 %v3019, %v3021
  %v3023 = vrot.slane %v2453, %v3022
  %v3024 = vcombine.high %v3023, %v3023
  %v3026 = vunpack.c.l.s4 1983009808
  %v3027 = vunpack.c.0.s8 %v3026
  %v3028 = vlaneseq
  %v3029 = vshrl.u32 %v3028, 7
  %v3030 = vsub.s32 %v3027, %v3029
  %v3031 = vrot.slane %v2461, %v3030
  %v3032 = vcombine.high %v3031, %v3031
  %v3034 = vunpack.c.l.s4 1983009808
  %v3035 = vunpack.c.0.s8 %v3034
  %v3036 = vlaneseq
  %v3037 = vshrl.u32 %v3036, 7
  %v3038 = vsub.s32 %v3035, %v3037
  %v3039 = vrot.slane %v2460, %v3038
  %v3040 = vcombine.high %v3039, %v3039
  %v3042 = vunpack.c.l.s4 1983009808
  %v3043 = vunpack.c.0.s8 %v3042
  %v3044 = vlaneseq
  %v3045 = vshrl.u32 %v3044, 7
  %v3046 = vsub.s32 %v3043, %v3045
  %v3047 = vrot.slane %v2462, %v3046
  %v3048 = vcombine.high %v3047, %v3047
  %v3050 = vunpack.c.l.s4 1983009808
  %v3051 = vunpack.c.0.s8 %v3050
  %v3052 = vlaneseq
  %v3053 = vshrl.u32 %v3052, 7
  %v3054 = vsub.s32 %v3051, %v3053
  %v3055 = vrot.slane %v2471, %v3054
  %v3056 = vcombine.high %v3055, %v3055
  %v3058 = vunpack.c.l.s4 1983009808
  %v3059 = vunpack.c.0.s8 %v3058
  %v3060 = vlaneseq
  %v3061 = vshrl.u32 %v3060, 7
  %v3062 = vsub.s32 %v3059, %v3061
  %v3063 = vrot.slane %v2479, %v3062
  %v3064 = vcombine.high %v3063, %v3063
  %v3066 = vunpack.c.l.s4 1983009808
  %v3067 = vunpack.c.0.s8 %v3066
  %v3068 = vlaneseq
  %v3069 = vshrl.u32 %v3068, 7
  %v3070 = vsub.s32 %v3067, %v3069
  %v3071 = vrot.slane %v2478, %v3070
  %v3072 = vcombine.high %v3071, %v3071
  %v3074 = vunpack.c.l.s4 1983009808
  %v3075 = vunpack.c.0.s8 %v3074
  %v3076 = vlaneseq
  %v3077 = vshrl.u32 %v3076, 7
  %v3078 = vsub.s32 %v3075, %v3077
  %v3079 = vrot.slane %v2480, %v3078
  %v3080 = vcombine.high %v3079, %v3079
  %v3082 = vunpack.c.l.s4 1983009808
  %v3083 = vunpack.c.0.s8 %v3082
  %v3084 = vlaneseq
  %v3085 = vshrl.u32 %v3084, 7
  %v3086 = vsub.s32 %v3083, %v3085
  %v3087 = vrot.slane %v2489, %v3086
  %v3088 = vcombine.high %v3087, %v3087
  %v3090 = vunpack.c.l.s4 1983009808
  %v3091 = vunpack.c.0.s8 %v3090
  %v3092 = vlaneseq
  %v3093 = vshrl.u32 %v3092, 7
  %v3094 = vsub.s32 %v3091, %v3093
  %v3095 = vrot.slane %v2497, %v3094
  %v3096 = vcombine.high %v3095, %v3095
  %v3098 = vunpack.c.l.s4 1983009808
  %v3099 = vunpack.c.0.s8 %v3098
  %v3100 = vlaneseq
  %v3101 = vshrl.u32 %v3100, 7
  %v3102 = vsub.s32 %v3099, %v3101
  %v3103 = vrot.slane %v2496, %v3102
  %v3104 = vcombine.high %v3103, %v3103
  %v3106 = vunpack.c.l.s4 1983009808
  %v3107 = vunpack.c.0.s8 %v3106
  %v3108 = vlaneseq
  %v3109 = vshrl.u32 %v3108, 7
  %v3110 = vsub.s32 %v3107, %v3109
  %v3111 = vrot.slane %v2498, %v3110
  %v3112 = vcombine.high %v3111, %v3111
  %v3114 = vunpack.c.l.s4 1983009808
  %v3115 = vunpack.c.0.s8 %v3114
  %v3116 = vlaneseq
  %v3117 = vshrl.u32 %v3116, 7
  %v3118 = vsub.s32 %v3115, %v3117
  %v3119 = vrot.slane %v2507, %v3118
  %v3120 = vcombine.high %v3119, %v3119
  %v3122 = vunpack.c.l.s4 1983009808
  %v3123 = vunpack.c.0.s8 %v3122
  %v3124 = vlaneseq
  %v3125 = vshrl.u32 %v3124, 7
  %v3126 = vsub.s32 %v3123, %v3125
  %v3127 = vrot.slane %v2515, %v3126
  %v3128 = vcombine.high %v3127, %v3127
  %v3130 = vunpack.c.l.s4 1983009808
  %v3131 = vunpack.c.0.s8 %v3130
  %v3132 = vlaneseq
  %v3133 = vshrl.u32 %v3132, 7
  %v3134 = vsub.s32 %v3131, %v3133
  %v3135 = vrot.slane %v2514, %v3134
  %v3136 = vcombine.high %v3135, %v3135
  %v3138 = vunpack.c.l.s4 1983009808
  %v3139 = vunpack.c.0.s8 %v3138
  %v3140 = vlaneseq
  %v3141 = vshrl.u32 %v3140, 7
  %v3142 = vsub.s32 %v3139, %v3141
  %v3143 = vrot.slane %v2516, %v3142
  %v3144 = vcombine.high %v3143, %v3143
  %v3146 = vunpack.c.l.s4 1983009808
  %v3147 = vunpack.c.0.s8 %v3146
  %v3148 = vlaneseq
  %v3149 = vshrl.u32 %v3148, 7
  %v3150 = vsub.s32 %v3147, %v3149
  %v3151 = vrot.slane %v2525, %v3150
  %v3152 = vcombine.high %v3151, %v3151
  %v3154 = vunpack.c.l.s4 1983009808
  %v3155 = vunpack.c.0.s8 %v3154
  %v3156 = vlaneseq
  %v3157 = vshrl.u32 %v3156, 7
  %v3158 = vsub.s32 %v3155, %v3157
  %v3159 = vrot.slane %v2533, %v3158
  %v3160 = vcombine.high %v3159, %v3159
  %v3162 = vunpack.c.l.s4 1983009808
  %v3163 = vunpack.c.0.s8 %v3162
  %v3164 = vlaneseq
  %v3165 = vshrl.u32 %v3164, 7
  %v3166 = vsub.s32 %v3163, %v3165
  %v3167 = vrot.slane %v2532, %v3166
  %v3168 = vcombine.high %v3167, %v3167
  %v3170 = vunpack.c.l.s4 1983009808
  %v3171 = vunpack.c.0.s8 %v3170
  %v3172 = vlaneseq
  %v3173 = vshrl.u32 %v3172, 7
  %v3174 = vsub.s32 %v3171, %v3173
  %v3175 = vrot.slane %v2534, %v3174
  %v3176 = vcombine.high %v3175, %v3175
  %v3178 = vunpack.c.l.s4 1983009808
  %v3179 = vunpack.c.0.s8 %v3178
  %v3180 = vlaneseq
  %v3181 = vshrl.u32 %v3180, 7
  %v3182 = vsub.s32 %v3179, %v3181
  %v3183 = vrot.slane %v2543, %v3182
  %v3184 = vcombine.high %v3183, %v3183
  %v3186 = vunpack.c.l.s4 1983009808
  %v3187 = vunpack.c.0.s8 %v3186
  %v3188 = vlaneseq
  %v3189 = vshrl.u32 %v3188, 7
  %v3190 = vsub.s32 %v3187, %v3189
  %v3191 = vrot.slane %v2551, %v3190
  %v3192 = vcombine.high %v3191, %v3191
  %v3194 = vunpack.c.l.s4 1983009808
  %v3195 = vunpack.c.0.s8 %v3194
  %v3196 = vlaneseq
  %v3197 = vshrl.u32 %v3196, 7
  %v3198 = vsub.s32 %v3195, %v3197
  %v3199 = vrot.slane %v2550, %v3198
  %v3200 = vcombine.high %v3199, %v3199
  %v3202 = vunpack.c.l.s4 1983009808
  %v3203 = vunpack.c.0.s8 %v3202
  %v3204 = vlaneseq
  %v3205 = vshrl.u32 %v3204, 7
  %v3206 = vsub.s32 %v3203, %v3205
  %v3207 = vrot.slane %v2552, %v3206
  %v3208 = vcombine.high %v3207, %v3207
  %v3210 = vunpack.c.l.s4 1983009808
  %v3211 = vunpack.c.0.s8 %v3210
  %v3212 = vlaneseq
  %v3213 = vshrl.u32 %v3212, 7
  %v3214 = vsub.s32 %v3211, %v3213
  %v3215 = vrot.slane %v2561, %v3214
  %v3216 = vcombine.high %v3215, %v3215
  %v3218 = vunpack.c.l.s4 1983009808
  %v3219 = vunpack.c.0.s8 %v3218
  %v3220 = vlaneseq
  %v3221 = vshrl.u32 %v3220, 7
  %v3222 = vsub.s32 %v3219, %v3221
  %v3223 = vrot.slane %v2569, %v3222
  %v3224 = vcombine.high %v3223, %v3223
  %v3226 = vunpack.c.l.s4 1983009808
  %v3227 = vunpack.c.0.s8 %v3226
  %v3228 = vlaneseq
  %v3229 = vshrl.u32 %v3228, 7
  %v3230 = vsub.s32 %v3227, %v3229
  %v3231 = vrot.slane %v2568, %v3230
  %v3232 = vcombine.high %v3231, %v3231
  %v3234 = vunpack.c.l.s4 1983009808
  %v3235 = vunpack.c.0.s8 %v3234
  %v3236 = vlaneseq
  %v3237 = vshrl.u32 %v3236, 7
  %v3238 = vsub.s32 %v3235, %v3237
  %v3239 = vrot.slane %v2570, %v3238
  %v3240 = vcombine.high %v3239, %v3239
  %v3242 = vunpack.c.l.s4 1983009808
  %v3243 = vunpack.c.0.s8 %v3242
  %v3244 = vlaneseq
  %v3245 = vshrl.u32 %v3244, 7
  %v3246 = vsub.s32 %v3243, %v3245
  %v3247 = vrot.slane %v2579, %v3246
  %v3248 = vcombine.high %v3247, %v3247
  %v3250 = vunpack.c.l.s4 1983009808
  %v3251 = vunpack.c.0.s8 %v3250
  %v3252 = vlaneseq
  %v3253 = vshrl.u32 %v3252, 7
  %v3254 = vsub.s32 %v3251, %v3253
  %v3255 = vrot.slane %v2587, %v3254
  %v3256 = vcombine.high %v3255, %v3255
  %v3258 = vunpack.c.l.s4 1983009808
  %v3259 = vunpack.c.0.s8 %v3258
  %v3260 = vlaneseq
  %v3261 = vshrl.u32 %v3260, 7
  %v3262 = vsub.s32 %v3259, %v3261
  %v3263 = vrot.slane %v2586, %v3262
  %v3264 = vcombine.high %v3263, %v3263
  %v3266 = vunpack.c.l.s4 1983009808
  %v3267 = vunpack.c.0.s8 %v3266
  %v3268 = vlaneseq
  %v3269 = vshrl.u32 %v3268, 7
  %v3270 = vsub.s32 %v3267, %v3269
  %v3271 = vrot.slane %v2588, %v3270
  %v3272 = vcombine.high %v3271, %v3271
  %v3274 = vunpack.c.l.s4 1983009808
  %v3275 = vunpack.c.0.s8 %v3274
  %v3276 = vlaneseq
  %v3277 = vshrl.u32 %v3276, 7
  %v3278 = vsub.s32 %v3275, %v3277
  %v3279 = vrot.slane %v2597, %v3278
  %v3280 = vcombine.high %v3279, %v3279
  %v3282 = vunpack.c.l.s4 1983009808
  %v3283 = vunpack.c.0.s8 %v3282
  %v3284 = vlaneseq
  %v3285 = vshrl.u32 %v3284, 7
  %v3286 = vsub.s32 %v3283, %v3285
  %v3287 = vrot.slane %v2605, %v3286
  %v3288 = vcombine.high %v3287, %v3287
  %v3290 = vunpack.c.l.s4 1983009808
  %v3291 = vunpack.c.0.s8 %v3290
  %v3292 = vlaneseq
  %v3293 = vshrl.u32 %v3292, 7
  %v3294 = vsub.s32 %v3291, %v3293
  %v3295 = vrot.slane %v2604, %v3294
  %v3296 = vcombine.high %v3295, %v3295
  %v3298 = vunpack.c.l.s4 1983009808
  %v3299 = vunpack.c.0.s8 %v3298
  %v3300 = vlaneseq
  %v3301 = vshrl.u32 %v3300, 7
  %v3302 = vsub.s32 %v3299, %v3301
  %v3303 = vrot.slane %v2606, %v3302
  %v3304 = vcombine.high %v3303, %v3303
  %v3306 = vunpack.c.l.s4 1983009808
  %v3307 = vunpack.c.0.s8 %v3306
  %v3308 = vlaneseq
  %v3309 = vshrl.u32 %v3308, 7
  %v3310 = vsub.s32 %v3307, %v3309
  %v3311 = vrot.slane %v2615, %v3310
  %v3312 = vcombine.high %v3311, %v3311
  %v3314 = vunpack.c.l.s4 1983009808
  %v3315 = vunpack.c.0.s8 %v3314
  %v3316 = vlaneseq
  %v3317 = vshrl.u32 %v3316, 7
  %v3318 = vsub.s32 %v3315, %v3317
  %v3319 = vrot.slane %v2623, %v3318
  %v3320 = vcombine.high %v3319, %v3319
  %v3322 = vunpack.c.l.s4 1983009808
  %v3323 = vunpack.c.0.s8 %v3322
  %v3324 = vlaneseq
  %v3325 = vshrl.u32 %v3324, 7
  %v3326 = vsub.s32 %v3323, %v3325
  %v3327 = vrot.slane %v2622, %v3326
  %v3328 = vcombine.high %v3327, %v3327
  %v3330 = vunpack.c.l.s4 1983009808
  %v3331 = vunpack.c.0.s8 %v3330
  %v3332 = vlaneseq
  %v3333 = vshrl.u32 %v3332, 7
  %v3334 = vsub.s32 %v3331, %v3333
  %v3335 = vrot.slane %v2624, %v3334
  %v3336 = vcombine.high %v3335, %v3335
  %v3338 = vunpack.c.l.s4 1983009808
  %v3339 = vunpack.c.0.s8 %v3338
  %v3340 = vlaneseq
  %v3341 = vshrl.u32 %v3340, 7
  %v3342 = vsub.s32 %v3339, %v3341
  %v3343 = vrot.slane %v2633, %v3342
  %v3344 = vcombine.high %v3343, %v3343
  %v3346 = vunpack.c.l.s4 1983009808
  %v3347 = vunpack.c.0.s8 %v3346
  %v3348 = vlaneseq
  %v3349 = vshrl.u32 %v3348, 7
  %v3350 = vsub.s32 %v3347, %v3349
  %v3351 = vrot.slane %v2641, %v3350
  %v3352 = vcombine.high %v3351, %v3351
  %v3354 = vunpack.c.l.s4 1983009808
  %v3355 = vunpack.c.0.s8 %v3354
  %v3356 = vlaneseq
  %v3357 = vshrl.u32 %v3356, 7
  %v3358 = vsub.s32 %v3355, %v3357
  %v3359 = vrot.slane %v2640, %v3358
  %v3360 = vcombine.high %v3359, %v3359
  %v3362 = vunpack.c.l.s4 1983009808
  %v3363 = vunpack.c.0.s8 %v3362
  %v3364 = vlaneseq
  %v3365 = vshrl.u32 %v3364, 7
  %v3366 = vsub.s32 %v3363, %v3365
  %v3367 = vrot.slane %v2642, %v3366
  %v3368 = vcombine.high %v3367, %v3367
  %v3370 = vunpack.c.l.s4 1983009808
  %v3371 = vunpack.c.0.s8 %v3370
  %v3372 = vlaneseq
  %v3373 = vshrl.u32 %v3372, 7
  %v3374 = vsub.s32 %v3371, %v3373
  %v3375 = vrot.slane %v2651, %v3374
  %v3376 = vcombine.high %v3375, %v3375
  %v3378 = vunpack.c.l.s4 1983009808
  %v3379 = vunpack.c.0.s8 %v3378
  %v3380 = vlaneseq
  %v3381 = vshrl.u32 %v3380, 7
  %v3382 = vsub.s32 %v3379, %v3381
  %v3383 = vrot.slane %v2659, %v3382
  %v3384 = vcombine.high %v3383, %v3383
  %v3386 = vunpack.c.l.s4 1983009808
  %v3387 = vunpack.c.0.s8 %v3386
  %v3388 = vlaneseq
  %v3389 = vshrl.u32 %v3388, 7
  %v3390 = vsub.s32 %v3387, %v3389
  %v3391 = vrot.slane %v2658, %v3390
  %v3392 = vcombine.high %v3391, %v3391
  %v3394 = vunpack.c.l.s4 1983009808
  %v3395 = vunpack.c.0.s8 %v3394
  %v3396 = vlaneseq
  %v3397 = vshrl.u32 %v3396, 7
  %v3398 = vsub.s32 %v3395, %v3397
  %v3399 = vrot.slane %v2660, %v3398
  %v3400 = vcombine.high %v3399, %v3399
  %v3402 = vunpack.c.l.s4 1983009808
  %v3403 = vunpack.c.0.s8 %v3402
  %v3404 = vlaneseq
  %v3405 = vshrl.u32 %v3404, 7
  %v3406 = vsub.s32 %v3403, %v3405
  %v3407 = vrot.slane %v2669, %v3406
  %v3408 = vcombine.high %v3407, %v3407
  %v3410 = vunpack.c.l.s4 1983009808
  %v3411 = vunpack.c.0.s8 %v3410
  %v3412 = vlaneseq
  %v3413 = vshrl.u32 %v3412, 7
  %v3414 = vsub.s32 %v3411, %v3413
  %v3415 = vrot.slane %v2677, %v3414
  %v3416 = vcombine.high %v3415, %v3415
  %v3418 = vunpack.c.l.s4 1983009808
  %v3419 = vunpack.c.0.s8 %v3418
  %v3420 = vlaneseq
  %v3421 = vshrl.u32 %v3420, 7
  %v3422 = vsub.s32 %v3419, %v3421
  %v3423 = vrot.slane %v2676, %v3422
  %v3424 = vcombine.high %v3423, %v3423
  %v3426 = vunpack.c.l.s4 1983009808
  %v3427 = vunpack.c.0.s8 %v3426
  %v3428 = vlaneseq
  %v3429 = vshrl.u32 %v3428, 7
  %v3430 = vsub.s32 %v3427, %v3429
  %v3431 = vrot.slane %v2678, %v3430
  %v3432 = vcombine.high %v3431, %v3431
  %v3434 = vunpack.c.l.s4 1983009808
  %v3435 = vunpack.c.0.s8 %v3434
  %v3436 = vlaneseq
  %v3437 = vshrl.u32 %v3436, 7
  %v3438 = vsub.s32 %v3435, %v3437
  %v3439 = vrot.slane %v2687, %v3438
  %v3440 = vcombine.high %v3439, %v3439
  %v3442 = vunpack.c.l.s4 1983009808
  %v3443 = vunpack.c.0.s8 %v3442
  %v3444 = vlaneseq
  %v3445 = vshrl.u32 %v3444, 7
  %v3446 = vsub.s32 %v3443, %v3445
  %v3447 = vrot.slane %v2695, %v3446
  %v3448 = vcombine.high %v3447, %v3447
  %v3450 = vunpack.c.l.s4 1983009808
  %v3451 = vunpack.c.0.s8 %v3450
  %v3452 = vlaneseq
  %v3453 = vshrl.u32 %v3452, 7
  %v3454 = vsub.s32 %v3451, %v3453
  %v3455 = vrot.slane %v2694, %v3454
  %v3456 = vcombine.high %v3455, %v3455
  %v3458 = vunpack.c.l.s4 1983009808
  %v3459 = vunpack.c.0.s8 %v3458
  %v3460 = vlaneseq
  %v3461 = vshrl.u32 %v3460, 7
  %v3462 = vsub.s32 %v3459, %v3461
  %v3463 = vrot.slane %v2696, %v3462
  %v3464 = vcombine.high %v3463, %v3463
  %vm3657 = vcmask 1041408
  %v3658 = vsel %vm3657, %v2703, -inf
  %v3659 = vrot.slane %v3658, 4
  %v3660 = vmax.f32 %v3658, %v3659
  %v3661 = vrot.slane %v3660, 2
  %v3662 = vmax.f32 %v3660, %v3661
  %v3663 = vrot.slane %v3662, 1
  %v3664 = vmax.f32 %v3662, %v3663
  %vm3665 = vcmask 910336
  %v3666 = vsel %vm3665, %v2704, -inf
  %v3667 = vrot.slane %v3666, 4
  %v3668 = vmax.f32 %v3666, %v3667
  %v3669 = vrot.slane %v3668, 2
  %v3670 = vmax.f32 %v3668, %v3669
  %v3671 = vrot.slane %v3670, 1
  %v3672 = vmax.f32 %v3670, %v3671
  %v3673 = vsel %vm3657, %v2711, -inf
  %v3674 = vrot.slane %v3673, 4
  %v3675 = vmax.f32 %v3673, %v3674
  %v3676 = vrot.slane %v3675, 2
  %v3677 = vmax.f32 %v3675, %v3676
  %v3678 = vrot.slane %v3677, 1
  %v3679 = vmax.f32 %v3677, %v3678
  %v3680 = vsel %vm3665, %v2712, -inf
  %v3681 = vrot.slane %v3680, 4
  %v3682 = vmax.f32 %v3680, %v3681
  %v3683 = vrot.slane %v3682, 2
  %v3684 = vmax.f32 %v3682, %v3683
  %v3685 = vrot.slane %v3684, 1
  %v3686 = vmax.f32 %v3684, %v3685
  %v3687 = vsel %vm3657, %v2719, -inf
  %v3688 = vrot.slane %v3687, 4
  %v3689 = vmax.f32 %v3687, %v3688
  %v3690 = vrot.slane %v3689, 2
  %v3691 = vmax.f32 %v3689, %v3690
  %v3692 = vrot.slane %v3691, 1
  %v3693 = vmax.f32 %v3691, %v3692
  %v3694 = vsel %vm3665, %v2720, -inf
  %v3695 = vrot.slane %v3694, 4
  %v3696 = vmax.f32 %v3694, %v3695
  %v3697 = vrot.slane %v3696, 2
  %v3698 = vmax.f32 %v3696, %v3697
  %v3699 = vrot.slane %v3698, 1
  %v3700 = vmax.f32 %v3698, %v3699
  %v3701 = vsel %vm3657, %v2727, -inf
  %v3702 = vrot.slane %v3701, 4
  %v3703 = vmax.f32 %v3701, %v3702
  %v3704 = vrot.slane %v3703, 2
  %v3705 = vmax.f32 %v3703, %v3704
  %v3706 = vrot.slane %v3705, 1
  %v3707 = vmax.f32 %v3705, %v3706
  %v3708 = vsel %vm3665, %v2728, -inf
  %v3709 = vrot.slane %v3708, 4
  %v3710 = vmax.f32 %v3708, %v3709
  %v3711 = vrot.slane %v3710, 2
  %v3712 = vmax.f32 %v3710, %v3711
  %v3713 = vrot.slane %v3712, 1
  %v3714 = vmax.f32 %v3712, %v3713
  %v3715 = vsel %vm3657, %v2735, -inf
  %v3716 = vrot.slane %v3715, 4
  %v3717 = vmax.f32 %v3715, %v3716
  %v3718 = vrot.slane %v3717, 2
  %v3719 = vmax.f32 %v3717, %v3718
  %v3720 = vrot.slane %v3719, 1
  %v3721 = vmax.f32 %v3719, %v3720
  %v3722 = vsel %vm3665, %v2736, -inf
  %v3723 = vrot.slane %v3722, 4
  %v3724 = vmax.f32 %v3722, %v3723
  %v3725 = vrot.slane %v3724, 2
  %v3726 = vmax.f32 %v3724, %v3725
  %v3727 = vrot.slane %v3726, 1
  %v3728 = vmax.f32 %v3726, %v3727
  %v3729 = vsel %vm3657, %v2743, -inf
  %v3730 = vrot.slane %v3729, 4
  %v3731 = vmax.f32 %v3729, %v3730
  %v3732 = vrot.slane %v3731, 2
  %v3733 = vmax.f32 %v3731, %v3732
  %v3734 = vrot.slane %v3733, 1
  %v3735 = vmax.f32 %v3733, %v3734
  %v3736 = vsel %vm3665, %v2744, -inf
  %v3737 = vrot.slane %v3736, 4
  %v3738 = vmax.f32 %v3736, %v3737
  %v3739 = vrot.slane %v3738, 2
  %v3740 = vmax.f32 %v3738, %v3739
  %v3741 = vrot.slane %v3740, 1
  %v3742 = vmax.f32 %v3740, %v3741
  %v3743 = vsel %vm3657, %v2751, -inf
  %v3744 = vrot.slane %v3743, 4
  %v3745 = vmax.f32 %v3743, %v3744
  %v3746 = vrot.slane %v3745, 2
  %v3747 = vmax.f32 %v3745, %v3746
  %v3748 = vrot.slane %v3747, 1
  %v3749 = vmax.f32 %v3747, %v3748
  %v3750 = vsel %vm3665, %v2752, -inf
  %v3751 = vrot.slane %v3750, 4
  %v3752 = vmax.f32 %v3750, %v3751
  %v3753 = vrot.slane %v3752, 2
  %v3754 = vmax.f32 %v3752, %v3753
  %v3755 = vrot.slane %v3754, 1
  %v3756 = vmax.f32 %v3754, %v3755
  %v3757 = vsel %vm3657, %v2759, -inf
  %v3758 = vrot.slane %v3757, 4
  %v3759 = vmax.f32 %v3757, %v3758
  %v3760 = vrot.slane %v3759, 2
  %v3761 = vmax.f32 %v3759, %v3760
  %v3762 = vrot.slane %v3761, 1
  %v3763 = vmax.f32 %v3761, %v3762
  %v3764 = vsel %vm3665, %v2760, -inf
  %v3765 = vrot.slane %v3764, 4
  %v3766 = vmax.f32 %v3764, %v3765
  %v3767 = vrot.slane %v3766, 2
  %v3768 = vmax.f32 %v3766, %v3767
  %v3769 = vrot.slane %v3768, 1
  %v3770 = vmax.f32 %v3768, %v3769
  %v3771 = vsel %vm3657, %v2767, -inf
  %v3772 = vrot.slane %v3771, 4
  %v3773 = vmax.f32 %v3771, %v3772
  %v3774 = vrot.slane %v3773, 2
  %v3775 = vmax.f32 %v3773, %v3774
  %v3776 = vrot.slane %v3775, 1
  %v3777 = vmax.f32 %v3775, %v3776
  %v3778 = vsel %vm3665, %v2768, -inf
  %v3779 = vrot.slane %v3778, 4
  %v3780 = vmax.f32 %v3778, %v3779
  %v3781 = vrot.slane %v3780, 2
  %v3782 = vmax.f32 %v3780, %v3781
  %v3783 = vrot.slane %v3782, 1
  %v3784 = vmax.f32 %v3782, %v3783
  %v3785 = vsel %vm3657, %v2775, -inf
  %v3786 = vrot.slane %v3785, 4
  %v3787 = vmax.f32 %v3785, %v3786
  %v3788 = vrot.slane %v3787, 2
  %v3789 = vmax.f32 %v3787, %v3788
  %v3790 = vrot.slane %v3789, 1
  %v3791 = vmax.f32 %v3789, %v3790
  %v3792 = vsel %vm3665, %v2776, -inf
  %v3793 = vrot.slane %v3792, 4
  %v3794 = vmax.f32 %v3792, %v3793
  %v3795 = vrot.slane %v3794, 2
  %v3796 = vmax.f32 %v3794, %v3795
  %v3797 = vrot.slane %v3796, 1
  %v3798 = vmax.f32 %v3796, %v3797
  %v3799 = vsel %vm3657, %v2783, -inf
  %v3800 = vrot.slane %v3799, 4
  %v3801 = vmax.f32 %v3799, %v3800
  %v3802 = vrot.slane %v3801, 2
  %v3803 = vmax.f32 %v3801, %v3802
  %v3804 = vrot.slane %v3803, 1
  %v3805 = vmax.f32 %v3803, %v3804
  %v3806 = vsel %vm3665, %v2784, -inf
  %v3807 = vrot.slane %v3806, 4
  %v3808 = vmax.f32 %v3806, %v3807
  %v3809 = vrot.slane %v3808, 2
  %v3810 = vmax.f32 %v3808, %v3809
  %v3811 = vrot.slane %v3810, 1
  %v3812 = vmax.f32 %v3810, %v3811
  %v3813 = vsel %vm3657, %v2791, -inf
  %v3814 = vrot.slane %v3813, 4
  %v3815 = vmax.f32 %v3813, %v3814
  %v3816 = vrot.slane %v3815, 2
  %v3817 = vmax.f32 %v3815, %v3816
  %v3818 = vrot.slane %v3817, 1
  %v3819 = vmax.f32 %v3817, %v3818
  %v3820 = vsel %vm3665, %v2792, -inf
  %v3821 = vrot.slane %v3820, 4
  %v3822 = vmax.f32 %v3820, %v3821
  %v3823 = vrot.slane %v3822, 2
  %v3824 = vmax.f32 %v3822, %v3823
  %v3825 = vrot.slane %v3824, 1
  %v3826 = vmax.f32 %v3824, %v3825
  %v3827 = vsel %vm3657, %v2799, -inf
  %v3828 = vrot.slane %v3827, 4
  %v3829 = vmax.f32 %v3827, %v3828
  %v3830 = vrot.slane %v3829, 2
  %v3831 = vmax.f32 %v3829, %v3830
  %v3832 = vrot.slane %v3831, 1
  %v3833 = vmax.f32 %v3831, %v3832
  %v3834 = vsel %vm3665, %v2800, -inf
  %v3835 = vrot.slane %v3834, 4
  %v3836 = vmax.f32 %v3834, %v3835
  %v3837 = vrot.slane %v3836, 2
  %v3838 = vmax.f32 %v3836, %v3837
  %v3839 = vrot.slane %v3838, 1
  %v3840 = vmax.f32 %v3838, %v3839
  %v3841 = vsel %vm3657, %v2807, -inf
  %v3842 = vrot.slane %v3841, 4
  %v3843 = vmax.f32 %v3841, %v3842
  %v3844 = vrot.slane %v3843, 2
  %v3845 = vmax.f32 %v3843, %v3844
  %v3846 = vrot.slane %v3845, 1
  %v3847 = vmax.f32 %v3845, %v3846
  %v3848 = vsel %vm3665, %v2808, -inf
  %v3849 = vrot.slane %v3848, 4
  %v3850 = vmax.f32 %v3848, %v3849
  %v3851 = vrot.slane %v3850, 2
  %v3852 = vmax.f32 %v3850, %v3851
  %v3853 = vrot.slane %v3852, 1
  %v3854 = vmax.f32 %v3852, %v3853
  %v3855 = vsel %vm3657, %v2815, -inf
  %v3856 = vrot.slane %v3855, 4
  %v3857 = vmax.f32 %v3855, %v3856
  %v3858 = vrot.slane %v3857, 2
  %v3859 = vmax.f32 %v3857, %v3858
  %v3860 = vrot.slane %v3859, 1
  %v3861 = vmax.f32 %v3859, %v3860
  %v3862 = vsel %vm3665, %v2816, -inf
  %v3863 = vrot.slane %v3862, 4
  %v3864 = vmax.f32 %v3862, %v3863
  %v3865 = vrot.slane %v3864, 2
  %v3866 = vmax.f32 %v3864, %v3865
  %v3867 = vrot.slane %v3866, 1
  %v3868 = vmax.f32 %v3866, %v3867
  %v3869 = vsel %vm3657, %v2823, -inf
  %v3870 = vrot.slane %v3869, 4
  %v3871 = vmax.f32 %v3869, %v3870
  %v3872 = vrot.slane %v3871, 2
  %v3873 = vmax.f32 %v3871, %v3872
  %v3874 = vrot.slane %v3873, 1
  %v3875 = vmax.f32 %v3873, %v3874
  %v3876 = vsel %vm3665, %v2824, -inf
  %v3877 = vrot.slane %v3876, 4
  %v3878 = vmax.f32 %v3876, %v3877
  %v3879 = vrot.slane %v3878, 2
  %v3880 = vmax.f32 %v3878, %v3879
  %v3881 = vrot.slane %v3880, 1
  %v3882 = vmax.f32 %v3880, %v3881
  %v3883 = vsel %vm3657, %v2831, -inf
  %v3884 = vrot.slane %v3883, 4
  %v3885 = vmax.f32 %v3883, %v3884
  %v3886 = vrot.slane %v3885, 2
  %v3887 = vmax.f32 %v3885, %v3886
  %v3888 = vrot.slane %v3887, 1
  %v3889 = vmax.f32 %v3887, %v3888
  %v3890 = vsel %vm3665, %v2832, -inf
  %v3891 = vrot.slane %v3890, 4
  %v3892 = vmax.f32 %v3890, %v3891
  %v3893 = vrot.slane %v3892, 2
  %v3894 = vmax.f32 %v3892, %v3893
  %v3895 = vrot.slane %v3894, 1
  %v3896 = vmax.f32 %v3894, %v3895
  %v3897 = vsel %vm3657, %v2839, -inf
  %v3898 = vrot.slane %v3897, 4
  %v3899 = vmax.f32 %v3897, %v3898
  %v3900 = vrot.slane %v3899, 2
  %v3901 = vmax.f32 %v3899, %v3900
  %v3902 = vrot.slane %v3901, 1
  %v3903 = vmax.f32 %v3901, %v3902
  %v3904 = vsel %vm3665, %v2840, -inf
  %v3905 = vrot.slane %v3904, 4
  %v3906 = vmax.f32 %v3904, %v3905
  %v3907 = vrot.slane %v3906, 2
  %v3908 = vmax.f32 %v3906, %v3907
  %v3909 = vrot.slane %v3908, 1
  %v3910 = vmax.f32 %v3908, %v3909
  %v3911 = vsel %vm3657, %v2847, -inf
  %v3912 = vrot.slane %v3911, 4
  %v3913 = vmax.f32 %v3911, %v3912
  %v3914 = vrot.slane %v3913, 2
  %v3915 = vmax.f32 %v3913, %v3914
  %v3916 = vrot.slane %v3915, 1
  %v3917 = vmax.f32 %v3915, %v3916
  %v3918 = vsel %vm3665, %v2848, -inf
  %v3919 = vrot.slane %v3918, 4
  %v3920 = vmax.f32 %v3918, %v3919
  %v3921 = vrot.slane %v3920, 2
  %v3922 = vmax.f32 %v3920, %v3921
  %v3923 = vrot.slane %v3922, 1
  %v3924 = vmax.f32 %v3922, %v3923
  %v3925 = vsel %vm3657, %v2855, -inf
  %v3926 = vrot.slane %v3925, 4
  %v3927 = vmax.f32 %v3925, %v3926
  %v3928 = vrot.slane %v3927, 2
  %v3929 = vmax.f32 %v3927, %v3928
  %v3930 = vrot.slane %v3929, 1
  %v3931 = vmax.f32 %v3929, %v3930
  %v3932 = vsel %vm3665, %v2856, -inf
  %v3933 = vrot.slane %v3932, 4
  %v3934 = vmax.f32 %v3932, %v3933
  %v3935 = vrot.slane %v3934, 2
  %v3936 = vmax.f32 %v3934, %v3935
  %v3937 = vrot.slane %v3936, 1
  %v3938 = vmax.f32 %v3936, %v3937
  %v3939 = vsel %vm3657, %v2863, -inf
  %v3940 = vrot.slane %v3939, 4
  %v3941 = vmax.f32 %v3939, %v3940
  %v3942 = vrot.slane %v3941, 2
  %v3943 = vmax.f32 %v3941, %v3942
  %v3944 = vrot.slane %v3943, 1
  %v3945 = vmax.f32 %v3943, %v3944
  %v3946 = vsel %vm3665, %v2864, -inf
  %v3947 = vrot.slane %v3946, 4
  %v3948 = vmax.f32 %v3946, %v3947
  %v3949 = vrot.slane %v3948, 2
  %v3950 = vmax.f32 %v3948, %v3949
  %v3951 = vrot.slane %v3950, 1
  %v3952 = vmax.f32 %v3950, %v3951
  %v3953 = vsel %vm3657, %v2871, -inf
  %v3954 = vrot.slane %v3953, 4
  %v3955 = vmax.f32 %v3953, %v3954
  %v3956 = vrot.slane %v3955, 2
  %v3957 = vmax.f32 %v3955, %v3956
  %v3958 = vrot.slane %v3957, 1
  %v3959 = vmax.f32 %v3957, %v3958
  %v3960 = vsel %vm3665, %v2872, -inf
  %v3961 = vrot.slane %v3960, 4
  %v3962 = vmax.f32 %v3960, %v3961
  %v3963 = vrot.slane %v3962, 2
  %v3964 = vmax.f32 %v3962, %v3963
  %v3965 = vrot.slane %v3964, 1
  %v3966 = vmax.f32 %v3964, %v3965
  %v3967 = vsel %vm3657, %v2879, -inf
  %v3968 = vrot.slane %v3967, 4
  %v3969 = vmax.f32 %v3967, %v3968
  %v3970 = vrot.slane %v3969, 2
  %v3971 = vmax.f32 %v3969, %v3970
  %v3972 = vrot.slane %v3971, 1
  %v3973 = vmax.f32 %v3971, %v3972
  %v3974 = vsel %vm3665, %v2880, -inf
  %v3975 = vrot.slane %v3974, 4
  %v3976 = vmax.f32 %v3974, %v3975
  %v3977 = vrot.slane %v3976, 2
  %v3978 = vmax.f32 %v3976, %v3977
  %v3979 = vrot.slane %v3978, 1
  %v3980 = vmax.f32 %v3978, %v3979
  %v3981 = vsel %vm3657, %v2887, -inf
  %v3982 = vrot.slane %v3981, 4
  %v3983 = vmax.f32 %v3981, %v3982
  %v3984 = vrot.slane %v3983, 2
  %v3985 = vmax.f32 %v3983, %v3984
  %v3986 = vrot.slane %v3985, 1
  %v3987 = vmax.f32 %v3985, %v3986
  %v3988 = vsel %vm3665, %v2888, -inf
  %v3989 = vrot.slane %v3988, 4
  %v3990 = vmax.f32 %v3988, %v3989
  %v3991 = vrot.slane %v3990, 2
  %v3992 = vmax.f32 %v3990, %v3991
  %v3993 = vrot.slane %v3992, 1
  %v3994 = vmax.f32 %v3992, %v3993
  %v3995 = vsel %vm3657, %v2895, -inf
  %v3996 = vrot.slane %v3995, 4
  %v3997 = vmax.f32 %v3995, %v3996
  %v3998 = vrot.slane %v3997, 2
  %v3999 = vmax.f32 %v3997, %v3998
  %v4000 = vrot.slane %v3999, 1
  %v4001 = vmax.f32 %v3999, %v4000
  %v4002 = vsel %vm3665, %v2896, -inf
  %v4003 = vrot.slane %v4002, 4
  %v4004 = vmax.f32 %v4002, %v4003
  %v4005 = vrot.slane %v4004, 2
  %v4006 = vmax.f32 %v4004, %v4005
  %v4007 = vrot.slane %v4006, 1
  %v4008 = vmax.f32 %v4006, %v4007
  %v4009 = vsel %vm3657, %v2903, -inf
  %v4010 = vrot.slane %v4009, 4
  %v4011 = vmax.f32 %v4009, %v4010
  %v4012 = vrot.slane %v4011, 2
  %v4013 = vmax.f32 %v4011, %v4012
  %v4014 = vrot.slane %v4013, 1
  %v4015 = vmax.f32 %v4013, %v4014
  %v4016 = vsel %vm3665, %v2904, -inf
  %v4017 = vrot.slane %v4016, 4
  %v4018 = vmax.f32 %v4016, %v4017
  %v4019 = vrot.slane %v4018, 2
  %v4020 = vmax.f32 %v4018, %v4019
  %v4021 = vrot.slane %v4020, 1
  %v4022 = vmax.f32 %v4020, %v4021
  %v4023 = vsel %vm3657, %v2911, -inf
  %v4024 = vrot.slane %v4023, 4
  %v4025 = vmax.f32 %v4023, %v4024
  %v4026 = vrot.slane %v4025, 2
  %v4027 = vmax.f32 %v4025, %v4026
  %v4028 = vrot.slane %v4027, 1
  %v4029 = vmax.f32 %v4027, %v4028
  %v4030 = vsel %vm3665, %v2912, -inf
  %v4031 = vrot.slane %v4030, 4
  %v4032 = vmax.f32 %v4030, %v4031
  %v4033 = vrot.slane %v4032, 2
  %v4034 = vmax.f32 %v4032, %v4033
  %v4035 = vrot.slane %v4034, 1
  %v4036 = vmax.f32 %v4034, %v4035
  %v4037 = vsel %vm3657, %v2919, -inf
  %v4038 = vrot.slane %v4037, 4
  %v4039 = vmax.f32 %v4037, %v4038
  %v4040 = vrot.slane %v4039, 2
  %v4041 = vmax.f32 %v4039, %v4040
  %v4042 = vrot.slane %v4041, 1
  %v4043 = vmax.f32 %v4041, %v4042
  %v4044 = vsel %vm3665, %v2920, -inf
  %v4045 = vrot.slane %v4044, 4
  %v4046 = vmax.f32 %v4044, %v4045
  %v4047 = vrot.slane %v4046, 2
  %v4048 = vmax.f32 %v4046, %v4047
  %v4049 = vrot.slane %v4048, 1
  %v4050 = vmax.f32 %v4048, %v4049
  %v4051 = vsel %vm3657, %v2927, -inf
  %v4052 = vrot.slane %v4051, 4
  %v4053 = vmax.f32 %v4051, %v4052
  %v4054 = vrot.slane %v4053, 2
  %v4055 = vmax.f32 %v4053, %v4054
  %v4056 = vrot.slane %v4055, 1
  %v4057 = vmax.f32 %v4055, %v4056
  %v4058 = vsel %vm3665, %v2928, -inf
  %v4059 = vrot.slane %v4058, 4
  %v4060 = vmax.f32 %v4058, %v4059
  %v4061 = vrot.slane %v4060, 2
  %v4062 = vmax.f32 %v4060, %v4061
  %v4063 = vrot.slane %v4062, 1
  %v4064 = vmax.f32 %v4062, %v4063
  %v4065 = vsel %vm3657, %v2935, -inf
  %v4066 = vrot.slane %v4065, 4
  %v4067 = vmax.f32 %v4065, %v4066
  %v4068 = vrot.slane %v4067, 2
  %v4069 = vmax.f32 %v4067, %v4068
  %v4070 = vrot.slane %v4069, 1
  %v4071 = vmax.f32 %v4069, %v4070
  %v4072 = vsel %vm3665, %v2936, -inf
  %v4073 = vrot.slane %v4072, 4
  %v4074 = vmax.f32 %v4072, %v4073
  %v4075 = vrot.slane %v4074, 2
  %v4076 = vmax.f32 %v4074, %v4075
  %v4077 = vrot.slane %v4076, 1
  %v4078 = vmax.f32 %v4076, %v4077
  %v4079 = vsel %vm3657, %v2943, -inf
  %v4080 = vrot.slane %v4079, 4
  %v4081 = vmax.f32 %v4079, %v4080
  %v4082 = vrot.slane %v4081, 2
  %v4083 = vmax.f32 %v4081, %v4082
  %v4084 = vrot.slane %v4083, 1
  %v4085 = vmax.f32 %v4083, %v4084
  %v4086 = vsel %vm3665, %v2944, -inf
  %v4087 = vrot.slane %v4086, 4
  %v4088 = vmax.f32 %v4086, %v4087
  %v4089 = vrot.slane %v4088, 2
  %v4090 = vmax.f32 %v4088, %v4089
  %v4091 = vrot.slane %v4090, 1
  %v4092 = vmax.f32 %v4090, %v4091
  %v4093 = vsel %vm3657, %v2951, -inf
  %v4094 = vrot.slane %v4093, 4
  %v4095 = vmax.f32 %v4093, %v4094
  %v4096 = vrot.slane %v4095, 2
  %v4097 = vmax.f32 %v4095, %v4096
  %v4098 = vrot.slane %v4097, 1
  %v4099 = vmax.f32 %v4097, %v4098
  %v4100 = vsel %vm3665, %v2952, -inf
  %v4101 = vrot.slane %v4100, 4
  %v4102 = vmax.f32 %v4100, %v4101
  %v4103 = vrot.slane %v4102, 2
  %v4104 = vmax.f32 %v4102, %v4103
  %v4105 = vrot.slane %v4104, 1
  %v4106 = vmax.f32 %v4104, %v4105
  %v4107 = vsel %vm3657, %v2959, -inf
  %v4108 = vrot.slane %v4107, 4
  %v4109 = vmax.f32 %v4107, %v4108
  %v4110 = vrot.slane %v4109, 2
  %v4111 = vmax.f32 %v4109, %v4110
  %v4112 = vrot.slane %v4111, 1
  %v4113 = vmax.f32 %v4111, %v4112
  %v4114 = vsel %vm3665, %v2960, -inf
  %v4115 = vrot.slane %v4114, 4
  %v4116 = vmax.f32 %v4114, %v4115
  %v4117 = vrot.slane %v4116, 2
  %v4118 = vmax.f32 %v4116, %v4117
  %v4119 = vrot.slane %v4118, 1
  %v4120 = vmax.f32 %v4118, %v4119
  %v4121 = vsel %vm3657, %v2967, -inf
  %v4122 = vrot.slane %v4121, 4
  %v4123 = vmax.f32 %v4121, %v4122
  %v4124 = vrot.slane %v4123, 2
  %v4125 = vmax.f32 %v4123, %v4124
  %v4126 = vrot.slane %v4125, 1
  %v4127 = vmax.f32 %v4125, %v4126
  %v4128 = vsel %vm3665, %v2968, -inf
  %v4129 = vrot.slane %v4128, 4
  %v4130 = vmax.f32 %v4128, %v4129
  %v4131 = vrot.slane %v4130, 2
  %v4132 = vmax.f32 %v4130, %v4131
  %v4133 = vrot.slane %v4132, 1
  %v4134 = vmax.f32 %v4132, %v4133
  %v4135 = vsel %vm3657, %v2975, -inf
  %v4136 = vrot.slane %v4135, 4
  %v4137 = vmax.f32 %v4135, %v4136
  %v4138 = vrot.slane %v4137, 2
  %v4139 = vmax.f32 %v4137, %v4138
  %v4140 = vrot.slane %v4139, 1
  %v4141 = vmax.f32 %v4139, %v4140
  %v4142 = vsel %vm3665, %v2976, -inf
  %v4143 = vrot.slane %v4142, 4
  %v4144 = vmax.f32 %v4142, %v4143
  %v4145 = vrot.slane %v4144, 2
  %v4146 = vmax.f32 %v4144, %v4145
  %v4147 = vrot.slane %v4146, 1
  %v4148 = vmax.f32 %v4146, %v4147
  %v4149 = vsel %vm3657, %v2983, -inf
  %v4150 = vrot.slane %v4149, 4
  %v4151 = vmax.f32 %v4149, %v4150
  %v4152 = vrot.slane %v4151, 2
  %v4153 = vmax.f32 %v4151, %v4152
  %v4154 = vrot.slane %v4153, 1
  %v4155 = vmax.f32 %v4153, %v4154
  %v4156 = vsel %vm3665, %v2984, -inf
  %v4157 = vrot.slane %v4156, 4
  %v4158 = vmax.f32 %v4156, %v4157
  %v4159 = vrot.slane %v4158, 2
  %v4160 = vmax.f32 %v4158, %v4159
  %v4161 = vrot.slane %v4160, 1
  %v4162 = vmax.f32 %v4160, %v4161
  %v4163 = vsel %vm3657, %v2991, -inf
  %v4164 = vrot.slane %v4163, 4
  %v4165 = vmax.f32 %v4163, %v4164
  %v4166 = vrot.slane %v4165, 2
  %v4167 = vmax.f32 %v4165, %v4166
  %v4168 = vrot.slane %v4167, 1
  %v4169 = vmax.f32 %v4167, %v4168
  %v4170 = vsel %vm3665, %v2992, -inf
  %v4171 = vrot.slane %v4170, 4
  %v4172 = vmax.f32 %v4170, %v4171
  %v4173 = vrot.slane %v4172, 2
  %v4174 = vmax.f32 %v4172, %v4173
  %v4175 = vrot.slane %v4174, 1
  %v4176 = vmax.f32 %v4174, %v4175
  %v4177 = vsel %vm3657, %v2999, -inf
  %v4178 = vrot.slane %v4177, 4
  %v4179 = vmax.f32 %v4177, %v4178
  %v4180 = vrot.slane %v4179, 2
  %v4181 = vmax.f32 %v4179, %v4180
  %v4182 = vrot.slane %v4181, 1
  %v4183 = vmax.f32 %v4181, %v4182
  %v4184 = vsel %vm3665, %v3000, -inf
  %v4185 = vrot.slane %v4184, 4
  %v4186 = vmax.f32 %v4184, %v4185
  %v4187 = vrot.slane %v4186, 2
  %v4188 = vmax.f32 %v4186, %v4187
  %v4189 = vrot.slane %v4188, 1
  %v4190 = vmax.f32 %v4188, %v4189
  %v4191 = vsel %vm3657, %v3007, -inf
  %v4192 = vrot.slane %v4191, 4
  %v4193 = vmax.f32 %v4191, %v4192
  %v4194 = vrot.slane %v4193, 2
  %v4195 = vmax.f32 %v4193, %v4194
  %v4196 = vrot.slane %v4195, 1
  %v4197 = vmax.f32 %v4195, %v4196
  %v4198 = vsel %vm3665, %v3008, -inf
  %v4199 = vrot.slane %v4198, 4
  %v4200 = vmax.f32 %v4198, %v4199
  %v4201 = vrot.slane %v4200, 2
  %v4202 = vmax.f32 %v4200, %v4201
  %v4203 = vrot.slane %v4202, 1
  %v4204 = vmax.f32 %v4202, %v4203
  %v4205 = vsel %vm3657, %v3015, -inf
  %v4206 = vrot.slane %v4205, 4
  %v4207 = vmax.f32 %v4205, %v4206
  %v4208 = vrot.slane %v4207, 2
  %v4209 = vmax.f32 %v4207, %v4208
  %v4210 = vrot.slane %v4209, 1
  %v4211 = vmax.f32 %v4209, %v4210
  %v4212 = vsel %vm3665, %v3016, -inf
  %v4213 = vrot.slane %v4212, 4
  %v4214 = vmax.f32 %v4212, %v4213
  %v4215 = vrot.slane %v4214, 2
  %v4216 = vmax.f32 %v4214, %v4215
  %v4217 = vrot.slane %v4216, 1
  %v4218 = vmax.f32 %v4216, %v4217
  %v4219 = vsel %vm3657, %v3023, -inf
  %v4220 = vrot.slane %v4219, 4
  %v4221 = vmax.f32 %v4219, %v4220
  %v4222 = vrot.slane %v4221, 2
  %v4223 = vmax.f32 %v4221, %v4222
  %v4224 = vrot.slane %v4223, 1
  %v4225 = vmax.f32 %v4223, %v4224
  %v4226 = vsel %vm3665, %v3024, -inf
  %v4227 = vrot.slane %v4226, 4
  %v4228 = vmax.f32 %v4226, %v4227
  %v4229 = vrot.slane %v4228, 2
  %v4230 = vmax.f32 %v4228, %v4229
  %v4231 = vrot.slane %v4230, 1
  %v4232 = vmax.f32 %v4230, %v4231
  %v4233 = vsel %vm3657, %v3031, -inf
  %v4234 = vrot.slane %v4233, 4
  %v4235 = vmax.f32 %v4233, %v4234
  %v4236 = vrot.slane %v4235, 2
  %v4237 = vmax.f32 %v4235, %v4236
  %v4238 = vrot.slane %v4237, 1
  %v4239 = vmax.f32 %v4237, %v4238
  %v4240 = vsel %vm3665, %v3032, -inf
  %v4241 = vrot.slane %v4240, 4
  %v4242 = vmax.f32 %v4240, %v4241
  %v4243 = vrot.slane %v4242, 2
  %v4244 = vmax.f32 %v4242, %v4243
  %v4245 = vrot.slane %v4244, 1
  %v4246 = vmax.f32 %v4244, %v4245
  %v4247 = vsel %vm3657, %v3039, -inf
  %v4248 = vrot.slane %v4247, 4
  %v4249 = vmax.f32 %v4247, %v4248
  %v4250 = vrot.slane %v4249, 2
  %v4251 = vmax.f32 %v4249, %v4250
  %v4252 = vrot.slane %v4251, 1
  %v4253 = vmax.f32 %v4251, %v4252
  %v4254 = vsel %vm3665, %v3040, -inf
  %v4255 = vrot.slane %v4254, 4
  %v4256 = vmax.f32 %v4254, %v4255
  %v4257 = vrot.slane %v4256, 2
  %v4258 = vmax.f32 %v4256, %v4257
  %v4259 = vrot.slane %v4258, 1
  %v4260 = vmax.f32 %v4258, %v4259
  %v4261 = vsel %vm3657, %v3047, -inf
  %v4262 = vrot.slane %v4261, 4
  %v4263 = vmax.f32 %v4261, %v4262
  %v4264 = vrot.slane %v4263, 2
  %v4265 = vmax.f32 %v4263, %v4264
  %v4266 = vrot.slane %v4265, 1
  %v4267 = vmax.f32 %v4265, %v4266
  %v4268 = vsel %vm3665, %v3048, -inf
  %v4269 = vrot.slane %v4268, 4
  %v4270 = vmax.f32 %v4268, %v4269
  %v4271 = vrot.slane %v4270, 2
  %v4272 = vmax.f32 %v4270, %v4271
  %v4273 = vrot.slane %v4272, 1
  %v4274 = vmax.f32 %v4272, %v4273
  %v4275 = vsel %vm3657, %v3055, -inf
  %v4276 = vrot.slane %v4275, 4
  %v4277 = vmax.f32 %v4275, %v4276
  %v4278 = vrot.slane %v4277, 2
  %v4279 = vmax.f32 %v4277, %v4278
  %v4280 = vrot.slane %v4279, 1
  %v4281 = vmax.f32 %v4279, %v4280
  %v4282 = vsel %vm3665, %v3056, -inf
  %v4283 = vrot.slane %v4282, 4
  %v4284 = vmax.f32 %v4282, %v4283
  %v4285 = vrot.slane %v4284, 2
  %v4286 = vmax.f32 %v4284, %v4285
  %v4287 = vrot.slane %v4286, 1
  %v4288 = vmax.f32 %v4286, %v4287
  %v4289 = vsel %vm3657, %v3063, -inf
  %v4290 = vrot.slane %v4289, 4
  %v4291 = vmax.f32 %v4289, %v4290
  %v4292 = vrot.slane %v4291, 2
  %v4293 = vmax.f32 %v4291, %v4292
  %v4294 = vrot.slane %v4293, 1
  %v4295 = vmax.f32 %v4293, %v4294
  %v4296 = vsel %vm3665, %v3064, -inf
  %v4297 = vrot.slane %v4296, 4
  %v4298 = vmax.f32 %v4296, %v4297
  %v4299 = vrot.slane %v4298, 2
  %v4300 = vmax.f32 %v4298, %v4299
  %v4301 = vrot.slane %v4300, 1
  %v4302 = vmax.f32 %v4300, %v4301
  %v4303 = vsel %vm3657, %v3071, -inf
  %v4304 = vrot.slane %v4303, 4
  %v4305 = vmax.f32 %v4303, %v4304
  %v4306 = vrot.slane %v4305, 2
  %v4307 = vmax.f32 %v4305, %v4306
  %v4308 = vrot.slane %v4307, 1
  %v4309 = vmax.f32 %v4307, %v4308
  %v4310 = vsel %vm3665, %v3072, -inf
  %v4311 = vrot.slane %v4310, 4
  %v4312 = vmax.f32 %v4310, %v4311
  %v4313 = vrot.slane %v4312, 2
  %v4314 = vmax.f32 %v4312, %v4313
  %v4315 = vrot.slane %v4314, 1
  %v4316 = vmax.f32 %v4314, %v4315
  %v4317 = vsel %vm3657, %v3079, -inf
  %v4318 = vrot.slane %v4317, 4
  %v4319 = vmax.f32 %v4317, %v4318
  %v4320 = vrot.slane %v4319, 2
  %v4321 = vmax.f32 %v4319, %v4320
  %v4322 = vrot.slane %v4321, 1
  %v4323 = vmax.f32 %v4321, %v4322
  %v4324 = vsel %vm3665, %v3080, -inf
  %v4325 = vrot.slane %v4324, 4
  %v4326 = vmax.f32 %v4324, %v4325
  %v4327 = vrot.slane %v4326, 2
  %v4328 = vmax.f32 %v4326, %v4327
  %v4329 = vrot.slane %v4328, 1
  %v4330 = vmax.f32 %v4328, %v4329
  %v4331 = vsel %vm3657, %v3087, -inf
  %v4332 = vrot.slane %v4331, 4
  %v4333 = vmax.f32 %v4331, %v4332
  %v4334 = vrot.slane %v4333, 2
  %v4335 = vmax.f32 %v4333, %v4334
  %v4336 = vrot.slane %v4335, 1
  %v4337 = vmax.f32 %v4335, %v4336
  %v4338 = vsel %vm3665, %v3088, -inf
  %v4339 = vrot.slane %v4338, 4
  %v4340 = vmax.f32 %v4338, %v4339
  %v4341 = vrot.slane %v4340, 2
  %v4342 = vmax.f32 %v4340, %v4341
  %v4343 = vrot.slane %v4342, 1
  %v4344 = vmax.f32 %v4342, %v4343
  %v4345 = vsel %vm3657, %v3095, -inf
  %v4346 = vrot.slane %v4345, 4
  %v4347 = vmax.f32 %v4345, %v4346
  %v4348 = vrot.slane %v4347, 2
  %v4349 = vmax.f32 %v4347, %v4348
  %v4350 = vrot.slane %v4349, 1
  %v4351 = vmax.f32 %v4349, %v4350
  %v4352 = vsel %vm3665, %v3096, -inf
  %v4353 = vrot.slane %v4352, 4
  %v4354 = vmax.f32 %v4352, %v4353
  %v4355 = vrot.slane %v4354, 2
  %v4356 = vmax.f32 %v4354, %v4355
  %v4357 = vrot.slane %v4356, 1
  %v4358 = vmax.f32 %v4356, %v4357
  %v4359 = vsel %vm3657, %v3103, -inf
  %v4360 = vrot.slane %v4359, 4
  %v4361 = vmax.f32 %v4359, %v4360
  %v4362 = vrot.slane %v4361, 2
  %v4363 = vmax.f32 %v4361, %v4362
  %v4364 = vrot.slane %v4363, 1
  %v4365 = vmax.f32 %v4363, %v4364
  %v4366 = vsel %vm3665, %v3104, -inf
  %v4367 = vrot.slane %v4366, 4
  %v4368 = vmax.f32 %v4366, %v4367
  %v4369 = vrot.slane %v4368, 2
  %v4370 = vmax.f32 %v4368, %v4369
  %v4371 = vrot.slane %v4370, 1
  %v4372 = vmax.f32 %v4370, %v4371
  %v4373 = vsel %vm3657, %v3111, -inf
  %v4374 = vrot.slane %v4373, 4
  %v4375 = vmax.f32 %v4373, %v4374
  %v4376 = vrot.slane %v4375, 2
  %v4377 = vmax.f32 %v4375, %v4376
  %v4378 = vrot.slane %v4377, 1
  %v4379 = vmax.f32 %v4377, %v4378
  %v4380 = vsel %vm3665, %v3112, -inf
  %v4381 = vrot.slane %v4380, 4
  %v4382 = vmax.f32 %v4380, %v4381
  %v4383 = vrot.slane %v4382, 2
  %v4384 = vmax.f32 %v4382, %v4383
  %v4385 = vrot.slane %v4384, 1
  %v4386 = vmax.f32 %v4384, %v4385
  %v4387 = vsel %vm3657, %v3119, -inf
  %v4388 = vrot.slane %v4387, 4
  %v4389 = vmax.f32 %v4387, %v4388
  %v4390 = vrot.slane %v4389, 2
  %v4391 = vmax.f32 %v4389, %v4390
  %v4392 = vrot.slane %v4391, 1
  %v4393 = vmax.f32 %v4391, %v4392
  %v4394 = vsel %vm3665, %v3120, -inf
  %v4395 = vrot.slane %v4394, 4
  %v4396 = vmax.f32 %v4394, %v4395
  %v4397 = vrot.slane %v4396, 2
  %v4398 = vmax.f32 %v4396, %v4397
  %v4399 = vrot.slane %v4398, 1
  %v4400 = vmax.f32 %v4398, %v4399
  %v4401 = vsel %vm3657, %v3127, -inf
  %v4402 = vrot.slane %v4401, 4
  %v4403 = vmax.f32 %v4401, %v4402
  %v4404 = vrot.slane %v4403, 2
  %v4405 = vmax.f32 %v4403, %v4404
  %v4406 = vrot.slane %v4405, 1
  %v4407 = vmax.f32 %v4405, %v4406
  %v4408 = vsel %vm3665, %v3128, -inf
  %v4409 = vrot.slane %v4408, 4
  %v4410 = vmax.f32 %v4408, %v4409
  %v4411 = vrot.slane %v4410, 2
  %v4412 = vmax.f32 %v4410, %v4411
  %v4413 = vrot.slane %v4412, 1
  %v4414 = vmax.f32 %v4412, %v4413
  %v4415 = vsel %vm3657, %v3135, -inf
  %v4416 = vrot.slane %v4415, 4
  %v4417 = vmax.f32 %v4415, %v4416
  %v4418 = vrot.slane %v4417, 2
  %v4419 = vmax.f32 %v4417, %v4418
  %v4420 = vrot.slane %v4419, 1
  %v4421 = vmax.f32 %v4419, %v4420
  %v4422 = vsel %vm3665, %v3136, -inf
  %v4423 = vrot.slane %v4422, 4
  %v4424 = vmax.f32 %v4422, %v4423
  %v4425 = vrot.slane %v4424, 2
  %v4426 = vmax.f32 %v4424, %v4425
  %v4427 = vrot.slane %v4426, 1
  %v4428 = vmax.f32 %v4426, %v4427
  %v4429 = vsel %vm3657, %v3143, -inf
  %v4430 = vrot.slane %v4429, 4
  %v4431 = vmax.f32 %v4429, %v4430
  %v4432 = vrot.slane %v4431, 2
  %v4433 = vmax.f32 %v4431, %v4432
  %v4434 = vrot.slane %v4433, 1
  %v4435 = vmax.f32 %v4433, %v4434
  %v4436 = vsel %vm3665, %v3144, -inf
  %v4437 = vrot.slane %v4436, 4
  %v4438 = vmax.f32 %v4436, %v4437
  %v4439 = vrot.slane %v4438, 2
  %v4440 = vmax.f32 %v4438, %v4439
  %v4441 = vrot.slane %v4440, 1
  %v4442 = vmax.f32 %v4440, %v4441
  %v4443 = vsel %vm3657, %v3151, -inf
  %v4444 = vrot.slane %v4443, 4
  %v4445 = vmax.f32 %v4443, %v4444
  %v4446 = vrot.slane %v4445, 2
  %v4447 = vmax.f32 %v4445, %v4446
  %v4448 = vrot.slane %v4447, 1
  %v4449 = vmax.f32 %v4447, %v4448
  %v4450 = vsel %vm3665, %v3152, -inf
  %v4451 = vrot.slane %v4450, 4
  %v4452 = vmax.f32 %v4450, %v4451
  %v4453 = vrot.slane %v4452, 2
  %v4454 = vmax.f32 %v4452, %v4453
  %v4455 = vrot.slane %v4454, 1
  %v4456 = vmax.f32 %v4454, %v4455
  %v4457 = vsel %vm3657, %v3159, -inf
  %v4458 = vrot.slane %v4457, 4
  %v4459 = vmax.f32 %v4457, %v4458
  %v4460 = vrot.slane %v4459, 2
  %v4461 = vmax.f32 %v4459, %v4460
  %v4462 = vrot.slane %v4461, 1
  %v4463 = vmax.f32 %v4461, %v4462
  %v4464 = vsel %vm3665, %v3160, -inf
  %v4465 = vrot.slane %v4464, 4
  %v4466 = vmax.f32 %v4464, %v4465
  %v4467 = vrot.slane %v4466, 2
  %v4468 = vmax.f32 %v4466, %v4467
  %v4469 = vrot.slane %v4468, 1
  %v4470 = vmax.f32 %v4468, %v4469
  %v4471 = vsel %vm3657, %v3167, -inf
  %v4472 = vrot.slane %v4471, 4
  %v4473 = vmax.f32 %v4471, %v4472
  %v4474 = vrot.slane %v4473, 2
  %v4475 = vmax.f32 %v4473, %v4474
  %v4476 = vrot.slane %v4475, 1
  %v4477 = vmax.f32 %v4475, %v4476
  %v4478 = vsel %vm3665, %v3168, -inf
  %v4479 = vrot.slane %v4478, 4
  %v4480 = vmax.f32 %v4478, %v4479
  %v4481 = vrot.slane %v4480, 2
  %v4482 = vmax.f32 %v4480, %v4481
  %v4483 = vrot.slane %v4482, 1
  %v4484 = vmax.f32 %v4482, %v4483
  %v4485 = vsel %vm3657, %v3175, -inf
  %v4486 = vrot.slane %v4485, 4
  %v4487 = vmax.f32 %v4485, %v4486
  %v4488 = vrot.slane %v4487, 2
  %v4489 = vmax.f32 %v4487, %v4488
  %v4490 = vrot.slane %v4489, 1
  %v4491 = vmax.f32 %v4489, %v4490
  %v4492 = vsel %vm3665, %v3176, -inf
  %v4493 = vrot.slane %v4492, 4
  %v4494 = vmax.f32 %v4492, %v4493
  %v4495 = vrot.slane %v4494, 2
  %v4496 = vmax.f32 %v4494, %v4495
  %v4497 = vrot.slane %v4496, 1
  %v4498 = vmax.f32 %v4496, %v4497
  %v4499 = vsel %vm3657, %v3183, -inf
  %v4500 = vrot.slane %v4499, 4
  %v4501 = vmax.f32 %v4499, %v4500
  %v4502 = vrot.slane %v4501, 2
  %v4503 = vmax.f32 %v4501, %v4502
  %v4504 = vrot.slane %v4503, 1
  %v4505 = vmax.f32 %v4503, %v4504
  %v4506 = vsel %vm3665, %v3184, -inf
  %v4507 = vrot.slane %v4506, 4
  %v4508 = vmax.f32 %v4506, %v4507
  %v4509 = vrot.slane %v4508, 2
  %v4510 = vmax.f32 %v4508, %v4509
  %v4511 = vrot.slane %v4510, 1
  %v4512 = vmax.f32 %v4510, %v4511
  %v4513 = vsel %vm3657, %v3191, -inf
  %v4514 = vrot.slane %v4513, 4
  %v4515 = vmax.f32 %v4513, %v4514
  %v4516 = vrot.slane %v4515, 2
  %v4517 = vmax.f32 %v4515, %v4516
  %v4518 = vrot.slane %v4517, 1
  %v4519 = vmax.f32 %v4517, %v4518
  %v4520 = vsel %vm3665, %v3192, -inf
  %v4521 = vrot.slane %v4520, 4
  %v4522 = vmax.f32 %v4520, %v4521
  %v4523 = vrot.slane %v4522, 2
  %v4524 = vmax.f32 %v4522, %v4523
  %v4525 = vrot.slane %v4524, 1
  %v4526 = vmax.f32 %v4524, %v4525
  %v4527 = vsel %vm3657, %v3199, -inf
  %v4528 = vrot.slane %v4527, 4
  %v4529 = vmax.f32 %v4527, %v4528
  %v4530 = vrot.slane %v4529, 2
  %v4531 = vmax.f32 %v4529, %v4530
  %v4532 = vrot.slane %v4531, 1
  %v4533 = vmax.f32 %v4531, %v4532
  %v4534 = vsel %vm3665, %v3200, -inf
  %v4535 = vrot.slane %v4534, 4
  %v4536 = vmax.f32 %v4534, %v4535
  %v4537 = vrot.slane %v4536, 2
  %v4538 = vmax.f32 %v4536, %v4537
  %v4539 = vrot.slane %v4538, 1
  %v4540 = vmax.f32 %v4538, %v4539
  %v4541 = vsel %vm3657, %v3207, -inf
  %v4542 = vrot.slane %v4541, 4
  %v4543 = vmax.f32 %v4541, %v4542
  %v4544 = vrot.slane %v4543, 2
  %v4545 = vmax.f32 %v4543, %v4544
  %v4546 = vrot.slane %v4545, 1
  %v4547 = vmax.f32 %v4545, %v4546
  %v4548 = vsel %vm3665, %v3208, -inf
  %v4549 = vrot.slane %v4548, 4
  %v4550 = vmax.f32 %v4548, %v4549
  %v4551 = vrot.slane %v4550, 2
  %v4552 = vmax.f32 %v4550, %v4551
  %v4553 = vrot.slane %v4552, 1
  %v4554 = vmax.f32 %v4552, %v4553
  %v4555 = vsel %vm3657, %v3215, -inf
  %v4556 = vrot.slane %v4555, 4
  %v4557 = vmax.f32 %v4555, %v4556
  %v4558 = vrot.slane %v4557, 2
  %v4559 = vmax.f32 %v4557, %v4558
  %v4560 = vrot.slane %v4559, 1
  %v4561 = vmax.f32 %v4559, %v4560
  %v4562 = vsel %vm3665, %v3216, -inf
  %v4563 = vrot.slane %v4562, 4
  %v4564 = vmax.f32 %v4562, %v4563
  %v4565 = vrot.slane %v4564, 2
  %v4566 = vmax.f32 %v4564, %v4565
  %v4567 = vrot.slane %v4566, 1
  %v4568 = vmax.f32 %v4566, %v4567
  %v4569 = vsel %vm3657, %v3223, -inf
  %v4570 = vrot.slane %v4569, 4
  %v4571 = vmax.f32 %v4569, %v4570
  %v4572 = vrot.slane %v4571, 2
  %v4573 = vmax.f32 %v4571, %v4572
  %v4574 = vrot.slane %v4573, 1
  %v4575 = vmax.f32 %v4573, %v4574
  %v4576 = vsel %vm3665, %v3224, -inf
  %v4577 = vrot.slane %v4576, 4
  %v4578 = vmax.f32 %v4576, %v4577
  %v4579 = vrot.slane %v4578, 2
  %v4580 = vmax.f32 %v4578, %v4579
  %v4581 = vrot.slane %v4580, 1
  %v4582 = vmax.f32 %v4580, %v4581
  %v4583 = vsel %vm3657, %v3231, -inf
  %v4584 = vrot.slane %v4583, 4
  %v4585 = vmax.f32 %v4583, %v4584
  %v4586 = vrot.slane %v4585, 2
  %v4587 = vmax.f32 %v4585, %v4586
  %v4588 = vrot.slane %v4587, 1
  %v4589 = vmax.f32 %v4587, %v4588
  %v4590 = vsel %vm3665, %v3232, -inf
  %v4591 = vrot.slane %v4590, 4
  %v4592 = vmax.f32 %v4590, %v4591
  %v4593 = vrot.slane %v4592, 2
  %v4594 = vmax.f32 %v4592, %v4593
  %v4595 = vrot.slane %v4594, 1
  %v4596 = vmax.f32 %v4594, %v4595
  %v4597 = vsel %vm3657, %v3239, -inf
  %v4598 = vrot.slane %v4597, 4
  %v4599 = vmax.f32 %v4597, %v4598
  %v4600 = vrot.slane %v4599, 2
  %v4601 = vmax.f32 %v4599, %v4600
  %v4602 = vrot.slane %v4601, 1
  %v4603 = vmax.f32 %v4601, %v4602
  %v4604 = vsel %vm3665, %v3240, -inf
  %v4605 = vrot.slane %v4604, 4
  %v4606 = vmax.f32 %v4604, %v4605
  %v4607 = vrot.slane %v4606, 2
  %v4608 = vmax.f32 %v4606, %v4607
  %v4609 = vrot.slane %v4608, 1
  %v4610 = vmax.f32 %v4608, %v4609
  %v4611 = vsel %vm3657, %v3247, -inf
  %v4612 = vrot.slane %v4611, 4
  %v4613 = vmax.f32 %v4611, %v4612
  %v4614 = vrot.slane %v4613, 2
  %v4615 = vmax.f32 %v4613, %v4614
  %v4616 = vrot.slane %v4615, 1
  %v4617 = vmax.f32 %v4615, %v4616
  %v4618 = vsel %vm3665, %v3248, -inf
  %v4619 = vrot.slane %v4618, 4
  %v4620 = vmax.f32 %v4618, %v4619
  %v4621 = vrot.slane %v4620, 2
  %v4622 = vmax.f32 %v4620, %v4621
  %v4623 = vrot.slane %v4622, 1
  %v4624 = vmax.f32 %v4622, %v4623
  %v4625 = vsel %vm3657, %v3255, -inf
  %v4626 = vrot.slane %v4625, 4
  %v4627 = vmax.f32 %v4625, %v4626
  %v4628 = vrot.slane %v4627, 2
  %v4629 = vmax.f32 %v4627, %v4628
  %v4630 = vrot.slane %v4629, 1
  %v4631 = vmax.f32 %v4629, %v4630
  %v4632 = vsel %vm3665, %v3256, -inf
  %v4633 = vrot.slane %v4632, 4
  %v4634 = vmax.f32 %v4632, %v4633
  %v4635 = vrot.slane %v4634, 2
  %v4636 = vmax.f32 %v4634, %v4635
  %v4637 = vrot.slane %v4636, 1
  %v4638 = vmax.f32 %v4636, %v4637
  %v4639 = vsel %vm3657, %v3263, -inf
  %v4640 = vrot.slane %v4639, 4
  %v4641 = vmax.f32 %v4639, %v4640
  %v4642 = vrot.slane %v4641, 2
  %v4643 = vmax.f32 %v4641, %v4642
  %v4644 = vrot.slane %v4643, 1
  %v4645 = vmax.f32 %v4643, %v4644
  %v4646 = vsel %vm3665, %v3264, -inf
  %v4647 = vrot.slane %v4646, 4
  %v4648 = vmax.f32 %v4646, %v4647
  %v4649 = vrot.slane %v4648, 2
  %v4650 = vmax.f32 %v4648, %v4649
  %v4651 = vrot.slane %v4650, 1
  %v4652 = vmax.f32 %v4650, %v4651
  %v4653 = vsel %vm3657, %v3271, -inf
  %v4654 = vrot.slane %v4653, 4
  %v4655 = vmax.f32 %v4653, %v4654
  %v4656 = vrot.slane %v4655, 2
  %v4657 = vmax.f32 %v4655, %v4656
  %v4658 = vrot.slane %v4657, 1
  %v4659 = vmax.f32 %v4657, %v4658
  %v4660 = vsel %vm3665, %v3272, -inf
  %v4661 = vrot.slane %v4660, 4
  %v4662 = vmax.f32 %v4660, %v4661
  %v4663 = vrot.slane %v4662, 2
  %v4664 = vmax.f32 %v4662, %v4663
  %v4665 = vrot.slane %v4664, 1
  %v4666 = vmax.f32 %v4664, %v4665
  %v4667 = vsel %vm3657, %v3279, -inf
  %v4668 = vrot.slane %v4667, 4
  %v4669 = vmax.f32 %v4667, %v4668
  %v4670 = vrot.slane %v4669, 2
  %v4671 = vmax.f32 %v4669, %v4670
  %v4672 = vrot.slane %v4671, 1
  %v4673 = vmax.f32 %v4671, %v4672
  %v4674 = vsel %vm3665, %v3280, -inf
  %v4675 = vrot.slane %v4674, 4
  %v4676 = vmax.f32 %v4674, %v4675
  %v4677 = vrot.slane %v4676, 2
  %v4678 = vmax.f32 %v4676, %v4677
  %v4679 = vrot.slane %v4678, 1
  %v4680 = vmax.f32 %v4678, %v4679
  %v4681 = vsel %vm3657, %v3287, -inf
  %v4682 = vrot.slane %v4681, 4
  %v4683 = vmax.f32 %v4681, %v4682
  %v4684 = vrot.slane %v4683, 2
  %v4685 = vmax.f32 %v4683, %v4684
  %v4686 = vrot.slane %v4685, 1
  %v4687 = vmax.f32 %v4685, %v4686
  %v4688 = vsel %vm3665, %v3288, -inf
  %v4689 = vrot.slane %v4688, 4
  %v4690 = vmax.f32 %v4688, %v4689
  %v4691 = vrot.slane %v4690, 2
  %v4692 = vmax.f32 %v4690, %v4691
  %v4693 = vrot.slane %v4692, 1
  %v4694 = vmax.f32 %v4692, %v4693
  %v4695 = vsel %vm3657, %v3295, -inf
  %v4696 = vrot.slane %v4695, 4
  %v4697 = vmax.f32 %v4695, %v4696
  %v4698 = vrot.slane %v4697, 2
  %v4699 = vmax.f32 %v4697, %v4698
  %v4700 = vrot.slane %v4699, 1
  %v4701 = vmax.f32 %v4699, %v4700
  %v4702 = vsel %vm3665, %v3296, -inf
  %v4703 = vrot.slane %v4702, 4
  %v4704 = vmax.f32 %v4702, %v4703
  %v4705 = vrot.slane %v4704, 2
  %v4706 = vmax.f32 %v4704, %v4705
  %v4707 = vrot.slane %v4706, 1
  %v4708 = vmax.f32 %v4706, %v4707
  %v4709 = vsel %vm3657, %v3303, -inf
  %v4710 = vrot.slane %v4709, 4
  %v4711 = vmax.f32 %v4709, %v4710
  %v4712 = vrot.slane %v4711, 2
  %v4713 = vmax.f32 %v4711, %v4712
  %v4714 = vrot.slane %v4713, 1
  %v4715 = vmax.f32 %v4713, %v4714
  %v4716 = vsel %vm3665, %v3304, -inf
  %v4717 = vrot.slane %v4716, 4
  %v4718 = vmax.f32 %v4716, %v4717
  %v4719 = vrot.slane %v4718, 2
  %v4720 = vmax.f32 %v4718, %v4719
  %v4721 = vrot.slane %v4720, 1
  %v4722 = vmax.f32 %v4720, %v4721
  %v4723 = vsel %vm3657, %v3311, -inf
  %v4724 = vrot.slane %v4723, 4
  %v4725 = vmax.f32 %v4723, %v4724
  %v4726 = vrot.slane %v4725, 2
  %v4727 = vmax.f32 %v4725, %v4726
  %v4728 = vrot.slane %v4727, 1
  %v4729 = vmax.f32 %v4727, %v4728
  %v4730 = vsel %vm3665, %v3312, -inf
  %v4731 = vrot.slane %v4730, 4
  %v4732 = vmax.f32 %v4730, %v4731
  %v4733 = vrot.slane %v4732, 2
  %v4734 = vmax.f32 %v4732, %v4733
  %v4735 = vrot.slane %v4734, 1
  %v4736 = vmax.f32 %v4734, %v4735
  %v4737 = vsel %vm3657, %v3319, -inf
  %v4738 = vrot.slane %v4737, 4
  %v4739 = vmax.f32 %v4737, %v4738
  %v4740 = vrot.slane %v4739, 2
  %v4741 = vmax.f32 %v4739, %v4740
  %v4742 = vrot.slane %v4741, 1
  %v4743 = vmax.f32 %v4741, %v4742
  %v4744 = vsel %vm3665, %v3320, -inf
  %v4745 = vrot.slane %v4744, 4
  %v4746 = vmax.f32 %v4744, %v4745
  %v4747 = vrot.slane %v4746, 2
  %v4748 = vmax.f32 %v4746, %v4747
  %v4749 = vrot.slane %v4748, 1
  %v4750 = vmax.f32 %v4748, %v4749
  %v4751 = vsel %vm3657, %v3327, -inf
  %v4752 = vrot.slane %v4751, 4
  %v4753 = vmax.f32 %v4751, %v4752
  %v4754 = vrot.slane %v4753, 2
  %v4755 = vmax.f32 %v4753, %v4754
  %v4756 = vrot.slane %v4755, 1
  %v4757 = vmax.f32 %v4755, %v4756
  %v4758 = vsel %vm3665, %v3328, -inf
  %v4759 = vrot.slane %v4758, 4
  %v4760 = vmax.f32 %v4758, %v4759
  %v4761 = vrot.slane %v4760, 2
  %v4762 = vmax.f32 %v4760, %v4761
  %v4763 = vrot.slane %v4762, 1
  %v4764 = vmax.f32 %v4762, %v4763
  %v4765 = vsel %vm3657, %v3335, -inf
  %v4766 = vrot.slane %v4765, 4
  %v4767 = vmax.f32 %v4765, %v4766
  %v4768 = vrot.slane %v4767, 2
  %v4769 = vmax.f32 %v4767, %v4768
  %v4770 = vrot.slane %v4769, 1
  %v4771 = vmax.f32 %v4769, %v4770
  %v4772 = vsel %vm3665, %v3336, -inf
  %v4773 = vrot.slane %v4772, 4
  %v4774 = vmax.f32 %v4772, %v4773
  %v4775 = vrot.slane %v4774, 2
  %v4776 = vmax.f32 %v4774, %v4775
  %v4777 = vrot.slane %v4776, 1
  %v4778 = vmax.f32 %v4776, %v4777
  %v4779 = vsel %vm3657, %v3343, -inf
  %v4780 = vrot.slane %v4779, 4
  %v4781 = vmax.f32 %v4779, %v4780
  %v4782 = vrot.slane %v4781, 2
  %v4783 = vmax.f32 %v4781, %v4782
  %v4784 = vrot.slane %v4783, 1
  %v4785 = vmax.f32 %v4783, %v4784
  %v4786 = vsel %vm3665, %v3344, -inf
  %v4787 = vrot.slane %v4786, 4
  %v4788 = vmax.f32 %v4786, %v4787
  %v4789 = vrot.slane %v4788, 2
  %v4790 = vmax.f32 %v4788, %v4789
  %v4791 = vrot.slane %v4790, 1
  %v4792 = vmax.f32 %v4790, %v4791
  %v4793 = vsel %vm3657, %v3351, -inf
  %v4794 = vrot.slane %v4793, 4
  %v4795 = vmax.f32 %v4793, %v4794
  %v4796 = vrot.slane %v4795, 2
  %v4797 = vmax.f32 %v4795, %v4796
  %v4798 = vrot.slane %v4797, 1
  %v4799 = vmax.f32 %v4797, %v4798
  %v4800 = vsel %vm3665, %v3352, -inf
  %v4801 = vrot.slane %v4800, 4
  %v4802 = vmax.f32 %v4800, %v4801
  %v4803 = vrot.slane %v4802, 2
  %v4804 = vmax.f32 %v4802, %v4803
  %v4805 = vrot.slane %v4804, 1
  %v4806 = vmax.f32 %v4804, %v4805
  %v4807 = vsel %vm3657, %v3359, -inf
  %v4808 = vrot.slane %v4807, 4
  %v4809 = vmax.f32 %v4807, %v4808
  %v4810 = vrot.slane %v4809, 2
  %v4811 = vmax.f32 %v4809, %v4810
  %v4812 = vrot.slane %v4811, 1
  %v4813 = vmax.f32 %v4811, %v4812
  %v4814 = vsel %vm3665, %v3360, -inf
  %v4815 = vrot.slane %v4814, 4
  %v4816 = vmax.f32 %v4814, %v4815
  %v4817 = vrot.slane %v4816, 2
  %v4818 = vmax.f32 %v4816, %v4817
  %v4819 = vrot.slane %v4818, 1
  %v4820 = vmax.f32 %v4818, %v4819
  %v4821 = vsel %vm3657, %v3367, -inf
  %v4822 = vrot.slane %v4821, 4
  %v4823 = vmax.f32 %v4821, %v4822
  %v4824 = vrot.slane %v4823, 2
  %v4825 = vmax.f32 %v4823, %v4824
  %v4826 = vrot.slane %v4825, 1
  %v4827 = vmax.f32 %v4825, %v4826
  %v4828 = vsel %vm3665, %v3368, -inf
  %v4829 = vrot.slane %v4828, 4
  %v4830 = vmax.f32 %v4828, %v4829
  %v4831 = vrot.slane %v4830, 2
  %v4832 = vmax.f32 %v4830, %v4831
  %v4833 = vrot.slane %v4832, 1
  %v4834 = vmax.f32 %v4832, %v4833
  %v4835 = vsel %vm3657, %v3375, -inf
  %v4836 = vrot.slane %v4835, 4
  %v4837 = vmax.f32 %v4835, %v4836
  %v4838 = vrot.slane %v4837, 2
  %v4839 = vmax.f32 %v4837, %v4838
  %v4840 = vrot.slane %v4839, 1
  %v4841 = vmax.f32 %v4839, %v4840
  %v4842 = vsel %vm3665, %v3376, -inf
  %v4843 = vrot.slane %v4842, 4
  %v4844 = vmax.f32 %v4842, %v4843
  %v4845 = vrot.slane %v4844, 2
  %v4846 = vmax.f32 %v4844, %v4845
  %v4847 = vrot.slane %v4846, 1
  %v4848 = vmax.f32 %v4846, %v4847
  %v4849 = vsel %vm3657, %v3383, -inf
  %v4850 = vrot.slane %v4849, 4
  %v4851 = vmax.f32 %v4849, %v4850
  %v4852 = vrot.slane %v4851, 2
  %v4853 = vmax.f32 %v4851, %v4852
  %v4854 = vrot.slane %v4853, 1
  %v4855 = vmax.f32 %v4853, %v4854
  %v4856 = vsel %vm3665, %v3384, -inf
  %v4857 = vrot.slane %v4856, 4
  %v4858 = vmax.f32 %v4856, %v4857
  %v4859 = vrot.slane %v4858, 2
  %v4860 = vmax.f32 %v4858, %v4859
  %v4861 = vrot.slane %v4860, 1
  %v4862 = vmax.f32 %v4860, %v4861
  %v4863 = vsel %vm3657, %v3391, -inf
  %v4864 = vrot.slane %v4863, 4
  %v4865 = vmax.f32 %v4863, %v4864
  %v4866 = vrot.slane %v4865, 2
  %v4867 = vmax.f32 %v4865, %v4866
  %v4868 = vrot.slane %v4867, 1
  %v4869 = vmax.f32 %v4867, %v4868
  %v4870 = vsel %vm3665, %v3392, -inf
  %v4871 = vrot.slane %v4870, 4
  %v4872 = vmax.f32 %v4870, %v4871
  %v4873 = vrot.slane %v4872, 2
  %v4874 = vmax.f32 %v4872, %v4873
  %v4875 = vrot.slane %v4874, 1
  %v4876 = vmax.f32 %v4874, %v4875
  %v4877 = vsel %vm3657, %v3399, -inf
  %v4878 = vrot.slane %v4877, 4
  %v4879 = vmax.f32 %v4877, %v4878
  %v4880 = vrot.slane %v4879, 2
  %v4881 = vmax.f32 %v4879, %v4880
  %v4882 = vrot.slane %v4881, 1
  %v4883 = vmax.f32 %v4881, %v4882
  %v4884 = vsel %vm3665, %v3400, -inf
  %v4885 = vrot.slane %v4884, 4
  %v4886 = vmax.f32 %v4884, %v4885
  %v4887 = vrot.slane %v4886, 2
  %v4888 = vmax.f32 %v4886, %v4887
  %v4889 = vrot.slane %v4888, 1
  %v4890 = vmax.f32 %v4888, %v4889
  %v4891 = vsel %vm3657, %v3407, -inf
  %v4892 = vrot.slane %v4891, 4
  %v4893 = vmax.f32 %v4891, %v4892
  %v4894 = vrot.slane %v4893, 2
  %v4895 = vmax.f32 %v4893, %v4894
  %v4896 = vrot.slane %v4895, 1
  %v4897 = vmax.f32 %v4895, %v4896
  %v4898 = vsel %vm3665, %v3408, -inf
  %v4899 = vrot.slane %v4898, 4
  %v4900 = vmax.f32 %v4898, %v4899
  %v4901 = vrot.slane %v4900, 2
  %v4902 = vmax.f32 %v4900, %v4901
  %v4903 = vrot.slane %v4902, 1
  %v4904 = vmax.f32 %v4902, %v4903
  %v4905 = vsel %vm3657, %v3415, -inf
  %v4906 = vrot.slane %v4905, 4
  %v4907 = vmax.f32 %v4905, %v4906
  %v4908 = vrot.slane %v4907, 2
  %v4909 = vmax.f32 %v4907, %v4908
  %v4910 = vrot.slane %v4909, 1
  %v4911 = vmax.f32 %v4909, %v4910
  %v4912 = vsel %vm3665, %v3416, -inf
  %v4913 = vrot.slane %v4912, 4
  %v4914 = vmax.f32 %v4912, %v4913
  %v4915 = vrot.slane %v4914, 2
  %v4916 = vmax.f32 %v4914, %v4915
  %v4917 = vrot.slane %v4916, 1
  %v4918 = vmax.f32 %v4916, %v4917
  %v4919 = vsel %vm3657, %v3423, -inf
  %v4920 = vrot.slane %v4919, 4
  %v4921 = vmax.f32 %v4919, %v4920
  %v4922 = vrot.slane %v4921, 2
  %v4923 = vmax.f32 %v4921, %v4922
  %v4924 = vrot.slane %v4923, 1
  %v4925 = vmax.f32 %v4923, %v4924
  %v4926 = vsel %vm3665, %v3424, -inf
  %v4927 = vrot.slane %v4926, 4
  %v4928 = vmax.f32 %v4926, %v4927
  %v4929 = vrot.slane %v4928, 2
  %v4930 = vmax.f32 %v4928, %v4929
  %v4931 = vrot.slane %v4930, 1
  %v4932 = vmax.f32 %v4930, %v4931
  %v4933 = vsel %vm3657, %v3431, -inf
  %v4934 = vrot.slane %v4933, 4
  %v4935 = vmax.f32 %v4933, %v4934
  %v4936 = vrot.slane %v4935, 2
  %v4937 = vmax.f32 %v4935, %v4936
  %v4938 = vrot.slane %v4937, 1
  %v4939 = vmax.f32 %v4937, %v4938
  %v4940 = vsel %vm3665, %v3432, -inf
  %v4941 = vrot.slane %v4940, 4
  %v4942 = vmax.f32 %v4940, %v4941
  %v4943 = vrot.slane %v4942, 2
  %v4944 = vmax.f32 %v4942, %v4943
  %v4945 = vrot.slane %v4944, 1
  %v4946 = vmax.f32 %v4944, %v4945
  %v4947 = vsel %vm3657, %v3439, -inf
  %v4948 = vrot.slane %v4947, 4
  %v4949 = vmax.f32 %v4947, %v4948
  %v4950 = vrot.slane %v4949, 2
  %v4951 = vmax.f32 %v4949, %v4950
  %v4952 = vrot.slane %v4951, 1
  %v4953 = vmax.f32 %v4951, %v4952
  %v4954 = vsel %vm3665, %v3440, -inf
  %v4955 = vrot.slane %v4954, 4
  %v4956 = vmax.f32 %v4954, %v4955
  %v4957 = vrot.slane %v4956, 2
  %v4958 = vmax.f32 %v4956, %v4957
  %v4959 = vrot.slane %v4958, 1
  %v4960 = vmax.f32 %v4958, %v4959
  %v4961 = vsel %vm3657, %v3447, -inf
  %v4962 = vrot.slane %v4961, 4
  %v4963 = vmax.f32 %v4961, %v4962
  %v4964 = vrot.slane %v4963, 2
  %v4965 = vmax.f32 %v4963, %v4964
  %v4966 = vrot.slane %v4965, 1
  %v4967 = vmax.f32 %v4965, %v4966
  %v4968 = vsel %vm3665, %v3448, -inf
  %v4969 = vrot.slane %v4968, 4
  %v4970 = vmax.f32 %v4968, %v4969
  %v4971 = vrot.slane %v4970, 2
  %v4972 = vmax.f32 %v4970, %v4971
  %v4973 = vrot.slane %v4972, 1
  %v4974 = vmax.f32 %v4972, %v4973
  %v4975 = vsel %vm3657, %v3455, -inf
  %v4976 = vrot.slane %v4975, 4
  %v4977 = vmax.f32 %v4975, %v4976
  %v4978 = vrot.slane %v4977, 2
  %v4979 = vmax.f32 %v4977, %v4978
  %v4980 = vrot.slane %v4979, 1
  %v4981 = vmax.f32 %v4979, %v4980
  %v4982 = vsel %vm3665, %v3456, -inf
  %v4983 = vrot.slane %v4982, 4
  %v4984 = vmax.f32 %v4982, %v4983
  %v4985 = vrot.slane %v4984, 2
  %v4986 = vmax.f32 %v4984, %v4985
  %v4987 = vrot.slane %v4986, 1
  %v4988 = vmax.f32 %v4986, %v4987
  %v4989 = vsel %vm3657, %v3463, -inf
  %v4990 = vrot.slane %v4989, 4
  %v4991 = vmax.f32 %v4989, %v4990
  %v4992 = vrot.slane %v4991, 2
  %v4993 = vmax.f32 %v4991, %v4992
  %v4994 = vrot.slane %v4993, 1
  %v4995 = vmax.f32 %v4993, %v4994
  %v4996 = vsel %vm3665, %v3464, -inf
  %v4997 = vrot.slane %v4996, 4
  %v4998 = vmax.f32 %v4996, %v4997
  %v4999 = vrot.slane %v4998, 2
  %v5000 = vmax.f32 %v4998, %v4999
  %v5001 = vrot.slane %v5000, 1
  %v5002 = vmax.f32 %v5000, %v5001
  %v5003 = vld [vmem:[%s3] sm:$0xff]
  %v5004 = vld [vmem:[%s3 + $0x8] sm:$0xff]
  %v5005 = vld [vmem:[%s3 + $0x10] sm:$0xff]
  %v5006 = vld [vmem:[%s3 + $0x18] sm:$0xff]
  %v5007 = vld [vmem:[%s3 + $0x20] sm:$0xff]
  %v5008 = vld [vmem:[%s3 + $0x28] sm:$0xff]
  %v5009 = vld [vmem:[%s3 + $0x30] sm:$0xff]
  %v5010 = vld [vmem:[%s3 + $0x38] sm:$0xff]
  %v5011 = vld [vmem:[%s3 + $0x40] sm:$0xff]
  %v5012 = vld [vmem:[%s3 + $0x48] sm:$0xff]
  %v5013 = vld [vmem:[%s3 + $0x50] sm:$0xff]
  %v5014 = vld [vmem:[%s3 + $0x58] sm:$0xff]
  %v5015 = vld [vmem:[%s3 + $0x60] sm:$0xff]
  %v5016 = vld [vmem:[%s3 + $0x68] sm:$0xff]
  %v5017 = vld [vmem:[%s3 + $0x70] sm:$0xff]
  %v5018 = vld [vmem:[%s3 + $0x78] sm:$0xff]
  %v5019 = vld [vmem:[%s3 + $0x80] sm:$0xff]
  %v5020 = vld [vmem:[%s3 + $0x88] sm:$0xff]
  %v5021 = vld [vmem:[%s3 + $0x90] sm:$0xff]
  %v5022 = vld [vmem:[%s3 + $0x98] sm:$0xff]
  %v5023 = vld [vmem:[%s3 + $0xa0] sm:$0xff]
  %v5024 = vld [vmem:[%s3 + $0xa8] sm:$0xff]
  %v5025 = vld [vmem:[%s3 + $0xb0] sm:$0xff]
  %v5026 = vld [vmem:[%s3 + $0xb8] sm:$0xff]
  %v5027 = vld [vmem:[%s3 + $0xc0] sm:$0xff]
  %v5028 = vld [vmem:[%s3 + $0xc8] sm:$0xff]
  %v5029 = vld [vmem:[%s3 + $0xd0] sm:$0xff]
  %v5030 = vld [vmem:[%s3 + $0xd8] sm:$0xff]
  %v5031 = vld [vmem:[%s3 + $0xe0] sm:$0xff]
  %v5032 = vld [vmem:[%s3 + $0xe8] sm:$0xff]
  %v5033 = vld [vmem:[%s3 + $0xf0] sm:$0xff]
  %v5034 = vld [vmem:[%s3 + $0xf8] sm:$0xff]
  %v5035 = vld [vmem:[%s3 + $0x100] sm:$0xff]
  %v5036 = vld [vmem:[%s3 + $0x108] sm:$0xff]
  %v5037 = vld [vmem:[%s3 + $0x110] sm:$0xff]
  %v5038 = vld [vmem:[%s3 + $0x118] sm:$0xff]
  %v5039 = vld [vmem:[%s3 + $0x120] sm:$0xff]
  %v5040 = vld [vmem:[%s3 + $0x128] sm:$0xff]
  %v5041 = vld [vmem:[%s3 + $0x130] sm:$0xff]
  %v5042 = vld [vmem:[%s3 + $0x138] sm:$0xff]
  %v5043 = vld [vmem:[%s3 + $0x140] sm:$0xff]
  %v5044 = vld [vmem:[%s3 + $0x148] sm:$0xff]
  %v5045 = vld [vmem:[%s3 + $0x150] sm:$0xff]
  %v5046 = vld [vmem:[%s3 + $0x158] sm:$0xff]
  %v5047 = vld [vmem:[%s3 + $0x160] sm:$0xff]
  %v5048 = vld [vmem:[%s3 + $0x168] sm:$0xff]
  %v5049 = vld [vmem:[%s3 + $0x170] sm:$0xff]
  %v5050 = vld [vmem:[%s3 + $0x178] sm:$0xff]
  %v5051 = vld [vmem:[%s3 + $0x180] sm:$0xff]
  %v5052 = vld [vmem:[%s3 + $0x188] sm:$0xff]
  %v5053 = vld [vmem:[%s3 + $0x190] sm:$0xff]
  %v5054 = vld [vmem:[%s3 + $0x198] sm:$0xff]
  %v5055 = vld [vmem:[%s3 + $0x1a0] sm:$0xff]
  %v5056 = vld [vmem:[%s3 + $0x1a8] sm:$0xff]
  %v5057 = vld [vmem:[%s3 + $0x1b0] sm:$0xff]
  %v5058 = vld [vmem:[%s3 + $0x1b8] sm:$0xff]
  %v5059 = vld [vmem:[%s3 + $0x1c0] sm:$0xff]
  %v5060 = vld [vmem:[%s3 + $0x1c8] sm:$0xff]
  %v5061 = vld [vmem:[%s3 + $0x1d0] sm:$0xff]
  %v5062 = vld [vmem:[%s3 + $0x1d8] sm:$0xff]
  %s5063 = scalar_lea.vmem %s3, 480
  %v5064 = vld [vmem:[%s5063] sm:$0xff]
  %v5065 = vld [vmem:[%s5063 + $0x8] sm:$0xff]
  %v5066 = vld [vmem:[%s5063 + $0x10] sm:$0xff]
  %v5067 = vld [vmem:[%s5063 + $0x18] sm:$0xff]
  %v5068 = vld [vmem:[%s5063 + $0x20] sm:$0xff]
  %v5069 = vld [vmem:[%s5063 + $0x28] sm:$0xff]
  %v5070 = vld [vmem:[%s5063 + $0x30] sm:$0xff]
  %v5071 = vld [vmem:[%s5063 + $0x38] sm:$0xff]
  %v5072 = vld [vmem:[%s5063 + $0x40] sm:$0xff]
  %v5073 = vld [vmem:[%s5063 + $0x48] sm:$0xff]
  %v5074 = vld [vmem:[%s5063 + $0x50] sm:$0xff]
  %v5075 = vld [vmem:[%s5063 + $0x58] sm:$0xff]
  %v5076 = vld [vmem:[%s5063 + $0x60] sm:$0xff]
  %v5077 = vld [vmem:[%s5063 + $0x68] sm:$0xff]
  %v5078 = vld [vmem:[%s5063 + $0x70] sm:$0xff]
  %v5079 = vld [vmem:[%s5063 + $0x78] sm:$0xff]
  %v5080 = vld [vmem:[%s5063 + $0x80] sm:$0xff]
  %v5081 = vld [vmem:[%s5063 + $0x88] sm:$0xff]
  %v5082 = vld [vmem:[%s5063 + $0x90] sm:$0xff]
  %v5083 = vld [vmem:[%s5063 + $0x98] sm:$0xff]
  %v5084 = vld [vmem:[%s5063 + $0xa0] sm:$0xff]
  %v5085 = vld [vmem:[%s5063 + $0xa8] sm:$0xff]
  %v5086 = vld [vmem:[%s5063 + $0xb0] sm:$0xff]
  %v5087 = vld [vmem:[%s5063 + $0xb8] sm:$0xff]
  %v5088 = vld [vmem:[%s5063 + $0xc0] sm:$0xff]
  %v5089 = vld [vmem:[%s5063 + $0xc8] sm:$0xff]
  %v5090 = vld [vmem:[%s5063 + $0xd0] sm:$0xff]
  %v5091 = vld [vmem:[%s5063 + $0xd8] sm:$0xff]
  %v5092 = vld [vmem:[%s5063 + $0xe0] sm:$0xff]
  %v5093 = vld [vmem:[%s5063 + $0xe8] sm:$0xff]
  %v5094 = vld [vmem:[%s5063 + $0xf0] sm:$0xff]
  %v5095 = vld [vmem:[%s5063 + $0xf8] sm:$0xff]
  %v5096 = vld [vmem:[%s5063 + $0x100] sm:$0xff]
  %v5097 = vld [vmem:[%s5063 + $0x108] sm:$0xff]
  %v5098 = vld [vmem:[%s5063 + $0x110] sm:$0xff]
  %v5099 = vld [vmem:[%s5063 + $0x118] sm:$0xff]
  %v5100 = vld [vmem:[%s5063 + $0x120] sm:$0xff]
  %v5101 = vld [vmem:[%s5063 + $0x128] sm:$0xff]
  %v5102 = vld [vmem:[%s5063 + $0x130] sm:$0xff]
  %v5103 = vld [vmem:[%s5063 + $0x138] sm:$0xff]
  %v5104 = vld [vmem:[%s5063 + $0x140] sm:$0xff]
  %v5105 = vld [vmem:[%s5063 + $0x148] sm:$0xff]
  %v5106 = vld [vmem:[%s5063 + $0x150] sm:$0xff]
  %v5107 = vld [vmem:[%s5063 + $0x158] sm:$0xff]
  %v5108 = vld [vmem:[%s5063 + $0x160] sm:$0xff]
  %v5109 = vld [vmem:[%s5063 + $0x168] sm:$0xff]
  %v5110 = vld [vmem:[%s5063 + $0x170] sm:$0xff]
  %v5111 = vld [vmem:[%s5063 + $0x178] sm:$0xff]
  %v5112 = vld [vmem:[%s5063 + $0x180] sm:$0xff]
  %v5113 = vld [vmem:[%s5063 + $0x188] sm:$0xff]
  %v5114 = vld [vmem:[%s5063 + $0x190] sm:$0xff]
  %v5115 = vld [vmem:[%s5063 + $0x198] sm:$0xff]
  %v5116 = vld [vmem:[%s5063 + $0x1a0] sm:$0xff]
  %v5117 = vld [vmem:[%s5063 + $0x1a8] sm:$0xff]
  %v5118 = vld [vmem:[%s5063 + $0x1b0] sm:$0xff]
  %v5119 = vld [vmem:[%s5063 + $0x1b8] sm:$0xff]
  %v5120 = vld [vmem:[%s5063 + $0x1c0] sm:$0xff]
  %v5121 = vld [vmem:[%s5063 + $0x1c8] sm:$0xff]
  %v5122 = vld [vmem:[%s5063 + $0x1d0] sm:$0xff]
  %v5123 = vld [vmem:[%s5063 + $0x1d8] sm:$0xff]
  %vm5252 = vcmask 1041409
  %v5253 = vsel %vm5252, %v3693, %v3679
  %vm5254 = vcmask 1042434
  %v5255 = vsel %vm5254, %v3707, %v5253
  %vm5256 = vcmask 1043459
  %v5257 = vsel %vm5256, %v3721, %v5255
  %vm5258 = vcmask 1044484
  %v5259 = vsel %vm5258, %v3735, %v5257
  %vm5260 = vcmask 1045509
  %v5261 = vsel %vm5260, %v3749, %v5259
  %vm5262 = vcmask 1046534
  %v5263 = vsel %vm5262, %v3763, %v5261
  %vm5264 = vcmask 1047559
  %v5265 = vsel %vm5264, %v3777, %v5263
  %v5266 = vsel %vm5252, %v3700, %v3686
  %v5267 = vsel %vm5254, %v3714, %v5266
  %v5268 = vsel %vm5256, %v3728, %v5267
  %v5269 = vsel %vm5258, %v3742, %v5268
  %v5270 = vsel %vm5260, %v3756, %v5269
  %v5271 = vsel %vm5262, %v3770, %v5270
  %v5272 = vsel %vm5264, %v3784, %v5271
  %v5273 = vsel %vm5252, %v3861, %v3847
  %v5274 = vsel %vm5254, %v3875, %v5273
  %v5275 = vsel %vm5256, %v3889, %v5274
  %v5276 = vsel %vm5258, %v3903, %v5275
  %v5277 = vsel %vm5260, %v3917, %v5276
  %v5278 = vsel %vm5262, %v3931, %v5277
  %v5279 = vsel %vm5264, %v3945, %v5278
  %v5280 = vsel %vm5252, %v3868, %v3854
  %v5281 = vsel %vm5254, %v3882, %v5280
  %v5282 = vsel %vm5256, %v3896, %v5281
  %v5283 = vsel %vm5258, %v3910, %v5282
  %v5284 = vsel %vm5260, %v3924, %v5283
  %v5285 = vsel %vm5262, %v3938, %v5284
  %v5286 = vsel %vm5264, %v3952, %v5285
  %v5287 = vsel %vm5252, %v4029, %v4015
  %v5288 = vsel %vm5254, %v4043, %v5287
  %v5289 = vsel %vm5256, %v4057, %v5288
  %v5290 = vsel %vm5258, %v4071, %v5289
  %v5291 = vsel %vm5260, %v4085, %v5290
  %v5292 = vsel %vm5262, %v4099, %v5291
  %v5293 = vsel %vm5264, %v4113, %v5292
  %v5294 = vsel %vm5252, %v4036, %v4022
  %v5295 = vsel %vm5254, %v4050, %v5294
  %v5296 = vsel %vm5256, %v4064, %v5295
  %v5297 = vsel %vm5258, %v4078, %v5296
  %v5298 = vsel %vm5260, %v4092, %v5297
  %v5299 = vsel %vm5262, %v4106, %v5298
  %v5300 = vsel %vm5264, %v4120, %v5299
  %v5301 = vsel %vm5252, %v4197, %v4183
  %v5302 = vsel %vm5254, %v4211, %v5301
  %v5303 = vsel %vm5256, %v4225, %v5302
  %v5304 = vsel %vm5258, %v4239, %v5303
  %v5305 = vsel %vm5260, %v4253, %v5304
  %v5306 = vsel %vm5262, %v4267, %v5305
  %v5307 = vsel %vm5264, %v4281, %v5306
  %v5308 = vsel %vm5252, %v4204, %v4190
  %v5309 = vsel %vm5254, %v4218, %v5308
  %v5310 = vsel %vm5256, %v4232, %v5309
  %v5311 = vsel %vm5258, %v4246, %v5310
  %v5312 = vsel %vm5260, %v4260, %v5311
  %v5313 = vsel %vm5262, %v4274, %v5312
  %v5314 = vsel %vm5264, %v4288, %v5313
  %v5315 = vsel %vm5252, %v4365, %v4351
  %v5316 = vsel %vm5254, %v4379, %v5315
  %v5317 = vsel %vm5256, %v4393, %v5316
  %v5318 = vsel %vm5258, %v4407, %v5317
  %v5319 = vsel %vm5260, %v4421, %v5318
  %v5320 = vsel %vm5262, %v4435, %v5319
  %v5321 = vsel %vm5264, %v4449, %v5320
  %v5322 = vsel %vm5252, %v4372, %v4358
  %v5323 = vsel %vm5254, %v4386, %v5322
  %v5324 = vsel %vm5256, %v4400, %v5323
  %v5325 = vsel %vm5258, %v4414, %v5324
  %v5326 = vsel %vm5260, %v4428, %v5325
  %v5327 = vsel %vm5262, %v4442, %v5326
  %v5328 = vsel %vm5264, %v4456, %v5327
  %v5329 = vsel %vm5252, %v4533, %v4519
  %v5330 = vsel %vm5254, %v4547, %v5329
  %v5331 = vsel %vm5256, %v4561, %v5330
  %v5332 = vsel %vm5258, %v4575, %v5331
  %v5333 = vsel %vm5260, %v4589, %v5332
  %v5334 = vsel %vm5262, %v4603, %v5333
  %v5335 = vsel %vm5264, %v4617, %v5334
  %v5336 = vsel %vm5252, %v4540, %v4526
  %v5337 = vsel %vm5254, %v4554, %v5336
  %v5338 = vsel %vm5256, %v4568, %v5337
  %v5339 = vsel %vm5258, %v4582, %v5338
  %v5340 = vsel %vm5260, %v4596, %v5339
  %v5341 = vsel %vm5262, %v4610, %v5340
  %v5342 = vsel %vm5264, %v4624, %v5341
  %v5343 = vsel %vm5252, %v4701, %v4687
  %v5344 = vsel %vm5254, %v4715, %v5343
  %v5345 = vsel %vm5256, %v4729, %v5344
  %v5346 = vsel %vm5258, %v4743, %v5345
  %v5347 = vsel %vm5260, %v4757, %v5346
  %v5348 = vsel %vm5262, %v4771, %v5347
  %v5349 = vsel %vm5264, %v4785, %v5348
  %v5350 = vsel %vm5252, %v4708, %v4694
  %v5351 = vsel %vm5254, %v4722, %v5350
  %v5352 = vsel %vm5256, %v4736, %v5351
  %v5353 = vsel %vm5258, %v4750, %v5352
  %v5354 = vsel %vm5260, %v4764, %v5353
  %v5355 = vsel %vm5262, %v4778, %v5354
  %v5356 = vsel %vm5264, %v4792, %v5355
  %v5357 = vsel %vm5252, %v4869, %v4855
  %v5358 = vsel %vm5254, %v4883, %v5357
  %v5359 = vsel %vm5256, %v4897, %v5358
  %v5360 = vsel %vm5258, %v4911, %v5359
  %v5361 = vsel %vm5260, %v4925, %v5360
  %v5362 = vsel %vm5262, %v4939, %v5361
  %v5363 = vsel %vm5264, %v4953, %v5362
  %v5364 = vsel %vm5252, %v4876, %v4862
  %v5365 = vsel %vm5254, %v4890, %v5364
  %v5366 = vsel %vm5256, %v4904, %v5365
  %v5367 = vsel %vm5258, %v4918, %v5366
  %v5368 = vsel %vm5260, %v4932, %v5367
  %v5369 = vsel %vm5262, %v4946, %v5368
  %v5370 = vsel %vm5264, %v4960, %v5369
  %vm5379 = vcmask 916480
  %v5380 = vsel %vm5379, %v5272, 0
  %v5382 = vsel %vm5379, %v5286, 0
  %v5384 = vsel %vm5379, %v5300, 0
  %v5386 = vsel %vm5379, %v5314, 0
  %v5388 = vsel %vm5379, %v5328, 0
  %v5390 = vsel %vm5379, %v5342, 0
  %v5392 = vsel %vm5379, %v5356, 0
  %v5394 = vsel %vm5379, %v5370, 0
  %5396 = vmatprep.subr.mxu0 %v5095
  %5397 = vmatpush1.msra.mxu0 %v5094
  %5398 = vmatprep.subr.mxu0 %v5093
  %5399 = vmatpush1.msra.mxu0 %v5092
  %5400 = vmatprep.subr.mxu0 %v5091
  %5401 = vmatpush1.msra.mxu0 %v5090
  %5402 = vmatprep.subr.mxu0 %v5089
  %5403 = vmatpush1.msra.mxu0 %v5088
  %5404 = vmatprep.subr.mxu0 %v5087
  %5405 = vmatpush1.msra.mxu0 %v5086
  %5406 = vmatprep.subr.mxu0 %v5085
  %5407 = vmatpush1.msra.mxu0 %v5084
  %5408 = vmatprep.subr.mxu0 %v5083
  %5409 = vmatpush1.msra.mxu0 %v5082
  %5410 = vmatprep.subr.mxu0 %v5081
  %5411 = vmatpush1.msra.mxu0 %v5080
  %5412 = vmatprep.subr.mxu0 %v5079
  %5413 = vmatpush1.msra.mxu0 %v5078
  %5414 = vmatprep.subr.mxu0 %v5077
  %5415 = vmatpush1.msra.mxu0 %v5076
  %5416 = vmatprep.subr.mxu0 %v5075
  %5417 = vmatpush1.msra.mxu0 %v5074
  %5418 = vmatprep.subr.mxu0 %v5073
  %5419 = vmatpush1.msra.mxu0 %v5072
  %5420 = vmatprep.subr.mxu0 %v5071
  %5421 = vmatpush1.msra.mxu0 %v5070
  %5422 = vmatprep.subr.mxu0 %v5069
  %5423 = vmatpush1.msra.mxu0 %v5068
  %5424 = vmatprep.subr.mxu0 %v5067
  %5425 = vmatpush1.msra.mxu0 %v5066
  %5426 = vmatprep.subr.mxu0 %v5065
  %5427 = vmatpush1.msra.mxu0 %v5064
  %5428 = vmatprep.subr.mxu0 0.0
  %5429 = vmatpush2.msra.mxu0 0.0
  %5430 = vmatprep.subr.mxu0 0.0
  %5431 = vmatpush2.msra.mxu0 0.0
  %5432 = vmatprep.subr.mxu0 %v5123
  %5433 = vmatpush2.msra.mxu0 %v5122
  %5434 = vmatprep.subr.mxu0 %v5121
  %5435 = vmatpush2.msra.mxu0 %v5120
  %5436 = vmatprep.subr.mxu0 %v5119
  %5437 = vmatpush2.msra.mxu0 %v5118
  %5438 = vmatprep.subr.mxu0 %v5117
  %5439 = vmatpush2.msra.mxu0 %v5116
  %5440 = vmatprep.subr.mxu0 %v5115
  %5441 = vmatpush2.msra.mxu0 %v5114
  %5442 = vmatprep.subr.mxu0 %v5113
  %5443 = vmatpush2.msra.mxu0 %v5112
  %5444 = vmatprep.subr.mxu0 %v5111
  %5445 = vmatpush2.msra.mxu0 %v5110
  %5446 = vmatprep.subr.mxu0 %v5109
  %5447 = vmatpush2.msra.mxu0 %v5108
  %5448 = vmatprep.subr.mxu0 %v5107
  %5449 = vmatpush2.msra.mxu0 %v5106
  %5450 = vmatprep.subr.mxu0 %v5105
  %5451 = vmatpush2.msra.mxu0 %v5104
  %5452 = vmatprep.subr.mxu0 %v5103
  %5453 = vmatpush2.msra.mxu0 %v5102
  %5454 = vmatprep.subr.mxu0 %v5101
  %5455 = vmatpush2.msra.mxu0 %v5100
  %5456 = vmatprep.subr.mxu0 %v5099
  %5457 = vmatpush2.msra.mxu0 %v5098
  %5458 = vmatprep.subr.mxu0 %v5097
  %5459 = vmatpush2.msra.mxu0 %v5096
  %5460 = vmatprep.mubr.f32.mxu0 %v5380
  %5461 = vmatmul.mubr.f32.gmra.mxu0 %v5265
  %v5462 = vpop.f32.mrf.mxu0
  %v5463 = vadd.f32 0.0, %v5462
  %v5464 = vpop.f32.mrf.mxu0
  %v5465 = vadd.f32 0.0, %v5464
  %5466 = vmatprep.mubr.f32.mxu0 %v5382
  %5467 = vmatmul.mubr.f32.gmra.mxu0 %v5279
  %v5468 = vpop.f32.mrf.mxu0
  %v5469 = vadd.f32 0.0, %v5468
  %v5470 = vpop.f32.mrf.mxu0
  %v5471 = vadd.f32 0.0, %v5470
  %5472 = vmatprep.mubr.f32.mxu0 %v5384
  %5473 = vmatmul.mubr.f32.gmra.mxu0 %v5293
  %v5474 = vpop.f32.mrf.mxu0
  %v5475 = vadd.f32 0.0, %v5474
  %v5476 = vpop.f32.mrf.mxu0
  %v5477 = vadd.f32 0.0, %v5476
  %5478 = vmatprep.mubr.f32.mxu0 %v5386
  %5479 = vmatmul.mubr.f32.gmra.mxu0 %v5307
  %v5480 = vpop.f32.mrf.mxu0
  %v5481 = vadd.f32 0.0, %v5480
  %v5482 = vpop.f32.mrf.mxu0
  %v5483 = vadd.f32 0.0, %v5482
  %5484 = vmatprep.mubr.f32.mxu0 %v5388
  %5485 = vmatmul.mubr.f32.gmra.mxu0 %v5321
  %v5486 = vpop.f32.mrf.mxu0
  %v5487 = vadd.f32 0.0, %v5486
  %v5488 = vpop.f32.mrf.mxu0
  %v5489 = vadd.f32 0.0, %v5488
  %5490 = vmatprep.mubr.f32.mxu0 %v5390
  %5491 = vmatmul.mubr.f32.gmra.mxu0 %v5335
  %v5492 = vpop.f32.mrf.mxu0
  %v5493 = vadd.f32 0.0, %v5492
  %v5494 = vpop.f32.mrf.mxu0
  %v5495 = vadd.f32 0.0, %v5494
  %5496 = vmatprep.mubr.f32.mxu0 %v5392
  %5497 = vmatmul.mubr.f32.gmra.mxu0 %v5349
  %v5498 = vpop.f32.mrf.mxu0
  %v5499 = vadd.f32 0.0, %v5498
  %v5500 = vpop.f32.mrf.mxu0
  %v5501 = vadd.f32 0.0, %v5500
  %5502 = vmatprep.mubr.f32.mxu0 %v5394
  %5503 = vmatmul.mubr.f32.gmra.mxu0 %v5363
  %v5504 = vpop.f32.mrf.mxu0
  %v5505 = vadd.f32 0.0, %v5504
  %v5506 = vpop.f32.mrf.mxu0
  %v5507 = vadd.f32 0.0, %v5506
  %5508 = vdwg.mxu0
  %v5525 = vsel %vm5252, %v3679, %v3664
  %v5526 = vsel %vm5254, %v3693, %v5525
  %v5527 = vsel %vm5256, %v3707, %v5526
  %v5528 = vsel %vm5258, %v3721, %v5527
  %v5529 = vsel %vm5260, %v3735, %v5528
  %v5530 = vsel %vm5262, %v3749, %v5529
  %v5531 = vsel %vm5264, %v3763, %v5530
  %v5532 = vsel %vm5252, %v3686, %v3672
  %v5533 = vsel %vm5254, %v3700, %v5532
  %v5534 = vsel %vm5256, %v3714, %v5533
  %v5535 = vsel %vm5258, %v3728, %v5534
  %v5536 = vsel %vm5260, %v3742, %v5535
  %v5537 = vsel %vm5262, %v3756, %v5536
  %v5538 = vsel %vm5264, %v3770, %v5537
  %v5539 = vsel %vm5252, %v3847, %v3833
  %v5540 = vsel %vm5254, %v3861, %v5539
  %v5541 = vsel %vm5256, %v3875, %v5540
  %v5542 = vsel %vm5258, %v3889, %v5541
  %v5543 = vsel %vm5260, %v3903, %v5542
  %v5544 = vsel %vm5262, %v3917, %v5543
  %v5545 = vsel %vm5264, %v3931, %v5544
  %v5546 = vsel %vm5252, %v3854, %v3840
  %v5547 = vsel %vm5254, %v3868, %v5546
  %v5548 = vsel %vm5256, %v3882, %v5547
  %v5549 = vsel %vm5258, %v3896, %v5548
  %v5550 = vsel %vm5260, %v3910, %v5549
  %v5551 = vsel %vm5262, %v3924, %v5550
  %v5552 = vsel %vm5264, %v3938, %v5551
  %v5553 = vsel %vm5252, %v4015, %v4001
  %v5554 = vsel %vm5254, %v4029, %v5553
  %v5555 = vsel %vm5256, %v4043, %v5554
  %v5556 = vsel %vm5258, %v4057, %v5555
  %v5557 = vsel %vm5260, %v4071, %v5556
  %v5558 = vsel %vm5262, %v4085, %v5557
  %v5559 = vsel %vm5264, %v4099, %v5558
  %v5560 = vsel %vm5252, %v4022, %v4008
  %v5561 = vsel %vm5254, %v4036, %v5560
  %v5562 = vsel %vm5256, %v4050, %v5561
  %v5563 = vsel %vm5258, %v4064, %v5562
  %v5564 = vsel %vm5260, %v4078, %v5563
  %v5565 = vsel %vm5262, %v4092, %v5564
  %v5566 = vsel %vm5264, %v4106, %v5565
  %v5567 = vsel %vm5252, %v4183, %v4169
  %v5568 = vsel %vm5254, %v4197, %v5567
  %v5569 = vsel %vm5256, %v4211, %v5568
  %v5570 = vsel %vm5258, %v4225, %v5569
  %v5571 = vsel %vm5260, %v4239, %v5570
  %v5572 = vsel %vm5262, %v4253, %v5571
  %v5573 = vsel %vm5264, %v4267, %v5572
  %v5574 = vsel %vm5252, %v4190, %v4176
  %v5575 = vsel %vm5254, %v4204, %v5574
  %v5576 = vsel %vm5256, %v4218, %v5575
  %v5577 = vsel %vm5258, %v4232, %v5576
  %v5578 = vsel %vm5260, %v4246, %v5577
  %v5579 = vsel %vm5262, %v4260, %v5578
  %v5580 = vsel %vm5264, %v4274, %v5579
  %v5581 = vsel %vm5252, %v4351, %v4337
  %v5582 = vsel %vm5254, %v4365, %v5581
  %v5583 = vsel %vm5256, %v4379, %v5582
  %v5584 = vsel %vm5258, %v4393, %v5583
  %v5585 = vsel %vm5260, %v4407, %v5584
  %v5586 = vsel %vm5262, %v4421, %v5585
  %v5587 = vsel %vm5264, %v4435, %v5586
  %v5588 = vsel %vm5252, %v4358, %v4344
  %v5589 = vsel %vm5254, %v4372, %v5588
  %v5590 = vsel %vm5256, %v4386, %v5589
  %v5591 = vsel %vm5258, %v4400, %v5590
  %v5592 = vsel %vm5260, %v4414, %v5591
  %v5593 = vsel %vm5262, %v4428, %v5592
  %v5594 = vsel %vm5264, %v4442, %v5593
  %v5595 = vsel %vm5252, %v4519, %v4505
  %v5596 = vsel %vm5254, %v4533, %v5595
  %v5597 = vsel %vm5256, %v4547, %v5596
  %v5598 = vsel %vm5258, %v4561, %v5597
  %v5599 = vsel %vm5260, %v4575, %v5598
  %v5600 = vsel %vm5262, %v4589, %v5599
  %v5601 = vsel %vm5264, %v4603, %v5600
  %v5602 = vsel %vm5252, %v4526, %v4512
  %v5603 = vsel %vm5254, %v4540, %v5602
  %v5604 = vsel %vm5256, %v4554, %v5603
  %v5605 = vsel %vm5258, %v4568, %v5604
  %v5606 = vsel %vm5260, %v4582, %v5605
  %v5607 = vsel %vm5262, %v4596, %v5606
  %v5608 = vsel %vm5264, %v4610, %v5607
  %v5609 = vsel %vm5252, %v4687, %v4673
  %v5610 = vsel %vm5254, %v4701, %v5609
  %v5611 = vsel %vm5256, %v4715, %v5610
  %v5612 = vsel %vm5258, %v4729, %v5611
  %v5613 = vsel %vm5260, %v4743, %v5612
  %v5614 = vsel %vm5262, %v4757, %v5613
  %v5615 = vsel %vm5264, %v4771, %v5614
  %v5616 = vsel %vm5252, %v4694, %v4680
  %v5617 = vsel %vm5254, %v4708, %v5616
  %v5618 = vsel %vm5256, %v4722, %v5617
  %v5619 = vsel %vm5258, %v4736, %v5618
  %v5620 = vsel %vm5260, %v4750, %v5619
  %v5621 = vsel %vm5262, %v4764, %v5620
  %v5622 = vsel %vm5264, %v4778, %v5621
  %v5623 = vsel %vm5252, %v4855, %v4841
  %v5624 = vsel %vm5254, %v4869, %v5623
  %v5625 = vsel %vm5256, %v4883, %v5624
  %v5626 = vsel %vm5258, %v4897, %v5625
  %v5627 = vsel %vm5260, %v4911, %v5626
  %v5628 = vsel %vm5262, %v4925, %v5627
  %v5629 = vsel %vm5264, %v4939, %v5628
  %v5630 = vsel %vm5252, %v4862, %v4848
  %v5631 = vsel %vm5254, %v4876, %v5630
  %v5632 = vsel %vm5256, %v4890, %v5631
  %v5633 = vsel %vm5258, %v4904, %v5632
  %v5634 = vsel %vm5260, %v4918, %v5633
  %v5635 = vsel %vm5262, %v4932, %v5634
  %v5636 = vsel %vm5264, %v4946, %v5635
  %v5645 = vsel %vm5379, %v5538, 0
  %v5647 = vsel %vm5379, %v5552, 0
  %v5649 = vsel %vm5379, %v5566, 0
  %v5651 = vsel %vm5379, %v5580, 0
  %v5653 = vsel %vm5379, %v5594, 0
  %v5655 = vsel %vm5379, %v5608, 0
  %v5657 = vsel %vm5379, %v5622, 0
  %v5659 = vsel %vm5379, %v5636, 0
  %5661 = vmatprep.subr.mxu0 %v5034
  %5662 = vmatpush1.msra.mxu0 %v5033
  %5663 = vmatprep.subr.mxu0 %v5032
  %5664 = vmatpush1.msra.mxu0 %v5031
  %5665 = vmatprep.subr.mxu0 %v5030
  %5666 = vmatpush1.msra.mxu0 %v5029
  %5667 = vmatprep.subr.mxu0 %v5028
  %5668 = vmatpush1.msra.mxu0 %v5027
  %5669 = vmatprep.subr.mxu0 %v5026
  %5670 = vmatpush1.msra.mxu0 %v5025
  %5671 = vmatprep.subr.mxu0 %v5024
  %5672 = vmatpush1.msra.mxu0 %v5023
  %5673 = vmatprep.subr.mxu0 %v5022
  %5674 = vmatpush1.msra.mxu0 %v5021
  %5675 = vmatprep.subr.mxu0 %v5020
  %5676 = vmatpush1.msra.mxu0 %v5019
  %5677 = vmatprep.subr.mxu0 %v5018
  %5678 = vmatpush1.msra.mxu0 %v5017
  %5679 = vmatprep.subr.mxu0 %v5016
  %5680 = vmatpush1.msra.mxu0 %v5015
  %5681 = vmatprep.subr.mxu0 %v5014
  %5682 = vmatpush1.msra.mxu0 %v5013
  %5683 = vmatprep.subr.mxu0 %v5012
  %5684 = vmatpush1.msra.mxu0 %v5011
  %5685 = vmatprep.subr.mxu0 %v5010
  %5686 = vmatpush1.msra.mxu0 %v5009
  %5687 = vmatprep.subr.mxu0 %v5008
  %5688 = vmatpush1.msra.mxu0 %v5007
  %5689 = vmatprep.subr.mxu0 %v5006
  %5690 = vmatpush1.msra.mxu0 %v5005
  %5691 = vmatprep.subr.mxu0 %v5004
  %5692 = vmatpush1.msra.mxu0 %v5003
  %5693 = vmatprep.subr.mxu0 0.0
  %5694 = vmatpush2.msra.mxu0 0.0
  %5695 = vmatprep.subr.mxu0 0.0
  %5696 = vmatpush2.msra.mxu0 0.0
  %5697 = vmatprep.subr.mxu0 %v5062
  %5698 = vmatpush2.msra.mxu0 %v5061
  %5699 = vmatprep.subr.mxu0 %v5060
  %5700 = vmatpush2.msra.mxu0 %v5059
  %5701 = vmatprep.subr.mxu0 %v5058
  %5702 = vmatpush2.msra.mxu0 %v5057
  %5703 = vmatprep.subr.mxu0 %v5056
  %5704 = vmatpush2.msra.mxu0 %v5055
  %5705 = vmatprep.subr.mxu0 %v5054
  %5706 = vmatpush2.msra.mxu0 %v5053
  %5707 = vmatprep.subr.mxu0 %v5052
  %5708 = vmatpush2.msra.mxu0 %v5051
  %5709 = vmatprep.subr.mxu0 %v5050
  %5710 = vmatpush2.msra.mxu0 %v5049
  %5711 = vmatprep.subr.mxu0 %v5048
  %5712 = vmatpush2.msra.mxu0 %v5047
  %5713 = vmatprep.subr.mxu0 %v5046
  %5714 = vmatpush2.msra.mxu0 %v5045
  %5715 = vmatprep.subr.mxu0 %v5044
  %5716 = vmatpush2.msra.mxu0 %v5043
  %5717 = vmatprep.subr.mxu0 %v5042
  %5718 = vmatpush2.msra.mxu0 %v5041
  %5719 = vmatprep.subr.mxu0 %v5040
  %5720 = vmatpush2.msra.mxu0 %v5039
  %5721 = vmatprep.subr.mxu0 %v5038
  %5722 = vmatpush2.msra.mxu0 %v5037
  %5723 = vmatprep.subr.mxu0 %v5036
  %5724 = vmatpush2.msra.mxu0 %v5035
  %5725 = vmatprep.mubr.f32.mxu0 %v5645
  %5726 = vmatmul.mubr.f32.gmra.mxu0 %v5531
  %v5727 = vpop.f32.mrf.mxu0
  %v5728 = vadd.f32 %v5463, %v5727
  %v5729 = vpop.f32.mrf.mxu0
  %v5730 = vadd.f32 %v5465, %v5729
  %5731 = vmatprep.mubr.f32.mxu0 %v5647
  %5732 = vmatmul.mubr.f32.gmra.mxu0 %v5545
  %v5733 = vpop.f32.mrf.mxu0
  %v5734 = vadd.f32 %v5469, %v5733
  %v5735 = vpop.f32.mrf.mxu0
  %v5736 = vadd.f32 %v5471, %v5735
  %5737 = vmatprep.mubr.f32.mxu0 %v5649
  %5738 = vmatmul.mubr.f32.gmra.mxu0 %v5559
  %v5739 = vpop.f32.mrf.mxu0
  %v5740 = vadd.f32 %v5475, %v5739
  %v5741 = vpop.f32.mrf.mxu0
  %v5742 = vadd.f32 %v5477, %v5741
  %5743 = vmatprep.mubr.f32.mxu0 %v5651
  %5744 = vmatmul.mubr.f32.gmra.mxu0 %v5573
  %v5745 = vpop.f32.mrf.mxu0
  %v5746 = vadd.f32 %v5481, %v5745
  %v5747 = vpop.f32.mrf.mxu0
  %v5748 = vadd.f32 %v5483, %v5747
  %5749 = vmatprep.mubr.f32.mxu0 %v5653
  %5750 = vmatmul.mubr.f32.gmra.mxu0 %v5587
  %v5751 = vpop.f32.mrf.mxu0
  %v5752 = vadd.f32 %v5487, %v5751
  %v5753 = vpop.f32.mrf.mxu0
  %v5754 = vadd.f32 %v5489, %v5753
  %5755 = vmatprep.mubr.f32.mxu0 %v5655
  %5756 = vmatmul.mubr.f32.gmra.mxu0 %v5601
  %v5757 = vpop.f32.mrf.mxu0
  %v5758 = vadd.f32 %v5493, %v5757
  %v5759 = vpop.f32.mrf.mxu0
  %v5760 = vadd.f32 %v5495, %v5759
  %5761 = vmatprep.mubr.f32.mxu0 %v5657
  %5762 = vmatmul.mubr.f32.gmra.mxu0 %v5615
  %v5763 = vpop.f32.mrf.mxu0
  %v5764 = vadd.f32 %v5499, %v5763
  %v5765 = vpop.f32.mrf.mxu0
  %v5766 = vadd.f32 %v5501, %v5765
  %5767 = vmatprep.mubr.f32.mxu0 %v5659
  %5768 = vmatmul.mubr.f32.gmra.mxu0 %v5629
  %v5769 = vpop.f32.mrf.mxu0
  %v5770 = vadd.f32 %v5505, %v5769
  %v5771 = vpop.f32.mrf.mxu0
  %v5772 = vadd.f32 %v5507, %v5771
  %5773 = vdwg.mxu0
  %s5774 = scalar_lea.vmem %s3, 960
  %v5775 = vld [vmem:[%s5774] sm:$0xff]
  %v5776 = vld [vmem:[%s5774 + $0x8] sm:$0xff]
  %v5777 = vld [vmem:[%s5774 + $0x10] sm:$0xff]
  %v5778 = vld [vmem:[%s5774 + $0x18] sm:$0xff]
  %v5779 = vld [vmem:[%s5774 + $0x20] sm:$0xff]
  %v5780 = vld [vmem:[%s5774 + $0x28] sm:$0xff]
  %v5781 = vld [vmem:[%s5774 + $0x30] sm:$0xff]
  %v5782 = vld [vmem:[%s5774 + $0x38] sm:$0xff]
  %v5783 = vld [vmem:[%s5774 + $0x40] sm:$0xff]
  %v5784 = vld [vmem:[%s5774 + $0x48] sm:$0xff]
  %v5785 = vld [vmem:[%s5774 + $0x50] sm:$0xff]
  %v5786 = vld [vmem:[%s5774 + $0x58] sm:$0xff]
  %v5787 = vld [vmem:[%s5774 + $0x60] sm:$0xff]
  %v5788 = vld [vmem:[%s5774 + $0x68] sm:$0xff]
  %v5789 = vld [vmem:[%s5774 + $0x70] sm:$0xff]
  %v5790 = vld [vmem:[%s5774 + $0x78] sm:$0xff]
  %v5791 = vld [vmem:[%s5774 + $0x80] sm:$0xff]
  %v5792 = vld [vmem:[%s5774 + $0x88] sm:$0xff]
  %v5793 = vld [vmem:[%s5774 + $0x90] sm:$0xff]
  %v5794 = vld [vmem:[%s5774 + $0x98] sm:$0xff]
  %v5795 = vld [vmem:[%s5774 + $0xa0] sm:$0xff]
  %v5796 = vld [vmem:[%s5774 + $0xa8] sm:$0xff]
  %v5797 = vld [vmem:[%s5774 + $0xb0] sm:$0xff]
  %v5798 = vld [vmem:[%s5774 + $0xb8] sm:$0xff]
  %v5799 = vld [vmem:[%s5774 + $0xc0] sm:$0xff]
  %v5800 = vld [vmem:[%s5774 + $0xc8] sm:$0xff]
  %v5801 = vld [vmem:[%s5774 + $0xd0] sm:$0xff]
  %v5802 = vld [vmem:[%s5774 + $0xd8] sm:$0xff]
  %v5803 = vld [vmem:[%s5774 + $0xe0] sm:$0xff]
  %v5804 = vld [vmem:[%s5774 + $0xe8] sm:$0xff]
  %v5805 = vld [vmem:[%s5774 + $0xf0] sm:$0xff]
  %v5806 = vld [vmem:[%s5774 + $0xf8] sm:$0xff]
  %v5807 = vld [vmem:[%s5774 + $0x100] sm:$0xff]
  %v5808 = vld [vmem:[%s5774 + $0x108] sm:$0xff]
  %v5809 = vld [vmem:[%s5774 + $0x110] sm:$0xff]
  %v5810 = vld [vmem:[%s5774 + $0x118] sm:$0xff]
  %v5811 = vld [vmem:[%s5774 + $0x120] sm:$0xff]
  %v5812 = vld [vmem:[%s5774 + $0x128] sm:$0xff]
  %v5813 = vld [vmem:[%s5774 + $0x130] sm:$0xff]
  %v5814 = vld [vmem:[%s5774 + $0x138] sm:$0xff]
  %v5815 = vld [vmem:[%s5774 + $0x140] sm:$0xff]
  %v5816 = vld [vmem:[%s5774 + $0x148] sm:$0xff]
  %v5817 = vld [vmem:[%s5774 + $0x150] sm:$0xff]
  %v5818 = vld [vmem:[%s5774 + $0x158] sm:$0xff]
  %v5819 = vld [vmem:[%s5774 + $0x160] sm:$0xff]
  %v5820 = vld [vmem:[%s5774 + $0x168] sm:$0xff]
  %v5821 = vld [vmem:[%s5774 + $0x170] sm:$0xff]
  %v5822 = vld [vmem:[%s5774 + $0x178] sm:$0xff]
  %v5823 = vld [vmem:[%s5774 + $0x180] sm:$0xff]
  %v5824 = vld [vmem:[%s5774 + $0x188] sm:$0xff]
  %v5825 = vld [vmem:[%s5774 + $0x190] sm:$0xff]
  %v5826 = vld [vmem:[%s5774 + $0x198] sm:$0xff]
  %v5827 = vld [vmem:[%s5774 + $0x1a0] sm:$0xff]
  %v5828 = vld [vmem:[%s5774 + $0x1a8] sm:$0xff]
  %v5829 = vld [vmem:[%s5774 + $0x1b0] sm:$0xff]
  %v5830 = vld [vmem:[%s5774 + $0x1b8] sm:$0xff]
  %v5831 = vld [vmem:[%s5774 + $0x1c0] sm:$0xff]
  %v5832 = vld [vmem:[%s5774 + $0x1c8] sm:$0xff]
  %v5833 = vld [vmem:[%s5774 + $0x1d0] sm:$0xff]
  %v5834 = vld [vmem:[%s5774 + $0x1d8] sm:$0xff]
  %v5851 = vsel %vm5252, %v3707, %v3693
  %v5852 = vsel %vm5254, %v3721, %v5851
  %v5853 = vsel %vm5256, %v3735, %v5852
  %v5854 = vsel %vm5258, %v3749, %v5853
  %v5855 = vsel %vm5260, %v3763, %v5854
  %v5856 = vsel %vm5262, %v3777, %v5855
  %v5857 = vsel %vm5264, %v3791, %v5856
  %v5858 = vsel %vm5252, %v3714, %v3700
  %v5859 = vsel %vm5254, %v3728, %v5858
  %v5860 = vsel %vm5256, %v3742, %v5859
  %v5861 = vsel %vm5258, %v3756, %v5860
  %v5862 = vsel %vm5260, %v3770, %v5861
  %v5863 = vsel %vm5262, %v3784, %v5862
  %v5864 = vsel %vm5264, %v3798, %v5863
  %v5865 = vsel %vm5252, %v3875, %v3861
  %v5866 = vsel %vm5254, %v3889, %v5865
  %v5867 = vsel %vm5256, %v3903, %v5866
  %v5868 = vsel %vm5258, %v3917, %v5867
  %v5869 = vsel %vm5260, %v3931, %v5868
  %v5870 = vsel %vm5262, %v3945, %v5869
  %v5871 = vsel %vm5264, %v3959, %v5870
  %v5872 = vsel %vm5252, %v3882, %v3868
  %v5873 = vsel %vm5254, %v3896, %v5872
  %v5874 = vsel %vm5256, %v3910, %v5873
  %v5875 = vsel %vm5258, %v3924, %v5874
  %v5876 = vsel %vm5260, %v3938, %v5875
  %v5877 = vsel %vm5262, %v3952, %v5876
  %v5878 = vsel %vm5264, %v3966, %v5877
  %v5879 = vsel %vm5252, %v4043, %v4029
  %v5880 = vsel %vm5254, %v4057, %v5879
  %v5881 = vsel %vm5256, %v4071, %v5880
  %v5882 = vsel %vm5258, %v4085, %v5881
  %v5883 = vsel %vm5260, %v4099, %v5882
  %v5884 = vsel %vm5262, %v4113, %v5883
  %v5885 = vsel %vm5264, %v4127, %v5884
  %v5886 = vsel %vm5252, %v4050, %v4036
  %v5887 = vsel %vm5254, %v4064, %v5886
  %v5888 = vsel %vm5256, %v4078, %v5887
  %v5889 = vsel %vm5258, %v4092, %v5888
  %v5890 = vsel %vm5260, %v4106, %v5889
  %v5891 = vsel %vm5262, %v4120, %v5890
  %v5892 = vsel %vm5264, %v4134, %v5891
  %v5893 = vsel %vm5252, %v4211, %v4197
  %v5894 = vsel %vm5254, %v4225, %v5893
  %v5895 = vsel %vm5256, %v4239, %v5894
  %v5896 = vsel %vm5258, %v4253, %v5895
  %v5897 = vsel %vm5260, %v4267, %v5896
  %v5898 = vsel %vm5262, %v4281, %v5897
  %v5899 = vsel %vm5264, %v4295, %v5898
  %v5900 = vsel %vm5252, %v4218, %v4204
  %v5901 = vsel %vm5254, %v4232, %v5900
  %v5902 = vsel %vm5256, %v4246, %v5901
  %v5903 = vsel %vm5258, %v4260, %v5902
  %v5904 = vsel %vm5260, %v4274, %v5903
  %v5905 = vsel %vm5262, %v4288, %v5904
  %v5906 = vsel %vm5264, %v4302, %v5905
  %v5907 = vsel %vm5252, %v4379, %v4365
  %v5908 = vsel %vm5254, %v4393, %v5907
  %v5909 = vsel %vm5256, %v4407, %v5908
  %v5910 = vsel %vm5258, %v4421, %v5909
  %v5911 = vsel %vm5260, %v4435, %v5910
  %v5912 = vsel %vm5262, %v4449, %v5911
  %v5913 = vsel %vm5264, %v4463, %v5912
  %v5914 = vsel %vm5252, %v4386, %v4372
  %v5915 = vsel %vm5254, %v4400, %v5914
  %v5916 = vsel %vm5256, %v4414, %v5915
  %v5917 = vsel %vm5258, %v4428, %v5916
  %v5918 = vsel %vm5260, %v4442, %v5917
  %v5919 = vsel %vm5262, %v4456, %v5918
  %v5920 = vsel %vm5264, %v4470, %v5919
  %v5921 = vsel %vm5252, %v4547, %v4533
  %v5922 = vsel %vm5254, %v4561, %v5921
  %v5923 = vsel %vm5256, %v4575, %v5922
  %v5924 = vsel %vm5258, %v4589, %v5923
  %v5925 = vsel %vm5260, %v4603, %v5924
  %v5926 = vsel %vm5262, %v4617, %v5925
  %v5927 = vsel %vm5264, %v4631, %v5926
  %v5928 = vsel %vm5252, %v4554, %v4540
  %v5929 = vsel %vm5254, %v4568, %v5928
  %v5930 = vsel %vm5256, %v4582, %v5929
  %v5931 = vsel %vm5258, %v4596, %v5930
  %v5932 = vsel %vm5260, %v4610, %v5931
  %v5933 = vsel %vm5262, %v4624, %v5932
  %v5934 = vsel %vm5264, %v4638, %v5933
  %v5935 = vsel %vm5252, %v4715, %v4701
  %v5936 = vsel %vm5254, %v4729, %v5935
  %v5937 = vsel %vm5256, %v4743, %v5936
  %v5938 = vsel %vm5258, %v4757, %v5937
  %v5939 = vsel %vm5260, %v4771, %v5938
  %v5940 = vsel %vm5262, %v4785, %v5939
  %v5941 = vsel %vm5264, %v4799, %v5940
  %v5942 = vsel %vm5252, %v4722, %v4708
  %v5943 = vsel %vm5254, %v4736, %v5942
  %v5944 = vsel %vm5256, %v4750, %v5943
  %v5945 = vsel %vm5258, %v4764, %v5944
  %v5946 = vsel %vm5260, %v4778, %v5945
  %v5947 = vsel %vm5262, %v4792, %v5946
  %v5948 = vsel %vm5264, %v4806, %v5947
  %v5949 = vsel %vm5252, %v4883, %v4869
  %v5950 = vsel %vm5254, %v4897, %v5949
  %v5951 = vsel %vm5256, %v4911, %v5950
  %v5952 = vsel %vm5258, %v4925, %v5951
  %v5953 = vsel %vm5260, %v4939, %v5952
  %v5954 = vsel %vm5262, %v4953, %v5953
  %v5955 = vsel %vm5264, %v4967, %v5954
  %v5956 = vsel %vm5252, %v4890, %v4876
  %v5957 = vsel %vm5254, %v4904, %v5956
  %v5958 = vsel %vm5256, %v4918, %v5957
  %v5959 = vsel %vm5258, %v4932, %v5958
  %v5960 = vsel %vm5260, %v4946, %v5959
  %v5961 = vsel %vm5262, %v4960, %v5960
  %v5962 = vsel %vm5264, %v4974, %v5961
  %v5971 = vsel %vm5379, %v5864, 0
  %v5973 = vsel %vm5379, %v5878, 0
  %v5975 = vsel %vm5379, %v5892, 0
  %v5977 = vsel %vm5379, %v5906, 0
  %v5979 = vsel %vm5379, %v5920, 0
  %v5981 = vsel %vm5379, %v5934, 0
  %v5983 = vsel %vm5379, %v5948, 0
  %v5985 = vsel %vm5379, %v5962, 0
  %5987 = vmatprep.subr.mxu0 %v5806
  %5988 = vmatpush1.msra.mxu0 %v5805
  %5989 = vmatprep.subr.mxu0 %v5804
  %5990 = vmatpush1.msra.mxu0 %v5803
  %5991 = vmatprep.subr.mxu0 %v5802
  %5992 = vmatpush1.msra.mxu0 %v5801
  %5993 = vmatprep.subr.mxu0 %v5800
  %5994 = vmatpush1.msra.mxu0 %v5799
  %5995 = vmatprep.subr.mxu0 %v5798
  %5996 = vmatpush1.msra.mxu0 %v5797
  %5997 = vmatprep.subr.mxu0 %v5796
  %5998 = vmatpush1.msra.mxu0 %v5795
  %5999 = vmatprep.subr.mxu0 %v5794
  %6000 = vmatpush1.msra.mxu0 %v5793
  %6001 = vmatprep.subr.mxu0 %v5792
  %6002 = vmatpush1.msra.mxu0 %v5791
  %6003 = vmatprep.subr.mxu0 %v5790
  %6004 = vmatpush1.msra.mxu0 %v5789
  %6005 = vmatprep.subr.mxu0 %v5788
  %6006 = vmatpush1.msra.mxu0 %v5787
  %6007 = vmatprep.subr.mxu0 %v5786
  %6008 = vmatpush1.msra.mxu0 %v5785
  %6009 = vmatprep.subr.mxu0 %v5784
  %6010 = vmatpush1.msra.mxu0 %v5783
  %6011 = vmatprep.subr.mxu0 %v5782
  %6012 = vmatpush1.msra.mxu0 %v5781
  %6013 = vmatprep.subr.mxu0 %v5780
  %6014 = vmatpush1.msra.mxu0 %v5779
  %6015 = vmatprep.subr.mxu0 %v5778
  %6016 = vmatpush1.msra.mxu0 %v5777
  %6017 = vmatprep.subr.mxu0 %v5776
  %6018 = vmatpush1.msra.mxu0 %v5775
  %6019 = vmatprep.subr.mxu0 0.0
  %6020 = vmatpush2.msra.mxu0 0.0
  %6021 = vmatprep.subr.mxu0 0.0
  %6022 = vmatpush2.msra.mxu0 0.0
  %6023 = vmatprep.subr.mxu0 %v5834
  %6024 = vmatpush2.msra.mxu0 %v5833
  %6025 = vmatprep.subr.mxu0 %v5832
  %6026 = vmatpush2.msra.mxu0 %v5831
  %6027 = vmatprep.subr.mxu0 %v5830
  %6028 = vmatpush2.msra.mxu0 %v5829
  %6029 = vmatprep.subr.mxu0 %v5828
  %6030 = vmatpush2.msra.mxu0 %v5827
  %6031 = vmatprep.subr.mxu0 %v5826
  %6032 = vmatpush2.msra.mxu0 %v5825
  %6033 = vmatprep.subr.mxu0 %v5824
  %6034 = vmatpush2.msra.mxu0 %v5823
  %6035 = vmatprep.subr.mxu0 %v5822
  %6036 = vmatpush2.msra.mxu0 %v5821
  %6037 = vmatprep.subr.mxu0 %v5820
  %6038 = vmatpush2.msra.mxu0 %v5819
  %6039 = vmatprep.subr.mxu0 %v5818
  %6040 = vmatpush2.msra.mxu0 %v5817
  %6041 = vmatprep.subr.mxu0 %v5816
  %6042 = vmatpush2.msra.mxu0 %v5815
  %6043 = vmatprep.subr.mxu0 %v5814
  %6044 = vmatpush2.msra.mxu0 %v5813
  %6045 = vmatprep.subr.mxu0 %v5812
  %6046 = vmatpush2.msra.mxu0 %v5811
  %6047 = vmatprep.subr.mxu0 %v5810
  %6048 = vmatpush2.msra.mxu0 %v5809
  %6049 = vmatprep.subr.mxu0 %v5808
  %6050 = vmatpush2.msra.mxu0 %v5807
  %6051 = vmatprep.mubr.f32.mxu0 %v5971
  %6052 = vmatmul.mubr.f32.gmra.mxu0 %v5857
  %v6053 = vpop.f32.mrf.mxu0
  %v6054 = vadd.f32 0.0, %v6053
  %v6055 = vpop.f32.mrf.mxu0
  %v6056 = vadd.f32 0.0, %v6055
  %6057 = vmatprep.mubr.f32.mxu0 %v5973
  %6058 = vmatmul.mubr.f32.gmra.mxu0 %v5871
  %v6059 = vpop.f32.mrf.mxu0
  %v6060 = vadd.f32 0.0, %v6059
  %v6061 = vpop.f32.mrf.mxu0
  %v6062 = vadd.f32 0.0, %v6061
  %6063 = vmatprep.mubr.f32.mxu0 %v5975
  %6064 = vmatmul.mubr.f32.gmra.mxu0 %v5885
  %v6065 = vpop.f32.mrf.mxu0
  %v6066 = vadd.f32 0.0, %v6065
  %v6067 = vpop.f32.mrf.mxu0
  %v6068 = vadd.f32 0.0, %v6067
  %6069 = vmatprep.mubr.f32.mxu0 %v5977
  %6070 = vmatmul.mubr.f32.gmra.mxu0 %v5899
  %v6071 = vpop.f32.mrf.mxu0
  %v6072 = vadd.f32 0.0, %v6071
  %v6073 = vpop.f32.mrf.mxu0
  %v6074 = vadd.f32 0.0, %v6073
  %6075 = vmatprep.mubr.f32.mxu0 %v5979
  %6076 = vmatmul.mubr.f32.gmra.mxu0 %v5913
  %v6077 = vpop.f32.mrf.mxu0
  %v6078 = vadd.f32 0.0, %v6077
  %v6079 = vpop.f32.mrf.mxu0
  %v6080 = vadd.f32 0.0, %v6079
  %6081 = vmatprep.mubr.f32.mxu0 %v5981
  %6082 = vmatmul.mubr.f32.gmra.mxu0 %v5927
  %v6083 = vpop.f32.mrf.mxu0
  %v6084 = vadd.f32 0.0, %v6083
  %v6085 = vpop.f32.mrf.mxu0
  %v6086 = vadd.f32 0.0, %v6085
  %6087 = vmatprep.mubr.f32.mxu0 %v5983
  %6088 = vmatmul.mubr.f32.gmra.mxu0 %v5941
  %v6089 = vpop.f32.mrf.mxu0
  %v6090 = vadd.f32 0.0, %v6089
  %v6091 = vpop.f32.mrf.mxu0
  %v6092 = vadd.f32 0.0, %v6091
  %6093 = vmatprep.mubr.f32.mxu0 %v5985
  %6094 = vmatmul.mubr.f32.gmra.mxu0 %v5955
  %v6095 = vpop.f32.mrf.mxu0
  %v6096 = vadd.f32 0.0, %v6095
  %v6097 = vpop.f32.mrf.mxu0
  %v6098 = vadd.f32 0.0, %v6097
  %6099 = vdwg.mxu0
  %v6100 = vadd.f32 %v5728, %v6054
  %v6101 = vadd.f32 %v5730, %v6056
  %v6102 = vadd.f32 %v5734, %v6060
  %v6103 = vadd.f32 %v5736, %v6062
  %v6104 = vadd.f32 %v5740, %v6066
  %v6105 = vadd.f32 %v5742, %v6068
  %v6106 = vadd.f32 %v5746, %v6072
  %v6107 = vadd.f32 %v5748, %v6074
  %v6108 = vadd.f32 %v5752, %v6078
  %v6109 = vadd.f32 %v5754, %v6080
  %v6110 = vadd.f32 %v5758, %v6084
  %v6111 = vadd.f32 %v5760, %v6086
  %v6112 = vadd.f32 %v5764, %v6090
  %v6113 = vadd.f32 %v5766, %v6092
  %v6114 = vadd.f32 %v5770, %v6096
  %v6115 = vadd.f32 %v5772, %v6098
  %s6116 = scalar_lea.vmem %s3, 1440
  %v6117 = vld [vmem:[%s6116] sm:$0xff]
  %v6118 = vld [vmem:[%s6116 + $0x8] sm:$0xff]
  %v6119 = vld [vmem:[%s6116 + $0x10] sm:$0xff]
  %v6120 = vld [vmem:[%s6116 + $0x18] sm:$0xff]
  %v6121 = vld [vmem:[%s6116 + $0x20] sm:$0xff]
  %v6122 = vld [vmem:[%s6116 + $0x28] sm:$0xff]
  %v6123 = vld [vmem:[%s6116 + $0x30] sm:$0xff]
  %v6124 = vld [vmem:[%s6116 + $0x38] sm:$0xff]
  %v6125 = vld [vmem:[%s6116 + $0x40] sm:$0xff]
  %v6126 = vld [vmem:[%s6116 + $0x48] sm:$0xff]
  %v6127 = vld [vmem:[%s6116 + $0x50] sm:$0xff]
  %v6128 = vld [vmem:[%s6116 + $0x58] sm:$0xff]
  %v6129 = vld [vmem:[%s6116 + $0x60] sm:$0xff]
  %v6130 = vld [vmem:[%s6116 + $0x68] sm:$0xff]
  %v6131 = vld [vmem:[%s6116 + $0x70] sm:$0xff]
  %v6132 = vld [vmem:[%s6116 + $0x78] sm:$0xff]
  %v6133 = vld [vmem:[%s6116 + $0x80] sm:$0xff]
  %v6134 = vld [vmem:[%s6116 + $0x88] sm:$0xff]
  %v6135 = vld [vmem:[%s6116 + $0x90] sm:$0xff]
  %v6136 = vld [vmem:[%s6116 + $0x98] sm:$0xff]
  %v6137 = vld [vmem:[%s6116 + $0xa0] sm:$0xff]
  %v6138 = vld [vmem:[%s6116 + $0xa8] sm:$0xff]
  %v6139 = vld [vmem:[%s6116 + $0xb0] sm:$0xff]
  %v6140 = vld [vmem:[%s6116 + $0xb8] sm:$0xff]
  %v6141 = vld [vmem:[%s6116 + $0xc0] sm:$0xff]
  %v6142 = vld [vmem:[%s6116 + $0xc8] sm:$0xff]
  %v6143 = vld [vmem:[%s6116 + $0xd0] sm:$0xff]
  %v6144 = vld [vmem:[%s6116 + $0xd8] sm:$0xff]
  %v6145 = vld [vmem:[%s6116 + $0xe0] sm:$0xff]
  %v6146 = vld [vmem:[%s6116 + $0xe8] sm:$0xff]
  %v6147 = vld [vmem:[%s6116 + $0xf0] sm:$0xff]
  %v6148 = vld [vmem:[%s6116 + $0xf8] sm:$0xff]
  %v6149 = vld [vmem:[%s6116 + $0x100] sm:$0xff]
  %v6150 = vld [vmem:[%s6116 + $0x108] sm:$0xff]
  %v6151 = vld [vmem:[%s6116 + $0x110] sm:$0xff]
  %v6152 = vld [vmem:[%s6116 + $0x118] sm:$0xff]
  %v6153 = vld [vmem:[%s6116 + $0x120] sm:$0xff]
  %v6154 = vld [vmem:[%s6116 + $0x128] sm:$0xff]
  %v6155 = vld [vmem:[%s6116 + $0x130] sm:$0xff]
  %v6156 = vld [vmem:[%s6116 + $0x138] sm:$0xff]
  %v6157 = vld [vmem:[%s6116 + $0x140] sm:$0xff]
  %v6158 = vld [vmem:[%s6116 + $0x148] sm:$0xff]
  %v6159 = vld [vmem:[%s6116 + $0x150] sm:$0xff]
  %v6160 = vld [vmem:[%s6116 + $0x158] sm:$0xff]
  %v6161 = vld [vmem:[%s6116 + $0x160] sm:$0xff]
  %v6162 = vld [vmem:[%s6116 + $0x168] sm:$0xff]
  %v6163 = vld [vmem:[%s6116 + $0x170] sm:$0xff]
  %v6164 = vld [vmem:[%s6116 + $0x178] sm:$0xff]
  %v6165 = vld [vmem:[%s6116 + $0x180] sm:$0xff]
  %v6166 = vld [vmem:[%s6116 + $0x188] sm:$0xff]
  %v6167 = vld [vmem:[%s6116 + $0x190] sm:$0xff]
  %v6168 = vld [vmem:[%s6116 + $0x198] sm:$0xff]
  %v6169 = vld [vmem:[%s6116 + $0x1a0] sm:$0xff]
  %v6170 = vld [vmem:[%s6116 + $0x1a8] sm:$0xff]
  %v6171 = vld [vmem:[%s6116 + $0x1b0] sm:$0xff]
  %v6172 = vld [vmem:[%s6116 + $0x1b8] sm:$0xff]
  %v6173 = vld [vmem:[%s6116 + $0x1c0] sm:$0xff]
  %v6174 = vld [vmem:[%s6116 + $0x1c8] sm:$0xff]
  %v6175 = vld [vmem:[%s6116 + $0x1d0] sm:$0xff]
  %v6176 = vld [vmem:[%s6116 + $0x1d8] sm:$0xff]
  %v6193 = vsel %vm5252, %v3721, %v3707
  %v6194 = vsel %vm5254, %v3735, %v6193
  %v6195 = vsel %vm5256, %v3749, %v6194
  %v6196 = vsel %vm5258, %v3763, %v6195
  %v6197 = vsel %vm5260, %v3777, %v6196
  %v6198 = vsel %vm5262, %v3791, %v6197
  %v6199 = vsel %vm5264, %v3805, %v6198
  %v6200 = vsel %vm5252, %v3728, %v3714
  %v6201 = vsel %vm5254, %v3742, %v6200
  %v6202 = vsel %vm5256, %v3756, %v6201
  %v6203 = vsel %vm5258, %v3770, %v6202
  %v6204 = vsel %vm5260, %v3784, %v6203
  %v6205 = vsel %vm5262, %v3798, %v6204
  %v6206 = vsel %vm5264, %v3812, %v6205
  %v6207 = vsel %vm5252, %v3889, %v3875
  %v6208 = vsel %vm5254, %v3903, %v6207
  %v6209 = vsel %vm5256, %v3917, %v6208
  %v6210 = vsel %vm5258, %v3931, %v6209
  %v6211 = vsel %vm5260, %v3945, %v6210
  %v6212 = vsel %vm5262, %v3959, %v6211
  %v6213 = vsel %vm5264, %v3973, %v6212
  %v6214 = vsel %vm5252, %v3896, %v3882
  %v6215 = vsel %vm5254, %v3910, %v6214
  %v6216 = vsel %vm5256, %v3924, %v6215
  %v6217 = vsel %vm5258, %v3938, %v6216
  %v6218 = vsel %vm5260, %v3952, %v6217
  %v6219 = vsel %vm5262, %v3966, %v6218
  %v6220 = vsel %vm5264, %v3980, %v6219
  %v6221 = vsel %vm5252, %v4057, %v4043
  %v6222 = vsel %vm5254, %v4071, %v6221
  %v6223 = vsel %vm5256, %v4085, %v6222
  %v6224 = vsel %vm5258, %v4099, %v6223
  %v6225 = vsel %vm5260, %v4113, %v6224
  %v6226 = vsel %vm5262, %v4127, %v6225
  %v6227 = vsel %vm5264, %v4141, %v6226
  %v6228 = vsel %vm5252, %v4064, %v4050
  %v6229 = vsel %vm5254, %v4078, %v6228
  %v6230 = vsel %vm5256, %v4092, %v6229
  %v6231 = vsel %vm5258, %v4106, %v6230
  %v6232 = vsel %vm5260, %v4120, %v6231
  %v6233 = vsel %vm5262, %v4134, %v6232
  %v6234 = vsel %vm5264, %v4148, %v6233
  %v6235 = vsel %vm5252, %v4225, %v4211
  %v6236 = vsel %vm5254, %v4239, %v6235
  %v6237 = vsel %vm5256, %v4253, %v6236
  %v6238 = vsel %vm5258, %v4267, %v6237
  %v6239 = vsel %vm5260, %v4281, %v6238
  %v6240 = vsel %vm5262, %v4295, %v6239
  %v6241 = vsel %vm5264, %v4309, %v6240
  %v6242 = vsel %vm5252, %v4232, %v4218
  %v6243 = vsel %vm5254, %v4246, %v6242
  %v6244 = vsel %vm5256, %v4260, %v6243
  %v6245 = vsel %vm5258, %v4274, %v6244
  %v6246 = vsel %vm5260, %v4288, %v6245
  %v6247 = vsel %vm5262, %v4302, %v6246
  %v6248 = vsel %vm5264, %v4316, %v6247
  %v6249 = vsel %vm5252, %v4393, %v4379
  %v6250 = vsel %vm5254, %v4407, %v6249
  %v6251 = vsel %vm5256, %v4421, %v6250
  %v6252 = vsel %vm5258, %v4435, %v6251
  %v6253 = vsel %vm5260, %v4449, %v6252
  %v6254 = vsel %vm5262, %v4463, %v6253
  %v6255 = vsel %vm5264, %v4477, %v6254
  %v6256 = vsel %vm5252, %v4400, %v4386
  %v6257 = vsel %vm5254, %v4414, %v6256
  %v6258 = vsel %vm5256, %v4428, %v6257
  %v6259 = vsel %vm5258, %v4442, %v6258
  %v6260 = vsel %vm5260, %v4456, %v6259
  %v6261 = vsel %vm5262, %v4470, %v6260
  %v6262 = vsel %vm5264, %v4484, %v6261
  %v6263 = vsel %vm5252, %v4561, %v4547
  %v6264 = vsel %vm5254, %v4575, %v6263
  %v6265 = vsel %vm5256, %v4589, %v6264
  %v6266 = vsel %vm5258, %v4603, %v6265
  %v6267 = vsel %vm5260, %v4617, %v6266
  %v6268 = vsel %vm5262, %v4631, %v6267
  %v6269 = vsel %vm5264, %v4645, %v6268
  %v6270 = vsel %vm5252, %v4568, %v4554
  %v6271 = vsel %vm5254, %v4582, %v6270
  %v6272 = vsel %vm5256, %v4596, %v6271
  %v6273 = vsel %vm5258, %v4610, %v6272
  %v6274 = vsel %vm5260, %v4624, %v6273
  %v6275 = vsel %vm5262, %v4638, %v6274
  %v6276 = vsel %vm5264, %v4652, %v6275
  %v6277 = vsel %vm5252, %v4729, %v4715
  %v6278 = vsel %vm5254, %v4743, %v6277
  %v6279 = vsel %vm5256, %v4757, %v6278
  %v6280 = vsel %vm5258, %v4771, %v6279
  %v6281 = vsel %vm5260, %v4785, %v6280
  %v6282 = vsel %vm5262, %v4799, %v6281
  %v6283 = vsel %vm5264, %v4813, %v6282
  %v6284 = vsel %vm5252, %v4736, %v4722
  %v6285 = vsel %vm5254, %v4750, %v6284
  %v6286 = vsel %vm5256, %v4764, %v6285
  %v6287 = vsel %vm5258, %v4778, %v6286
  %v6288 = vsel %vm5260, %v4792, %v6287
  %v6289 = vsel %vm5262, %v4806, %v6288
  %v6290 = vsel %vm5264, %v4820, %v6289
  %v6291 = vsel %vm5252, %v4897, %v4883
  %v6292 = vsel %vm5254, %v4911, %v6291
  %v6293 = vsel %vm5256, %v4925, %v6292
  %v6294 = vsel %vm5258, %v4939, %v6293
  %v6295 = vsel %vm5260, %v4953, %v6294
  %v6296 = vsel %vm5262, %v4967, %v6295
  %v6297 = vsel %vm5264, %v4981, %v6296
  %v6298 = vsel %vm5252, %v4904, %v4890
  %v6299 = vsel %vm5254, %v4918, %v6298
  %v6300 = vsel %vm5256, %v4932, %v6299
  %v6301 = vsel %vm5258, %v4946, %v6300
  %v6302 = vsel %vm5260, %v4960, %v6301
  %v6303 = vsel %vm5262, %v4974, %v6302
  %v6304 = vsel %vm5264, %v4988, %v6303
  %v6313 = vsel %vm5379, %v6206, 0
  %v6315 = vsel %vm5379, %v6220, 0
  %v6317 = vsel %vm5379, %v6234, 0
  %v6319 = vsel %vm5379, %v6248, 0
  %v6321 = vsel %vm5379, %v6262, 0
  %v6323 = vsel %vm5379, %v6276, 0
  %v6325 = vsel %vm5379, %v6290, 0
  %v6327 = vsel %vm5379, %v6304, 0
  %6329 = vmatprep.subr.mxu0 %v6148
  %6330 = vmatpush1.msra.mxu0 %v6147
  %6331 = vmatprep.subr.mxu0 %v6146
  %6332 = vmatpush1.msra.mxu0 %v6145
  %6333 = vmatprep.subr.mxu0 %v6144
  %6334 = vmatpush1.msra.mxu0 %v6143
  %6335 = vmatprep.subr.mxu0 %v6142
  %6336 = vmatpush1.msra.mxu0 %v6141
  %6337 = vmatprep.subr.mxu0 %v6140
  %6338 = vmatpush1.msra.mxu0 %v6139
  %6339 = vmatprep.subr.mxu0 %v6138
  %6340 = vmatpush1.msra.mxu0 %v6137
  %6341 = vmatprep.subr.mxu0 %v6136
  %6342 = vmatpush1.msra.mxu0 %v6135
  %6343 = vmatprep.subr.mxu0 %v6134
  %6344 = vmatpush1.msra.mxu0 %v6133
  %6345 = vmatprep.subr.mxu0 %v6132
  %6346 = vmatpush1.msra.mxu0 %v6131
  %6347 = vmatprep.subr.mxu0 %v6130
  %6348 = vmatpush1.msra.mxu0 %v6129
  %6349 = vmatprep.subr.mxu0 %v6128
  %6350 = vmatpush1.msra.mxu0 %v6127
  %6351 = vmatprep.subr.mxu0 %v6126
  %6352 = vmatpush1.msra.mxu0 %v6125
  %6353 = vmatprep.subr.mxu0 %v6124
  %6354 = vmatpush1.msra.mxu0 %v6123
  %6355 = vmatprep.subr.mxu0 %v6122
  %6356 = vmatpush1.msra.mxu0 %v6121
  %6357 = vmatprep.subr.mxu0 %v6120
  %6358 = vmatpush1.msra.mxu0 %v6119
  %6359 = vmatprep.subr.mxu0 %v6118
  %6360 = vmatpush1.msra.mxu0 %v6117
  %6361 = vmatprep.subr.mxu0 0.0
  %6362 = vmatpush2.msra.mxu0 0.0
  %6363 = vmatprep.subr.mxu0 0.0
  %6364 = vmatpush2.msra.mxu0 0.0
  %6365 = vmatprep.subr.mxu0 %v6176
  %6366 = vmatpush2.msra.mxu0 %v6175
  %6367 = vmatprep.subr.mxu0 %v6174
  %6368 = vmatpush2.msra.mxu0 %v6173
  %6369 = vmatprep.subr.mxu0 %v6172
  %6370 = vmatpush2.msra.mxu0 %v6171
  %6371 = vmatprep.subr.mxu0 %v6170
  %6372 = vmatpush2.msra.mxu0 %v6169
  %6373 = vmatprep.subr.mxu0 %v6168
  %6374 = vmatpush2.msra.mxu0 %v6167
  %6375 = vmatprep.subr.mxu0 %v6166
  %6376 = vmatpush2.msra.mxu0 %v6165
  %6377 = vmatprep.subr.mxu0 %v6164
  %6378 = vmatpush2.msra.mxu0 %v6163
  %6379 = vmatprep.subr.mxu0 %v6162
  %6380 = vmatpush2.msra.mxu0 %v6161
  %6381 = vmatprep.subr.mxu0 %v6160
  %6382 = vmatpush2.msra.mxu0 %v6159
  %6383 = vmatprep.subr.mxu0 %v6158
  %6384 = vmatpush2.msra.mxu0 %v6157
  %6385 = vmatprep.subr.mxu0 %v6156
  %6386 = vmatpush2.msra.mxu0 %v6155
  %6387 = vmatprep.subr.mxu0 %v6154
  %6388 = vmatpush2.msra.mxu0 %v6153
  %6389 = vmatprep.subr.mxu0 %v6152
  %6390 = vmatpush2.msra.mxu0 %v6151
  %6391 = vmatprep.subr.mxu0 %v6150
  %6392 = vmatpush2.msra.mxu0 %v6149
  %6393 = vmatprep.mubr.f32.mxu0 %v6313
  %6394 = vmatmul.mubr.f32.gmra.mxu0 %v6199
  %v6395 = vpop.f32.mrf.mxu0
  %v6396 = vadd.f32 0.0, %v6395
  %v6397 = vpop.f32.mrf.mxu0
  %v6398 = vadd.f32 0.0, %v6397
  %6399 = vmatprep.mubr.f32.mxu0 %v6315
  %6400 = vmatmul.mubr.f32.gmra.mxu0 %v6213
  %v6401 = vpop.f32.mrf.mxu0
  %v6402 = vadd.f32 0.0, %v6401
  %v6403 = vpop.f32.mrf.mxu0
  %v6404 = vadd.f32 0.0, %v6403
  %6405 = vmatprep.mubr.f32.mxu0 %v6317
  %6406 = vmatmul.mubr.f32.gmra.mxu0 %v6227
  %v6407 = vpop.f32.mrf.mxu0
  %v6408 = vadd.f32 0.0, %v6407
  %v6409 = vpop.f32.mrf.mxu0
  %v6410 = vadd.f32 0.0, %v6409
  %6411 = vmatprep.mubr.f32.mxu0 %v6319
  %6412 = vmatmul.mubr.f32.gmra.mxu0 %v6241
  %v6413 = vpop.f32.mrf.mxu0
  %v6414 = vadd.f32 0.0, %v6413
  %v6415 = vpop.f32.mrf.mxu0
  %v6416 = vadd.f32 0.0, %v6415
  %6417 = vmatprep.mubr.f32.mxu0 %v6321
  %6418 = vmatmul.mubr.f32.gmra.mxu0 %v6255
  %v6419 = vpop.f32.mrf.mxu0
  %v6420 = vadd.f32 0.0, %v6419
  %v6421 = vpop.f32.mrf.mxu0
  %v6422 = vadd.f32 0.0, %v6421
  %6423 = vmatprep.mubr.f32.mxu0 %v6323
  %6424 = vmatmul.mubr.f32.gmra.mxu0 %v6269
  %v6425 = vpop.f32.mrf.mxu0
  %v6426 = vadd.f32 0.0, %v6425
  %v6427 = vpop.f32.mrf.mxu0
  %v6428 = vadd.f32 0.0, %v6427
  %6429 = vmatprep.mubr.f32.mxu0 %v6325
  %6430 = vmatmul.mubr.f32.gmra.mxu0 %v6283
  %v6431 = vpop.f32.mrf.mxu0
  %v6432 = vadd.f32 0.0, %v6431
  %v6433 = vpop.f32.mrf.mxu0
  %v6434 = vadd.f32 0.0, %v6433
  %6435 = vmatprep.mubr.f32.mxu0 %v6327
  %6436 = vmatmul.mubr.f32.gmra.mxu0 %v6297
  %v6437 = vpop.f32.mrf.mxu0
  %v6438 = vadd.f32 0.0, %v6437
  %v6439 = vpop.f32.mrf.mxu0
  %v6440 = vadd.f32 0.0, %v6439
  %6441 = vdwg.mxu0
  %v6442 = vadd.f32 %v6100, %v6396
  %v6443 = vadd.f32 %v6101, %v6398
  %v6444 = vadd.f32 %v6102, %v6402
  %v6445 = vadd.f32 %v6103, %v6404
  %v6446 = vadd.f32 %v6104, %v6408
  %v6447 = vadd.f32 %v6105, %v6410
  %v6448 = vadd.f32 %v6106, %v6414
  %v6449 = vadd.f32 %v6107, %v6416
  %v6450 = vadd.f32 %v6108, %v6420
  %v6451 = vadd.f32 %v6109, %v6422
  %v6452 = vadd.f32 %v6110, %v6426
  %v6453 = vadd.f32 %v6111, %v6428
  %v6454 = vadd.f32 %v6112, %v6432
  %v6455 = vadd.f32 %v6113, %v6434
  %v6456 = vadd.f32 %v6114, %v6438
  %v6457 = vadd.f32 %v6115, %v6440
  %s6458 = scalar_lea.vmem %s3, 1920
  %v6459 = vld [vmem:[%s6458] sm:$0xff]
  %v6460 = vld [vmem:[%s6458 + $0x8] sm:$0xff]
  %v6461 = vld [vmem:[%s6458 + $0x10] sm:$0xff]
  %v6462 = vld [vmem:[%s6458 + $0x18] sm:$0xff]
  %v6463 = vld [vmem:[%s6458 + $0x20] sm:$0xff]
  %v6464 = vld [vmem:[%s6458 + $0x28] sm:$0xff]
  %v6465 = vld [vmem:[%s6458 + $0x30] sm:$0xff]
  %v6466 = vld [vmem:[%s6458 + $0x38] sm:$0xff]
  %v6467 = vld [vmem:[%s6458 + $0x40] sm:$0xff]
  %v6468 = vld [vmem:[%s6458 + $0x48] sm:$0xff]
  %v6469 = vld [vmem:[%s6458 + $0x50] sm:$0xff]
  %v6470 = vld [vmem:[%s6458 + $0x58] sm:$0xff]
  %v6471 = vld [vmem:[%s6458 + $0x60] sm:$0xff]
  %v6472 = vld [vmem:[%s6458 + $0x68] sm:$0xff]
  %v6473 = vld [vmem:[%s6458 + $0x70] sm:$0xff]
  %v6474 = vld [vmem:[%s6458 + $0x78] sm:$0xff]
  %v6475 = vld [vmem:[%s6458 + $0x80] sm:$0xff]
  %v6476 = vld [vmem:[%s6458 + $0x88] sm:$0xff]
  %v6477 = vld [vmem:[%s6458 + $0x90] sm:$0xff]
  %v6478 = vld [vmem:[%s6458 + $0x98] sm:$0xff]
  %v6479 = vld [vmem:[%s6458 + $0xa0] sm:$0xff]
  %v6480 = vld [vmem:[%s6458 + $0xa8] sm:$0xff]
  %v6481 = vld [vmem:[%s6458 + $0xb0] sm:$0xff]
  %v6482 = vld [vmem:[%s6458 + $0xb8] sm:$0xff]
  %v6483 = vld [vmem:[%s6458 + $0xc0] sm:$0xff]
  %v6484 = vld [vmem:[%s6458 + $0xc8] sm:$0xff]
  %v6485 = vld [vmem:[%s6458 + $0xd0] sm:$0xff]
  %v6486 = vld [vmem:[%s6458 + $0xd8] sm:$0xff]
  %v6487 = vld [vmem:[%s6458 + $0xe0] sm:$0xff]
  %v6488 = vld [vmem:[%s6458 + $0xe8] sm:$0xff]
  %v6489 = vld [vmem:[%s6458 + $0xf0] sm:$0xff]
  %v6490 = vld [vmem:[%s6458 + $0xf8] sm:$0xff]
  %v6491 = vld [vmem:[%s6458 + $0x100] sm:$0xff]
  %v6492 = vld [vmem:[%s6458 + $0x108] sm:$0xff]
  %v6493 = vld [vmem:[%s6458 + $0x110] sm:$0xff]
  %v6494 = vld [vmem:[%s6458 + $0x118] sm:$0xff]
  %v6495 = vld [vmem:[%s6458 + $0x120] sm:$0xff]
  %v6496 = vld [vmem:[%s6458 + $0x128] sm:$0xff]
  %v6497 = vld [vmem:[%s6458 + $0x130] sm:$0xff]
  %v6498 = vld [vmem:[%s6458 + $0x138] sm:$0xff]
  %v6499 = vld [vmem:[%s6458 + $0x140] sm:$0xff]
  %v6500 = vld [vmem:[%s6458 + $0x148] sm:$0xff]
  %v6501 = vld [vmem:[%s6458 + $0x150] sm:$0xff]
  %v6502 = vld [vmem:[%s6458 + $0x158] sm:$0xff]
  %v6503 = vld [vmem:[%s6458 + $0x160] sm:$0xff]
  %v6504 = vld [vmem:[%s6458 + $0x168] sm:$0xff]
  %v6505 = vld [vmem:[%s6458 + $0x170] sm:$0xff]
  %v6506 = vld [vmem:[%s6458 + $0x178] sm:$0xff]
  %v6507 = vld [vmem:[%s6458 + $0x180] sm:$0xff]
  %v6508 = vld [vmem:[%s6458 + $0x188] sm:$0xff]
  %v6509 = vld [vmem:[%s6458 + $0x190] sm:$0xff]
  %v6510 = vld [vmem:[%s6458 + $0x198] sm:$0xff]
  %v6511 = vld [vmem:[%s6458 + $0x1a0] sm:$0xff]
  %v6512 = vld [vmem:[%s6458 + $0x1a8] sm:$0xff]
  %v6513 = vld [vmem:[%s6458 + $0x1b0] sm:$0xff]
  %v6514 = vld [vmem:[%s6458 + $0x1b8] sm:$0xff]
  %v6515 = vld [vmem:[%s6458 + $0x1c0] sm:$0xff]
  %v6516 = vld [vmem:[%s6458 + $0x1c8] sm:$0xff]
  %v6517 = vld [vmem:[%s6458 + $0x1d0] sm:$0xff]
  %v6518 = vld [vmem:[%s6458 + $0x1d8] sm:$0xff]
  %v6535 = vsel %vm5252, %v3735, %v3721
  %v6536 = vsel %vm5254, %v3749, %v6535
  %v6537 = vsel %vm5256, %v3763, %v6536
  %v6538 = vsel %vm5258, %v3777, %v6537
  %v6539 = vsel %vm5260, %v3791, %v6538
  %v6540 = vsel %vm5262, %v3805, %v6539
  %v6541 = vsel %vm5264, %v3819, %v6540
  %v6542 = vsel %vm5252, %v3742, %v3728
  %v6543 = vsel %vm5254, %v3756, %v6542
  %v6544 = vsel %vm5256, %v3770, %v6543
  %v6545 = vsel %vm5258, %v3784, %v6544
  %v6546 = vsel %vm5260, %v3798, %v6545
  %v6547 = vsel %vm5262, %v3812, %v6546
  %v6548 = vsel %vm5264, %v3826, %v6547
  %v6549 = vsel %vm5252, %v3903, %v3889
  %v6550 = vsel %vm5254, %v3917, %v6549
  %v6551 = vsel %vm5256, %v3931, %v6550
  %v6552 = vsel %vm5258, %v3945, %v6551
  %v6553 = vsel %vm5260, %v3959, %v6552
  %v6554 = vsel %vm5262, %v3973, %v6553
  %v6555 = vsel %vm5264, %v3987, %v6554
  %v6556 = vsel %vm5252, %v3910, %v3896
  %v6557 = vsel %vm5254, %v3924, %v6556
  %v6558 = vsel %vm5256, %v3938, %v6557
  %v6559 = vsel %vm5258, %v3952, %v6558
  %v6560 = vsel %vm5260, %v3966, %v6559
  %v6561 = vsel %vm5262, %v3980, %v6560
  %v6562 = vsel %vm5264, %v3994, %v6561
  %v6563 = vsel %vm5252, %v4071, %v4057
  %v6564 = vsel %vm5254, %v4085, %v6563
  %v6565 = vsel %vm5256, %v4099, %v6564
  %v6566 = vsel %vm5258, %v4113, %v6565
  %v6567 = vsel %vm5260, %v4127, %v6566
  %v6568 = vsel %vm5262, %v4141, %v6567
  %v6569 = vsel %vm5264, %v4155, %v6568
  %v6570 = vsel %vm5252, %v4078, %v4064
  %v6571 = vsel %vm5254, %v4092, %v6570
  %v6572 = vsel %vm5256, %v4106, %v6571
  %v6573 = vsel %vm5258, %v4120, %v6572
  %v6574 = vsel %vm5260, %v4134, %v6573
  %v6575 = vsel %vm5262, %v4148, %v6574
  %v6576 = vsel %vm5264, %v4162, %v6575
  %v6577 = vsel %vm5252, %v4239, %v4225
  %v6578 = vsel %vm5254, %v4253, %v6577
  %v6579 = vsel %vm5256, %v4267, %v6578
  %v6580 = vsel %vm5258, %v4281, %v6579
  %v6581 = vsel %vm5260, %v4295, %v6580
  %v6582 = vsel %vm5262, %v4309, %v6581
  %v6583 = vsel %vm5264, %v4323, %v6582
  %v6584 = vsel %vm5252, %v4246, %v4232
  %v6585 = vsel %vm5254, %v4260, %v6584
  %v6586 = vsel %vm5256, %v4274, %v6585
  %v6587 = vsel %vm5258, %v4288, %v6586
  %v6588 = vsel %vm5260, %v4302, %v6587
  %v6589 = vsel %vm5262, %v4316, %v6588
  %v6590 = vsel %vm5264, %v4330, %v6589
  %v6591 = vsel %vm5252, %v4407, %v4393
  %v6592 = vsel %vm5254, %v4421, %v6591
  %v6593 = vsel %vm5256, %v4435, %v6592
  %v6594 = vsel %vm5258, %v4449, %v6593
  %v6595 = vsel %vm5260, %v4463, %v6594
  %v6596 = vsel %vm5262, %v4477, %v6595
  %v6597 = vsel %vm5264, %v4491, %v6596
  %v6598 = vsel %vm5252, %v4414, %v4400
  %v6599 = vsel %vm5254, %v4428, %v6598
  %v6600 = vsel %vm5256, %v4442, %v6599
  %v6601 = vsel %vm5258, %v4456, %v6600
  %v6602 = vsel %vm5260, %v4470, %v6601
  %v6603 = vsel %vm5262, %v4484, %v6602
  %v6604 = vsel %vm5264, %v4498, %v6603
  %v6605 = vsel %vm5252, %v4575, %v4561
  %v6606 = vsel %vm5254, %v4589, %v6605
  %v6607 = vsel %vm5256, %v4603, %v6606
  %v6608 = vsel %vm5258, %v4617, %v6607
  %v6609 = vsel %vm5260, %v4631, %v6608
  %v6610 = vsel %vm5262, %v4645, %v6609
  %v6611 = vsel %vm5264, %v4659, %v6610
  %v6612 = vsel %vm5252, %v4582, %v4568
  %v6613 = vsel %vm5254, %v4596, %v6612
  %v6614 = vsel %vm5256, %v4610, %v6613
  %v6615 = vsel %vm5258, %v4624, %v6614
  %v6616 = vsel %vm5260, %v4638, %v6615
  %v6617 = vsel %vm5262, %v4652, %v6616
  %v6618 = vsel %vm5264, %v4666, %v6617
  %v6619 = vsel %vm5252, %v4743, %v4729
  %v6620 = vsel %vm5254, %v4757, %v6619
  %v6621 = vsel %vm5256, %v4771, %v6620
  %v6622 = vsel %vm5258, %v4785, %v6621
  %v6623 = vsel %vm5260, %v4799, %v6622
  %v6624 = vsel %vm5262, %v4813, %v6623
  %v6625 = vsel %vm5264, %v4827, %v6624
  %v6626 = vsel %vm5252, %v4750, %v4736
  %v6627 = vsel %vm5254, %v4764, %v6626
  %v6628 = vsel %vm5256, %v4778, %v6627
  %v6629 = vsel %vm5258, %v4792, %v6628
  %v6630 = vsel %vm5260, %v4806, %v6629
  %v6631 = vsel %vm5262, %v4820, %v6630
  %v6632 = vsel %vm5264, %v4834, %v6631
  %v6633 = vsel %vm5252, %v4911, %v4897
  %v6634 = vsel %vm5254, %v4925, %v6633
  %v6635 = vsel %vm5256, %v4939, %v6634
  %v6636 = vsel %vm5258, %v4953, %v6635
  %v6637 = vsel %vm5260, %v4967, %v6636
  %v6638 = vsel %vm5262, %v4981, %v6637
  %v6639 = vsel %vm5264, %v4995, %v6638
  %v6640 = vsel %vm5252, %v4918, %v4904
  %v6641 = vsel %vm5254, %v4932, %v6640
  %v6642 = vsel %vm5256, %v4946, %v6641
  %v6643 = vsel %vm5258, %v4960, %v6642
  %v6644 = vsel %vm5260, %v4974, %v6643
  %v6645 = vsel %vm5262, %v4988, %v6644
  %v6646 = vsel %vm5264, %v5002, %v6645
  %v6655 = vsel %vm5379, %v6548, 0
  %v6657 = vsel %vm5379, %v6562, 0
  %v6659 = vsel %vm5379, %v6576, 0
  %v6661 = vsel %vm5379, %v6590, 0
  %v6663 = vsel %vm5379, %v6604, 0
  %v6665 = vsel %vm5379, %v6618, 0
  %v6667 = vsel %vm5379, %v6632, 0
  %v6669 = vsel %vm5379, %v6646, 0
  %6671 = vmatprep.subr.mxu0 %v6490
  %6672 = vmatpush1.msra.mxu0 %v6489
  %6673 = vmatprep.subr.mxu0 %v6488
  %6674 = vmatpush1.msra.mxu0 %v6487
  %6675 = vmatprep.subr.mxu0 %v6486
  %6676 = vmatpush1.msra.mxu0 %v6485
  %6677 = vmatprep.subr.mxu0 %v6484
  %6678 = vmatpush1.msra.mxu0 %v6483
  %6679 = vmatprep.subr.mxu0 %v6482
  %6680 = vmatpush1.msra.mxu0 %v6481
  %6681 = vmatprep.subr.mxu0 %v6480
  %6682 = vmatpush1.msra.mxu0 %v6479
  %6683 = vmatprep.subr.mxu0 %v6478
  %6684 = vmatpush1.msra.mxu0 %v6477
  %6685 = vmatprep.subr.mxu0 %v6476
  %6686 = vmatpush1.msra.mxu0 %v6475
  %6687 = vmatprep.subr.mxu0 %v6474
  %6688 = vmatpush1.msra.mxu0 %v6473
  %6689 = vmatprep.subr.mxu0 %v6472
  %6690 = vmatpush1.msra.mxu0 %v6471
  %6691 = vmatprep.subr.mxu0 %v6470
  %6692 = vmatpush1.msra.mxu0 %v6469
  %6693 = vmatprep.subr.mxu0 %v6468
  %6694 = vmatpush1.msra.mxu0 %v6467
  %6695 = vmatprep.subr.mxu0 %v6466
  %6696 = vmatpush1.msra.mxu0 %v6465
  %6697 = vmatprep.subr.mxu0 %v6464
  %6698 = vmatpush1.msra.mxu0 %v6463
  %6699 = vmatprep.subr.mxu0 %v6462
  %6700 = vmatpush1.msra.mxu0 %v6461
  %6701 = vmatprep.subr.mxu0 %v6460
  %6702 = vmatpush1.msra.mxu0 %v6459
  %6703 = vmatprep.subr.mxu0 0.0
  %6704 = vmatpush2.msra.mxu0 0.0
  %6705 = vmatprep.subr.mxu0 0.0
  %6706 = vmatpush2.msra.mxu0 0.0
  %6707 = vmatprep.subr.mxu0 %v6518
  %6708 = vmatpush2.msra.mxu0 %v6517
  %6709 = vmatprep.subr.mxu0 %v6516
  %6710 = vmatpush2.msra.mxu0 %v6515
  %6711 = vmatprep.subr.mxu0 %v6514
  %6712 = vmatpush2.msra.mxu0 %v6513
  %6713 = vmatprep.subr.mxu0 %v6512
  %6714 = vmatpush2.msra.mxu0 %v6511
  %6715 = vmatprep.subr.mxu0 %v6510
  %6716 = vmatpush2.msra.mxu0 %v6509
  %6717 = vmatprep.subr.mxu0 %v6508
  %6718 = vmatpush2.msra.mxu0 %v6507
  %6719 = vmatprep.subr.mxu0 %v6506
  %6720 = vmatpush2.msra.mxu0 %v6505
  %6721 = vmatprep.subr.mxu0 %v6504
  %6722 = vmatpush2.msra.mxu0 %v6503
  %6723 = vmatprep.subr.mxu0 %v6502
  %6724 = vmatpush2.msra.mxu0 %v6501
  %6725 = vmatprep.subr.mxu0 %v6500
  %6726 = vmatpush2.msra.mxu0 %v6499
  %6727 = vmatprep.subr.mxu0 %v6498
  %6728 = vmatpush2.msra.mxu0 %v6497
  %6729 = vmatprep.subr.mxu0 %v6496
  %6730 = vmatpush2.msra.mxu0 %v6495
  %6731 = vmatprep.subr.mxu0 %v6494
  %6732 = vmatpush2.msra.mxu0 %v6493
  %6733 = vmatprep.subr.mxu0 %v6492
  %6734 = vmatpush2.msra.mxu0 %v6491
  %6735 = vmatprep.mubr.f32.mxu0 %v6655
  %6736 = vmatmul.mubr.f32.gmra.mxu0 %v6541
  %v6737 = vpop.f32.mrf.mxu0
  %v6738 = vadd.f32 0.0, %v6737
  %v6739 = vpop.f32.mrf.mxu0
  %v6740 = vadd.f32 0.0, %v6739
  %6741 = vmatprep.mubr.f32.mxu0 %v6657
  %6742 = vmatmul.mubr.f32.gmra.mxu0 %v6555
  %v6743 = vpop.f32.mrf.mxu0
  %v6744 = vadd.f32 0.0, %v6743
  %v6745 = vpop.f32.mrf.mxu0
  %v6746 = vadd.f32 0.0, %v6745
  %6747 = vmatprep.mubr.f32.mxu0 %v6659
  %6748 = vmatmul.mubr.f32.gmra.mxu0 %v6569
  %v6749 = vpop.f32.mrf.mxu0
  %v6750 = vadd.f32 0.0, %v6749
  %v6751 = vpop.f32.mrf.mxu0
  %v6752 = vadd.f32 0.0, %v6751
  %6753 = vmatprep.mubr.f32.mxu0 %v6661
  %6754 = vmatmul.mubr.f32.gmra.mxu0 %v6583
  %v6755 = vpop.f32.mrf.mxu0
  %v6756 = vadd.f32 0.0, %v6755
  %v6757 = vpop.f32.mrf.mxu0
  %v6758 = vadd.f32 0.0, %v6757
  %6759 = vmatprep.mubr.f32.mxu0 %v6663
  %6760 = vmatmul.mubr.f32.gmra.mxu0 %v6597
  %v6761 = vpop.f32.mrf.mxu0
  %v6762 = vadd.f32 0.0, %v6761
  %v6763 = vpop.f32.mrf.mxu0
  %v6764 = vadd.f32 0.0, %v6763
  %6765 = vmatprep.mubr.f32.mxu0 %v6665
  %6766 = vmatmul.mubr.f32.gmra.mxu0 %v6611
  %v6767 = vpop.f32.mrf.mxu0
  %v6768 = vadd.f32 0.0, %v6767
  %v6769 = vpop.f32.mrf.mxu0
  %v6770 = vadd.f32 0.0, %v6769
  %6771 = vmatprep.mubr.f32.mxu0 %v6667
  %6772 = vmatmul.mubr.f32.gmra.mxu0 %v6625
  %v6773 = vpop.f32.mrf.mxu0
  %v6774 = vadd.f32 0.0, %v6773
  %v6775 = vpop.f32.mrf.mxu0
  %v6776 = vadd.f32 0.0, %v6775
  %6777 = vmatprep.mubr.f32.mxu0 %v6669
  %6778 = vmatmul.mubr.f32.gmra.mxu0 %v6639
  %v6779 = vpop.f32.mrf.mxu0
  %v6780 = vadd.f32 0.0, %v6779
  %v6781 = vpop.f32.mrf.mxu0
  %v6782 = vadd.f32 0.0, %v6781
  %6783 = vdwg.mxu0
  %v6784 = vadd.f32 %v6442, %v6738
  %v6785 = vadd.f32 %v6443, %v6740
  %v6786 = vadd.f32 %v6444, %v6744
  %v6787 = vadd.f32 %v6445, %v6746
  %v6788 = vadd.f32 %v6446, %v6750
  %v6789 = vadd.f32 %v6447, %v6752
  %v6790 = vadd.f32 %v6448, %v6756
  %v6791 = vadd.f32 %v6449, %v6758
  %v6792 = vadd.f32 %v6450, %v6762
  %v6793 = vadd.f32 %v6451, %v6764
  %v6794 = vadd.f32 %v6452, %v6768
  %v6795 = vadd.f32 %v6453, %v6770
  %v6796 = vadd.f32 %v6454, %v6774
  %v6797 = vadd.f32 %v6455, %v6776
  %v6798 = vadd.f32 %v6456, %v6780
  %v6799 = vadd.f32 %v6457, %v6782
  %v6800 = vld [vmem:[%s4] sm:$0x3]
  %v6802 = vlaneseq
  %v6803 = vshrl.u32 %v6802, 7
  %v6804 = vsub.s32 0, %v6803
  %v6805 = vrot.slane %v6800, %v6804
  %v6806 = vlaneseq
  %v6807 = vshrl.u32 %v6806, 7
  %v6808 = vsub.s32 1, %v6807
  %v6809 = vrot.slane %v6800, %v6808
  %v6812 = vadd.f32 %v6784, %v6805
  %v6813 = vadd.f32 %v6785, %v6809
  %v6814 = vadd.f32 %v6786, %v6805
  %v6815 = vadd.f32 %v6787, %v6809
  %v6816 = vadd.f32 %v6788, %v6805
  %v6817 = vadd.f32 %v6789, %v6809
  %v6818 = vadd.f32 %v6790, %v6805
  %v6819 = vadd.f32 %v6791, %v6809
  %v6820 = vadd.f32 %v6792, %v6805
  %v6821 = vadd.f32 %v6793, %v6809
  %v6822 = vadd.f32 %v6794, %v6805
  %v6823 = vadd.f32 %v6795, %v6809
  %v6824 = vadd.f32 %v6796, %v6805
  %v6825 = vadd.f32 %v6797, %v6809
  %v6826 = vadd.f32 %v6798, %v6805
  %v6827 = vadd.f32 %v6799, %v6809
  %v6828 = vmax.f32 %v6812, 0.0
  %v6829 = vmax.f32 %v6813, 0.0
  %v6830 = vmax.f32 %v6814, 0.0
  %v6831 = vmax.f32 %v6815, 0.0
  %v6832 = vmax.f32 %v6816, 0.0
  %v6833 = vmax.f32 %v6817, 0.0
  %v6834 = vmax.f32 %v6818, 0.0
  %v6835 = vmax.f32 %v6819, 0.0
  %v6836 = vmax.f32 %v6820, 0.0
  %v6837 = vmax.f32 %v6821, 0.0
  %v6838 = vmax.f32 %v6822, 0.0
  %v6839 = vmax.f32 %v6823, 0.0
  %v6840 = vmax.f32 %v6824, 0.0
  %v6841 = vmax.f32 %v6825, 0.0
  %v6842 = vmax.f32 %v6826, 0.0
  %v6843 = vmax.f32 %v6827, 0.0
  %vm6844 = vcmask 1047808
  %6845 = vrot.lane.b32.xlu0 %v6828, 32
  %v6846 = vpop.permute.xlu0 %6845
  %6847 = vrot.lane.b32.xlu0 %v6830, 32
  %v6848 = vpop.permute.xlu0 %6847
  %6849 = vrot.lane.b32.xlu0 %v6832, 32
  %v6850 = vpop.permute.xlu0 %6849
  %6851 = vrot.lane.b32.xlu0 %v6834, 32
  %v6852 = vpop.permute.xlu0 %6851
  %6853 = vrot.lane.b32.xlu0 %v6836, 32
  %v6854 = vpop.permute.xlu0 %6853
  %6855 = vrot.lane.b32.xlu0 %v6838, 32
  %v6856 = vpop.permute.xlu0 %6855
  %6857 = vrot.lane.b32.xlu0 %v6840, 32
  %v6858 = vpop.permute.xlu0 %6857
  %6859 = vrot.lane.b32.xlu0 %v6842, 32
  %v6860 = vpop.permute.xlu0 %6859
  %v6861 = vsel %vm6844, %v6846, %v6829
  %v6862 = vsel %vm6844, %v6848, %v6831
  %v6863 = vsel %vm6844, %v6850, %v6833
  %v6864 = vsel %vm6844, %v6852, %v6835
  %v6865 = vsel %vm6844, %v6854, %v6837
  %v6866 = vsel %vm6844, %v6856, %v6839
  %v6867 = vsel %vm6844, %v6858, %v6841
  %v6868 = vsel %vm6844, %v6860, %v6843
  %6885 = vrot.lane.b32.xlu0 %v6828, 108
  %v6886 = vpop.permute.xlu0 %6885
  %6887 = vrot.lane.b32.xlu0 %v6861, 108
  %v6888 = vpop.permute.xlu0 %6887
  %6889 = vrot.lane.b32.xlu0 %v6830, 108
  %v6890 = vpop.permute.xlu0 %6889
  %6891 = vrot.lane.b32.xlu0 %v6862, 108
  %v6892 = vpop.permute.xlu0 %6891
  %6893 = vrot.lane.b32.xlu0 %v6832, 108
  %v6894 = vpop.permute.xlu0 %6893
  %6895 = vrot.lane.b32.xlu0 %v6863, 108
  %v6896 = vpop.permute.xlu0 %6895
  %6897 = vrot.lane.b32.xlu0 %v6834, 108
  %v6898 = vpop.permute.xlu0 %6897
  %6899 = vrot.lane.b32.xlu0 %v6864, 108
  %v6900 = vpop.permute.xlu0 %6899
  %6901 = vrot.lane.b32.xlu0 %v6836, 108
  %v6902 = vpop.permute.xlu0 %6901
  %6903 = vrot.lane.b32.xlu0 %v6865, 108
  %v6904 = vpop.permute.xlu0 %6903
  %6905 = vrot.lane.b32.xlu0 %v6838, 108
  %v6906 = vpop.permute.xlu0 %6905
  %6907 = vrot.lane.b32.xlu0 %v6866, 108
  %v6908 = vpop.permute.xlu0 %6907
  %6909 = vrot.lane.b32.xlu0 %v6840, 108
  %v6910 = vpop.permute.xlu0 %6909
  %6911 = vrot.lane.b32.xlu0 %v6867, 108
  %v6912 = vpop.permute.xlu0 %6911
  %6913 = vrot.lane.b32.xlu0 %v6842, 108
  %v6914 = vpop.permute.xlu0 %6913
  %6915 = vrot.lane.b32.xlu0 %v6868, 108
  %v6916 = vpop.permute.xlu0 %6915
  %vm6917 = vcmask 883712
  %v6918 = vsel %vm6917, %v6886, %v6888
  %v6919 = vsel %vm6917, %v6890, %v6892
  %v6920 = vsel %vm6917, %v6894, %v6896
  %v6921 = vsel %vm6917, %v6898, %v6900
  %v6922 = vsel %vm6917, %v6902, %v6904
  %v6923 = vsel %vm6917, %v6906, %v6908
  %v6924 = vsel %vm6917, %v6910, %v6912
  %v6925 = vsel %vm6917, %v6914, %v6916
  %v6942 = vmax.f32 %v6828, %v6918
  %v6943 = vmax.f32 %v6829, %v6888
  %v6944 = vmax.f32 %v6830, %v6919
  %v6945 = vmax.f32 %v6831, %v6892
  %v6946 = vmax.f32 %v6832, %v6920
  %v6947 = vmax.f32 %v6833, %v6896
  %v6948 = vmax.f32 %v6834, %v6921
  %v6949 = vmax.f32 %v6835, %v6900
  %v6950 = vmax.f32 %v6836, %v6922
  %v6951 = vmax.f32 %v6837, %v6904
  %v6952 = vmax.f32 %v6838, %v6923
  %v6953 = vmax.f32 %v6839, %v6908
  %v6954 = vmax.f32 %v6840, %v6924
  %v6955 = vmax.f32 %v6841, %v6912
  %v6956 = vmax.f32 %v6842, %v6925
  %v6957 = vmax.f32 %v6843, %v6916
  %v6974 = vcombine.low %v6942, %v6943
  %v6975 = vcombine.high %v6942, %v6943
  %v6977 = vunpack.c.l.s4 1983009808
  %v6978 = vunpack.c.0.s8 %v6977
  %v6979 = vlaneseq
  %v6980 = vshrl.u32 %v6979, 7
  %v6981 = vsub.s32 %v6978, %v6980
  %v6982 = vrot.slane %v6974, %v6981
  %v6984 = vunpack.c.l.s4 1983009808
  %v6985 = vunpack.c.0.s8 %v6984
  %v6986 = vlaneseq
  %v6987 = vshrl.u32 %v6986, 7
  %v6988 = vsub.s32 %v6985, %v6987
  %v6989 = vrot.slane %v6975, %v6988
  %v6990 = vcombine.high %v6982, %v6982
  %v6991 = vcombine.high %v6989, %v6989
  %v6992 = vcombine.low %v6944, %v6945
  %v6993 = vcombine.high %v6944, %v6945
  %v6995 = vunpack.c.l.s4 1983009808
  %v6996 = vunpack.c.0.s8 %v6995
  %v6997 = vlaneseq
  %v6998 = vshrl.u32 %v6997, 7
  %v6999 = vsub.s32 %v6996, %v6998
  %v7000 = vrot.slane %v6992, %v6999
  %v7002 = vunpack.c.l.s4 1983009808
  %v7003 = vunpack.c.0.s8 %v7002
  %v7004 = vlaneseq
  %v7005 = vshrl.u32 %v7004, 7
  %v7006 = vsub.s32 %v7003, %v7005
  %v7007 = vrot.slane %v6993, %v7006
  %v7008 = vcombine.high %v7000, %v7000
  %v7009 = vcombine.high %v7007, %v7007
  %v7010 = vcombine.low %v6946, %v6947
  %v7011 = vcombine.high %v6946, %v6947
  %v7013 = vunpack.c.l.s4 1983009808
  %v7014 = vunpack.c.0.s8 %v7013
  %v7015 = vlaneseq
  %v7016 = vshrl.u32 %v7015, 7
  %v7017 = vsub.s32 %v7014, %v7016
  %v7018 = vrot.slane %v7010, %v7017
  %v7020 = vunpack.c.l.s4 1983009808
  %v7021 = vunpack.c.0.s8 %v7020
  %v7022 = vlaneseq
  %v7023 = vshrl.u32 %v7022, 7
  %v7024 = vsub.s32 %v7021, %v7023
  %v7025 = vrot.slane %v7011, %v7024
  %v7026 = vcombine.high %v7018, %v7018
  %v7027 = vcombine.high %v7025, %v7025
  %v7028 = vcombine.low %v6948, %v6949
  %v7029 = vcombine.high %v6948, %v6949
  %v7031 = vunpack.c.l.s4 1983009808
  %v7032 = vunpack.c.0.s8 %v7031
  %v7033 = vlaneseq
  %v7034 = vshrl.u32 %v7033, 7
  %v7035 = vsub.s32 %v7032, %v7034
  %v7036 = vrot.slane %v7028, %v7035
  %v7038 = vunpack.c.l.s4 1983009808
  %v7039 = vunpack.c.0.s8 %v7038
  %v7040 = vlaneseq
  %v7041 = vshrl.u32 %v7040, 7
  %v7042 = vsub.s32 %v7039, %v7041
  %v7043 = vrot.slane %v7029, %v7042
  %v7044 = vcombine.high %v7036, %v7036
  %v7045 = vcombine.high %v7043, %v7043
  %v7046 = vcombine.low %v6950, %v6951
  %v7047 = vcombine.high %v6950, %v6951
  %v7049 = vunpack.c.l.s4 1983009808
  %v7050 = vunpack.c.0.s8 %v7049
  %v7051 = vlaneseq
  %v7052 = vshrl.u32 %v7051, 7
  %v7053 = vsub.s32 %v7050, %v7052
  %v7054 = vrot.slane %v7046, %v7053
  %v7056 = vunpack.c.l.s4 1983009808
  %v7057 = vunpack.c.0.s8 %v7056
  %v7058 = vlaneseq
  %v7059 = vshrl.u32 %v7058, 7
  %v7060 = vsub.s32 %v7057, %v7059
  %v7061 = vrot.slane %v7047, %v7060
  %v7062 = vcombine.high %v7054, %v7054
  %v7063 = vcombine.high %v7061, %v7061
  %v7064 = vcombine.low %v6952, %v6953
  %v7065 = vcombine.high %v6952, %v6953
  %v7067 = vunpack.c.l.s4 1983009808
  %v7068 = vunpack.c.0.s8 %v7067
  %v7069 = vlaneseq
  %v7070 = vshrl.u32 %v7069, 7
  %v7071 = vsub.s32 %v7068, %v7070
  %v7072 = vrot.slane %v7064, %v7071
  %v7074 = vunpack.c.l.s4 1983009808
  %v7075 = vunpack.c.0.s8 %v7074
  %v7076 = vlaneseq
  %v7077 = vshrl.u32 %v7076, 7
  %v7078 = vsub.s32 %v7075, %v7077
  %v7079 = vrot.slane %v7065, %v7078
  %v7080 = vcombine.high %v7072, %v7072
  %v7081 = vcombine.high %v7079, %v7079
  %v7082 = vcombine.low %v6954, %v6955
  %v7083 = vcombine.high %v6954, %v6955
  %v7085 = vunpack.c.l.s4 1983009808
  %v7086 = vunpack.c.0.s8 %v7085
  %v7087 = vlaneseq
  %v7088 = vshrl.u32 %v7087, 7
  %v7089 = vsub.s32 %v7086, %v7088
  %v7090 = vrot.slane %v7082, %v7089
  %v7092 = vunpack.c.l.s4 1983009808
  %v7093 = vunpack.c.0.s8 %v7092
  %v7094 = vlaneseq
  %v7095 = vshrl.u32 %v7094, 7
  %v7096 = vsub.s32 %v7093, %v7095
  %v7097 = vrot.slane %v7083, %v7096
  %v7098 = vcombine.high %v7090, %v7090
  %v7099 = vcombine.high %v7097, %v7097
  %v7100 = vcombine.low %v6956, %v6957
  %v7101 = vcombine.high %v6956, %v6957
  %v7103 = vunpack.c.l.s4 1983009808
  %v7104 = vunpack.c.0.s8 %v7103
  %v7105 = vlaneseq
  %v7106 = vshrl.u32 %v7105, 7
  %v7107 = vsub.s32 %v7104, %v7106
  %v7108 = vrot.slane %v7100, %v7107
  %v7110 = vunpack.c.l.s4 1983009808
  %v7111 = vunpack.c.0.s8 %v7110
  %v7112 = vlaneseq
  %v7113 = vshrl.u32 %v7112, 7
  %v7114 = vsub.s32 %v7111, %v7113
  %v7115 = vrot.slane %v7101, %v7114
  %v7116 = vcombine.high %v7108, %v7108
  %v7117 = vcombine.high %v7115, %v7115
  %v7119 = vunpack.c.l.s4 1983009808
  %v7120 = vunpack.c.0.s8 %v7119
  %v7121 = vlaneseq
  %v7122 = vshrl.u32 %v7121, 7
  %v7123 = vsub.s32 %v7120, %v7122
  %v7124 = vrot.slane %v6982, %v7123
  %v7125 = vcombine.high %v7124, %v7124
  %v7127 = vunpack.c.l.s4 1983009808
  %v7128 = vunpack.c.0.s8 %v7127
  %v7129 = vlaneseq
  %v7130 = vshrl.u32 %v7129, 7
  %v7131 = vsub.s32 %v7128, %v7130
  %v7132 = vrot.slane %v6990, %v7131
  %v7133 = vcombine.high %v7132, %v7132
  %v7135 = vunpack.c.l.s4 1983009808
  %v7136 = vunpack.c.0.s8 %v7135
  %v7137 = vlaneseq
  %v7138 = vshrl.u32 %v7137, 7
  %v7139 = vsub.s32 %v7136, %v7138
  %v7140 = vrot.slane %v6989, %v7139
  %v7141 = vcombine.high %v7140, %v7140
  %v7143 = vunpack.c.l.s4 1983009808
  %v7144 = vunpack.c.0.s8 %v7143
  %v7145 = vlaneseq
  %v7146 = vshrl.u32 %v7145, 7
  %v7147 = vsub.s32 %v7144, %v7146
  %v7148 = vrot.slane %v6991, %v7147
  %v7149 = vcombine.high %v7148, %v7148
  %v7151 = vunpack.c.l.s4 1983009808
  %v7152 = vunpack.c.0.s8 %v7151
  %v7153 = vlaneseq
  %v7154 = vshrl.u32 %v7153, 7
  %v7155 = vsub.s32 %v7152, %v7154
  %v7156 = vrot.slane %v7000, %v7155
  %v7157 = vcombine.high %v7156, %v7156
  %v7159 = vunpack.c.l.s4 1983009808
  %v7160 = vunpack.c.0.s8 %v7159
  %v7161 = vlaneseq
  %v7162 = vshrl.u32 %v7161, 7
  %v7163 = vsub.s32 %v7160, %v7162
  %v7164 = vrot.slane %v7008, %v7163
  %v7165 = vcombine.high %v7164, %v7164
  %v7167 = vunpack.c.l.s4 1983009808
  %v7168 = vunpack.c.0.s8 %v7167
  %v7169 = vlaneseq
  %v7170 = vshrl.u32 %v7169, 7
  %v7171 = vsub.s32 %v7168, %v7170
  %v7172 = vrot.slane %v7007, %v7171
  %v7173 = vcombine.high %v7172, %v7172
  %v7175 = vunpack.c.l.s4 1983009808
  %v7176 = vunpack.c.0.s8 %v7175
  %v7177 = vlaneseq
  %v7178 = vshrl.u32 %v7177, 7
  %v7179 = vsub.s32 %v7176, %v7178
  %v7180 = vrot.slane %v7009, %v7179
  %v7181 = vcombine.high %v7180, %v7180
  %v7183 = vunpack.c.l.s4 1983009808
  %v7184 = vunpack.c.0.s8 %v7183
  %v7185 = vlaneseq
  %v7186 = vshrl.u32 %v7185, 7
  %v7187 = vsub.s32 %v7184, %v7186
  %v7188 = vrot.slane %v7018, %v7187
  %v7189 = vcombine.high %v7188, %v7188
  %v7191 = vunpack.c.l.s4 1983009808
  %v7192 = vunpack.c.0.s8 %v7191
  %v7193 = vlaneseq
  %v7194 = vshrl.u32 %v7193, 7
  %v7195 = vsub.s32 %v7192, %v7194
  %v7196 = vrot.slane %v7026, %v7195
  %v7197 = vcombine.high %v7196, %v7196
  %v7199 = vunpack.c.l.s4 1983009808
  %v7200 = vunpack.c.0.s8 %v7199
  %v7201 = vlaneseq
  %v7202 = vshrl.u32 %v7201, 7
  %v7203 = vsub.s32 %v7200, %v7202
  %v7204 = vrot.slane %v7025, %v7203
  %v7205 = vcombine.high %v7204, %v7204
  %v7207 = vunpack.c.l.s4 1983009808
  %v7208 = vunpack.c.0.s8 %v7207
  %v7209 = vlaneseq
  %v7210 = vshrl.u32 %v7209, 7
  %v7211 = vsub.s32 %v7208, %v7210
  %v7212 = vrot.slane %v7027, %v7211
  %v7213 = vcombine.high %v7212, %v7212
  %v7215 = vunpack.c.l.s4 1983009808
  %v7216 = vunpack.c.0.s8 %v7215
  %v7217 = vlaneseq
  %v7218 = vshrl.u32 %v7217, 7
  %v7219 = vsub.s32 %v7216, %v7218
  %v7220 = vrot.slane %v7036, %v7219
  %v7221 = vcombine.high %v7220, %v7220
  %v7223 = vunpack.c.l.s4 1983009808
  %v7224 = vunpack.c.0.s8 %v7223
  %v7225 = vlaneseq
  %v7226 = vshrl.u32 %v7225, 7
  %v7227 = vsub.s32 %v7224, %v7226
  %v7228 = vrot.slane %v7044, %v7227
  %v7229 = vcombine.high %v7228, %v7228
  %v7231 = vunpack.c.l.s4 1983009808
  %v7232 = vunpack.c.0.s8 %v7231
  %v7233 = vlaneseq
  %v7234 = vshrl.u32 %v7233, 7
  %v7235 = vsub.s32 %v7232, %v7234
  %v7236 = vrot.slane %v7043, %v7235
  %v7237 = vcombine.high %v7236, %v7236
  %v7239 = vunpack.c.l.s4 1983009808
  %v7240 = vunpack.c.0.s8 %v7239
  %v7241 = vlaneseq
  %v7242 = vshrl.u32 %v7241, 7
  %v7243 = vsub.s32 %v7240, %v7242
  %v7244 = vrot.slane %v7045, %v7243
  %v7245 = vcombine.high %v7244, %v7244
  %v7247 = vunpack.c.l.s4 1983009808
  %v7248 = vunpack.c.0.s8 %v7247
  %v7249 = vlaneseq
  %v7250 = vshrl.u32 %v7249, 7
  %v7251 = vsub.s32 %v7248, %v7250
  %v7252 = vrot.slane %v7054, %v7251
  %v7253 = vcombine.high %v7252, %v7252
  %v7255 = vunpack.c.l.s4 1983009808
  %v7256 = vunpack.c.0.s8 %v7255
  %v7257 = vlaneseq
  %v7258 = vshrl.u32 %v7257, 7
  %v7259 = vsub.s32 %v7256, %v7258
  %v7260 = vrot.slane %v7062, %v7259
  %v7261 = vcombine.high %v7260, %v7260
  %v7263 = vunpack.c.l.s4 1983009808
  %v7264 = vunpack.c.0.s8 %v7263
  %v7265 = vlaneseq
  %v7266 = vshrl.u32 %v7265, 7
  %v7267 = vsub.s32 %v7264, %v7266
  %v7268 = vrot.slane %v7061, %v7267
  %v7269 = vcombine.high %v7268, %v7268
  %v7271 = vunpack.c.l.s4 1983009808
  %v7272 = vunpack.c.0.s8 %v7271
  %v7273 = vlaneseq
  %v7274 = vshrl.u32 %v7273, 7
  %v7275 = vsub.s32 %v7272, %v7274
  %v7276 = vrot.slane %v7063, %v7275
  %v7277 = vcombine.high %v7276, %v7276
  %v7279 = vunpack.c.l.s4 1983009808
  %v7280 = vunpack.c.0.s8 %v7279
  %v7281 = vlaneseq
  %v7282 = vshrl.u32 %v7281, 7
  %v7283 = vsub.s32 %v7280, %v7282
  %v7284 = vrot.slane %v7072, %v7283
  %v7285 = vcombine.high %v7284, %v7284
  %v7287 = vunpack.c.l.s4 1983009808
  %v7288 = vunpack.c.0.s8 %v7287
  %v7289 = vlaneseq
  %v7290 = vshrl.u32 %v7289, 7
  %v7291 = vsub.s32 %v7288, %v7290
  %v7292 = vrot.slane %v7080, %v7291
  %v7293 = vcombine.high %v7292, %v7292
  %v7295 = vunpack.c.l.s4 1983009808
  %v7296 = vunpack.c.0.s8 %v7295
  %v7297 = vlaneseq
  %v7298 = vshrl.u32 %v7297, 7
  %v7299 = vsub.s32 %v7296, %v7298
  %v7300 = vrot.slane %v7079, %v7299
  %v7301 = vcombine.high %v7300, %v7300
  %v7303 = vunpack.c.l.s4 1983009808
  %v7304 = vunpack.c.0.s8 %v7303
  %v7305 = vlaneseq
  %v7306 = vshrl.u32 %v7305, 7
  %v7307 = vsub.s32 %v7304, %v7306
  %v7308 = vrot.slane %v7081, %v7307
  %v7309 = vcombine.high %v7308, %v7308
  %v7311 = vunpack.c.l.s4 1983009808
  %v7312 = vunpack.c.0.s8 %v7311
  %v7313 = vlaneseq
  %v7314 = vshrl.u32 %v7313, 7
  %v7315 = vsub.s32 %v7312, %v7314
  %v7316 = vrot.slane %v7090, %v7315
  %v7317 = vcombine.high %v7316, %v7316
  %v7319 = vunpack.c.l.s4 1983009808
  %v7320 = vunpack.c.0.s8 %v7319
  %v7321 = vlaneseq
  %v7322 = vshrl.u32 %v7321, 7
  %v7323 = vsub.s32 %v7320, %v7322
  %v7324 = vrot.slane %v7098, %v7323
  %v7325 = vcombine.high %v7324, %v7324
  %v7327 = vunpack.c.l.s4 1983009808
  %v7328 = vunpack.c.0.s8 %v7327
  %v7329 = vlaneseq
  %v7330 = vshrl.u32 %v7329, 7
  %v7331 = vsub.s32 %v7328, %v7330
  %v7332 = vrot.slane %v7097, %v7331
  %v7333 = vcombine.high %v7332, %v7332
  %v7335 = vunpack.c.l.s4 1983009808
  %v7336 = vunpack.c.0.s8 %v7335
  %v7337 = vlaneseq
  %v7338 = vshrl.u32 %v7337, 7
  %v7339 = vsub.s32 %v7336, %v7338
  %v7340 = vrot.slane %v7099, %v7339
  %v7341 = vcombine.high %v7340, %v7340
  %v7343 = vunpack.c.l.s4 1983009808
  %v7344 = vunpack.c.0.s8 %v7343
  %v7345 = vlaneseq
  %v7346 = vshrl.u32 %v7345, 7
  %v7347 = vsub.s32 %v7344, %v7346
  %v7348 = vrot.slane %v7108, %v7347
  %v7349 = vcombine.high %v7348, %v7348
  %v7351 = vunpack.c.l.s4 1983009808
  %v7352 = vunpack.c.0.s8 %v7351
  %v7353 = vlaneseq
  %v7354 = vshrl.u32 %v7353, 7
  %v7355 = vsub.s32 %v7352, %v7354
  %v7356 = vrot.slane %v7116, %v7355
  %v7357 = vcombine.high %v7356, %v7356
  %v7359 = vunpack.c.l.s4 1983009808
  %v7360 = vunpack.c.0.s8 %v7359
  %v7361 = vlaneseq
  %v7362 = vshrl.u32 %v7361, 7
  %v7363 = vsub.s32 %v7360, %v7362
  %v7364 = vrot.slane %v7115, %v7363
  %v7365 = vcombine.high %v7364, %v7364
  %v7367 = vunpack.c.l.s4 1983009808
  %v7368 = vunpack.c.0.s8 %v7367
  %v7369 = vlaneseq
  %v7370 = vshrl.u32 %v7369, 7
  %v7371 = vsub.s32 %v7368, %v7370
  %v7372 = vrot.slane %v7117, %v7371
  %v7373 = vcombine.high %v7372, %v7372
  %v7438 = vsel %vm3657, %v7124, -inf
  %v7439 = vrot.slane %v7438, 4
  %v7440 = vmax.f32 %v7438, %v7439
  %v7441 = vrot.slane %v7440, 2
  %v7442 = vmax.f32 %v7440, %v7441
  %v7443 = vrot.slane %v7442, 1
  %v7444 = vmax.f32 %v7442, %v7443
  %vm7445 = vcmask 254976
  %v7446 = vsel %vm7445, %v7125, -inf
  %v7447 = vrot.slane %v7446, 4
  %v7448 = vmax.f32 %v7446, %v7447
  %v7449 = vrot.slane %v7448, 2
  %v7450 = vmax.f32 %v7448, %v7449
  %v7451 = vrot.slane %v7450, 1
  %v7452 = vmax.f32 %v7450, %v7451
  %v7453 = vsel %vm3657, %v7132, -inf
  %v7454 = vrot.slane %v7453, 4
  %v7455 = vmax.f32 %v7453, %v7454
  %v7456 = vrot.slane %v7455, 2
  %v7457 = vmax.f32 %v7455, %v7456
  %v7458 = vrot.slane %v7457, 1
  %v7459 = vmax.f32 %v7457, %v7458
  %v7460 = vsel %vm7445, %v7133, -inf
  %v7461 = vrot.slane %v7460, 4
  %v7462 = vmax.f32 %v7460, %v7461
  %v7463 = vrot.slane %v7462, 2
  %v7464 = vmax.f32 %v7462, %v7463
  %v7465 = vrot.slane %v7464, 1
  %v7466 = vmax.f32 %v7464, %v7465
  %v7467 = vsel %vm3657, %v7140, -inf
  %v7468 = vrot.slane %v7467, 4
  %v7469 = vmax.f32 %v7467, %v7468
  %v7470 = vrot.slane %v7469, 2
  %v7471 = vmax.f32 %v7469, %v7470
  %v7472 = vrot.slane %v7471, 1
  %v7473 = vmax.f32 %v7471, %v7472
  %v7474 = vsel %vm7445, %v7141, -inf
  %v7475 = vrot.slane %v7474, 4
  %v7476 = vmax.f32 %v7474, %v7475
  %v7477 = vrot.slane %v7476, 2
  %v7478 = vmax.f32 %v7476, %v7477
  %v7479 = vrot.slane %v7478, 1
  %v7480 = vmax.f32 %v7478, %v7479
  %v7481 = vsel %vm3657, %v7148, -inf
  %v7482 = vrot.slane %v7481, 4
  %v7483 = vmax.f32 %v7481, %v7482
  %v7484 = vrot.slane %v7483, 2
  %v7485 = vmax.f32 %v7483, %v7484
  %v7486 = vrot.slane %v7485, 1
  %v7487 = vmax.f32 %v7485, %v7486
  %v7488 = vsel %vm7445, %v7149, -inf
  %v7489 = vrot.slane %v7488, 4
  %v7490 = vmax.f32 %v7488, %v7489
  %v7491 = vrot.slane %v7490, 2
  %v7492 = vmax.f32 %v7490, %v7491
  %v7493 = vrot.slane %v7492, 1
  %v7494 = vmax.f32 %v7492, %v7493
  %v7495 = vsel %vm3657, %v7156, -inf
  %v7496 = vrot.slane %v7495, 4
  %v7497 = vmax.f32 %v7495, %v7496
  %v7498 = vrot.slane %v7497, 2
  %v7499 = vmax.f32 %v7497, %v7498
  %v7500 = vrot.slane %v7499, 1
  %v7501 = vmax.f32 %v7499, %v7500
  %v7502 = vsel %vm7445, %v7157, -inf
  %v7503 = vrot.slane %v7502, 4
  %v7504 = vmax.f32 %v7502, %v7503
  %v7505 = vrot.slane %v7504, 2
  %v7506 = vmax.f32 %v7504, %v7505
  %v7507 = vrot.slane %v7506, 1
  %v7508 = vmax.f32 %v7506, %v7507
  %v7509 = vsel %vm3657, %v7164, -inf
  %v7510 = vrot.slane %v7509, 4
  %v7511 = vmax.f32 %v7509, %v7510
  %v7512 = vrot.slane %v7511, 2
  %v7513 = vmax.f32 %v7511, %v7512
  %v7514 = vrot.slane %v7513, 1
  %v7515 = vmax.f32 %v7513, %v7514
  %v7516 = vsel %vm7445, %v7165, -inf
  %v7517 = vrot.slane %v7516, 4
  %v7518 = vmax.f32 %v7516, %v7517
  %v7519 = vrot.slane %v7518, 2
  %v7520 = vmax.f32 %v7518, %v7519
  %v7521 = vrot.slane %v7520, 1
  %v7522 = vmax.f32 %v7520, %v7521
  %v7523 = vsel %vm3657, %v7172, -inf
  %v7524 = vrot.slane %v7523, 4
  %v7525 = vmax.f32 %v7523, %v7524
  %v7526 = vrot.slane %v7525, 2
  %v7527 = vmax.f32 %v7525, %v7526
  %v7528 = vrot.slane %v7527, 1
  %v7529 = vmax.f32 %v7527, %v7528
  %v7530 = vsel %vm7445, %v7173, -inf
  %v7531 = vrot.slane %v7530, 4
  %v7532 = vmax.f32 %v7530, %v7531
  %v7533 = vrot.slane %v7532, 2
  %v7534 = vmax.f32 %v7532, %v7533
  %v7535 = vrot.slane %v7534, 1
  %v7536 = vmax.f32 %v7534, %v7535
  %v7537 = vsel %vm3657, %v7180, -inf
  %v7538 = vrot.slane %v7537, 4
  %v7539 = vmax.f32 %v7537, %v7538
  %v7540 = vrot.slane %v7539, 2
  %v7541 = vmax.f32 %v7539, %v7540
  %v7542 = vrot.slane %v7541, 1
  %v7543 = vmax.f32 %v7541, %v7542
  %v7544 = vsel %vm7445, %v7181, -inf
  %v7545 = vrot.slane %v7544, 4
  %v7546 = vmax.f32 %v7544, %v7545
  %v7547 = vrot.slane %v7546, 2
  %v7548 = vmax.f32 %v7546, %v7547
  %v7549 = vrot.slane %v7548, 1
  %v7550 = vmax.f32 %v7548, %v7549
  %v7551 = vsel %vm3657, %v7188, -inf
  %v7552 = vrot.slane %v7551, 4
  %v7553 = vmax.f32 %v7551, %v7552
  %v7554 = vrot.slane %v7553, 2
  %v7555 = vmax.f32 %v7553, %v7554
  %v7556 = vrot.slane %v7555, 1
  %v7557 = vmax.f32 %v7555, %v7556
  %v7558 = vsel %vm7445, %v7189, -inf
  %v7559 = vrot.slane %v7558, 4
  %v7560 = vmax.f32 %v7558, %v7559
  %v7561 = vrot.slane %v7560, 2
  %v7562 = vmax.f32 %v7560, %v7561
  %v7563 = vrot.slane %v7562, 1
  %v7564 = vmax.f32 %v7562, %v7563
  %v7565 = vsel %vm3657, %v7196, -inf
  %v7566 = vrot.slane %v7565, 4
  %v7567 = vmax.f32 %v7565, %v7566
  %v7568 = vrot.slane %v7567, 2
  %v7569 = vmax.f32 %v7567, %v7568
  %v7570 = vrot.slane %v7569, 1
  %v7571 = vmax.f32 %v7569, %v7570
  %v7572 = vsel %vm7445, %v7197, -inf
  %v7573 = vrot.slane %v7572, 4
  %v7574 = vmax.f32 %v7572, %v7573
  %v7575 = vrot.slane %v7574, 2
  %v7576 = vmax.f32 %v7574, %v7575
  %v7577 = vrot.slane %v7576, 1
  %v7578 = vmax.f32 %v7576, %v7577
  %v7579 = vsel %vm3657, %v7204, -inf
  %v7580 = vrot.slane %v7579, 4
  %v7581 = vmax.f32 %v7579, %v7580
  %v7582 = vrot.slane %v7581, 2
  %v7583 = vmax.f32 %v7581, %v7582
  %v7584 = vrot.slane %v7583, 1
  %v7585 = vmax.f32 %v7583, %v7584
  %v7586 = vsel %vm7445, %v7205, -inf
  %v7587 = vrot.slane %v7586, 4
  %v7588 = vmax.f32 %v7586, %v7587
  %v7589 = vrot.slane %v7588, 2
  %v7590 = vmax.f32 %v7588, %v7589
  %v7591 = vrot.slane %v7590, 1
  %v7592 = vmax.f32 %v7590, %v7591
  %v7593 = vsel %vm3657, %v7212, -inf
  %v7594 = vrot.slane %v7593, 4
  %v7595 = vmax.f32 %v7593, %v7594
  %v7596 = vrot.slane %v7595, 2
  %v7597 = vmax.f32 %v7595, %v7596
  %v7598 = vrot.slane %v7597, 1
  %v7599 = vmax.f32 %v7597, %v7598
  %v7600 = vsel %vm7445, %v7213, -inf
  %v7601 = vrot.slane %v7600, 4
  %v7602 = vmax.f32 %v7600, %v7601
  %v7603 = vrot.slane %v7602, 2
  %v7604 = vmax.f32 %v7602, %v7603
  %v7605 = vrot.slane %v7604, 1
  %v7606 = vmax.f32 %v7604, %v7605
  %v7607 = vsel %vm3657, %v7220, -inf
  %v7608 = vrot.slane %v7607, 4
  %v7609 = vmax.f32 %v7607, %v7608
  %v7610 = vrot.slane %v7609, 2
  %v7611 = vmax.f32 %v7609, %v7610
  %v7612 = vrot.slane %v7611, 1
  %v7613 = vmax.f32 %v7611, %v7612
  %v7614 = vsel %vm7445, %v7221, -inf
  %v7615 = vrot.slane %v7614, 4
  %v7616 = vmax.f32 %v7614, %v7615
  %v7617 = vrot.slane %v7616, 2
  %v7618 = vmax.f32 %v7616, %v7617
  %v7619 = vrot.slane %v7618, 1
  %v7620 = vmax.f32 %v7618, %v7619
  %v7621 = vsel %vm3657, %v7228, -inf
  %v7622 = vrot.slane %v7621, 4
  %v7623 = vmax.f32 %v7621, %v7622
  %v7624 = vrot.slane %v7623, 2
  %v7625 = vmax.f32 %v7623, %v7624
  %v7626 = vrot.slane %v7625, 1
  %v7627 = vmax.f32 %v7625, %v7626
  %v7628 = vsel %vm7445, %v7229, -inf
  %v7629 = vrot.slane %v7628, 4
  %v7630 = vmax.f32 %v7628, %v7629
  %v7631 = vrot.slane %v7630, 2
  %v7632 = vmax.f32 %v7630, %v7631
  %v7633 = vrot.slane %v7632, 1
  %v7634 = vmax.f32 %v7632, %v7633
  %v7635 = vsel %vm3657, %v7236, -inf
  %v7636 = vrot.slane %v7635, 4
  %v7637 = vmax.f32 %v7635, %v7636
  %v7638 = vrot.slane %v7637, 2
  %v7639 = vmax.f32 %v7637, %v7638
  %v7640 = vrot.slane %v7639, 1
  %v7641 = vmax.f32 %v7639, %v7640
  %v7642 = vsel %vm7445, %v7237, -inf
  %v7643 = vrot.slane %v7642, 4
  %v7644 = vmax.f32 %v7642, %v7643
  %v7645 = vrot.slane %v7644, 2
  %v7646 = vmax.f32 %v7644, %v7645
  %v7647 = vrot.slane %v7646, 1
  %v7648 = vmax.f32 %v7646, %v7647
  %v7649 = vsel %vm3657, %v7244, -inf
  %v7650 = vrot.slane %v7649, 4
  %v7651 = vmax.f32 %v7649, %v7650
  %v7652 = vrot.slane %v7651, 2
  %v7653 = vmax.f32 %v7651, %v7652
  %v7654 = vrot.slane %v7653, 1
  %v7655 = vmax.f32 %v7653, %v7654
  %v7656 = vsel %vm7445, %v7245, -inf
  %v7657 = vrot.slane %v7656, 4
  %v7658 = vmax.f32 %v7656, %v7657
  %v7659 = vrot.slane %v7658, 2
  %v7660 = vmax.f32 %v7658, %v7659
  %v7661 = vrot.slane %v7660, 1
  %v7662 = vmax.f32 %v7660, %v7661
  %v7663 = vsel %vm3657, %v7252, -inf
  %v7664 = vrot.slane %v7663, 4
  %v7665 = vmax.f32 %v7663, %v7664
  %v7666 = vrot.slane %v7665, 2
  %v7667 = vmax.f32 %v7665, %v7666
  %v7668 = vrot.slane %v7667, 1
  %v7669 = vmax.f32 %v7667, %v7668
  %v7670 = vsel %vm7445, %v7253, -inf
  %v7671 = vrot.slane %v7670, 4
  %v7672 = vmax.f32 %v7670, %v7671
  %v7673 = vrot.slane %v7672, 2
  %v7674 = vmax.f32 %v7672, %v7673
  %v7675 = vrot.slane %v7674, 1
  %v7676 = vmax.f32 %v7674, %v7675
  %v7677 = vsel %vm3657, %v7260, -inf
  %v7678 = vrot.slane %v7677, 4
  %v7679 = vmax.f32 %v7677, %v7678
  %v7680 = vrot.slane %v7679, 2
  %v7681 = vmax.f32 %v7679, %v7680
  %v7682 = vrot.slane %v7681, 1
  %v7683 = vmax.f32 %v7681, %v7682
  %v7684 = vsel %vm7445, %v7261, -inf
  %v7685 = vrot.slane %v7684, 4
  %v7686 = vmax.f32 %v7684, %v7685
  %v7687 = vrot.slane %v7686, 2
  %v7688 = vmax.f32 %v7686, %v7687
  %v7689 = vrot.slane %v7688, 1
  %v7690 = vmax.f32 %v7688, %v7689
  %v7691 = vsel %vm3657, %v7268, -inf
  %v7692 = vrot.slane %v7691, 4
  %v7693 = vmax.f32 %v7691, %v7692
  %v7694 = vrot.slane %v7693, 2
  %v7695 = vmax.f32 %v7693, %v7694
  %v7696 = vrot.slane %v7695, 1
  %v7697 = vmax.f32 %v7695, %v7696
  %v7698 = vsel %vm7445, %v7269, -inf
  %v7699 = vrot.slane %v7698, 4
  %v7700 = vmax.f32 %v7698, %v7699
  %v7701 = vrot.slane %v7700, 2
  %v7702 = vmax.f32 %v7700, %v7701
  %v7703 = vrot.slane %v7702, 1
  %v7704 = vmax.f32 %v7702, %v7703
  %v7705 = vsel %vm3657, %v7276, -inf
  %v7706 = vrot.slane %v7705, 4
  %v7707 = vmax.f32 %v7705, %v7706
  %v7708 = vrot.slane %v7707, 2
  %v7709 = vmax.f32 %v7707, %v7708
  %v7710 = vrot.slane %v7709, 1
  %v7711 = vmax.f32 %v7709, %v7710
  %v7712 = vsel %vm7445, %v7277, -inf
  %v7713 = vrot.slane %v7712, 4
  %v7714 = vmax.f32 %v7712, %v7713
  %v7715 = vrot.slane %v7714, 2
  %v7716 = vmax.f32 %v7714, %v7715
  %v7717 = vrot.slane %v7716, 1
  %v7718 = vmax.f32 %v7716, %v7717
  %v7719 = vsel %vm3657, %v7284, -inf
  %v7720 = vrot.slane %v7719, 4
  %v7721 = vmax.f32 %v7719, %v7720
  %v7722 = vrot.slane %v7721, 2
  %v7723 = vmax.f32 %v7721, %v7722
  %v7724 = vrot.slane %v7723, 1
  %v7725 = vmax.f32 %v7723, %v7724
  %v7726 = vsel %vm7445, %v7285, -inf
  %v7727 = vrot.slane %v7726, 4
  %v7728 = vmax.f32 %v7726, %v7727
  %v7729 = vrot.slane %v7728, 2
  %v7730 = vmax.f32 %v7728, %v7729
  %v7731 = vrot.slane %v7730, 1
  %v7732 = vmax.f32 %v7730, %v7731
  %v7733 = vsel %vm3657, %v7292, -inf
  %v7734 = vrot.slane %v7733, 4
  %v7735 = vmax.f32 %v7733, %v7734
  %v7736 = vrot.slane %v7735, 2
  %v7737 = vmax.f32 %v7735, %v7736
  %v7738 = vrot.slane %v7737, 1
  %v7739 = vmax.f32 %v7737, %v7738
  %v7740 = vsel %vm7445, %v7293, -inf
  %v7741 = vrot.slane %v7740, 4
  %v7742 = vmax.f32 %v7740, %v7741
  %v7743 = vrot.slane %v7742, 2
  %v7744 = vmax.f32 %v7742, %v7743
  %v7745 = vrot.slane %v7744, 1
  %v7746 = vmax.f32 %v7744, %v7745
  %v7747 = vsel %vm3657, %v7300, -inf
  %v7748 = vrot.slane %v7747, 4
  %v7749 = vmax.f32 %v7747, %v7748
  %v7750 = vrot.slane %v7749, 2
  %v7751 = vmax.f32 %v7749, %v7750
  %v7752 = vrot.slane %v7751, 1
  %v7753 = vmax.f32 %v7751, %v7752
  %v7754 = vsel %vm7445, %v7301, -inf
  %v7755 = vrot.slane %v7754, 4
  %v7756 = vmax.f32 %v7754, %v7755
  %v7757 = vrot.slane %v7756, 2
  %v7758 = vmax.f32 %v7756, %v7757
  %v7759 = vrot.slane %v7758, 1
  %v7760 = vmax.f32 %v7758, %v7759
  %v7761 = vsel %vm3657, %v7308, -inf
  %v7762 = vrot.slane %v7761, 4
  %v7763 = vmax.f32 %v7761, %v7762
  %v7764 = vrot.slane %v7763, 2
  %v7765 = vmax.f32 %v7763, %v7764
  %v7766 = vrot.slane %v7765, 1
  %v7767 = vmax.f32 %v7765, %v7766
  %v7768 = vsel %vm7445, %v7309, -inf
  %v7769 = vrot.slane %v7768, 4
  %v7770 = vmax.f32 %v7768, %v7769
  %v7771 = vrot.slane %v7770, 2
  %v7772 = vmax.f32 %v7770, %v7771
  %v7773 = vrot.slane %v7772, 1
  %v7774 = vmax.f32 %v7772, %v7773
  %v7775 = vsel %vm3657, %v7316, -inf
  %v7776 = vrot.slane %v7775, 4
  %v7777 = vmax.f32 %v7775, %v7776
  %v7778 = vrot.slane %v7777, 2
  %v7779 = vmax.f32 %v7777, %v7778
  %v7780 = vrot.slane %v7779, 1
  %v7781 = vmax.f32 %v7779, %v7780
  %v7782 = vsel %vm7445, %v7317, -inf
  %v7783 = vrot.slane %v7782, 4
  %v7784 = vmax.f32 %v7782, %v7783
  %v7785 = vrot.slane %v7784, 2
  %v7786 = vmax.f32 %v7784, %v7785
  %v7787 = vrot.slane %v7786, 1
  %v7788 = vmax.f32 %v7786, %v7787
  %v7789 = vsel %vm3657, %v7324, -inf
  %v7790 = vrot.slane %v7789, 4
  %v7791 = vmax.f32 %v7789, %v7790
  %v7792 = vrot.slane %v7791, 2
  %v7793 = vmax.f32 %v7791, %v7792
  %v7794 = vrot.slane %v7793, 1
  %v7795 = vmax.f32 %v7793, %v7794
  %v7796 = vsel %vm7445, %v7325, -inf
  %v7797 = vrot.slane %v7796, 4
  %v7798 = vmax.f32 %v7796, %v7797
  %v7799 = vrot.slane %v7798, 2
  %v7800 = vmax.f32 %v7798, %v7799
  %v7801 = vrot.slane %v7800, 1
  %v7802 = vmax.f32 %v7800, %v7801
  %v7803 = vsel %vm3657, %v7332, -inf
  %v7804 = vrot.slane %v7803, 4
  %v7805 = vmax.f32 %v7803, %v7804
  %v7806 = vrot.slane %v7805, 2
  %v7807 = vmax.f32 %v7805, %v7806
  %v7808 = vrot.slane %v7807, 1
  %v7809 = vmax.f32 %v7807, %v7808
  %v7810 = vsel %vm7445, %v7333, -inf
  %v7811 = vrot.slane %v7810, 4
  %v7812 = vmax.f32 %v7810, %v7811
  %v7813 = vrot.slane %v7812, 2
  %v7814 = vmax.f32 %v7812, %v7813
  %v7815 = vrot.slane %v7814, 1
  %v7816 = vmax.f32 %v7814, %v7815
  %v7817 = vsel %vm3657, %v7340, -inf
  %v7818 = vrot.slane %v7817, 4
  %v7819 = vmax.f32 %v7817, %v7818
  %v7820 = vrot.slane %v7819, 2
  %v7821 = vmax.f32 %v7819, %v7820
  %v7822 = vrot.slane %v7821, 1
  %v7823 = vmax.f32 %v7821, %v7822
  %v7824 = vsel %vm7445, %v7341, -inf
  %v7825 = vrot.slane %v7824, 4
  %v7826 = vmax.f32 %v7824, %v7825
  %v7827 = vrot.slane %v7826, 2
  %v7828 = vmax.f32 %v7826, %v7827
  %v7829 = vrot.slane %v7828, 1
  %v7830 = vmax.f32 %v7828, %v7829
  %v7831 = vsel %vm3657, %v7348, -inf
  %v7832 = vrot.slane %v7831, 4
  %v7833 = vmax.f32 %v7831, %v7832
  %v7834 = vrot.slane %v7833, 2
  %v7835 = vmax.f32 %v7833, %v7834
  %v7836 = vrot.slane %v7835, 1
  %v7837 = vmax.f32 %v7835, %v7836
  %v7838 = vsel %vm7445, %v7349, -inf
  %v7839 = vrot.slane %v7838, 4
  %v7840 = vmax.f32 %v7838, %v7839
  %v7841 = vrot.slane %v7840, 2
  %v7842 = vmax.f32 %v7840, %v7841
  %v7843 = vrot.slane %v7842, 1
  %v7844 = vmax.f32 %v7842, %v7843
  %v7845 = vsel %vm3657, %v7356, -inf
  %v7846 = vrot.slane %v7845, 4
  %v7847 = vmax.f32 %v7845, %v7846
  %v7848 = vrot.slane %v7847, 2
  %v7849 = vmax.f32 %v7847, %v7848
  %v7850 = vrot.slane %v7849, 1
  %v7851 = vmax.f32 %v7849, %v7850
  %v7852 = vsel %vm7445, %v7357, -inf
  %v7853 = vrot.slane %v7852, 4
  %v7854 = vmax.f32 %v7852, %v7853
  %v7855 = vrot.slane %v7854, 2
  %v7856 = vmax.f32 %v7854, %v7855
  %v7857 = vrot.slane %v7856, 1
  %v7858 = vmax.f32 %v7856, %v7857
  %v7859 = vsel %vm3657, %v7364, -inf
  %v7860 = vrot.slane %v7859, 4
  %v7861 = vmax.f32 %v7859, %v7860
  %v7862 = vrot.slane %v7861, 2
  %v7863 = vmax.f32 %v7861, %v7862
  %v7864 = vrot.slane %v7863, 1
  %v7865 = vmax.f32 %v7863, %v7864
  %v7866 = vsel %vm7445, %v7365, -inf
  %v7867 = vrot.slane %v7866, 4
  %v7868 = vmax.f32 %v7866, %v7867
  %v7869 = vrot.slane %v7868, 2
  %v7870 = vmax.f32 %v7868, %v7869
  %v7871 = vrot.slane %v7870, 1
  %v7872 = vmax.f32 %v7870, %v7871
  %v7873 = vsel %vm3657, %v7372, -inf
  %v7874 = vrot.slane %v7873, 4
  %v7875 = vmax.f32 %v7873, %v7874
  %v7876 = vrot.slane %v7875, 2
  %v7877 = vmax.f32 %v7875, %v7876
  %v7878 = vrot.slane %v7877, 1
  %v7879 = vmax.f32 %v7877, %v7878
  %v7880 = vsel %vm7445, %v7373, -inf
  %v7881 = vrot.slane %v7880, 4
  %v7882 = vmax.f32 %v7880, %v7881
  %v7883 = vrot.slane %v7882, 2
  %v7884 = vmax.f32 %v7882, %v7883
  %v7885 = vrot.slane %v7884, 1
  %v7886 = vmax.f32 %v7884, %v7885
  %v7951 = vcombine.low %v7444, %v7452
  %v7952 = vcombine.low %v7459, %v7466
  %v7953 = vcombine.low %v7473, %v7480
  %v7954 = vcombine.low %v7487, %v7494
  %v7955 = vcombine.low %v7501, %v7508
  %v7956 = vcombine.low %v7515, %v7522
  %v7957 = vcombine.low %v7529, %v7536
  %v7958 = vcombine.low %v7543, %v7550
  %v7959 = vcombine.low %v7557, %v7564
  %v7960 = vcombine.low %v7571, %v7578
  %v7961 = vcombine.low %v7585, %v7592
  %v7962 = vcombine.low %v7599, %v7606
  %v7963 = vcombine.low %v7613, %v7620
  %v7964 = vcombine.low %v7627, %v7634
  %v7965 = vcombine.low %v7641, %v7648
  %v7966 = vcombine.low %v7655, %v7662
  %v7967 = vcombine.low %v7669, %v7676
  %v7968 = vcombine.low %v7683, %v7690
  %v7969 = vcombine.low %v7697, %v7704
  %v7970 = vcombine.low %v7711, %v7718
  %v7971 = vcombine.low %v7725, %v7732
  %v7972 = vcombine.low %v7739, %v7746
  %v7973 = vcombine.low %v7753, %v7760
  %v7974 = vcombine.low %v7767, %v7774
  %v7975 = vcombine.low %v7781, %v7788
  %v7976 = vcombine.low %v7795, %v7802
  %v7977 = vcombine.low %v7809, %v7816
  %v7978 = vcombine.low %v7823, %v7830
  %v7979 = vcombine.low %v7837, %v7844
  %v7980 = vcombine.low %v7851, %v7858
  %v7981 = vcombine.low %v7865, %v7872
  %v7982 = vcombine.low %v7879, %v7886
  %v7983 = vrot.slane %v7952, 7
  %v7984 = vsel %vm5252, %v7983, %v7951
  %v7985 = vsel %vm5260, %v7983, %v7984
  %v7986 = vrot.slane %v7953, 6
  %v7987 = vsel %vm5254, %v7986, %v7985
  %v7988 = vsel %vm5262, %v7986, %v7987
  %v7989 = vrot.slane %v7954, 5
  %v7990 = vsel %vm5256, %v7989, %v7988
  %v7991 = vsel %vm5264, %v7989, %v7990
  %v7992 = vrot.slane %v7956, 7
  %v7993 = vsel %vm5252, %v7992, %v7955
  %v7994 = vsel %vm5260, %v7992, %v7993
  %v7995 = vrot.slane %v7957, 6
  %v7996 = vsel %vm5254, %v7995, %v7994
  %v7997 = vsel %vm5262, %v7995, %v7996
  %v7998 = vrot.slane %v7958, 5
  %v7999 = vsel %vm5256, %v7998, %v7997
  %v8000 = vsel %vm5264, %v7998, %v7999
  %v8001 = vrot.slane %v7960, 7
  %v8002 = vsel %vm5252, %v8001, %v7959
  %v8003 = vsel %vm5260, %v8001, %v8002
  %v8004 = vrot.slane %v7961, 6
  %v8005 = vsel %vm5254, %v8004, %v8003
  %v8006 = vsel %vm5262, %v8004, %v8005
  %v8007 = vrot.slane %v7962, 5
  %v8008 = vsel %vm5256, %v8007, %v8006
  %v8009 = vsel %vm5264, %v8007, %v8008
  %v8010 = vrot.slane %v7964, 7
  %v8011 = vsel %vm5252, %v8010, %v7963
  %v8012 = vsel %vm5260, %v8010, %v8011
  %v8013 = vrot.slane %v7965, 6
  %v8014 = vsel %vm5254, %v8013, %v8012
  %v8015 = vsel %vm5262, %v8013, %v8014
  %v8016 = vrot.slane %v7966, 5
  %v8017 = vsel %vm5256, %v8016, %v8015
  %v8018 = vsel %vm5264, %v8016, %v8017
  %v8019 = vrot.slane %v7968, 7
  %v8020 = vsel %vm5252, %v8019, %v7967
  %v8021 = vsel %vm5260, %v8019, %v8020
  %v8022 = vrot.slane %v7969, 6
  %v8023 = vsel %vm5254, %v8022, %v8021
  %v8024 = vsel %vm5262, %v8022, %v8023
  %v8025 = vrot.slane %v7970, 5
  %v8026 = vsel %vm5256, %v8025, %v8024
  %v8027 = vsel %vm5264, %v8025, %v8026
  %v8028 = vrot.slane %v7972, 7
  %v8029 = vsel %vm5252, %v8028, %v7971
  %v8030 = vsel %vm5260, %v8028, %v8029
  %v8031 = vrot.slane %v7973, 6
  %v8032 = vsel %vm5254, %v8031, %v8030
  %v8033 = vsel %vm5262, %v8031, %v8032
  %v8034 = vrot.slane %v7974, 5
  %v8035 = vsel %vm5256, %v8034, %v8033
  %v8036 = vsel %vm5264, %v8034, %v8035
  %v8037 = vrot.slane %v7976, 7
  %v8038 = vsel %vm5252, %v8037, %v7975
  %v8039 = vsel %vm5260, %v8037, %v8038
  %v8040 = vrot.slane %v7977, 6
  %v8041 = vsel %vm5254, %v8040, %v8039
  %v8042 = vsel %vm5262, %v8040, %v8041
  %v8043 = vrot.slane %v7978, 5
  %v8044 = vsel %vm5256, %v8043, %v8042
  %v8045 = vsel %vm5264, %v8043, %v8044
  %v8046 = vrot.slane %v7980, 7
  %v8047 = vsel %vm5252, %v8046, %v7979
  %v8048 = vsel %vm5260, %v8046, %v8047
  %v8049 = vrot.slane %v7981, 6
  %v8050 = vsel %vm5254, %v8049, %v8048
  %v8051 = vsel %vm5262, %v8049, %v8050
  %v8052 = vrot.slane %v7982, 5
  %v8053 = vsel %vm5256, %v8052, %v8051
  %v8054 = vsel %vm5264, %v8052, %v8053
  %v8063 = vcombine.low %v7991, %v8009
  %v8064 = vcombine.high %v7991, %v8009
  %v8066 = vunpack.c.l.s4 1983009808
  %v8067 = vunpack.c.0.s8 %v8066
  %v8068 = vlaneseq
  %v8069 = vshrl.u32 %v8068, 7
  %v8070 = vsub.s32 %v8067, %v8069
  %v8071 = vrot.slane %v8063, %v8070
  %v8073 = vunpack.c.l.s4 1983009808
  %v8074 = vunpack.c.0.s8 %v8073
  %v8075 = vlaneseq
  %v8076 = vshrl.u32 %v8075, 7
  %v8077 = vsub.s32 %v8074, %v8076
  %v8078 = vrot.slane %v8064, %v8077
  %v8079 = vcombine.low %v8000, %v8018
  %v8080 = vcombine.high %v8000, %v8018
  %v8082 = vunpack.c.l.s4 1983009808
  %v8083 = vunpack.c.0.s8 %v8082
  %v8084 = vlaneseq
  %v8085 = vshrl.u32 %v8084, 7
  %v8086 = vsub.s32 %v8083, %v8085
  %v8087 = vrot.slane %v8079, %v8086
  %v8089 = vunpack.c.l.s4 1983009808
  %v8090 = vunpack.c.0.s8 %v8089
  %v8091 = vlaneseq
  %v8092 = vshrl.u32 %v8091, 7
  %v8093 = vsub.s32 %v8090, %v8092
  %v8094 = vrot.slane %v8080, %v8093
  %v8095 = vcombine.low %v8071, %v8087
  %v8096 = vcombine.high %v8071, %v8087
  %v8098 = vunpack.c.l.s4 1934713408
  %v8099 = vunpack.c.0.s8 %v8098
  %v8100 = vlaneseq
  %v8101 = vshrl.u32 %v8100, 7
  %v8102 = vsub.s32 %v8099, %v8101
  %v8103 = vrot.slane %v8095, %v8102
  %v8105 = vunpack.c.l.s4 1934713408
  %v8106 = vunpack.c.0.s8 %v8105
  %v8107 = vlaneseq
  %v8108 = vshrl.u32 %v8107, 7
  %v8109 = vsub.s32 %v8106, %v8108
  %v8110 = vrot.slane %v8096, %v8109
  %v8111 = vcombine.low %v8078, %v8094
  %v8112 = vcombine.high %v8078, %v8094
  %v8114 = vunpack.c.l.s4 1934713408
  %v8115 = vunpack.c.0.s8 %v8114
  %v8116 = vlaneseq
  %v8117 = vshrl.u32 %v8116, 7
  %v8118 = vsub.s32 %v8115, %v8117
  %v8119 = vrot.slane %v8111, %v8118
  %v8121 = vunpack.c.l.s4 1934713408
  %v8122 = vunpack.c.0.s8 %v8121
  %v8123 = vlaneseq
  %v8124 = vshrl.u32 %v8123, 7
  %v8125 = vsub.s32 %v8122, %v8124
  %v8126 = vrot.slane %v8112, %v8125
  %v8127 = vcombine.low %v8103, %v8119
  %v8128 = vcombine.high %v8103, %v8119
  %v8129 = vcombine.low %v8110, %v8126
  %v8130 = vcombine.high %v8110, %v8126
  %v8131 = vcombine.low %v8027, %v8045
  %v8132 = vcombine.high %v8027, %v8045
  %v8134 = vunpack.c.l.s4 1983009808
  %v8135 = vunpack.c.0.s8 %v8134
  %v8136 = vlaneseq
  %v8137 = vshrl.u32 %v8136, 7
  %v8138 = vsub.s32 %v8135, %v8137
  %v8139 = vrot.slane %v8131, %v8138
  %v8141 = vunpack.c.l.s4 1983009808
  %v8142 = vunpack.c.0.s8 %v8141
  %v8143 = vlaneseq
  %v8144 = vshrl.u32 %v8143, 7
  %v8145 = vsub.s32 %v8142, %v8144
  %v8146 = vrot.slane %v8132, %v8145
  %v8147 = vcombine.low %v8036, %v8054
  %v8148 = vcombine.high %v8036, %v8054
  %v8150 = vunpack.c.l.s4 1983009808
  %v8151 = vunpack.c.0.s8 %v8150
  %v8152 = vlaneseq
  %v8153 = vshrl.u32 %v8152, 7
  %v8154 = vsub.s32 %v8151, %v8153
  %v8155 = vrot.slane %v8147, %v8154
  %v8157 = vunpack.c.l.s4 1983009808
  %v8158 = vunpack.c.0.s8 %v8157
  %v8159 = vlaneseq
  %v8160 = vshrl.u32 %v8159, 7
  %v8161 = vsub.s32 %v8158, %v8160
  %v8162 = vrot.slane %v8148, %v8161
  %v8163 = vcombine.low %v8139, %v8155
  %v8164 = vcombine.high %v8139, %v8155
  %v8166 = vunpack.c.l.s4 1934713408
  %v8167 = vunpack.c.0.s8 %v8166
  %v8168 = vlaneseq
  %v8169 = vshrl.u32 %v8168, 7
  %v8170 = vsub.s32 %v8167, %v8169
  %v8171 = vrot.slane %v8163, %v8170
  %v8173 = vunpack.c.l.s4 1934713408
  %v8174 = vunpack.c.0.s8 %v8173
  %v8175 = vlaneseq
  %v8176 = vshrl.u32 %v8175, 7
  %v8177 = vsub.s32 %v8174, %v8176
  %v8178 = vrot.slane %v8164, %v8177
  %v8179 = vcombine.low %v8146, %v8162
  %v8180 = vcombine.high %v8146, %v8162
  %v8182 = vunpack.c.l.s4 1934713408
  %v8183 = vunpack.c.0.s8 %v8182
  %v8184 = vlaneseq
  %v8185 = vshrl.u32 %v8184, 7
  %v8186 = vsub.s32 %v8183, %v8185
  %v8187 = vrot.slane %v8179, %v8186
  %v8189 = vunpack.c.l.s4 1934713408
  %v8190 = vunpack.c.0.s8 %v8189
  %v8191 = vlaneseq
  %v8192 = vshrl.u32 %v8191, 7
  %v8193 = vsub.s32 %v8190, %v8192
  %v8194 = vrot.slane %v8180, %v8193
  %v8195 = vcombine.low %v8171, %v8187
  %v8196 = vcombine.high %v8171, %v8187
  %v8197 = vcombine.low %v8178, %v8194
  %v8198 = vcombine.high %v8178, %v8194
  %v8201 = vcombine.low %v8127, %v8195
  %v8202 = vcombine.high %v8127, %v8195
  %v8207 = vcombine.low %v8128, %v8196
  %v8208 = vcombine.high %v8128, %v8196
  %8209 = vrot.lane.b32.xlu0 %v8207, 32
  %v8210 = vpop.permute.xlu0 %8209
  %8211 = vrot.lane.b32.xlu0 %v8208, 32
  %v8212 = vpop.permute.xlu0 %8211
  %vm8213 = vcmask 261120
  %v8214 = vsel %vm8213, %v8210, %v8212
  %v8219 = vcombine.low %v8129, %v8197
  %v8220 = vcombine.high %v8129, %v8197
  %8221 = vrot.lane.b32.xlu0 %v8219, 64
  %v8222 = vpop.permute.xlu0 %8221
  %8223 = vrot.lane.b32.xlu0 %v8220, 64
  %v8224 = vpop.permute.xlu0 %8223
  %vm8225 = vcmask 523264
  %v8226 = vsel %vm8225, %v8222, %v8224
  %v8231 = vcombine.low %v8130, %v8198
  %v8232 = vcombine.high %v8130, %v8198
  %8233 = vrot.lane.b32.xlu0 %v8231, 96
  %v8234 = vpop.permute.xlu0 %8233
  %8235 = vrot.lane.b32.xlu0 %v8232, 96
  %v8236 = vpop.permute.xlu0 %8235
  %vm8237 = vcmask 785408
  %v8238 = vsel %vm8237, %v8234, %v8236
  %v8241 = vsel %vm8213, %v8202, %v8210
  %v8242 = vsel %vm8225, %v8214, %v8222
  %v8243 = vsel %vm8237, %v8226, %v8234
  %v8244 = vld [vmem:[%s5] sm:$0xff]
  %v8245 = vld [vmem:[%s5 + $0x8] sm:$0xff]
  %v8246 = vld [vmem:[%s5 + $0x10] sm:$0xff]
  %v8247 = vld [vmem:[%s5 + $0x18] sm:$0xff]
  %v8248 = vld [vmem:[%s5 + $0x20] sm:$0xff]
  %v8249 = vld [vmem:[%s5 + $0x28] sm:$0xff]
  %v8250 = vld [vmem:[%s5 + $0x30] sm:$0xff]
  %v8251 = vld [vmem:[%s5 + $0x38] sm:$0xff]
  %v8252 = vld [vmem:[%s5 + $0x40] sm:$0xff]
  %v8253 = vld [vmem:[%s5 + $0x48] sm:$0xff]
  %v8254 = vld [vmem:[%s5 + $0x50] sm:$0xff]
  %v8255 = vld [vmem:[%s5 + $0x58] sm:$0xff]
  %v8256 = vld [vmem:[%s5 + $0x60] sm:$0xff]
  %v8257 = vld [vmem:[%s5 + $0x68] sm:$0xff]
  %v8258 = vld [vmem:[%s5 + $0x70] sm:$0xff]
  %v8259 = vld [vmem:[%s5 + $0x78] sm:$0xff]
  %v8260 = vld [vmem:[%s5 + $0x80] sm:$0xff]
  %v8261 = vld [vmem:[%s5 + $0x88] sm:$0xff]
  %v8262 = vld [vmem:[%s5 + $0x90] sm:$0xff]
  %v8263 = vld [vmem:[%s5 + $0x98] sm:$0xff]
  %v8264 = vld [vmem:[%s5 + $0xa0] sm:$0xff]
  %v8265 = vld [vmem:[%s5 + $0xa8] sm:$0xff]
  %v8266 = vld [vmem:[%s5 + $0xb0] sm:$0xff]
  %v8267 = vld [vmem:[%s5 + $0xb8] sm:$0xff]
  %v8268 = vld [vmem:[%s5 + $0xc0] sm:$0xff]
  %v8269 = vld [vmem:[%s5 + $0xc8] sm:$0xff]
  %v8270 = vld [vmem:[%s5 + $0xd0] sm:$0xff]
  %v8271 = vld [vmem:[%s5 + $0xd8] sm:$0xff]
  %v8272 = vld [vmem:[%s5 + $0xe0] sm:$0xff]
  %v8273 = vld [vmem:[%s5 + $0xe8] sm:$0xff]
  %v8274 = vld [vmem:[%s5 + $0xf0] sm:$0xff]
  %v8275 = vld [vmem:[%s5 + $0xf8] sm:$0xff]
  %v8276 = vld [vmem:[%s5 + $0x100] sm:$0xff]
  %v8277 = vld [vmem:[%s5 + $0x108] sm:$0xff]
  %v8278 = vld [vmem:[%s5 + $0x110] sm:$0xff]
  %v8279 = vld [vmem:[%s5 + $0x118] sm:$0xff]
  %v8280 = vld [vmem:[%s5 + $0x120] sm:$0xff]
  %v8281 = vld [vmem:[%s5 + $0x128] sm:$0xff]
  %v8282 = vld [vmem:[%s5 + $0x130] sm:$0xff]
  %v8283 = vld [vmem:[%s5 + $0x138] sm:$0xff]
  %v8284 = vld [vmem:[%s5 + $0x140] sm:$0xff]
  %v8285 = vld [vmem:[%s5 + $0x148] sm:$0xff]
  %v8286 = vld [vmem:[%s5 + $0x150] sm:$0xff]
  %v8287 = vld [vmem:[%s5 + $0x158] sm:$0xff]
  %v8288 = vld [vmem:[%s5 + $0x160] sm:$0xff]
  %v8289 = vld [vmem:[%s5 + $0x168] sm:$0xff]
  %v8290 = vld [vmem:[%s5 + $0x170] sm:$0xff]
  %v8291 = vld [vmem:[%s5 + $0x178] sm:$0xff]
  %v8292 = vld [vmem:[%s5 + $0x180] sm:$0xff]
  %v8293 = vld [vmem:[%s5 + $0x188] sm:$0xff]
  %v8294 = vld [vmem:[%s5 + $0x190] sm:$0xff]
  %v8295 = vld [vmem:[%s5 + $0x198] sm:$0xff]
  %v8296 = vld [vmem:[%s5 + $0x1a0] sm:$0xff]
  %v8297 = vld [vmem:[%s5 + $0x1a8] sm:$0xff]
  %v8298 = vld [vmem:[%s5 + $0x1b0] sm:$0xff]
  %v8299 = vld [vmem:[%s5 + $0x1b8] sm:$0xff]
  %v8300 = vld [vmem:[%s5 + $0x1c0] sm:$0xff]
  %v8301 = vld [vmem:[%s5 + $0x1c8] sm:$0xff]
  %v8302 = vld [vmem:[%s5 + $0x1d0] sm:$0xff]
  %v8303 = vld [vmem:[%s5 + $0x1d8] sm:$0xff]
  %v8304 = vld [vmem:[%s5 + $0x1e0] sm:$0xff]
  %v8305 = vld [vmem:[%s5 + $0x1e8] sm:$0xff]
  %v8306 = vld [vmem:[%s5 + $0x1f0] sm:$0xff]
  %v8307 = vld [vmem:[%s5 + $0x1f8] sm:$0xff]
  %v8308 = vld [vmem:[%s5 + $0x200] sm:$0xff]
  %v8309 = vld [vmem:[%s5 + $0x208] sm:$0xff]
  %v8310 = vld [vmem:[%s5 + $0x210] sm:$0xff]
  %v8311 = vld [vmem:[%s5 + $0x218] sm:$0xff]
  %v8312 = vld [vmem:[%s5 + $0x220] sm:$0xff]
  %v8313 = vld [vmem:[%s5 + $0x228] sm:$0xff]
  %v8314 = vld [vmem:[%s5 + $0x230] sm:$0xff]
  %v8315 = vld [vmem:[%s5 + $0x238] sm:$0xff]
  %v8316 = vld [vmem:[%s5 + $0x240] sm:$0xff]
  %v8317 = vld [vmem:[%s5 + $0x248] sm:$0xff]
  %v8318 = vld [vmem:[%s5 + $0x250] sm:$0xff]
  %v8319 = vld [vmem:[%s5 + $0x258] sm:$0xff]
  %v8320 = vld [vmem:[%s5 + $0x260] sm:$0xff]
  %v8321 = vld [vmem:[%s5 + $0x268] sm:$0xff]
  %v8322 = vld [vmem:[%s5 + $0x270] sm:$0xff]
  %v8323 = vld [vmem:[%s5 + $0x278] sm:$0xff]
  %v8324 = vld [vmem:[%s6] sm:$0x1]
  %v8326 = vlaneseq
  %v8327 = vshrl.u32 %v8326, 7
  %v8328 = vsub.s32 0, %v8327
  %v8329 = vrot.slane %v8324, %v8328
  %8331 = vmatprep.subr.mxu0 0.0
  %8332 = vmatpush1.msra.mxu0 %v8259
  %8333 = vmatprep.subr.mxu0 0.0
  %8334 = vmatpush1.msra.mxu0 %v8258
  %8335 = vmatprep.subr.mxu0 0.0
  %8336 = vmatpush1.msra.mxu0 %v8257
  %8337 = vmatprep.subr.mxu0 0.0
  %8338 = vmatpush1.msra.mxu0 %v8256
  %8339 = vmatprep.subr.mxu0 0.0
  %8340 = vmatpush1.msra.mxu0 %v8255
  %8341 = vmatprep.subr.mxu0 0.0
  %8342 = vmatpush1.msra.mxu0 %v8254
  %8343 = vmatprep.subr.mxu0 0.0
  %8344 = vmatpush1.msra.mxu0 %v8253
  %8345 = vmatprep.subr.mxu0 0.0
  %8346 = vmatpush1.msra.mxu0 %v8252
  %8347 = vmatprep.subr.mxu0 0.0
  %8348 = vmatpush1.msra.mxu0 %v8251
  %8349 = vmatprep.subr.mxu0 0.0
  %8350 = vmatpush1.msra.mxu0 %v8250
  %8351 = vmatprep.subr.mxu0 0.0
  %8352 = vmatpush1.msra.mxu0 %v8249
  %8353 = vmatprep.subr.mxu0 0.0
  %8354 = vmatpush1.msra.mxu0 %v8248
  %8355 = vmatprep.subr.mxu0 0.0
  %8356 = vmatpush1.msra.mxu0 %v8247
  %8357 = vmatprep.subr.mxu0 0.0
  %8358 = vmatpush1.msra.mxu0 %v8246
  %8359 = vmatprep.subr.mxu0 0.0
  %8360 = vmatpush1.msra.mxu0 %v8245
  %8361 = vmatprep.subr.mxu0 0.0
  %8362 = vmatpush1.msra.mxu0 %v8244
  %8363 = vmatprep.subr.mxu0 0.0
  %8364 = vmatpush2.msra.mxu0 %v8275
  %8365 = vmatprep.subr.mxu0 0.0
  %8366 = vmatpush2.msra.mxu0 %v8274
  %8367 = vmatprep.subr.mxu0 0.0
  %8368 = vmatpush2.msra.mxu0 %v8273
  %8369 = vmatprep.subr.mxu0 0.0
  %8370 = vmatpush2.msra.mxu0 %v8272
  %8371 = vmatprep.subr.mxu0 0.0
  %8372 = vmatpush2.msra.mxu0 %v8271
  %8373 = vmatprep.subr.mxu0 0.0
  %8374 = vmatpush2.msra.mxu0 %v8270
  %8375 = vmatprep.subr.mxu0 0.0
  %8376 = vmatpush2.msra.mxu0 %v8269
  %8377 = vmatprep.subr.mxu0 0.0
  %8378 = vmatpush2.msra.mxu0 %v8268
  %8379 = vmatprep.subr.mxu0 0.0
  %8380 = vmatpush2.msra.mxu0 %v8267
  %8381 = vmatprep.subr.mxu0 0.0
  %8382 = vmatpush2.msra.mxu0 %v8266
  %8383 = vmatprep.subr.mxu0 0.0
  %8384 = vmatpush2.msra.mxu0 %v8265
  %8385 = vmatprep.subr.mxu0 0.0
  %8386 = vmatpush2.msra.mxu0 %v8264
  %8387 = vmatprep.subr.mxu0 0.0
  %8388 = vmatpush2.msra.mxu0 %v8263
  %8389 = vmatprep.subr.mxu0 0.0
  %8390 = vmatpush2.msra.mxu0 %v8262
  %8391 = vmatprep.subr.mxu0 0.0
  %8392 = vmatpush2.msra.mxu0 %v8261
  %8393 = vmatprep.subr.mxu0 0.0
  %8394 = vmatpush2.msra.mxu0 %v8260
  %8395 = vmatprep.mubr.f32.mxu0 %v8241
  %8396 = vmatmul.mubr.f32.gmra.mxu0 %v8201
  %v8397 = vpop.f32.mrf.mxu0
  %v8398 = vadd.f32 %v8329, %v8397
  %v8399 = vpop.f32.mrf.mxu0
  %8400 = vdwg.mxu0
  %8401 = vmatprep.subr.mxu0 0.0
  %8402 = vmatpush1.msra.mxu0 %v8291
  %8403 = vmatprep.subr.mxu0 0.0
  %8404 = vmatpush1.msra.mxu0 %v8290
  %8405 = vmatprep.subr.mxu0 0.0
  %8406 = vmatpush1.msra.mxu0 %v8289
  %8407 = vmatprep.subr.mxu0 0.0
  %8408 = vmatpush1.msra.mxu0 %v8288
  %8409 = vmatprep.subr.mxu0 0.0
  %8410 = vmatpush1.msra.mxu0 %v8287
  %8411 = vmatprep.subr.mxu0 0.0
  %8412 = vmatpush1.msra.mxu0 %v8286
  %8413 = vmatprep.subr.mxu0 0.0
  %8414 = vmatpush1.msra.mxu0 %v8285
  %8415 = vmatprep.subr.mxu0 0.0
  %8416 = vmatpush1.msra.mxu0 %v8284
  %8417 = vmatprep.subr.mxu0 0.0
  %8418 = vmatpush1.msra.mxu0 %v8283
  %8419 = vmatprep.subr.mxu0 0.0
  %8420 = vmatpush1.msra.mxu0 %v8282
  %8421 = vmatprep.subr.mxu0 0.0
  %8422 = vmatpush1.msra.mxu0 %v8281
  %8423 = vmatprep.subr.mxu0 0.0
  %8424 = vmatpush1.msra.mxu0 %v8280
  %8425 = vmatprep.subr.mxu0 0.0
  %8426 = vmatpush1.msra.mxu0 %v8279
  %8427 = vmatprep.subr.mxu0 0.0
  %8428 = vmatpush1.msra.mxu0 %v8278
  %8429 = vmatprep.subr.mxu0 0.0
  %8430 = vmatpush1.msra.mxu0 %v8277
  %8431 = vmatprep.subr.mxu0 0.0
  %8432 = vmatpush1.msra.mxu0 %v8276
  %8433 = vmatprep.subr.mxu0 0.0
  %8434 = vmatpush2.msra.mxu0 %v8307
  %8435 = vmatprep.subr.mxu0 0.0
  %8436 = vmatpush2.msra.mxu0 %v8306
  %8437 = vmatprep.subr.mxu0 0.0
  %8438 = vmatpush2.msra.mxu0 %v8305
  %8439 = vmatprep.subr.mxu0 0.0
  %8440 = vmatpush2.msra.mxu0 %v8304
  %8441 = vmatprep.subr.mxu0 0.0
  %8442 = vmatpush2.msra.mxu0 %v8303
  %8443 = vmatprep.subr.mxu0 0.0
  %8444 = vmatpush2.msra.mxu0 %v8302
  %8445 = vmatprep.subr.mxu0 0.0
  %8446 = vmatpush2.msra.mxu0 %v8301
  %8447 = vmatprep.subr.mxu0 0.0
  %8448 = vmatpush2.msra.mxu0 %v8300
  %8449 = vmatprep.subr.mxu0 0.0
  %8450 = vmatpush2.msra.mxu0 %v8299
  %8451 = vmatprep.subr.mxu0 0.0
  %8452 = vmatpush2.msra.mxu0 %v8298
  %8453 = vmatprep.subr.mxu0 0.0
  %8454 = vmatpush2.msra.mxu0 %v8297
  %8455 = vmatprep.subr.mxu0 0.0
  %8456 = vmatpush2.msra.mxu0 %v8296
  %8457 = vmatprep.subr.mxu0 0.0
  %8458 = vmatpush2.msra.mxu0 %v8295
  %8459 = vmatprep.subr.mxu0 0.0
  %8460 = vmatpush2.msra.mxu0 %v8294
  %8461 = vmatprep.subr.mxu0 0.0
  %8462 = vmatpush2.msra.mxu0 %v8293
  %8463 = vmatprep.subr.mxu0 0.0
  %8464 = vmatpush2.msra.mxu0 %v8292
  %8465 = vmatprep.mubr.f32.mxu0 %v8243
  %8466 = vmatmul.mubr.f32.gmra.mxu0 %v8242
  %v8467 = vpop.f32.mrf.mxu0
  %v8468 = vadd.f32 %v8398, %v8467
  %v8469 = vpop.f32.mrf.mxu0
  %8470 = vdwg.mxu0
  %8471 = vmatprep.subr.mxu0 0.0
  %8472 = vmatpush1.msra.mxu0 %v8323
  %8473 = vmatprep.subr.mxu0 0.0
  %8474 = vmatpush1.msra.mxu0 %v8322
  %8475 = vmatprep.subr.mxu0 0.0
  %8476 = vmatpush1.msra.mxu0 %v8321
  %8477 = vmatprep.subr.mxu0 0.0
  %8478 = vmatpush1.msra.mxu0 %v8320
  %8479 = vmatprep.subr.mxu0 0.0
  %8480 = vmatpush1.msra.mxu0 %v8319
  %8481 = vmatprep.subr.mxu0 0.0
  %8482 = vmatpush1.msra.mxu0 %v8318
  %8483 = vmatprep.subr.mxu0 0.0
  %8484 = vmatpush1.msra.mxu0 %v8317
  %8485 = vmatprep.subr.mxu0 0.0
  %8486 = vmatpush1.msra.mxu0 %v8316
  %8487 = vmatprep.subr.mxu0 0.0
  %8488 = vmatpush1.msra.mxu0 %v8315
  %8489 = vmatprep.subr.mxu0 0.0
  %8490 = vmatpush1.msra.mxu0 %v8314
  %8491 = vmatprep.subr.mxu0 0.0
  %8492 = vmatpush1.msra.mxu0 %v8313
  %8493 = vmatprep.subr.mxu0 0.0
  %8494 = vmatpush1.msra.mxu0 %v8312
  %8495 = vmatprep.subr.mxu0 0.0
  %8496 = vmatpush1.msra.mxu0 %v8311
  %8497 = vmatprep.subr.mxu0 0.0
  %8498 = vmatpush1.msra.mxu0 %v8310
  %8499 = vmatprep.subr.mxu0 0.0
  %8500 = vmatpush1.msra.mxu0 %v8309
  %8501 = vmatprep.subr.mxu0 0.0
  %8502 = vmatpush1.msra.mxu0 %v8308
  %8503 = vmatprep.subr.mxu0 0.0
  %8504 = vmatpush2.msra.mxu0 0.0
  %8505 = vmatprep.subr.mxu0 0.0
  %8506 = vmatpush2.msra.mxu0 0.0
  %8507 = vmatprep.subr.mxu0 0.0
  %8508 = vmatpush2.msra.mxu0 0.0
  %8509 = vmatprep.subr.mxu0 0.0
  %8510 = vmatpush2.msra.mxu0 0.0
  %8511 = vmatprep.subr.mxu0 0.0
  %8512 = vmatpush2.msra.mxu0 0.0
  %8513 = vmatprep.subr.mxu0 0.0
  %8514 = vmatpush2.msra.mxu0 0.0
  %8515 = vmatprep.subr.mxu0 0.0
  %8516 = vmatpush2.msra.mxu0 0.0
  %8517 = vmatprep.subr.mxu0 0.0
  %8518 = vmatpush2.msra.mxu0 0.0
  %8519 = vmatprep.subr.mxu0 0.0
  %8520 = vmatpush2.msra.mxu0 0.0
  %8521 = vmatprep.subr.mxu0 0.0
  %8522 = vmatpush2.msra.mxu0 0.0
  %8523 = vmatprep.subr.mxu0 0.0
  %8524 = vmatpush2.msra.mxu0 0.0
  %8525 = vmatprep.subr.mxu0 0.0
  %8526 = vmatpush2.msra.mxu0 0.0
  %8527 = vmatprep.subr.mxu0 0.0
  %8528 = vmatpush2.msra.mxu0 0.0
  %8529 = vmatprep.subr.mxu0 0.0
  %8530 = vmatpush2.msra.mxu0 0.0
  %8531 = vmatprep.subr.mxu0 0.0
  %8532 = vmatpush2.msra.mxu0 0.0
  %8533 = vmatprep.subr.mxu0 0.0
  %8534 = vmatpush2.msra.mxu0 0.0
  %8535 = vmatprep.mubr.f32.mxu0 0.0
  %8536 = vmatmul.mubr.f32.gmra.mxu0 %v8238
  %v8537 = vpop.f32.mrf.mxu0
  %v8538 = vadd.f32 %v8468, %v8537
  %v8539 = vpop.f32.mrf.mxu0
  %8540 = vdwg.mxu0
  %vm8541 = vcmask 80896
  %8542 = vst.msk [vmem:[%s7] sm:$0xff] %vm8541, %v8538
  // Predicated region
  $region30: #{cnnet_forward.1} parent=0 // pred_check
    _
  $region31: #{cnnet_forward.1} parent=0 // pred_check_branch
    %8544 = sbr.rel (0) target = $region33
  $region32: #{cnnet_forward.1} parent=0 // pred_region
    _
  $region33: #{cnnet_forward.1} parent=0 // pred_fallthru
    _
  // Predicated region
  $region34: #{cnnet_forward.1} parent=0 // pred_check
    _
  $region35: #{cnnet_forward.1} parent=0 // pred_check_branch
    %8546 = sbr.rel (0) target = $region37
  $region36: #{cnnet_forward.1} parent=0 // pred_region
    _
  $region37: #{cnnet_forward.1} parent=0 // pred_fallthru
    _

</llo_original>
